<compile_context>
chip_gen: v6e
topology: v6e:2x2x1
jax: 0.10.0
libtpu: 0.0.40
codegen_flags: <defaults>
</compile_context>

<pallas_src>
import math
from functools import partial

import jax
import jax.numpy as jnp
from jax.experimental import pallas as pl
from jax.experimental.pallas import tpu as pltpu


# ----------------------------- fused Pallas kernel ----------------------------
def _cross_attn_kernel(fq_ref, fg_ref,
                       wq_ref, bq_ref, wkv_ref, bkv_ref,
                       wc_ref, bc_ref,
                       o_ref,
                       q_scr, k_scr, v_scr, acc_scr,
                       *, num_heads, head_dim):
    h = pl.program_id(1)
    C = num_heads * head_dim

    # ---- h == 0: full-width in-projection for this batch element -------------
    @pl.when(h == 0)
    def _():
        # NCHW -> tokens transpose done in-kernel on the XLU (not in the wrapper).
        q_tok = fq_ref[0].T                                   # [T, C] f32
        k_tok = fg_ref[0].T                                   # [T, C] f32
        q_bf = q_tok.astype(jnp.bfloat16)
        k_bf = k_tok.astype(jnp.bfloat16)

        # Two full-width MXU matmuls (scale already folded into wq / bq).
        q_all = jnp.dot(q_bf, wq_ref[...],
                        preferred_element_type=jnp.float32) + bq_ref[...]   # [T, C]
        kv_all = jnp.dot(k_bf, wkv_ref[...],
                         preferred_element_type=jnp.float32) + bkv_ref[...]  # [T, 2C]

        # Scatter static per-head column slices into [heads, T, hd] scratch
        # (cheap VPU/XLU relayout; keeps the attention matmuls free of any
        #  dynamic lane slicing).
        for n in range(num_heads):
            lo = n * head_dim
            q_scr[n] = q_all[:, lo:lo + head_dim].astype(jnp.bfloat16)
            k_scr[n] = kv_all[:, lo:lo + head_dim].astype(jnp.bfloat16)
            v_scr[n] = kv_all[:, C + lo:C + lo + head_dim].astype(jnp.bfloat16)

        acc_scr[...] = jnp.zeros_like(acc_scr)

    # ---- per-head attention (head h of this batch element) -------------------
    qh = q_scr[h]                                             # [T, hd] bf16 (scaled)
    kh = k_scr[h]                                             # [T, hd] bf16
    vh = v_scr[h]                                             # [T, hd] bf16

    s = jax.lax.dot_general(qh, kh,
                            dimension_numbers=(((1,), (1,)), ((), ())),
                            preferred_element_type=jnp.float32)             # [T, T] f32
    s = s - jnp.max(s, axis=-1, keepdims=True)
    p = jnp.exp(s)
    p = p * pl.reciprocal(jnp.sum(p, axis=-1, keepdims=True), approx=True)

    ctx = jnp.dot(p.astype(jnp.bfloat16), vh,
                  preferred_element_type=jnp.float32)                        # [T, hd]

    # Head-h slice of the folded (out_proj @ proj) weight, streamed per step.
    acc_scr[...] += jnp.dot(ctx.astype(jnp.bfloat16), wc_ref[0],
                            preferred_element_type=jnp.float32)              # [T, C]

    # ---- last head: combined bias, residual, tokens -> NCHW, store -----------
    @pl.when(h == num_heads - 1)
    def _():
        fused = acc_scr[...] + bc_ref[...]                    # [T, C] f32
        # dropout(p=0.0) == identity; residual "+ fq" applied in [C, T] space.
        o_ref[0] = fused.T + fq_ref[0]                        # [C, T] lane-dense store


# ----------------------------- wrapper -----------------------------------------
def cross_attention_block(fq, fg, kp, num_heads):
    """Pallas forward of CrossAttentionBlock. fq, fg: [B, C, H, W] float32."""
    B, C, H, W = fq.shape
    T = H * W
    hd = C // num_heads

    # Only free reshapes in the wrapper; the NCHW<->token transposes are in-kernel.
    fq_t = fq.reshape(B, C, T)
    fg_t = fg.reshape(B, C, T)

    map_spec = pl.BlockSpec((1, C, T), lambda b, h: (b, 0, 0))

    def const_spec(shape):
        nd = len(shape)
        return pl.BlockSpec(shape, lambda b, h, _nd=nd: (0,) * _nd)

    grid_spec = pltpu.PrefetchScalarGridSpec(
        num_scalar_prefetch=0,
        grid=(B, num_heads),
        in_specs=[
            map_spec,                                          # fq  [B, C, T]
            map_spec,                                          # fg  [B, C, T]
            const_spec((C, C)),                                # Wq  (scale folded, bf16)
            const_spec((1, C)),                                # bq  (scale folded, f32)
            const_spec((C, 2 * C)),                            # [Wk | Wv] bf16
            const_spec((1, 2 * C)),                            # [bk | bv] f32
            pl.BlockSpec((1, hd, C), lambda b, h: (h, 0, 0)),  # Wc[h] = Wo_h @ Wp (bf16)
            const_spec((1, C)),                                # b_comb = bo@Wp + bp (f32)
        ],
        out_specs=map_spec,
        scratch_shapes=[
            pltpu.VMEM((num_heads, T, hd), jnp.bfloat16),      # per-head Q (scaled)
            pltpu.VMEM((num_heads, T, hd), jnp.bfloat16),      # per-head K
            pltpu.VMEM((num_heads, T, hd), jnp.bfloat16),      # per-head V
            pltpu.VMEM((T, C), jnp.float32),                   # output accumulator
        ],
    )

    out = pl.pallas_call(
        partial(_cross_attn_kernel, num_heads=num_heads, head_dim=hd),
        out_shape=jax.ShapeDtypeStruct((B, C, T), jnp.float32),
        grid_spec=grid_spec,
        compiler_params=pltpu.CompilerParams(
            dimension_semantics=("parallel", "arbitrary"),
            vmem_limit_bytes=16 * 1024 * 1024),
    )(fq_t, fg_t, kp["wq"], kp["bq"], kp["wkv"], kp["bkv"], kp["wc"], kp["bc"])

    return out.reshape(B, C, H, W)


# ----------------------------- parameters --------------------------------------
def init_raw_params(key, dim):
    """f32 weights in right-multiply layout (y = x @ W + b)."""
    ks = jax.random.split(key, 10)
    s = 1.0 / math.sqrt(dim)

    def w(k):
        return s * jax.random.normal(k, (dim, dim), dtype=jnp.float32)

    def b(k):
        return 0.02 * jax.random.normal(k, (dim,), dtype=jnp.float32)

    return {"wq": w(ks[0]), "wk": w(ks[1]), "wv": w(ks[2]),
            "bq": b(ks[3]), "bk": b(ks[4]), "bv": b(ks[5]),
            "wo": w(ks[6]), "bo": b(ks[7]),
            "wp": w(ks[8]), "bp": b(ks[9])}


def prepare_kernel_params(raw, dim, num_heads):
    """Offline folds: softmax scale into Wq/bq, out_proj@proj into per-head Wc."""
    hd = dim // num_heads
    scale = 1.0 / math.sqrt(hd)

    wq = (raw["wq"] * scale).astype(jnp.bfloat16)                      # [C, C]
    bq = (raw["bq"] * scale).reshape(1, dim)                           # f32
    wkv = jnp.concatenate([raw["wk"], raw["wv"]], axis=1).astype(jnp.bfloat16)  # [C, 2C]
    bkv = jnp.concatenate([raw["bk"], raw["bv"]]).reshape(1, 2 * dim)  # f32

    # Exact fold of the two trailing linears: attn@Wp+bp with attn=ctx@Wo+bo.
    wc_full = raw["wo"] @ raw["wp"]                                    # f32 [C, C]
    wc = wc_full.reshape(num_heads, hd, dim).astype(jnp.bfloat16)      # [heads, hd, C]
    bc = (raw["bo"] @ raw["wp"] + raw["bp"]).reshape(1, dim)           # f32

    return {"wq": wq, "bq": bq, "wkv": wkv, "bkv": bkv, "wc": wc, "bc": bc}


# ----------------------------- pure-JAX reference (f32) ------------------------
def reference_forward(fq, fg, raw, num_heads):
    B, C, H, W = fq.shape
    T = H * W
    hd = C // num_heads
    q = fq.reshape(B, C, T).transpose(0, 2, 1)
    k = fg.reshape(B, C, T).transpose(0, 2, 1)
    Q = q @ raw["wq"] + raw["bq"]
    K = k @ raw["wk"] + raw["bk"]
    V = k @ raw["wv"] + raw["bv"]

    def split(x):
        return x.reshape(B, T, num_heads, hd).transpose(0, 2, 1, 3)

    Qh, Kh, Vh = split(Q), split(K), split(V)
    s = jnp.einsum("bhtd,bhsd->bhts", Qh, Kh) / math.sqrt(hd)
    p = jax.nn.softmax(s, axis=-1)
    ctx = jnp.einsum("bhts,bhsd->bhtd", p, Vh)
    ctx = ctx.transpose(0, 2, 1, 3).reshape(B, T, C)
    attn = ctx @ raw["wo"] + raw["bo"]
    fused = attn @ raw["wp"] + raw["bp"]
    return fused.transpose(0, 2, 1).reshape(B, C, H, W) + fq


# ----------------------------- main ---------------------------------------------
if __name__ == "__main__":
    key = jax.random.PRNGKey(0)
    k_fq, k_fg, k_w = jax.random.split(key, 3)

    B, C, H, W = 2, 256, 16, 16          # dim=256, 8 heads -> head_dim=32; T=256 tokens
    NUM_HEADS = 8

    fq = jax.random.normal(k_fq, (B, C, H, W), dtype=jnp.float32)
    fg = jax.random.normal(k_fg, (B, C, H, W), dtype=jnp.float32)

    raw = init_raw_params(k_w, C)
    kparams = prepare_kernel_params(raw, C, NUM_HEADS)

    fwd = jax.jit(lambda a, b: cross_attention_block(a, b, kparams, NUM_HEADS))
    out = jax.block_until_ready(fwd(fq, fg))

    assert out.shape == (B, C, H, W), out.shape
    assert out.dtype == jnp.float32
    assert bool(jnp.all(jnp.isfinite(out)))

    ref = reference_forward(fq, fg, raw, NUM_HEADS)
    err = float(jnp.max(jnp.abs(out - ref)))
    assert err < 0.1, f"max abs diff vs f32 reference too large: {err}"

    print("KERNEL_OK")
</pallas_src>

<mosaic_0001>
module attributes {stable_mosaic.version = 11 : i64} {
  func.func @_cross_attn_kernel(%arg0: i32, %arg1: i32, %arg2: memref<1x256x256xf32, #tpu.memory_space<vmem>>, %arg3: memref<1x256x256xf32, #tpu.memory_space<vmem>>, %arg4: memref<256x256xbf16, #tpu.memory_space<vmem>>, %arg5: memref<1x256xf32, #tpu.memory_space<vmem>>, %arg6: memref<256x512xbf16, #tpu.memory_space<vmem>>, %arg7: memref<1x512xf32, #tpu.memory_space<vmem>>, %arg8: memref<1x32x256xbf16, #tpu.memory_space<vmem>>, %arg9: memref<1x256xf32, #tpu.memory_space<vmem>>, %arg10: memref<1x256x256xf32, #tpu.memory_space<vmem>>, %arg11: memref<8x256x32xbf16, #tpu.memory_space<vmem>>, %arg12: memref<8x256x32xbf16, #tpu.memory_space<vmem>>, %arg13: memref<8x256x32xbf16, #tpu.memory_space<vmem>>, %arg14: memref<256x256xf32, #tpu.memory_space<vmem>>) attributes {dimension_semantics = [#tpu.dimension_semantics<parallel>, #tpu.dimension_semantics<arbitrary>], iteration_bounds = array<i64: 2, 8>, scalar_prefetch = 0 : i64, scratch_operands = 4 : i64, tpu.core_type = #tpu.core_type<tc>, window_params = [{transform_indices = @transform_0, window_bounds = array<i64: 1, 256, 256>}, {transform_indices = @transform_1, window_bounds = array<i64: 1, 256, 256>}, {pipeline_mode = #tpu.pipeline_mode<synchronous>, transform_indices = @transform_2, window_bounds = array<i64: 256, 256>}, {pipeline_mode = #tpu.pipeline_mode<synchronous>, transform_indices = @transform_3, window_bounds = array<i64: 1, 256>}, {pipeline_mode = #tpu.pipeline_mode<synchronous>, transform_indices = @transform_4, window_bounds = array<i64: 256, 512>}, {pipeline_mode = #tpu.pipeline_mode<synchronous>, transform_indices = @transform_5, window_bounds = array<i64: 1, 512>}, {transform_indices = @transform_6, window_bounds = array<i64: 1, 32, 256>}, {pipeline_mode = #tpu.pipeline_mode<synchronous>, transform_indices = @transform_7, window_bounds = array<i64: 1, 256>}, {transform_indices = @transform_8, window_bounds = array<i64: 1, 256, 256>}]} {
    %c0_i32 = arith.constant 0 : i32
    %0 = arith.cmpi eq, %arg1, %c0_i32 : i32
    %1 = arith.extui %0 : i1 to i32
    %c0_i32_0 = arith.constant 0 : i32
    %2 = arith.cmpi ne, %1, %c0_i32_0 : i32
    scf.if %2 {
      %c0_18 = arith.constant 0 : index
      %c0_19 = arith.constant 0 : index
      %c0_20 = arith.constant 0 : index
      %35 = vector.load %arg2[%c0_18, %c0_19, %c0_20] : memref<1x256x256xf32, #tpu.memory_space<vmem>>, vector<1x256x256xf32>
      %36 = vector.shape_cast %35 : vector<1x256x256xf32> to vector<256x256xf32>
      %37 = tpu.transpose %36, [1, 0] : vector<256x256xf32> -> vector<256x256xf32>
      %c0_21 = arith.constant 0 : index
      %c0_22 = arith.constant 0 : index
      %c0_23 = arith.constant 0 : index
      %38 = vector.load %arg3[%c0_21, %c0_22, %c0_23] : memref<1x256x256xf32, #tpu.memory_space<vmem>>, vector<1x256x256xf32>
      %39 = vector.shape_cast %38 : vector<1x256x256xf32> to vector<256x256xf32>
      %40 = tpu.transpose %39, [1, 0] : vector<256x256xf32> -> vector<256x256xf32>
      %41 = arith.truncf %37 : vector<256x256xf32> to vector<256x256xbf16>
      %42 = arith.truncf %40 : vector<256x256xf32> to vector<256x256xbf16>
      %c0_24 = arith.constant 0 : index
      %c0_25 = arith.constant 0 : index
      %43 = vector.load %arg4[%c0_24, %c0_25] : memref<256x256xbf16, #tpu.memory_space<vmem>>, vector<256x256xbf16>
      %cst_26 = arith.constant dense<0.000000e+00> : vector<256x256xf32>
      %44 = tpu.matmul %41, %43, %cst_26 {dimension_numbers = #tpu.dot_dimension_numbers<[1], [0], [0], [1], [0, 0, 1, 1], [], []>} : vector<256x256xbf16>, vector<256x256xbf16>, vector<256x256xf32> -> vector<256x256xf32>
      %c0_27 = arith.constant 0 : index
      %c0_28 = arith.constant 0 : index
      %45 = vector.load %arg5[%c0_27, %c0_28] : memref<1x256xf32, #tpu.memory_space<vmem>>, vector<1x256xf32>
      %46 = vector.broadcast %45 : vector<1x256xf32> to vector<256x256xf32>
      %47 = arith.addf %44, %46 : vector<256x256xf32>
      %c0_29 = arith.constant 0 : index
      %c0_30 = arith.constant 0 : index
      %48 = vector.load %arg6[%c0_29, %c0_30] : memref<256x512xbf16, #tpu.memory_space<vmem>>, vector<256x512xbf16>
      %cst_31 = arith.constant dense<0.000000e+00> : vector<256x512xf32>
      %49 = tpu.matmul %42, %48, %cst_31 {dimension_numbers = #tpu.dot_dimension_numbers<[1], [0], [0], [1], [0, 0, 1, 1], [], []>} : vector<256x256xbf16>, vector<256x512xbf16>, vector<256x512xf32> -> vector<256x512xf32>
      %c0_32 = arith.constant 0 : index
      %c0_33 = arith.constant 0 : index
      %50 = vector.load %arg7[%c0_32, %c0_33] : memref<1x512xf32, #tpu.memory_space<vmem>>, vector<1x512xf32>
      %51 = vector.broadcast %50 : vector<1x512xf32> to vector<256x512xf32>
      %52 = arith.addf %49, %51 : vector<256x512xf32>
      %53 = vector.extract_strided_slice %47 {offsets = [0, 0], sizes = [256, 32], strides = [1, 1]} : vector<256x256xf32> to vector<256x32xf32>
      %54 = arith.truncf %53 : vector<256x32xf32> to vector<256x32xbf16>
      %c0_34 = arith.constant 0 : index
      %c0_35 = arith.constant 0 : index
      %c0_36 = arith.constant 0 : index
      %55 = vector.load %arg11[%c0_34, %c0_35, %c0_36] : memref<8x256x32xbf16, #tpu.memory_space<vmem>>, vector<1x256x32xbf16>
      %56 = vector.shape_cast %55 : vector<1x256x32xbf16> to vector<256x32xbf16>
      %57 = vector.shape_cast %54 : vector<256x32xbf16> to vector<1x256x32xbf16>
      tpu.vector_store %arg11[%c0_34, %c0_35, %c0_36], %57 {strides = array<i32>} : memref<8x256x32xbf16, #tpu.memory_space<vmem>>, vector<1x256x32xbf16>,
      %58 = vector.extract_strided_slice %52 {offsets = [0, 0], sizes = [256, 32], strides = [1, 1]} : vector<256x512xf32> to vector<256x32xf32>
      %59 = arith.truncf %58 : vector<256x32xf32> to vector<256x32xbf16>
      %c0_37 = arith.constant 0 : index
      %c0_38 = arith.constant 0 : index
      %c0_39 = arith.constant 0 : index
      %60 = vector.load %arg12[%c0_37, %c0_38, %c0_39] : memref<8x256x32xbf16, #tpu.memory_space<vmem>>, vector<1x256x32xbf16>
      %61 = vector.shape_cast %60 : vector<1x256x32xbf16> to vector<256x32xbf16>
      %62 = vector.shape_cast %59 : vector<256x32xbf16> to vector<1x256x32xbf16>
      tpu.vector_store %arg12[%c0_37, %c0_38, %c0_39], %62 {strides = array<i32>} : memref<8x256x32xbf16, #tpu.memory_space<vmem>>, vector<1x256x32xbf16>,
      %63 = vector.extract_strided_slice %52 {offsets = [0, 256], sizes = [256, 32], strides = [1, 1]} : vector<256x512xf32> to vector<256x32xf32>
      %64 = arith.truncf %63 : vector<256x32xf32> to vector<256x32xbf16>
      %c0_40 = arith.constant 0 : index
      %c0_41 = arith.constant 0 : index
      %c0_42 = arith.constant 0 : index
      %65 = vector.load %arg13[%c0_40, %c0_41, %c0_42] : memref<8x256x32xbf16, #tpu.memory_space<vmem>>, vector<1x256x32xbf16>
      %66 = vector.shape_cast %65 : vector<1x256x32xbf16> to vector<256x32xbf16>
      %67 = vector.shape_cast %64 : vector<256x32xbf16> to vector<1x256x32xbf16>
      tpu.vector_store %arg13[%c0_40, %c0_41, %c0_42], %67 {strides = array<i32>} : memref<8x256x32xbf16, #tpu.memory_space<vmem>>, vector<1x256x32xbf16>,
      %68 = vector.extract_strided_slice %47 {offsets = [0, 32], sizes = [256, 32], strides = [1, 1]} : vector<256x256xf32> to vector<256x32xf32>
      %69 = arith.truncf %68 : vector<256x32xf32> to vector<256x32xbf16>
      %c1 = arith.constant 1 : index
      %c0_43 = arith.constant 0 : index
      %c0_44 = arith.constant 0 : index
      %70 = vector.load %arg11[%c1, %c0_43, %c0_44] : memref<8x256x32xbf16, #tpu.memory_space<vmem>>, vector<1x256x32xbf16>
      %71 = vector.shape_cast %70 : vector<1x256x32xbf16> to vector<256x32xbf16>
      %72 = vector.shape_cast %69 : vector<256x32xbf16> to vector<1x256x32xbf16>
      tpu.vector_store %arg11[%c1, %c0_43, %c0_44], %72 {strides = array<i32>} : memref<8x256x32xbf16, #tpu.memory_space<vmem>>, vector<1x256x32xbf16>,
      %73 = vector.extract_strided_slice %52 {offsets = [0, 32], sizes = [256, 32], strides = [1, 1]} : vector<256x512xf32> to vector<256x32xf32>
      %74 = arith.truncf %73 : vector<256x32xf32> to vector<256x32xbf16>
      %c1_45 = arith.constant 1 : index
      %c0_46 = arith.constant 0 : index
      %c0_47 = arith.constant 0 : index
      %75 = vector.load %arg12[%c1_45, %c0_46, %c0_47] : memref<8x256x32xbf16, #tpu.memory_space<vmem>>, vector<1x256x32xbf16>
      %76 = vector.shape_cast %75 : vector<1x256x32xbf16> to vector<256x32xbf16>
      %77 = vector.shape_cast %74 : vector<256x32xbf16> to vector<1x256x32xbf16>
      tpu.vector_store %arg12[%c1_45, %c0_46, %c0_47], %77 {strides = array<i32>} : memref<8x256x32xbf16, #tpu.memory_space<vmem>>, vector<1x256x32xbf16>,
      %78 = vector.extract_strided_slice %52 {offsets = [0, 288], sizes = [256, 32], strides = [1, 1]} : vector<256x512xf32> to vector<256x32xf32>
      %79 = arith.truncf %78 : vector<256x32xf32> to vector<256x32xbf16>
      %c1_48 = arith.constant 1 : index
      %c0_49 = arith.constant 0 : index
      %c0_50 = arith.constant 0 : index
      %80 = vector.load %arg13[%c1_48, %c0_49, %c0_50] : memref<8x256x32xbf16, #tpu.memory_space<vmem>>, vector<1x256x32xbf16>
      %81 = vector.shape_cast %80 : vector<1x256x32xbf16> to vector<256x32xbf16>
      %82 = vector.shape_cast %79 : vector<256x32xbf16> to vector<1x256x32xbf16>
      tpu.vector_store %arg13[%c1_48, %c0_49, %c0_50], %82 {strides = array<i32>} : memref<8x256x32xbf16, #tpu.memory_space<vmem>>, vector<1x256x32xbf16>,
      %83 = vector.extract_strided_slice %47 {offsets = [0, 64], sizes = [256, 32], strides = [1, 1]} : vector<256x256xf32> to vector<256x32xf32>
      %84 = arith.truncf %83 : vector<256x32xf32> to vector<256x32xbf16>
      %c2 = arith.constant 2 : index
      %c0_51 = arith.constant 0 : index
      %c0_52 = arith.constant 0 : index
      %85 = vector.load %arg11[%c2, %c0_51, %c0_52] : memref<8x256x32xbf16, #tpu.memory_space<vmem>>, vector<1x256x32xbf16>
      %86 = vector.shape_cast %85 : vector<1x256x32xbf16> to vector<256x32xbf16>
      %87 = vector.shape_cast %84 : vector<256x32xbf16> to vector<1x256x32xbf16>
      tpu.vector_store %arg11[%c2, %c0_51, %c0_52], %87 {strides = array<i32>} : memref<8x256x32xbf16, #tpu.memory_space<vmem>>, vector<1x256x32xbf16>,
      %88 = vector.extract_strided_slice %52 {offsets = [0, 64], sizes = [256, 32], strides = [1, 1]} : vector<256x512xf32> to vector<256x32xf32>
      %89 = arith.truncf %88 : vector<256x32xf32> to vector<256x32xbf16>
      %c2_53 = arith.constant 2 : index
      %c0_54 = arith.constant 0 : index
      %c0_55 = arith.constant 0 : index
      %90 = vector.load %arg12[%c2_53, %c0_54, %c0_55] : memref<8x256x32xbf16, #tpu.memory_space<vmem>>, vector<1x256x32xbf16>
      %91 = vector.shape_cast %90 : vector<1x256x32xbf16> to vector<256x32xbf16>
      %92 = vector.shape_cast %89 : vector<256x32xbf16> to vector<1x256x32xbf16>
      tpu.vector_store %arg12[%c2_53, %c0_54, %c0_55], %92 {strides = array<i32>} : memref<8x256x32xbf16, #tpu.memory_space<vmem>>, vector<1x256x32xbf16>,
      %93 = vector.extract_strided_slice %52 {offsets = [0, 320], sizes = [256, 32], strides = [1, 1]} : vector<256x512xf32> to vector<256x32xf32>
      %94 = arith.truncf %93 : vector<256x32xf32> to vector<256x32xbf16>
      %c2_56 = arith.constant 2 : index
      %c0_57 = arith.constant 0 : index
      %c0_58 = arith.constant 0 : index
      %95 = vector.load %arg13[%c2_56, %c0_57, %c0_58] : memref<8x256x32xbf16, #tpu.memory_space<vmem>>, vector<1x256x32xbf16>
      %96 = vector.shape_cast %95 : vector<1x256x32xbf16> to vector<256x32xbf16>
      %97 = vector.shape_cast %94 : vector<256x32xbf16> to vector<1x256x32xbf16>
      tpu.vector_store %arg13[%c2_56, %c0_57, %c0_58], %97 {strides = array<i32>} : memref<8x256x32xbf16, #tpu.memory_space<vmem>>, vector<1x256x32xbf16>,
      %98 = vector.extract_strided_slice %47 {offsets = [0, 96], sizes = [256, 32], strides = [1, 1]} : vector<256x256xf32> to vector<256x32xf32>
      %99 = arith.truncf %98 : vector<256x32xf32> to vector<256x32xbf16>
      %c3 = arith.constant 3 : index
      %c0_59 = arith.constant 0 : index
      %c0_60 = arith.constant 0 : index
      %100 = vector.load %arg11[%c3, %c0_59, %c0_60] : memref<8x256x32xbf16, #tpu.memory_space<vmem>>, vector<1x256x32xbf16>
      %101 = vector.shape_cast %100 : vector<1x256x32xbf16> to vector<256x32xbf16>
      %102 = vector.shape_cast %99 : vector<256x32xbf16> to vector<1x256x32xbf16>
      tpu.vector_store %arg11[%c3, %c0_59, %c0_60], %102 {strides = array<i32>} : memref<8x256x32xbf16, #tpu.memory_space<vmem>>, vector<1x256x32xbf16>,
      %103 = vector.extract_strided_slice %52 {offsets = [0, 96], sizes = [256, 32], strides = [1, 1]} : vector<256x512xf32> to vector<256x32xf32>
      %104 = arith.truncf %103 : vector<256x32xf32> to vector<256x32xbf16>
      %c3_61 = arith.constant 3 : index
      %c0_62 = arith.constant 0 : index
      %c0_63 = arith.constant 0 : index
      %105 = vector.load %arg12[%c3_61, %c0_62, %c0_63] : memref<8x256x32xbf16, #tpu.memory_space<vmem>>, vector<1x256x32xbf16>
      %106 = vector.shape_cast %105 : vector<1x256x32xbf16> to vector<256x32xbf16>
      %107 = vector.shape_cast %104 : vector<256x32xbf16> to vector<1x256x32xbf16>
      tpu.vector_store %arg12[%c3_61, %c0_62, %c0_63], %107 {strides = array<i32>} : memref<8x256x32xbf16, #tpu.memory_space<vmem>>, vector<1x256x32xbf16>,
      %108 = vector.extract_strided_slice %52 {offsets = [0, 352], sizes = [256, 32], strides = [1, 1]} : vector<256x512xf32> to vector<256x32xf32>
      %109 = arith.truncf %108 : vector<256x32xf32> to vector<256x32xbf16>
      %c3_64 = arith.constant 3 : index
      %c0_65 = arith.constant 0 : index
      %c0_66 = arith.constant 0 : index
      %110 = vector.load %arg13[%c3_64, %c0_65, %c0_66] : memref<8x256x32xbf16, #tpu.memory_space<vmem>>, vector<1x256x32xbf16>
      %111 = vector.shape_cast %110 : vector<1x256x32xbf16> to vector<256x32xbf16>
      %112 = vector.shape_cast %109 : vector<256x32xbf16> to vector<1x256x32xbf16>
      tpu.vector_store %arg13[%c3_64, %c0_65, %c0_66], %112 {strides = array<i32>} : memref<8x256x32xbf16, #tpu.memory_space<vmem>>, vector<1x256x32xbf16>,
      %113 = vector.extract_strided_slice %47 {offsets = [0, 128], sizes = [256, 32], strides = [1, 1]} : vector<256x256xf32> to vector<256x32xf32>
      %114 = arith.truncf %113 : vector<256x32xf32> to vector<256x32xbf16>
      %c4 = arith.constant 4 : index
      %c0_67 = arith.constant 0 : index
      %c0_68 = arith.constant 0 : index
      %115 = vector.load %arg11[%c4, %c0_67, %c0_68] : memref<8x256x32xbf16, #tpu.memory_space<vmem>>, vector<1x256x32xbf16>
      %116 = vector.shape_cast %115 : vector<1x256x32xbf16> to vector<256x32xbf16>
      %117 = vector.shape_cast %114 : vector<256x32xbf16> to vector<1x256x32xbf16>
      tpu.vector_store %arg11[%c4, %c0_67, %c0_68], %117 {strides = array<i32>} : memref<8x256x32xbf16, #tpu.memory_space<vmem>>, vector<1x256x32xbf16>,
      %118 = vector.extract_strided_slice %52 {offsets = [0, 128], sizes = [256, 32], strides = [1, 1]} : vector<256x512xf32> to vector<256x32xf32>
      %119 = arith.truncf %118 : vector<256x32xf32> to vector<256x32xbf16>
      %c4_69 = arith.constant 4 : index
      %c0_70 = arith.constant 0 : index
      %c0_71 = arith.constant 0 : index
      %120 = vector.load %arg12[%c4_69, %c0_70, %c0_71] : memref<8x256x32xbf16, #tpu.memory_space<vmem>>, vector<1x256x32xbf16>
      %121 = vector.shape_cast %120 : vector<1x256x32xbf16> to vector<256x32xbf16>
      %122 = vector.shape_cast %119 : vector<256x32xbf16> to vector<1x256x32xbf16>
      tpu.vector_store %arg12[%c4_69, %c0_70, %c0_71], %122 {strides = array<i32>} : memref<8x256x32xbf16, #tpu.memory_space<vmem>>, vector<1x256x32xbf16>,
      %123 = vector.extract_strided_slice %52 {offsets = [0, 384], sizes = [256, 32], strides = [1, 1]} : vector<256x512xf32> to vector<256x32xf32>
      %124 = arith.truncf %123 : vector<256x32xf32> to vector<256x32xbf16>
      %c4_72 = arith.constant 4 : index
      %c0_73 = arith.constant 0 : index
      %c0_74 = arith.constant 0 : index
      %125 = vector.load %arg13[%c4_72, %c0_73, %c0_74] : memref<8x256x32xbf16, #tpu.memory_space<vmem>>, vector<1x256x32xbf16>
      %126 = vector.shape_cast %125 : vector<1x256x32xbf16> to vector<256x32xbf16>
      %127 = vector.shape_cast %124 : vector<256x32xbf16> to vector<1x256x32xbf16>
      tpu.vector_store %arg13[%c4_72, %c0_73, %c0_74], %127 {strides = array<i32>} : memref<8x256x32xbf16, #tpu.memory_space<vmem>>, vector<1x256x32xbf16>,
      %128 = vector.extract_strided_slice %47 {offsets = [0, 160], sizes = [256, 32], strides = [1, 1]} : vector<256x256xf32> to vector<256x32xf32>
      %129 = arith.truncf %128 : vector<256x32xf32> to vector<256x32xbf16>
      %c5 = arith.constant 5 : index
      %c0_75 = arith.constant 0 : index
      %c0_76 = arith.constant 0 : index
      %130 = vector.load %arg11[%c5, %c0_75, %c0_76] : memref<8x256x32xbf16, #tpu.memory_space<vmem>>, vector<1x256x32xbf16>
      %131 = vector.shape_cast %130 : vector<1x256x32xbf16> to vector<256x32xbf16>
      %132 = vector.shape_cast %129 : vector<256x32xbf16> to vector<1x256x32xbf16>
      tpu.vector_store %arg11[%c5, %c0_75, %c0_76], %132 {strides = array<i32>} : memref<8x256x32xbf16, #tpu.memory_space<vmem>>, vector<1x256x32xbf16>,
      %133 = vector.extract_strided_slice %52 {offsets = [0, 160], sizes = [256, 32], strides = [1, 1]} : vector<256x512xf32> to vector<256x32xf32>
      %134 = arith.truncf %133 : vector<256x32xf32> to vector<256x32xbf16>
      %c5_77 = arith.constant 5 : index
      %c0_78 = arith.constant 0 : index
      %c0_79 = arith.constant 0 : index
      %135 = vector.load %arg12[%c5_77, %c0_78, %c0_79] : memref<8x256x32xbf16, #tpu.memory_space<vmem>>, vector<1x256x32xbf16>
      %136 = vector.shape_cast %135 : vector<1x256x32xbf16> to vector<256x32xbf16>
      %137 = vector.shape_cast %134 : vector<256x32xbf16> to vector<1x256x32xbf16>
      tpu.vector_store %arg12[%c5_77, %c0_78, %c0_79], %137 {strides = array<i32>} : memref<8x256x32xbf16, #tpu.memory_space<vmem>>, vector<1x256x32xbf16>,
      %138 = vector.extract_strided_slice %52 {offsets = [0, 416], sizes = [256, 32], strides = [1, 1]} : vector<256x512xf32> to vector<256x32xf32>
      %139 = arith.truncf %138 : vector<256x32xf32> to vector<256x32xbf16>
      %c5_80 = arith.constant 5 : index
      %c0_81 = arith.constant 0 : index
      %c0_82 = arith.constant 0 : index
      %140 = vector.load %arg13[%c5_80, %c0_81, %c0_82] : memref<8x256x32xbf16, #tpu.memory_space<vmem>>, vector<1x256x32xbf16>
      %141 = vector.shape_cast %140 : vector<1x256x32xbf16> to vector<256x32xbf16>
      %142 = vector.shape_cast %139 : vector<256x32xbf16> to vector<1x256x32xbf16>
      tpu.vector_store %arg13[%c5_80, %c0_81, %c0_82], %142 {strides = array<i32>} : memref<8x256x32xbf16, #tpu.memory_space<vmem>>, vector<1x256x32xbf16>,
      %143 = vector.extract_strided_slice %47 {offsets = [0, 192], sizes = [256, 32], strides = [1, 1]} : vector<256x256xf32> to vector<256x32xf32>
      %144 = arith.truncf %143 : vector<256x32xf32> to vector<256x32xbf16>
      %c6 = arith.constant 6 : index
      %c0_83 = arith.constant 0 : index
      %c0_84 = arith.constant 0 : index
      %145 = vector.load %arg11[%c6, %c0_83, %c0_84] : memref<8x256x32xbf16, #tpu.memory_space<vmem>>, vector<1x256x32xbf16>
      %146 = vector.shape_cast %145 : vector<1x256x32xbf16> to vector<256x32xbf16>
      %147 = vector.shape_cast %144 : vector<256x32xbf16> to vector<1x256x32xbf16>
      tpu.vector_store %arg11[%c6, %c0_83, %c0_84], %147 {strides = array<i32>} : memref<8x256x32xbf16, #tpu.memory_space<vmem>>, vector<1x256x32xbf16>,
      %148 = vector.extract_strided_slice %52 {offsets = [0, 192], sizes = [256, 32], strides = [1, 1]} : vector<256x512xf32> to vector<256x32xf32>
      %149 = arith.truncf %148 : vector<256x32xf32> to vector<256x32xbf16>
      %c6_85 = arith.constant 6 : index
      %c0_86 = arith.constant 0 : index
      %c0_87 = arith.constant 0 : index
      %150 = vector.load %arg12[%c6_85, %c0_86, %c0_87] : memref<8x256x32xbf16, #tpu.memory_space<vmem>>, vector<1x256x32xbf16>
      %151 = vector.shape_cast %150 : vector<1x256x32xbf16> to vector<256x32xbf16>
      %152 = vector.shape_cast %149 : vector<256x32xbf16> to vector<1x256x32xbf16>
      tpu.vector_store %arg12[%c6_85, %c0_86, %c0_87], %152 {strides = array<i32>} : memref<8x256x32xbf16, #tpu.memory_space<vmem>>, vector<1x256x32xbf16>,
      %153 = vector.extract_strided_slice %52 {offsets = [0, 448], sizes = [256, 32], strides = [1, 1]} : vector<256x512xf32> to vector<256x32xf32>
      %154 = arith.truncf %153 : vector<256x32xf32> to vector<256x32xbf16>
      %c6_88 = arith.constant 6 : index
      %c0_89 = arith.constant 0 : index
      %c0_90 = arith.constant 0 : index
      %155 = vector.load %arg13[%c6_88, %c0_89, %c0_90] : memref<8x256x32xbf16, #tpu.memory_space<vmem>>, vector<1x256x32xbf16>
      %156 = vector.shape_cast %155 : vector<1x256x32xbf16> to vector<256x32xbf16>
      %157 = vector.shape_cast %154 : vector<256x32xbf16> to vector<1x256x32xbf16>
      tpu.vector_store %arg13[%c6_88, %c0_89, %c0_90], %157 {strides = array<i32>} : memref<8x256x32xbf16, #tpu.memory_space<vmem>>, vector<1x256x32xbf16>,
      %158 = vector.extract_strided_slice %47 {offsets = [0, 224], sizes = [256, 32], strides = [1, 1]} : vector<256x256xf32> to vector<256x32xf32>
      %159 = arith.truncf %158 : vector<256x32xf32> to vector<256x32xbf16>
      %c7 = arith.constant 7 : index
      %c0_91 = arith.constant 0 : index
      %c0_92 = arith.constant 0 : index
      %160 = vector.load %arg11[%c7, %c0_91, %c0_92] : memref<8x256x32xbf16, #tpu.memory_space<vmem>>, vector<1x256x32xbf16>
      %161 = vector.shape_cast %160 : vector<1x256x32xbf16> to vector<256x32xbf16>
      %162 = vector.shape_cast %159 : vector<256x32xbf16> to vector<1x256x32xbf16>
      tpu.vector_store %arg11[%c7, %c0_91, %c0_92], %162 {strides = array<i32>} : memref<8x256x32xbf16, #tpu.memory_space<vmem>>, vector<1x256x32xbf16>,
      %163 = vector.extract_strided_slice %52 {offsets = [0, 224], sizes = [256, 32], strides = [1, 1]} : vector<256x512xf32> to vector<256x32xf32>
      %164 = arith.truncf %163 : vector<256x32xf32> to vector<256x32xbf16>
      %c7_93 = arith.constant 7 : index
      %c0_94 = arith.constant 0 : index
      %c0_95 = arith.constant 0 : index
      %165 = vector.load %arg12[%c7_93, %c0_94, %c0_95] : memref<8x256x32xbf16, #tpu.memory_space<vmem>>, vector<1x256x32xbf16>
      %166 = vector.shape_cast %165 : vector<1x256x32xbf16> to vector<256x32xbf16>
      %167 = vector.shape_cast %164 : vector<256x32xbf16> to vector<1x256x32xbf16>
      tpu.vector_store %arg12[%c7_93, %c0_94, %c0_95], %167 {strides = array<i32>} : memref<8x256x32xbf16, #tpu.memory_space<vmem>>, vector<1x256x32xbf16>,
      %168 = vector.extract_strided_slice %52 {offsets = [0, 480], sizes = [256, 32], strides = [1, 1]} : vector<256x512xf32> to vector<256x32xf32>
      %169 = arith.truncf %168 : vector<256x32xf32> to vector<256x32xbf16>
      %c7_96 = arith.constant 7 : index
      %c0_97 = arith.constant 0 : index
      %c0_98 = arith.constant 0 : index
      %170 = vector.load %arg13[%c7_96, %c0_97, %c0_98] : memref<8x256x32xbf16, #tpu.memory_space<vmem>>, vector<1x256x32xbf16>
      %171 = vector.shape_cast %170 : vector<1x256x32xbf16> to vector<256x32xbf16>
      %172 = vector.shape_cast %169 : vector<256x32xbf16> to vector<1x256x32xbf16>
      tpu.vector_store %arg13[%c7_96, %c0_97, %c0_98], %172 {strides = array<i32>} : memref<8x256x32xbf16, #tpu.memory_space<vmem>>, vector<1x256x32xbf16>,
      %cst_99 = arith.constant 0.000000e+00 : f32
      %173 = vector.broadcast %cst_99 : f32 to vector<256x256xf32>
      %c0_100 = arith.constant 0 : index
      %c0_101 = arith.constant 0 : index
      %174 = vector.load %arg14[%c0_100, %c0_101] : memref<256x256xf32, #tpu.memory_space<vmem>>, vector<256x256xf32>
      tpu.vector_store %arg14[%c0_100, %c0_101], %173 {strides = array<i32>} : memref<256x256xf32, #tpu.memory_space<vmem>>, vector<256x256xf32>,
    } else {
    }
    %3 = arith.index_cast %arg1 : i32 to index
    %c0 = arith.constant 0 : index
    %c0_1 = arith.constant 0 : index
    %4 = vector.load %arg11[%3, %c0, %c0_1] : memref<8x256x32xbf16, #tpu.memory_space<vmem>>, vector<1x256x32xbf16>
    %5 = vector.shape_cast %4 : vector<1x256x32xbf16> to vector<256x32xbf16>
    %6 = arith.index_cast %arg1 : i32 to index
    %c0_2 = arith.constant 0 : index
    %c0_3 = arith.constant 0 : index
    %7 = vector.load %arg12[%6, %c0_2, %c0_3] : memref<8x256x32xbf16, #tpu.memory_space<vmem>>, vector<1x256x32xbf16>
    %8 = vector.shape_cast %7 : vector<1x256x32xbf16> to vector<256x32xbf16>
    %9 = arith.index_cast %arg1 : i32 to index
    %c0_4 = arith.constant 0 : index
    %c0_5 = arith.constant 0 : index
    %10 = vector.load %arg13[%9, %c0_4, %c0_5] : memref<8x256x32xbf16, #tpu.memory_space<vmem>>, vector<1x256x32xbf16>
    %11 = vector.shape_cast %10 : vector<1x256x32xbf16> to vector<256x32xbf16>
    %cst = arith.constant dense<0.000000e+00> : vector<256x256xf32>
    %12 = tpu.matmul %5, %8, %cst {dimension_numbers = #tpu.dot_dimension_numbers<[1], [1], [0], [0], [0, 0, 1, 0], [], []>} : vector<256x32xbf16>, vector<256x32xbf16>, vector<256x256xf32> -> vector<256x256xf32>
    %cst_6 = arith.constant dense<0xFF800000> : vector<256xf32>
    %13 = vector.multi_reduction <maximumf>, %12, %cst_6 [1] : vector<256x256xf32> to vector<256xf32>
    %14 = vector.shape_cast %13 : vector<256xf32> to vector<256x1xf32>
    %15 = vector.broadcast %14 : vector<256x1xf32> to vector<256x256xf32>
    %16 = arith.subf %12, %15 : vector<256x256xf32>
    %17 = math.exp %16 : vector<256x256xf32>
    %cst_7 = arith.constant dense<0.000000e+00> : vector<256xf32>
    %18 = vector.multi_reduction <add>, %17, %cst_7 [1] : vector<256x256xf32> to vector<256xf32>
    %19 = vector.shape_cast %18 : vector<256xf32> to vector<256x1xf32>
    %20 = tpu.reciprocal %19 {approx = true} : vector<256x1xf32> -> vector<256x1xf32>
    %21 = vector.broadcast %20 : vector<256x1xf32> to vector<256x256xf32>
    %22 = arith.mulf %17, %21 : vector<256x256xf32>
    %23 = arith.truncf %22 : vector<256x256xf32> to vector<256x256xbf16>
    %cst_8 = arith.constant dense<0.000000e+00> : vector<256x32xf32>
    %24 = tpu.matmul %23, %11, %cst_8 {dimension_numbers = #tpu.dot_dimension_numbers<[1], [0], [0], [1], [0, 0, 1, 1], [], []>} : vector<256x256xbf16>, vector<256x32xbf16>, vector<256x32xf32> -> vector<256x32xf32>
    %c0_9 = arith.constant 0 : index
    %c0_10 = arith.constant 0 : index
    %25 = vector.load %arg14[%c0_9, %c0_10] : memref<256x256xf32, #tpu.memory_space<vmem>>, vector<256x256xf32>
    %26 = arith.truncf %24 : vector<256x32xf32> to vector<256x32xbf16>
    %c0_11 = arith.constant 0 : index
    %c0_12 = arith.constant 0 : index
    %c0_13 = arith.constant 0 : index
    %27 = vector.load %arg8[%c0_11, %c0_12, %c0_13] : memref<1x32x256xbf16, #tpu.memory_space<vmem>>, vector<1x32x256xbf16>
    %28 = vector.shape_cast %27 : vector<1x32x256xbf16> to vector<32x256xbf16>
    %cst_14 = arith.constant dense<0.000000e+00> : vector<256x256xf32>
    %29 = tpu.matmul %26, %28, %cst_14 {dimension_numbers = #tpu.dot_dimension_numbers<[1], [0], [0], [1], [0, 0, 1, 1], [], []>} : vector<256x32xbf16>, vector<32x256xbf16>, vector<256x256xf32> -> vector<256x256xf32>
    %30 = arith.addf %25, %29 : vector<256x256xf32>
    %c0_15 = arith.constant 0 : index
    %c0_16 = arith.constant 0 : index
    %31 = vector.load %arg14[%c0_15, %c0_16] : memref<256x256xf32, #tpu.memory_space<vmem>>, vector<256x256xf32>
    tpu.vector_store %arg14[%c0_15, %c0_16], %30 {strides = array<i32>} : memref<256x256xf32, #tpu.memory_space<vmem>>, vector<256x256xf32>,
    %c7_i32 = arith.constant 7 : i32
    %32 = arith.cmpi eq, %arg1, %c7_i32 : i32
    %33 = arith.extui %32 : i1 to i32
    %c0_i32_17 = arith.constant 0 : i32
    %34 = arith.cmpi ne, %33, %c0_i32_17 : i32
    scf.if %34 {
      %c0_18 = arith.constant 0 : index
      %c0_19 = arith.constant 0 : index
      %35 = vector.load %arg14[%c0_18, %c0_19] : memref<256x256xf32, #tpu.memory_space<vmem>>, vector<256x256xf32>
      %c0_20 = arith.constant 0 : index
      %c0_21 = arith.constant 0 : index
      %36 = vector.load %arg9[%c0_20, %c0_21] : memref<1x256xf32, #tpu.memory_space<vmem>>, vector<1x256xf32>
      %37 = vector.broadcast %36 : vector<1x256xf32> to vector<256x256xf32>
      %38 = arith.addf %35, %37 : vector<256x256xf32>
      %39 = tpu.transpose %38, [1, 0] : vector<256x256xf32> -> vector<256x256xf32>
      %c0_22 = arith.constant 0 : index
      %c0_23 = arith.constant 0 : index
      %c0_24 = arith.constant 0 : index
      %40 = vector.load %arg2[%c0_22, %c0_23, %c0_24] : memref<1x256x256xf32, #tpu.memory_space<vmem>>, vector<1x256x256xf32>
      %41 = vector.shape_cast %40 : vector<1x256x256xf32> to vector<256x256xf32>
      %42 = arith.addf %39, %41 : vector<256x256xf32>
      %c0_25 = arith.constant 0 : index
      %c0_26 = arith.constant 0 : index
      %c0_27 = arith.constant 0 : index
      %43 = vector.load %arg10[%c0_25, %c0_26, %c0_27] : memref<1x256x256xf32, #tpu.memory_space<vmem>>, vector<1x256x256xf32>
      %44 = vector.shape_cast %43 : vector<1x256x256xf32> to vector<256x256xf32>
      %45 = vector.shape_cast %42 : vector<256x256xf32> to vector<1x256x256xf32>
      tpu.vector_store %arg10[%c0_25, %c0_26, %c0_27], %45 {strides = array<i32>} : memref<1x256x256xf32, #tpu.memory_space<vmem>>, vector<1x256x256xf32>,
    } else {
    }
    return
  }
  func.func @transform_0(%arg0: i32, %arg1: i32) -> (i32, i32, i32) {
    %c0_i32 = arith.constant 0 : i32
    %c0_i32_0 = arith.constant 0 : i32
    %c0_i32_1 = arith.constant 0 : i32
    return %arg0, %c0_i32, %c0_i32_0 : i32, i32, i32
  }
  func.func @transform_1(%arg0: i32, %arg1: i32) -> (i32, i32, i32) {
    %c0_i32 = arith.constant 0 : i32
    %c0_i32_0 = arith.constant 0 : i32
    %c0_i32_1 = arith.constant 0 : i32
    return %arg0, %c0_i32, %c0_i32_0 : i32, i32, i32
  }
  func.func @transform_2(%arg0: i32, %arg1: i32) -> (i32, i32) {
    %c0_i32 = arith.constant 0 : i32
    %c0_i32_0 = arith.constant 0 : i32
    %c0_i32_1 = arith.constant 0 : i32
    return %c0_i32, %c0_i32_0 : i32, i32
  }
  func.func @transform_3(%arg0: i32, %arg1: i32) -> (i32, i32) {
    %c0_i32 = arith.constant 0 : i32
    %c0_i32_0 = arith.constant 0 : i32
    %c0_i32_1 = arith.constant 0 : i32
    return %c0_i32, %c0_i32_0 : i32, i32
  }
  func.func @transform_4(%arg0: i32, %arg1: i32) -> (i32, i32) {
    %c0_i32 = arith.constant 0 : i32
    %c0_i32_0 = arith.constant 0 : i32
    %c0_i32_1 = arith.constant 0 : i32
    return %c0_i32, %c0_i32_0 : i32, i32
  }
  func.func @transform_5(%arg0: i32, %arg1: i32) -> (i32, i32) {
    %c0_i32 = arith.constant 0 : i32
    %c0_i32_0 = arith.constant 0 : i32
    %c0_i32_1 = arith.constant 0 : i32
    return %c0_i32, %c0_i32_0 : i32, i32
  }
  func.func @transform_6(%arg0: i32, %arg1: i32) -> (i32, i32, i32) {
    %c0_i32 = arith.constant 0 : i32
    %c0_i32_0 = arith.constant 0 : i32
    %c0_i32_1 = arith.constant 0 : i32
    return %arg1, %c0_i32, %c0_i32_0 : i32, i32, i32
  }
  func.func @transform_7(%arg0: i32, %arg1: i32) -> (i32, i32) {
    %c0_i32 = arith.constant 0 : i32
    %c0_i32_0 = arith.constant 0 : i32
    %c0_i32_1 = arith.constant 0 : i32
    return %c0_i32, %c0_i32_0 : i32, i32
  }
  func.func @transform_8(%arg0: i32, %arg1: i32) -> (i32, i32, i32) {
    %c0_i32 = arith.constant 0 : i32
    %c0_i32_0 = arith.constant 0 : i32
    %c0_i32_1 = arith.constant 0 : i32
    return %arg0, %c0_i32, %c0_i32_0 : i32, i32, i32
  }
}

</mosaic_0001>

<llo_original>
// kernel: _lambda_.1
$region0: #{_lambda_.1}
  #allocation0 [shape = 'u32[]', space=smem, size = 0x4, offset = 0x4, fixed_abs, tag = 'smem constant byte address 0x4 - core index']
  #allocation1 [shape = 'u32[144,128]{1,0:T(1,128)}', space=vmem, size = 0x12000, scoped, tag = 'internal scratch']
  #allocation2 [shape = 'bf16[8,256,32]{2,1,0:T(8,128)(2,1)}', space=vmem, size = 0x80000, scoped, tag = 'scratch operand']
  #allocation3 [shape = 'bf16[8,256,32]{2,1,0:T(8,128)(2,1)}', space=vmem, size = 0x80000, scoped, tag = 'scratch operand']
  #allocation4 [shape = 'bf16[8,256,32]{2,1,0:T(8,128)(2,1)}', space=vmem, size = 0x80000, scoped, tag = 'scratch operand']
  #allocation5 [shape = 'f32[256,256]{1,0:T(8,128)}', space=vmem, size = 0x40000, scoped, tag = 'scratch operand']
  %s0 = inlined_call_operand.vmem [shape: f32[2,256,256], index: 0, kind: input, shape index: {}]
  %s1 = inlined_call_operand.vmem [shape: f32[2,256,256], index: 1, kind: input, shape index: {}]
  %s2 = inlined_call_operand.vmem [shape: bf16[256,256], index: 2, kind: input, shape index: {}]
  %s3 = inlined_call_operand.vmem [shape: f32[1,256], index: 3, kind: input, shape index: {}]
  %s4 = inlined_call_operand.vmem [shape: bf16[256,512], index: 4, kind: input, shape index: {}]
  %s5 = inlined_call_operand.vmem [shape: f32[1,512], index: 5, kind: input, shape index: {}]
  %s6 = inlined_call_operand.vmem [shape: bf16[8,32,256], index: 6, kind: input, shape index: {}]
  %s7 = inlined_call_operand.vmem [shape: f32[1,256], index: 7, kind: input, shape index: {}]
  %s8 = inlined_call_operand.vmem [shape: f32[2,256,256], index: 8, kind: output, shape index: {}]
  %s9 = sld [smem:[#allocation0]]
  $region73: #{_lambda_.1} parent=0
    _
  %s11 = ssub.s32 1, %s9
  %s12 = scalar_select 0, %s11, %s9
  loop: start=0, step=1, limit=18
  $region2: #{_lambda_.1} parent=0 // loop_pre_header
    _
  $region3: #{_lambda_.1} parent=0 // loop_header
    %s14 = sphi 0, %s18
    %p15 = scmp.ge.s32.totalorder %s14, 18
    %s21 = sphi 0, %s33
    %s22 = sphi 0, %s29
    %s23 = sphi 0, %s21
    %s24 = sphi 0, %s22
    %s25 = sphi 0, %s23
    %s26 = sphi 0, %s24
    %s36 = sphi 0, %s38
    %s39 = sphi 0, %s36
    %s40 = sphi 0, %s39
    %s56 = sphi 0, %s40
    %s62 = sphi 0, %s64
    %s65 = sphi 0, %s62
    %s66 = sphi 0, %s65
    %s82 = sphi 0, %s66
    %s86 = sphi 0, %s86
    %s88 = sphi 0, %s86
    %s89 = sphi 0, %s88
    %s103 = sphi 0, %s89
    %s107 = sphi 0, %s107
    %s109 = sphi 0, %s107
    %s110 = sphi 0, %s109
    %s124 = sphi 0, %s110
    %s128 = sphi 0, %s128
    %s130 = sphi 0, %s128
    %s131 = sphi 0, %s130
    %s145 = sphi 0, %s131
    %s149 = sphi 0, %s149
    %s151 = sphi 0, %s149
    %s152 = sphi 0, %s151
    %s166 = sphi 0, %s152
    %s172 = sphi 0, %s174
    %s175 = sphi 0, %s172
    %s176 = sphi 0, %s175
    %s192 = sphi 0, %s176
    %s196 = sphi 0, %s196
    %s198 = sphi 0, %s196
    %s199 = sphi 0, %s198
    %s213 = sphi 0, %s199
    %s219 = sphi 0, %s221
    %s222 = sphi 0, %s219
    %s223 = sphi 0, %s222
    %s239 = sphi 0, %s223
  $region4: #{_lambda_.1} parent=0 // loop_header_branch
    %17 = sbr.rel (%p15) target = $region8
  $region5: #{_lambda_.1} parent=0 // loop_body
    %s19 = ssub.s32 %s14, 1
    %s20 = ssub.s32 %s14, 2
    %s27 = sadd.s32 1, %s22
    %p28 = scmp.ge.s32.totalorder %s27, 8
    %s29 = scalar_select %p28, 0, %s27
    %s30 = sadd.s32 1, %s21
    %s31 = scalar_select %p28, %s30, %s21
    %p32 = scmp.ge.s32.totalorder %s31, 2
    %s33 = scalar_select %p32, 0, %s31
    %s34 = ssub.s32 %s21, %s33
    %p35 = scmp.eq.s32.totalorder %s34, 0
    %s37 = sadd.s32 %s36, 1
    %s38 = scalar_select %p35, %s36, %s37
    %p41 = pneg %p35
    %p42 = scmp.eq.s32.totalorder %s14, 15
    %p43 = por %p41, %p42
    %p44 = scmp.ne.s32.totalorder %s36, %s39
    %p45 = scmp.eq.s32.totalorder %s14, 0
    %p46 = por %p44, %p45
    %p47 = scmp.ne.s32.totalorder %s36, %s39
    %p48 = scmp.eq.s32.totalorder %s19, 15
    %p49 = por %p47, %p48
    %p50 = scmp.ne.s32.totalorder %s39, %s40
    %p51 = scmp.eq.s32.totalorder %s19, 0
    %p52 = por %p50, %p51
    %p53 = scmp.ne.s32.totalorder %s39, %s40
    %p54 = scmp.eq.s32.totalorder %s20, 15
    %p55 = por %p53, %p54
    %p57 = scmp.ne.s32.totalorder %s40, %s56
    %p58 = scmp.eq.s32.totalorder %s20, 0
    %p59 = por %p57, %p58
    %s60 = ssub.s32 %s21, %s33
    %p61 = scmp.eq.s32.totalorder %s60, 0
    %s63 = sadd.s32 %s62, 1
    %s64 = scalar_select %p61, %s62, %s63
    %p67 = pneg %p61
    %p68 = scmp.eq.s32.totalorder %s14, 15
    %p69 = por %p67, %p68
    %p70 = scmp.ne.s32.totalorder %s62, %s65
    %p71 = scmp.eq.s32.totalorder %s14, 0
    %p72 = por %p70, %p71
    %p73 = scmp.ne.s32.totalorder %s62, %s65
    %p74 = scmp.eq.s32.totalorder %s19, 15
    %p75 = por %p73, %p74
    %p76 = scmp.ne.s32.totalorder %s65, %s66
    %p77 = scmp.eq.s32.totalorder %s19, 0
    %p78 = por %p76, %p77
    %p79 = scmp.ne.s32.totalorder %s65, %s66
    %p80 = scmp.eq.s32.totalorder %s20, 15
    %p81 = por %p79, %p80
    %p83 = scmp.ne.s32.totalorder %s66, %s82
    %p84 = scmp.eq.s32.totalorder %s20, 0
    %p85 = por %p83, %p84
    %s87 = sadd.s32 %s86, 1
    %p90 = scmp.eq.s32.totalorder %s14, 15
    %p91 = scmp.ne.s32.totalorder %s86, %s88
    %p92 = scmp.eq.s32.totalorder %s14, 0
    %p93 = por %p91, %p92
    %p94 = scmp.ne.s32.totalorder %s86, %s88
    %p95 = scmp.eq.s32.totalorder %s19, 15
    %p96 = por %p94, %p95
    %p97 = scmp.ne.s32.totalorder %s88, %s89
    %p98 = scmp.eq.s32.totalorder %s19, 0
    %p99 = por %p97, %p98
    %p100 = scmp.ne.s32.totalorder %s88, %s89
    %p101 = scmp.eq.s32.totalorder %s20, 15
    %p102 = por %p100, %p101
    %p104 = scmp.ne.s32.totalorder %s89, %s103
    %p105 = scmp.eq.s32.totalorder %s20, 0
    %p106 = por %p104, %p105
    %s108 = sadd.s32 %s107, 1
    %p111 = scmp.eq.s32.totalorder %s14, 15
    %p112 = scmp.ne.s32.totalorder %s107, %s109
    %p113 = scmp.eq.s32.totalorder %s14, 0
    %p114 = por %p112, %p113
    %p115 = scmp.ne.s32.totalorder %s107, %s109
    %p116 = scmp.eq.s32.totalorder %s19, 15
    %p117 = por %p115, %p116
    %p118 = scmp.ne.s32.totalorder %s109, %s110
    %p119 = scmp.eq.s32.totalorder %s19, 0
    %p120 = por %p118, %p119
    %p121 = scmp.ne.s32.totalorder %s109, %s110
    %p122 = scmp.eq.s32.totalorder %s20, 15
    %p123 = por %p121, %p122
    %p125 = scmp.ne.s32.totalorder %s110, %s124
    %p126 = scmp.eq.s32.totalorder %s20, 0
    %p127 = por %p125, %p126
    %s129 = sadd.s32 %s128, 1
    %p132 = scmp.eq.s32.totalorder %s14, 15
    %p133 = scmp.ne.s32.totalorder %s128, %s130
    %p134 = scmp.eq.s32.totalorder %s14, 0
    %p135 = por %p133, %p134
    %p136 = scmp.ne.s32.totalorder %s128, %s130
    %p137 = scmp.eq.s32.totalorder %s19, 15
    %p138 = por %p136, %p137
    %p139 = scmp.ne.s32.totalorder %s130, %s131
    %p140 = scmp.eq.s32.totalorder %s19, 0
    %p141 = por %p139, %p140
    %p142 = scmp.ne.s32.totalorder %s130, %s131
    %p143 = scmp.eq.s32.totalorder %s20, 15
    %p144 = por %p142, %p143
    %p146 = scmp.ne.s32.totalorder %s131, %s145
    %p147 = scmp.eq.s32.totalorder %s20, 0
    %p148 = por %p146, %p147
    %s150 = sadd.s32 %s149, 1
    %p153 = scmp.eq.s32.totalorder %s14, 15
    %p154 = scmp.ne.s32.totalorder %s149, %s151
    %p155 = scmp.eq.s32.totalorder %s14, 0
    %p156 = por %p154, %p155
    %p157 = scmp.ne.s32.totalorder %s149, %s151
    %p158 = scmp.eq.s32.totalorder %s19, 15
    %p159 = por %p157, %p158
    %p160 = scmp.ne.s32.totalorder %s151, %s152
    %p161 = scmp.eq.s32.totalorder %s19, 0
    %p162 = por %p160, %p161
    %p163 = scmp.ne.s32.totalorder %s151, %s152
    %p164 = scmp.eq.s32.totalorder %s20, 15
    %p165 = por %p163, %p164
    %p167 = scmp.ne.s32.totalorder %s152, %s166
    %p168 = scmp.eq.s32.totalorder %s20, 0
    %p169 = por %p167, %p168
    %s170 = ssub.s32 %s22, %s29
    %p171 = scmp.eq.s32.totalorder %s170, 0
    %s173 = sadd.s32 %s172, 1
    %s174 = scalar_select %p171, %s172, %s173
    %p177 = pneg %p171
    %p178 = scmp.eq.s32.totalorder %s14, 15
    %p179 = por %p177, %p178
    %p180 = scmp.ne.s32.totalorder %s172, %s175
    %p181 = scmp.eq.s32.totalorder %s14, 0
    %p182 = por %p180, %p181
    %p183 = scmp.ne.s32.totalorder %s172, %s175
    %p184 = scmp.eq.s32.totalorder %s19, 15
    %p185 = por %p183, %p184
    %p186 = scmp.ne.s32.totalorder %s175, %s176
    %p187 = scmp.eq.s32.totalorder %s19, 0
    %p188 = por %p186, %p187
    %p189 = scmp.ne.s32.totalorder %s175, %s176
    %p190 = scmp.eq.s32.totalorder %s20, 15
    %p191 = por %p189, %p190
    %p193 = scmp.ne.s32.totalorder %s176, %s192
    %p194 = scmp.eq.s32.totalorder %s20, 0
    %p195 = por %p193, %p194
    %s197 = sadd.s32 %s196, 1
    %p200 = scmp.eq.s32.totalorder %s14, 15
    %p201 = scmp.ne.s32.totalorder %s196, %s198
    %p202 = scmp.eq.s32.totalorder %s14, 0
    %p203 = por %p201, %p202
    %p204 = scmp.ne.s32.totalorder %s196, %s198
    %p205 = scmp.eq.s32.totalorder %s19, 15
    %p206 = por %p204, %p205
    %p207 = scmp.ne.s32.totalorder %s198, %s199
    %p208 = scmp.eq.s32.totalorder %s19, 0
    %p209 = por %p207, %p208
    %p210 = scmp.ne.s32.totalorder %s198, %s199
    %p211 = scmp.eq.s32.totalorder %s20, 15
    %p212 = por %p210, %p211
    %p214 = scmp.ne.s32.totalorder %s199, %s213
    %p215 = scmp.eq.s32.totalorder %s20, 0
    %p216 = por %p214, %p215
    %s217 = ssub.s32 %s21, %s33
    %p218 = scmp.eq.s32.totalorder %s217, 0
    %s220 = sadd.s32 %s219, 1
    %s221 = scalar_select %p218, %s219, %s220
    %p224 = pneg %p218
    %p225 = scmp.eq.s32.totalorder %s14, 15
    %p226 = por %p224, %p225
    %p227 = scmp.ne.s32.totalorder %s219, %s222
    %p228 = scmp.eq.s32.totalorder %s14, 0
    %p229 = por %p227, %p228
    %p230 = scmp.ne.s32.totalorder %s219, %s222
    %p231 = scmp.eq.s32.totalorder %s19, 15
    %p232 = por %p230, %p231
    %p233 = scmp.ne.s32.totalorder %s222, %s223
    %p234 = scmp.eq.s32.totalorder %s19, 0
    %p235 = por %p233, %p234
    %p236 = scmp.ne.s32.totalorder %s222, %s223
    %p237 = scmp.eq.s32.totalorder %s20, 15
    %p238 = por %p236, %p237
    %p240 = scmp.ne.s32.totalorder %s223, %s239
    %p241 = scmp.eq.s32.totalorder %s20, 0
    %p242 = por %p240, %p241
    %p243 = scmp.le.s32.totalorder 1, %s14
    %p244 = scmp.lt.s32.totalorder %s14, 17
    %p245 = pnand %p243, %p244
    %p246 = pneg %p245
    // Predicated region
    $region9: #{_lambda_.1} parent=5 // pred_check
      _
    $region10: #{_lambda_.1} parent=5 // pred_check_branch
      %248 = sbr.rel (%p245) target = $region12
    $region11: #{_lambda_.1} parent=5 // pred_region
      %s249 = ssub.s32 %s14, 1
      // Predicated region
      $region13: #{_lambda_.1} parent=11 // pred_check
        %p250 = pneg %p99
      $region14: #{_lambda_.1} parent=11 // pred_check_branch
        %252 = sbr.rel (%p250) target = $region16
      $region15: #{_lambda_.1} parent=11 // pred_region
        _
      $region16: #{_lambda_.1} parent=11 // pred_fallthru
        _
      // Predicated region
      $region17: #{_lambda_.1} parent=11 // pred_check
        %p253 = pneg %p120
      $region18: #{_lambda_.1} parent=11 // pred_check_branch
        %255 = sbr.rel (%p253) target = $region20
      $region19: #{_lambda_.1} parent=11 // pred_region
        _
      $region20: #{_lambda_.1} parent=11 // pred_fallthru
        _
      // Predicated region
      $region21: #{_lambda_.1} parent=11 // pred_check
        %p256 = pneg %p141
      $region22: #{_lambda_.1} parent=11 // pred_check_branch
        %258 = sbr.rel (%p256) target = $region24
      $region23: #{_lambda_.1} parent=11 // pred_region
        _
      $region24: #{_lambda_.1} parent=11 // pred_fallthru
        _
      // Predicated region
      $region25: #{_lambda_.1} parent=11 // pred_check
        %p259 = pneg %p162
      $region26: #{_lambda_.1} parent=11 // pred_check_branch
        %261 = sbr.rel (%p259) target = $region28
      $region27: #{_lambda_.1} parent=11 // pred_region
        _
      $region28: #{_lambda_.1} parent=11 // pred_fallthru
        _
      // Predicated region
      $region29: #{_lambda_.1} parent=11 // pred_check
        %p262 = pneg %p209
      $region30: #{_lambda_.1} parent=11 // pred_check_branch
        %264 = sbr.rel (%p262) target = $region32
      $region31: #{_lambda_.1} parent=11 // pred_region
        _
      $region32: #{_lambda_.1} parent=11 // pred_fallthru
        _
    $region12: #{_lambda_.1} parent=5 // pred_fallthru
      _
    %p265 = scmp.lt.s32.totalorder %s14, 16
    // Predicated region
    $region33: #{_lambda_.1} parent=5 // pred_check
      %p266 = pneg %p265
    $region34: #{_lambda_.1} parent=5 // pred_check_branch
      %268 = sbr.rel (%p266) target = $region36
    $region35: #{_lambda_.1} parent=5 // pred_region
      // Predicated region
      $region37: #{_lambda_.1} parent=35 // pred_check
        %p269 = pneg %p46
      $region38: #{_lambda_.1} parent=35 // pred_check_branch
        %271 = sbr.rel (%p269) target = $region40
      $region39: #{_lambda_.1} parent=35 // pred_region
        %p272 = scmp.lt.s32.totalorder %s21, 1
        %s273 = scalar_select %p272, %s21, 1
        %s274 = smul.addr %s273, 64
        %s275 = smul.addr %s274, 8
        %s276 = scalar_lea.vmem %s0, %s275
      $region40: #{_lambda_.1} parent=35 // pred_fallthru
        _
      // Predicated region
      $region41: #{_lambda_.1} parent=35 // pred_check
        %p277 = pneg %p72
      $region42: #{_lambda_.1} parent=35 // pred_check_branch
        %279 = sbr.rel (%p277) target = $region44
      $region43: #{_lambda_.1} parent=35 // pred_region
        %p280 = scmp.lt.s32.totalorder %s21, 1
        %s281 = scalar_select %p280, %s21, 1
        %s282 = smul.addr %s281, 64
        %s283 = smul.addr %s282, 8
        %s284 = scalar_lea.vmem %s1, %s283
      $region44: #{_lambda_.1} parent=35 // pred_fallthru
        _
      // Predicated region
      $region45: #{_lambda_.1} parent=35 // pred_check
        %p285 = pneg %p182
      $region46: #{_lambda_.1} parent=35 // pred_check_branch
        %287 = sbr.rel (%p285) target = $region48
      $region47: #{_lambda_.1} parent=35 // pred_region
        %p288 = scmp.lt.s32.totalorder %s22, 7
        %s289 = scalar_select %p288, %s22, 7
        %s290 = smul.addr %s289, 8
        %s291 = smul.addr %s290, 4
        %s292 = scalar_lea.vmem %s6, %s291
      $region48: #{_lambda_.1} parent=35 // pred_fallthru
        _
    $region36: #{_lambda_.1} parent=5 // pred_fallthru
      _
    %p293 = scmp.le.s32.totalorder 1, %s14
    %p294 = scmp.lt.s32.totalorder %s14, 17
    %p295 = pnand %p293, %p294
    %p296 = pneg %p295
    // Predicated region
    $region49: #{_lambda_.1} parent=5 // pred_check
      _
    $region50: #{_lambda_.1} parent=5 // pred_check_branch
      %298 = sbr.rel (%p295) target = $region52
    $region51: #{_lambda_.1} parent=5 // pred_region
      %s299 = ssub.s32 %s14, 1
      %p300 = scmp.lt.s32.totalorder %s23, 1
      %s301 = scalar_select %p300, %s23, 1
      %s302 = smul.addr %s301, 64
      %s303 = smul.addr %s302, 8
      %s304 = scalar_lea.vmem %s0, %s303
      %p305 = pneg %p52
      %p306 = pneg %p49
      %p307 = scmp.lt.s32.totalorder %s23, 1
      %s308 = scalar_select %p307, %s23, 1
      %s309 = smul.addr %s308, 64
      %s310 = smul.addr %s309, 8
      %s311 = scalar_lea.vmem %s1, %s310
      %p312 = pneg %p78
      %p313 = pneg %p75
      %p314 = pneg %p99
      %p315 = pneg %p96
      %p316 = pneg %p120
      %p317 = pneg %p117
      %p318 = pneg %p141
      %p319 = pneg %p138
      %p320 = pneg %p162
      %p321 = pneg %p159
      %p322 = scmp.lt.s32.totalorder %s24, 7
      %s323 = scalar_select %p322, %s24, 7
      %s324 = smul.addr %s323, 8
      %s325 = smul.addr %s324, 4
      %s326 = scalar_lea.vmem %s6, %s325
      %p327 = pneg %p188
      %p328 = pneg %p185
      %p329 = pneg %p209
      %p330 = pneg %p206
      %p331 = pneg %p235
      %p332 = pneg %p232
      %p333 = scmp.lt.s32.totalorder %s23, 1
      %s334 = scalar_select %p333, %s23, 1
      %s335 = smul.addr %s334, 64
      %s336 = smul.addr %s335, 8
      %s337 = scalar_lea.vmem %s8, %s336
      %p338 = scmp.lt.s32.totalorder %s23, 1
      %s339 = scalar_select %p338, %s23, 1
      %s340 = smul.addr %s339, 64
      %s341 = smul.addr %s340, 8
      %s342 = scalar_lea.vmem %s0, %s341
      %p343 = scmp.lt.s32.totalorder %s23, 1
      %s344 = scalar_select %p343, %s23, 1
      %s345 = smul.addr %s344, 64
      %s346 = smul.addr %s345, 8
      %s347 = scalar_lea.vmem %s1, %s346
      %p348 = scmp.lt.s32.totalorder %s24, 7
      %s349 = scalar_select %p348, %s24, 7
      %s350 = smul.addr %s349, 8
      %s351 = smul.addr %s350, 4
      %s352 = scalar_lea.vmem %s6, %s351
      %p353 = scmp.lt.s32.totalorder %s23, 1
      %s354 = scalar_select %p353, %s23, 1
      %s355 = smul.addr %s354, 64
      %s356 = smul.addr %s355, 8
      %s357 = scalar_lea.vmem %s8, %s356
      %p359 = scmp.eq.s32.totalorder %s24, 0
      // Predicated region
      $region53: #{_lambda_.1} parent=51 // pred_check
        %p360 = pneg %p359
      $region54: #{_lambda_.1} parent=51 // pred_check_branch
        %362 = sbr.rel (%p360) target = $region56
      $region55: #{_lambda_.1} parent=51 // pred_region
        %v363 = vld [vmem:[%s342] sm:$0xff]
        %v364 = vld [vmem:[%s342 + $0x8] sm:$0xff]
        %v365 = vld [vmem:[%s342 + $0x10] sm:$0xff]
        %v366 = vld [vmem:[%s342 + $0x18] sm:$0xff]
        %v367 = vld [vmem:[%s342 + $0x20] sm:$0xff]
        %v368 = vld [vmem:[%s342 + $0x28] sm:$0xff]
        %v369 = vld [vmem:[%s342 + $0x30] sm:$0xff]
        %v370 = vld [vmem:[%s342 + $0x38] sm:$0xff]
        %v371 = vld [vmem:[%s342 + $0x40] sm:$0xff]
        %v372 = vld [vmem:[%s342 + $0x48] sm:$0xff]
        %v373 = vld [vmem:[%s342 + $0x50] sm:$0xff]
        %v374 = vld [vmem:[%s342 + $0x58] sm:$0xff]
        %v375 = vld [vmem:[%s342 + $0x60] sm:$0xff]
        %v376 = vld [vmem:[%s342 + $0x68] sm:$0xff]
        %v377 = vld [vmem:[%s342 + $0x70] sm:$0xff]
        %v378 = vld [vmem:[%s342 + $0x78] sm:$0xff]
        %v379 = vld [vmem:[%s342 + $0x80] sm:$0xff]
        %v380 = vld [vmem:[%s342 + $0x88] sm:$0xff]
        %v381 = vld [vmem:[%s342 + $0x90] sm:$0xff]
        %v382 = vld [vmem:[%s342 + $0x98] sm:$0xff]
        %v383 = vld [vmem:[%s342 + $0xa0] sm:$0xff]
        %v384 = vld [vmem:[%s342 + $0xa8] sm:$0xff]
        %v385 = vld [vmem:[%s342 + $0xb0] sm:$0xff]
        %v386 = vld [vmem:[%s342 + $0xb8] sm:$0xff]
        %v387 = vld [vmem:[%s342 + $0xc0] sm:$0xff]
        %v388 = vld [vmem:[%s342 + $0xc8] sm:$0xff]
        %v389 = vld [vmem:[%s342 + $0xd0] sm:$0xff]
        %v390 = vld [vmem:[%s342 + $0xd8] sm:$0xff]
        %v391 = vld [vmem:[%s342 + $0xe0] sm:$0xff]
        %v392 = vld [vmem:[%s342 + $0xe8] sm:$0xff]
        %v393 = vld [vmem:[%s342 + $0xf0] sm:$0xff]
        %v394 = vld [vmem:[%s342 + $0xf8] sm:$0xff]
        %v395 = vld [vmem:[%s342 + $0x100] sm:$0xff]
        %v396 = vld [vmem:[%s342 + $0x108] sm:$0xff]
        %v397 = vld [vmem:[%s342 + $0x110] sm:$0xff]
        %v398 = vld [vmem:[%s342 + $0x118] sm:$0xff]
        %v399 = vld [vmem:[%s342 + $0x120] sm:$0xff]
        %v400 = vld [vmem:[%s342 + $0x128] sm:$0xff]
        %v401 = vld [vmem:[%s342 + $0x130] sm:$0xff]
        %v402 = vld [vmem:[%s342 + $0x138] sm:$0xff]
        %v403 = vld [vmem:[%s342 + $0x140] sm:$0xff]
        %v404 = vld [vmem:[%s342 + $0x148] sm:$0xff]
        %v405 = vld [vmem:[%s342 + $0x150] sm:$0xff]
        %v406 = vld [vmem:[%s342 + $0x158] sm:$0xff]
        %v407 = vld [vmem:[%s342 + $0x160] sm:$0xff]
        %v408 = vld [vmem:[%s342 + $0x168] sm:$0xff]
        %v409 = vld [vmem:[%s342 + $0x170] sm:$0xff]
        %v410 = vld [vmem:[%s342 + $0x178] sm:$0xff]
        %v411 = vld [vmem:[%s342 + $0x180] sm:$0xff]
        %v412 = vld [vmem:[%s342 + $0x188] sm:$0xff]
        %v413 = vld [vmem:[%s342 + $0x190] sm:$0xff]
        %v414 = vld [vmem:[%s342 + $0x198] sm:$0xff]
        %v415 = vld [vmem:[%s342 + $0x1a0] sm:$0xff]
        %v416 = vld [vmem:[%s342 + $0x1a8] sm:$0xff]
        %v417 = vld [vmem:[%s342 + $0x1b0] sm:$0xff]
        %v418 = vld [vmem:[%s342 + $0x1b8] sm:$0xff]
        %v419 = vld [vmem:[%s342 + $0x1c0] sm:$0xff]
        %v420 = vld [vmem:[%s342 + $0x1c8] sm:$0xff]
        %v421 = vld [vmem:[%s342 + $0x1d0] sm:$0xff]
        %v422 = vld [vmem:[%s342 + $0x1d8] sm:$0xff]
        %v423 = vld [vmem:[%s342 + $0x1e0] sm:$0xff]
        %v424 = vld [vmem:[%s342 + $0x1e8] sm:$0xff]
        %v425 = vld [vmem:[%s342 + $0x1f0] sm:$0xff]
        %v426 = vld [vmem:[%s342 + $0x1f8] sm:$0xff]
        %427 = vxpose.xlu0.b32.start [1/16] %v363, 128
        %428 = vxpose.xlu0.b32.cont [2/16] %v365, 128
        %429 = vxpose.xlu0.b32.cont [3/16] %v367, 128
        %430 = vxpose.xlu0.b32.cont [4/16] %v369, 128
        %431 = vxpose.xlu0.b32.cont [5/16] %v371, 128
        %432 = vxpose.xlu0.b32.cont [6/16] %v373, 128
        %433 = vxpose.xlu0.b32.cont [7/16] %v375, 128
        %434 = vxpose.xlu0.b32.cont [8/16] %v377, 128
        %435 = vxpose.xlu0.b32.cont [9/16] %v379, 128
        %436 = vxpose.xlu0.b32.cont [10/16] %v381, 128
        %437 = vxpose.xlu0.b32.cont [11/16] %v383, 128
        %438 = vxpose.xlu0.b32.cont [12/16] %v385, 128
        %439 = vxpose.xlu0.b32.cont [13/16] %v387, 128
        %440 = vxpose.xlu0.b32.cont [14/16] %v389, 128
        %441 = vxpose.xlu0.b32.cont [15/16] %v391, 128
        %442 = vxpose.xlu0.b32.end [16/16] %v393, 128
        %v443 = vpop.trf.xlu0
        %v444 = vpop.trf.xlu0
        %v445 = vpop.trf.xlu0
        %v446 = vpop.trf.xlu0
        %v447 = vpop.trf.xlu0
        %v448 = vpop.trf.xlu0
        %v449 = vpop.trf.xlu0
        %v450 = vpop.trf.xlu0
        %v451 = vpop.trf.xlu0
        %v452 = vpop.trf.xlu0
        %v453 = vpop.trf.xlu0
        %v454 = vpop.trf.xlu0
        %v455 = vpop.trf.xlu0
        %v456 = vpop.trf.xlu0
        %v457 = vpop.trf.xlu0
        %v458 = vpop.trf.xlu0
        %459 = vxpose.xlu0.b32.start [1/16] %v364, 128
        %460 = vxpose.xlu0.b32.cont [2/16] %v366, 128
        %461 = vxpose.xlu0.b32.cont [3/16] %v368, 128
        %462 = vxpose.xlu0.b32.cont [4/16] %v370, 128
        %463 = vxpose.xlu0.b32.cont [5/16] %v372, 128
        %464 = vxpose.xlu0.b32.cont [6/16] %v374, 128
        %465 = vxpose.xlu0.b32.cont [7/16] %v376, 128
        %466 = vxpose.xlu0.b32.cont [8/16] %v378, 128
        %467 = vxpose.xlu0.b32.cont [9/16] %v380, 128
        %468 = vxpose.xlu0.b32.cont [10/16] %v382, 128
        %469 = vxpose.xlu0.b32.cont [11/16] %v384, 128
        %470 = vxpose.xlu0.b32.cont [12/16] %v386, 128
        %471 = vxpose.xlu0.b32.cont [13/16] %v388, 128
        %472 = vxpose.xlu0.b32.cont [14/16] %v390, 128
        %473 = vxpose.xlu0.b32.cont [15/16] %v392, 128
        %474 = vxpose.xlu0.b32.end [16/16] %v394, 128
        %v475 = vpop.trf.xlu0
        %v476 = vpop.trf.xlu0
        %v477 = vpop.trf.xlu0
        %v478 = vpop.trf.xlu0
        %v479 = vpop.trf.xlu0
        %v480 = vpop.trf.xlu0
        %v481 = vpop.trf.xlu0
        %v482 = vpop.trf.xlu0
        %v483 = vpop.trf.xlu0
        %v484 = vpop.trf.xlu0
        %v485 = vpop.trf.xlu0
        %v486 = vpop.trf.xlu0
        %v487 = vpop.trf.xlu0
        %v488 = vpop.trf.xlu0
        %v489 = vpop.trf.xlu0
        %v490 = vpop.trf.xlu0
        %491 = vxpose.xlu0.b32.start [1/16] %v395, 128
        %492 = vxpose.xlu0.b32.cont [2/16] %v397, 128
        %493 = vxpose.xlu0.b32.cont [3/16] %v399, 128
        %494 = vxpose.xlu0.b32.cont [4/16] %v401, 128
        %495 = vxpose.xlu0.b32.cont [5/16] %v403, 128
        %496 = vxpose.xlu0.b32.cont [6/16] %v405, 128
        %497 = vxpose.xlu0.b32.cont [7/16] %v407, 128
        %498 = vxpose.xlu0.b32.cont [8/16] %v409, 128
        %499 = vxpose.xlu0.b32.cont [9/16] %v411, 128
        %500 = vxpose.xlu0.b32.cont [10/16] %v413, 128
        %501 = vxpose.xlu0.b32.cont [11/16] %v415, 128
        %502 = vxpose.xlu0.b32.cont [12/16] %v417, 128
        %503 = vxpose.xlu0.b32.cont [13/16] %v419, 128
        %504 = vxpose.xlu0.b32.cont [14/16] %v421, 128
        %505 = vxpose.xlu0.b32.cont [15/16] %v423, 128
        %506 = vxpose.xlu0.b32.end [16/16] %v425, 128
        %v507 = vpop.trf.xlu0
        %v508 = vpop.trf.xlu0
        %v509 = vpop.trf.xlu0
        %v510 = vpop.trf.xlu0
        %v511 = vpop.trf.xlu0
        %v512 = vpop.trf.xlu0
        %v513 = vpop.trf.xlu0
        %v514 = vpop.trf.xlu0
        %v515 = vpop.trf.xlu0
        %v516 = vpop.trf.xlu0
        %v517 = vpop.trf.xlu0
        %v518 = vpop.trf.xlu0
        %v519 = vpop.trf.xlu0
        %v520 = vpop.trf.xlu0
        %v521 = vpop.trf.xlu0
        %v522 = vpop.trf.xlu0
        %523 = vxpose.xlu0.b32.start [1/16] %v396, 128
        %524 = vxpose.xlu0.b32.cont [2/16] %v398, 128
        %525 = vxpose.xlu0.b32.cont [3/16] %v400, 128
        %526 = vxpose.xlu0.b32.cont [4/16] %v402, 128
        %527 = vxpose.xlu0.b32.cont [5/16] %v404, 128
        %528 = vxpose.xlu0.b32.cont [6/16] %v406, 128
        %529 = vxpose.xlu0.b32.cont [7/16] %v408, 128
        %530 = vxpose.xlu0.b32.cont [8/16] %v410, 128
        %531 = vxpose.xlu0.b32.cont [9/16] %v412, 128
        %532 = vxpose.xlu0.b32.cont [10/16] %v414, 128
        %533 = vxpose.xlu0.b32.cont [11/16] %v416, 128
        %534 = vxpose.xlu0.b32.cont [12/16] %v418, 128
        %535 = vxpose.xlu0.b32.cont [13/16] %v420, 128
        %536 = vxpose.xlu0.b32.cont [14/16] %v422, 128
        %537 = vxpose.xlu0.b32.cont [15/16] %v424, 128
        %538 = vxpose.xlu0.b32.end [16/16] %v426, 128
        %v539 = vpop.trf.xlu0
        %v540 = vpop.trf.xlu0
        %v541 = vpop.trf.xlu0
        %v542 = vpop.trf.xlu0
        %v543 = vpop.trf.xlu0
        %v544 = vpop.trf.xlu0
        %v545 = vpop.trf.xlu0
        %v546 = vpop.trf.xlu0
        %v547 = vpop.trf.xlu0
        %v548 = vpop.trf.xlu0
        %v549 = vpop.trf.xlu0
        %v550 = vpop.trf.xlu0
        %v551 = vpop.trf.xlu0
        %v552 = vpop.trf.xlu0
        %v553 = vpop.trf.xlu0
        %v554 = vpop.trf.xlu0
        %v555 = vld [vmem:[%s347] sm:$0xff]
        %v556 = vld [vmem:[%s347 + $0x8] sm:$0xff]
        %v557 = vld [vmem:[%s347 + $0x10] sm:$0xff]
        %v558 = vld [vmem:[%s347 + $0x18] sm:$0xff]
        %v559 = vld [vmem:[%s347 + $0x20] sm:$0xff]
        %v560 = vld [vmem:[%s347 + $0x28] sm:$0xff]
        %v561 = vld [vmem:[%s347 + $0x30] sm:$0xff]
        %v562 = vld [vmem:[%s347 + $0x38] sm:$0xff]
        %v563 = vld [vmem:[%s347 + $0x40] sm:$0xff]
        %v564 = vld [vmem:[%s347 + $0x48] sm:$0xff]
        %v565 = vld [vmem:[%s347 + $0x50] sm:$0xff]
        %v566 = vld [vmem:[%s347 + $0x58] sm:$0xff]
        %v567 = vld [vmem:[%s347 + $0x60] sm:$0xff]
        %v568 = vld [vmem:[%s347 + $0x68] sm:$0xff]
        %v569 = vld [vmem:[%s347 + $0x70] sm:$0xff]
        %v570 = vld [vmem:[%s347 + $0x78] sm:$0xff]
        %v571 = vld [vmem:[%s347 + $0x80] sm:$0xff]
        %v572 = vld [vmem:[%s347 + $0x88] sm:$0xff]
        %v573 = vld [vmem:[%s347 + $0x90] sm:$0xff]
        %v574 = vld [vmem:[%s347 + $0x98] sm:$0xff]
        %v575 = vld [vmem:[%s347 + $0xa0] sm:$0xff]
        %v576 = vld [vmem:[%s347 + $0xa8] sm:$0xff]
        %v577 = vld [vmem:[%s347 + $0xb0] sm:$0xff]
        %v578 = vld [vmem:[%s347 + $0xb8] sm:$0xff]
        %v579 = vld [vmem:[%s347 + $0xc0] sm:$0xff]
        %v580 = vld [vmem:[%s347 + $0xc8] sm:$0xff]
        %v581 = vld [vmem:[%s347 + $0xd0] sm:$0xff]
        %v582 = vld [vmem:[%s347 + $0xd8] sm:$0xff]
        %v583 = vld [vmem:[%s347 + $0xe0] sm:$0xff]
        %v584 = vld [vmem:[%s347 + $0xe8] sm:$0xff]
        %v585 = vld [vmem:[%s347 + $0xf0] sm:$0xff]
        %v586 = vld [vmem:[%s347 + $0xf8] sm:$0xff]
        %v587 = vld [vmem:[%s347 + $0x100] sm:$0xff]
        %v588 = vld [vmem:[%s347 + $0x108] sm:$0xff]
        %v589 = vld [vmem:[%s347 + $0x110] sm:$0xff]
        %v590 = vld [vmem:[%s347 + $0x118] sm:$0xff]
        %v591 = vld [vmem:[%s347 + $0x120] sm:$0xff]
        %v592 = vld [vmem:[%s347 + $0x128] sm:$0xff]
        %v593 = vld [vmem:[%s347 + $0x130] sm:$0xff]
        %v594 = vld [vmem:[%s347 + $0x138] sm:$0xff]
        %v595 = vld [vmem:[%s347 + $0x140] sm:$0xff]
        %v596 = vld [vmem:[%s347 + $0x148] sm:$0xff]
        %v597 = vld [vmem:[%s347 + $0x150] sm:$0xff]
        %v598 = vld [vmem:[%s347 + $0x158] sm:$0xff]
        %v599 = vld [vmem:[%s347 + $0x160] sm:$0xff]
        %v600 = vld [vmem:[%s347 + $0x168] sm:$0xff]
        %v601 = vld [vmem:[%s347 + $0x170] sm:$0xff]
        %v602 = vld [vmem:[%s347 + $0x178] sm:$0xff]
        %v603 = vld [vmem:[%s347 + $0x180] sm:$0xff]
        %v604 = vld [vmem:[%s347 + $0x188] sm:$0xff]
        %v605 = vld [vmem:[%s347 + $0x190] sm:$0xff]
        %v606 = vld [vmem:[%s347 + $0x198] sm:$0xff]
        %v607 = vld [vmem:[%s347 + $0x1a0] sm:$0xff]
        %v608 = vld [vmem:[%s347 + $0x1a8] sm:$0xff]
        %v609 = vld [vmem:[%s347 + $0x1b0] sm:$0xff]
        %v610 = vld [vmem:[%s347 + $0x1b8] sm:$0xff]
        %v611 = vld [vmem:[%s347 + $0x1c0] sm:$0xff]
        %v612 = vld [vmem:[%s347 + $0x1c8] sm:$0xff]
        %v613 = vld [vmem:[%s347 + $0x1d0] sm:$0xff]
        %v614 = vld [vmem:[%s347 + $0x1d8] sm:$0xff]
        %v615 = vld [vmem:[%s347 + $0x1e0] sm:$0xff]
        %v616 = vld [vmem:[%s347 + $0x1e8] sm:$0xff]
        %v617 = vld [vmem:[%s347 + $0x1f0] sm:$0xff]
        %v618 = vld [vmem:[%s347 + $0x1f8] sm:$0xff]
        %619 = vxpose.xlu0.b32.start [1/16] %v555, 128
        %620 = vxpose.xlu0.b32.cont [2/16] %v557, 128
        %621 = vxpose.xlu0.b32.cont [3/16] %v559, 128
        %622 = vxpose.xlu0.b32.cont [4/16] %v561, 128
        %623 = vxpose.xlu0.b32.cont [5/16] %v563, 128
        %624 = vxpose.xlu0.b32.cont [6/16] %v565, 128
        %625 = vxpose.xlu0.b32.cont [7/16] %v567, 128
        %626 = vxpose.xlu0.b32.cont [8/16] %v569, 128
        %627 = vxpose.xlu0.b32.cont [9/16] %v571, 128
        %628 = vxpose.xlu0.b32.cont [10/16] %v573, 128
        %629 = vxpose.xlu0.b32.cont [11/16] %v575, 128
        %630 = vxpose.xlu0.b32.cont [12/16] %v577, 128
        %631 = vxpose.xlu0.b32.cont [13/16] %v579, 128
        %632 = vxpose.xlu0.b32.cont [14/16] %v581, 128
        %633 = vxpose.xlu0.b32.cont [15/16] %v583, 128
        %634 = vxpose.xlu0.b32.end [16/16] %v585, 128
        %v635 = vpop.trf.xlu0
        %v636 = vpop.trf.xlu0
        %v637 = vpop.trf.xlu0
        %v638 = vpop.trf.xlu0
        %v639 = vpop.trf.xlu0
        %v640 = vpop.trf.xlu0
        %v641 = vpop.trf.xlu0
        %v642 = vpop.trf.xlu0
        %v643 = vpop.trf.xlu0
        %v644 = vpop.trf.xlu0
        %v645 = vpop.trf.xlu0
        %v646 = vpop.trf.xlu0
        %v647 = vpop.trf.xlu0
        %v648 = vpop.trf.xlu0
        %v649 = vpop.trf.xlu0
        %v650 = vpop.trf.xlu0
        %651 = vxpose.xlu0.b32.start [1/16] %v556, 128
        %652 = vxpose.xlu0.b32.cont [2/16] %v558, 128
        %653 = vxpose.xlu0.b32.cont [3/16] %v560, 128
        %654 = vxpose.xlu0.b32.cont [4/16] %v562, 128
        %655 = vxpose.xlu0.b32.cont [5/16] %v564, 128
        %656 = vxpose.xlu0.b32.cont [6/16] %v566, 128
        %657 = vxpose.xlu0.b32.cont [7/16] %v568, 128
        %658 = vxpose.xlu0.b32.cont [8/16] %v570, 128
        %659 = vxpose.xlu0.b32.cont [9/16] %v572, 128
        %660 = vxpose.xlu0.b32.cont [10/16] %v574, 128
        %661 = vxpose.xlu0.b32.cont [11/16] %v576, 128
        %662 = vxpose.xlu0.b32.cont [12/16] %v578, 128
        %663 = vxpose.xlu0.b32.cont [13/16] %v580, 128
        %664 = vxpose.xlu0.b32.cont [14/16] %v582, 128
        %665 = vxpose.xlu0.b32.cont [15/16] %v584, 128
        %666 = vxpose.xlu0.b32.end [16/16] %v586, 128
        %v667 = vpop.trf.xlu0
        %v668 = vpop.trf.xlu0
        %v669 = vpop.trf.xlu0
        %v670 = vpop.trf.xlu0
        %v671 = vpop.trf.xlu0
        %v672 = vpop.trf.xlu0
        %v673 = vpop.trf.xlu0
        %v674 = vpop.trf.xlu0
        %v675 = vpop.trf.xlu0
        %v676 = vpop.trf.xlu0
        %v677 = vpop.trf.xlu0
        %v678 = vpop.trf.xlu0
        %v679 = vpop.trf.xlu0
        %v680 = vpop.trf.xlu0
        %v681 = vpop.trf.xlu0
        %v682 = vpop.trf.xlu0
        %683 = vxpose.xlu0.b32.start [1/16] %v587, 128
        %684 = vxpose.xlu0.b32.cont [2/16] %v589, 128
        %685 = vxpose.xlu0.b32.cont [3/16] %v591, 128
        %686 = vxpose.xlu0.b32.cont [4/16] %v593, 128
        %687 = vxpose.xlu0.b32.cont [5/16] %v595, 128
        %688 = vxpose.xlu0.b32.cont [6/16] %v597, 128
        %689 = vxpose.xlu0.b32.cont [7/16] %v599, 128
        %690 = vxpose.xlu0.b32.cont [8/16] %v601, 128
        %691 = vxpose.xlu0.b32.cont [9/16] %v603, 128
        %692 = vxpose.xlu0.b32.cont [10/16] %v605, 128
        %693 = vxpose.xlu0.b32.cont [11/16] %v607, 128
        %694 = vxpose.xlu0.b32.cont [12/16] %v609, 128
        %695 = vxpose.xlu0.b32.cont [13/16] %v611, 128
        %696 = vxpose.xlu0.b32.cont [14/16] %v613, 128
        %697 = vxpose.xlu0.b32.cont [15/16] %v615, 128
        %698 = vxpose.xlu0.b32.end [16/16] %v617, 128
        %v699 = vpop.trf.xlu0
        %v700 = vpop.trf.xlu0
        %v701 = vpop.trf.xlu0
        %v702 = vpop.trf.xlu0
        %v703 = vpop.trf.xlu0
        %v704 = vpop.trf.xlu0
        %v705 = vpop.trf.xlu0
        %v706 = vpop.trf.xlu0
        %v707 = vpop.trf.xlu0
        %v708 = vpop.trf.xlu0
        %v709 = vpop.trf.xlu0
        %v710 = vpop.trf.xlu0
        %v711 = vpop.trf.xlu0
        %v712 = vpop.trf.xlu0
        %v713 = vpop.trf.xlu0
        %v714 = vpop.trf.xlu0
        %715 = vxpose.xlu0.b32.start [1/16] %v588, 128
        %716 = vxpose.xlu0.b32.cont [2/16] %v590, 128
        %717 = vxpose.xlu0.b32.cont [3/16] %v592, 128
        %718 = vxpose.xlu0.b32.cont [4/16] %v594, 128
        %719 = vxpose.xlu0.b32.cont [5/16] %v596, 128
        %720 = vxpose.xlu0.b32.cont [6/16] %v598, 128
        %721 = vxpose.xlu0.b32.cont [7/16] %v600, 128
        %722 = vxpose.xlu0.b32.cont [8/16] %v602, 128
        %723 = vxpose.xlu0.b32.cont [9/16] %v604, 128
        %724 = vxpose.xlu0.b32.cont [10/16] %v606, 128
        %725 = vxpose.xlu0.b32.cont [11/16] %v608, 128
        %726 = vxpose.xlu0.b32.cont [12/16] %v610, 128
        %727 = vxpose.xlu0.b32.cont [13/16] %v612, 128
        %728 = vxpose.xlu0.b32.cont [14/16] %v614, 128
        %729 = vxpose.xlu0.b32.cont [15/16] %v616, 128
        %730 = vxpose.xlu0.b32.end [16/16] %v618, 128
        %v731 = vpop.trf.xlu0
        %v732 = vpop.trf.xlu0
        %v733 = vpop.trf.xlu0
        %v734 = vpop.trf.xlu0
        %v735 = vpop.trf.xlu0
        %v736 = vpop.trf.xlu0
        %v737 = vpop.trf.xlu0
        %v738 = vpop.trf.xlu0
        %v739 = vpop.trf.xlu0
        %v740 = vpop.trf.xlu0
        %v741 = vpop.trf.xlu0
        %v742 = vpop.trf.xlu0
        %v743 = vpop.trf.xlu0
        %v744 = vpop.trf.xlu0
        %v745 = vpop.trf.xlu0
        %v746 = vpop.trf.xlu0
        %v747 = vpack.c.bf16 %v444, %v443
        %v748 = vpack.c.bf16 %v508, %v507
        %v749 = vpack.c.bf16 %v446, %v445
        %v750 = vpack.c.bf16 %v510, %v509
        %v751 = vpack.c.bf16 %v448, %v447
        %v752 = vpack.c.bf16 %v512, %v511
        %v753 = vpack.c.bf16 %v450, %v449
        %v754 = vpack.c.bf16 %v514, %v513
        %v755 = vpack.c.bf16 %v452, %v451
        %v756 = vpack.c.bf16 %v516, %v515
        %v757 = vpack.c.bf16 %v454, %v453
        %v758 = vpack.c.bf16 %v518, %v517
        %v759 = vpack.c.bf16 %v456, %v455
        %v760 = vpack.c.bf16 %v520, %v519
        %v761 = vpack.c.bf16 %v458, %v457
        %v762 = vpack.c.bf16 %v522, %v521
        %v763 = vpack.c.bf16 %v476, %v475
        %v764 = vpack.c.bf16 %v540, %v539
        %v765 = vpack.c.bf16 %v478, %v477
        %v766 = vpack.c.bf16 %v542, %v541
        %v767 = vpack.c.bf16 %v480, %v479
        %v768 = vpack.c.bf16 %v544, %v543
        %v769 = vpack.c.bf16 %v482, %v481
        %v770 = vpack.c.bf16 %v546, %v545
        %v771 = vpack.c.bf16 %v484, %v483
        %v772 = vpack.c.bf16 %v548, %v547
        %v773 = vpack.c.bf16 %v486, %v485
        %v774 = vpack.c.bf16 %v550, %v549
        %v775 = vpack.c.bf16 %v488, %v487
        %v776 = vpack.c.bf16 %v552, %v551
        %v777 = vpack.c.bf16 %v490, %v489
        %v778 = vpack.c.bf16 %v554, %v553
        %v779 = vpack.c.bf16 %v636, %v635
        %v780 = vpack.c.bf16 %v700, %v699
        %v781 = vpack.c.bf16 %v638, %v637
        %v782 = vpack.c.bf16 %v702, %v701
        %v783 = vpack.c.bf16 %v640, %v639
        %v784 = vpack.c.bf16 %v704, %v703
        %v785 = vpack.c.bf16 %v642, %v641
        %v786 = vpack.c.bf16 %v706, %v705
        %v787 = vpack.c.bf16 %v644, %v643
        %v788 = vpack.c.bf16 %v708, %v707
        %v789 = vpack.c.bf16 %v646, %v645
        %v790 = vpack.c.bf16 %v710, %v709
        %v791 = vpack.c.bf16 %v648, %v647
        %v792 = vpack.c.bf16 %v712, %v711
        %v793 = vpack.c.bf16 %v650, %v649
        %v794 = vpack.c.bf16 %v714, %v713
        %v795 = vpack.c.bf16 %v668, %v667
        %v796 = vpack.c.bf16 %v732, %v731
        %v797 = vpack.c.bf16 %v670, %v669
        %v798 = vpack.c.bf16 %v734, %v733
        %v799 = vpack.c.bf16 %v672, %v671
        %v800 = vpack.c.bf16 %v736, %v735
        %v801 = vpack.c.bf16 %v674, %v673
        %v802 = vpack.c.bf16 %v738, %v737
        %v803 = vpack.c.bf16 %v676, %v675
        %v804 = vpack.c.bf16 %v740, %v739
        %v805 = vpack.c.bf16 %v678, %v677
        %v806 = vpack.c.bf16 %v742, %v741
        %v807 = vpack.c.bf16 %v680, %v679
        %v808 = vpack.c.bf16 %v744, %v743
        %v809 = vpack.c.bf16 %v682, %v681
        %v810 = vpack.c.bf16 %v746, %v745
        %v811 = vld [vmem:[%s2] sm:$0xff]
        %v812 = vld [vmem:[%s2 + $0x8] sm:$0xff]
        %v813 = vld [vmem:[%s2 + $0x10] sm:$0xff]
        %v814 = vld [vmem:[%s2 + $0x18] sm:$0xff]
        %v815 = vld [vmem:[%s2 + $0x20] sm:$0xff]
        %v816 = vld [vmem:[%s2 + $0x28] sm:$0xff]
        %v817 = vld [vmem:[%s2 + $0x30] sm:$0xff]
        %v818 = vld [vmem:[%s2 + $0x38] sm:$0xff]
        %v819 = vld [vmem:[%s2 + $0x40] sm:$0xff]
        %v820 = vld [vmem:[%s2 + $0x48] sm:$0xff]
        %v821 = vld [vmem:[%s2 + $0x50] sm:$0xff]
        %v822 = vld [vmem:[%s2 + $0x58] sm:$0xff]
        %v823 = vld [vmem:[%s2 + $0x60] sm:$0xff]
        %v824 = vld [vmem:[%s2 + $0x68] sm:$0xff]
        %v825 = vld [vmem:[%s2 + $0x70] sm:$0xff]
        %v826 = vld [vmem:[%s2 + $0x78] sm:$0xff]
        %v827 = vld [vmem:[%s2 + $0x80] sm:$0xff]
        %v828 = vld [vmem:[%s2 + $0x88] sm:$0xff]
        %v829 = vld [vmem:[%s2 + $0x90] sm:$0xff]
        %v830 = vld [vmem:[%s2 + $0x98] sm:$0xff]
        %v831 = vld [vmem:[%s2 + $0xa0] sm:$0xff]
        %v832 = vld [vmem:[%s2 + $0xa8] sm:$0xff]
        %v833 = vld [vmem:[%s2 + $0xb0] sm:$0xff]
        %v834 = vld [vmem:[%s2 + $0xb8] sm:$0xff]
        %v835 = vld [vmem:[%s2 + $0xc0] sm:$0xff]
        %v836 = vld [vmem:[%s2 + $0xc8] sm:$0xff]
        %v837 = vld [vmem:[%s2 + $0xd0] sm:$0xff]
        %v838 = vld [vmem:[%s2 + $0xd8] sm:$0xff]
        %v839 = vld [vmem:[%s2 + $0xe0] sm:$0xff]
        %v840 = vld [vmem:[%s2 + $0xe8] sm:$0xff]
        %v841 = vld [vmem:[%s2 + $0xf0] sm:$0xff]
        %v842 = vld [vmem:[%s2 + $0xf8] sm:$0xff]
        %v843 = vld [vmem:[%s3] sm:$0x3]
        %v845 = vlaneseq
        %v846 = vshrl.u32 %v845, 7
        %v847 = vsub.s32 0, %v846
        %v848 = vrot.slane %v843, %v847
        %v849 = vlaneseq
        %v850 = vshrl.u32 %v849, 7
        %v851 = vsub.s32 1, %v850
        %v852 = vrot.slane %v843, %v851
        %v887 = vunpack.c.l.b16 %v811
        %v888 = vunpack.c.h.b16 %v811
        %v889 = vunpack.c.l.b16 %v812
        %v890 = vunpack.c.h.b16 %v812
        %v891 = vunpack.c.l.b16 %v813
        %v892 = vunpack.c.h.b16 %v813
        %v893 = vunpack.c.l.b16 %v814
        %v894 = vunpack.c.h.b16 %v814
        %v895 = vunpack.c.l.b16 %v815
        %v896 = vunpack.c.h.b16 %v815
        %v897 = vunpack.c.l.b16 %v816
        %v898 = vunpack.c.h.b16 %v816
        %v899 = vunpack.c.l.b16 %v817
        %v900 = vunpack.c.h.b16 %v817
        %v901 = vunpack.c.l.b16 %v818
        %v902 = vunpack.c.h.b16 %v818
        %v903 = vunpack.c.l.b16 %v819
        %v904 = vunpack.c.h.b16 %v819
        %v905 = vunpack.c.l.b16 %v820
        %v906 = vunpack.c.h.b16 %v820
        %v907 = vunpack.c.l.b16 %v821
        %v908 = vunpack.c.h.b16 %v821
        %v909 = vunpack.c.l.b16 %v822
        %v910 = vunpack.c.h.b16 %v822
        %v911 = vunpack.c.l.b16 %v823
        %v912 = vunpack.c.h.b16 %v823
        %v913 = vunpack.c.l.b16 %v824
        %v914 = vunpack.c.h.b16 %v824
        %v915 = vunpack.c.l.b16 %v825
        %v916 = vunpack.c.h.b16 %v825
        %v917 = vunpack.c.l.b16 %v826
        %v918 = vunpack.c.h.b16 %v826
        %v919 = vunpack.c.l.b16 %v827
        %v920 = vunpack.c.h.b16 %v827
        %v921 = vunpack.c.l.b16 %v828
        %v922 = vunpack.c.h.b16 %v828
        %v923 = vunpack.c.l.b16 %v829
        %v924 = vunpack.c.h.b16 %v829
        %v925 = vunpack.c.l.b16 %v830
        %v926 = vunpack.c.h.b16 %v830
        %v927 = vunpack.c.l.b16 %v831
        %v928 = vunpack.c.h.b16 %v831
        %v929 = vunpack.c.l.b16 %v832
        %v930 = vunpack.c.h.b16 %v832
        %v931 = vunpack.c.l.b16 %v833
        %v932 = vunpack.c.h.b16 %v833
        %v933 = vunpack.c.l.b16 %v834
        %v934 = vunpack.c.h.b16 %v834
        %v935 = vunpack.c.l.b16 %v835
        %v936 = vunpack.c.h.b16 %v835
        %v937 = vunpack.c.l.b16 %v836
        %v938 = vunpack.c.h.b16 %v836
        %v939 = vunpack.c.l.b16 %v837
        %v940 = vunpack.c.h.b16 %v837
        %v941 = vunpack.c.l.b16 %v838
        %v942 = vunpack.c.h.b16 %v838
        %v943 = vunpack.c.l.b16 %v839
        %v944 = vunpack.c.h.b16 %v839
        %v945 = vunpack.c.l.b16 %v840
        %v946 = vunpack.c.h.b16 %v840
        %v947 = vunpack.c.l.b16 %v841
        %v948 = vunpack.c.h.b16 %v841
        %v949 = vunpack.c.l.b16 %v842
        %v950 = vunpack.c.h.b16 %v842
        %v951 = vpack.c.b16 %v889, %v887
        %v952 = vpack.c.b16 %v890, %v888
        %v953 = vpack.c.b16 %v893, %v891
        %v954 = vpack.c.b16 %v894, %v892
        %v955 = vpack.c.b16 %v897, %v895
        %v956 = vpack.c.b16 %v898, %v896
        %v957 = vpack.c.b16 %v901, %v899
        %v958 = vpack.c.b16 %v902, %v900
        %v959 = vpack.c.b16 %v905, %v903
        %v960 = vpack.c.b16 %v906, %v904
        %v961 = vpack.c.b16 %v909, %v907
        %v962 = vpack.c.b16 %v910, %v908
        %v963 = vpack.c.b16 %v913, %v911
        %v964 = vpack.c.b16 %v914, %v912
        %v965 = vpack.c.b16 %v917, %v915
        %v966 = vpack.c.b16 %v918, %v916
        %v967 = vpack.c.b16 %v921, %v919
        %v968 = vpack.c.b16 %v922, %v920
        %v969 = vpack.c.b16 %v925, %v923
        %v970 = vpack.c.b16 %v926, %v924
        %v971 = vpack.c.b16 %v929, %v927
        %v972 = vpack.c.b16 %v930, %v928
        %v973 = vpack.c.b16 %v933, %v931
        %v974 = vpack.c.b16 %v934, %v932
        %v975 = vpack.c.b16 %v937, %v935
        %v976 = vpack.c.b16 %v938, %v936
        %v977 = vpack.c.b16 %v941, %v939
        %v978 = vpack.c.b16 %v942, %v940
        %v979 = vpack.c.b16 %v945, %v943
        %v980 = vpack.c.b16 %v946, %v944
        %v981 = vpack.c.b16 %v949, %v947
        %v982 = vpack.c.b16 %v950, %v948
        %1015 = vmatprep.subr.bf16.mxu0 %v966
        %1016 = vmatpush1.bf16.msra.mxu0 %v965
        %1017 = vmatprep.subr.bf16.mxu0 %v964
        %1018 = vmatpush1.bf16.msra.mxu0 %v963
        %1019 = vmatprep.subr.bf16.mxu0 %v962
        %1020 = vmatpush1.bf16.msra.mxu0 %v961
        %1021 = vmatprep.subr.bf16.mxu0 %v960
        %1022 = vmatpush1.bf16.msra.mxu0 %v959
        %1023 = vmatprep.subr.bf16.mxu0 %v958
        %1024 = vmatpush1.bf16.msra.mxu0 %v957
        %1025 = vmatprep.subr.bf16.mxu0 %v956
        %1026 = vmatpush1.bf16.msra.mxu0 %v955
        %1027 = vmatprep.subr.bf16.mxu0 %v954
        %1028 = vmatpush1.bf16.msra.mxu0 %v953
        %1029 = vmatprep.subr.bf16.mxu0 %v952
        %1030 = vmatpush1.bf16.msra.mxu0 %v951
        %1031 = vmatprep.subr.bf16.mxu0 %v982
        %1032 = vmatpush2.bf16.msra.mxu0 %v981
        %1033 = vmatprep.subr.bf16.mxu0 %v980
        %1034 = vmatpush2.bf16.msra.mxu0 %v979
        %1035 = vmatprep.subr.bf16.mxu0 %v978
        %1036 = vmatpush2.bf16.msra.mxu0 %v977
        %1037 = vmatprep.subr.bf16.mxu0 %v976
        %1038 = vmatpush2.bf16.msra.mxu0 %v975
        %1039 = vmatprep.subr.bf16.mxu0 %v974
        %1040 = vmatpush2.bf16.msra.mxu0 %v973
        %1041 = vmatprep.subr.bf16.mxu0 %v972
        %1042 = vmatpush2.bf16.msra.mxu0 %v971
        %1043 = vmatprep.subr.bf16.mxu0 %v970
        %1044 = vmatpush2.bf16.msra.mxu0 %v969
        %1045 = vmatprep.subr.bf16.mxu0 %v968
        %1046 = vmatpush2.bf16.msra.mxu0 %v967
        %1047 = vmatprep.mubr.bf16.mxu0 %v748
        %1048 = vmatmul.mubr.bf16.gmra.mxu0 %v747
        %v1049 = vpop.f32.mrf.mxu0
        %v1050 = vadd.f32 %v848, %v1049
        %v1051 = vpop.f32.mrf.mxu0
        %v1052 = vadd.f32 %v852, %v1051
        %v1053 = vpop.f32.mrf.mxu0
        %v1054 = vadd.f32 %v848, %v1053
        %v1055 = vpop.f32.mrf.mxu0
        %v1056 = vadd.f32 %v852, %v1055
        %1057 = vmatprep.mubr.bf16.mxu0 %v750
        %1058 = vmatmul.mubr.bf16.gmra.mxu0 %v749
        %v1059 = vpop.f32.mrf.mxu0
        %v1060 = vadd.f32 %v848, %v1059
        %v1061 = vpop.f32.mrf.mxu0
        %v1062 = vadd.f32 %v852, %v1061
        %v1063 = vpop.f32.mrf.mxu0
        %v1064 = vadd.f32 %v848, %v1063
        %v1065 = vpop.f32.mrf.mxu0
        %v1066 = vadd.f32 %v852, %v1065
        %1067 = vmatprep.mubr.bf16.mxu0 %v752
        %1068 = vmatmul.mubr.bf16.gmra.mxu0 %v751
        %v1069 = vpop.f32.mrf.mxu0
        %v1070 = vadd.f32 %v848, %v1069
        %v1071 = vpop.f32.mrf.mxu0
        %v1072 = vadd.f32 %v852, %v1071
        %v1073 = vpop.f32.mrf.mxu0
        %v1074 = vadd.f32 %v848, %v1073
        %v1075 = vpop.f32.mrf.mxu0
        %v1076 = vadd.f32 %v852, %v1075
        %1077 = vmatprep.mubr.bf16.mxu0 %v754
        %1078 = vmatmul.mubr.bf16.gmra.mxu0 %v753
        %v1079 = vpop.f32.mrf.mxu0
        %v1080 = vadd.f32 %v848, %v1079
        %v1081 = vpop.f32.mrf.mxu0
        %v1082 = vadd.f32 %v852, %v1081
        %v1083 = vpop.f32.mrf.mxu0
        %v1084 = vadd.f32 %v848, %v1083
        %v1085 = vpop.f32.mrf.mxu0
        %v1086 = vadd.f32 %v852, %v1085
        %1087 = vmatprep.mubr.bf16.mxu0 %v756
        %1088 = vmatmul.mubr.bf16.gmra.mxu0 %v755
        %v1089 = vpop.f32.mrf.mxu0
        %v1090 = vadd.f32 %v848, %v1089
        %v1091 = vpop.f32.mrf.mxu0
        %v1092 = vadd.f32 %v852, %v1091
        %v1093 = vpop.f32.mrf.mxu0
        %v1094 = vadd.f32 %v848, %v1093
        %v1095 = vpop.f32.mrf.mxu0
        %v1096 = vadd.f32 %v852, %v1095
        %1097 = vmatprep.mubr.bf16.mxu0 %v758
        %1098 = vmatmul.mubr.bf16.gmra.mxu0 %v757
        %v1099 = vpop.f32.mrf.mxu0
        %v1100 = vadd.f32 %v848, %v1099
        %v1101 = vpop.f32.mrf.mxu0
        %v1102 = vadd.f32 %v852, %v1101
        %v1103 = vpop.f32.mrf.mxu0
        %v1104 = vadd.f32 %v848, %v1103
        %v1105 = vpop.f32.mrf.mxu0
        %v1106 = vadd.f32 %v852, %v1105
        %1107 = vmatprep.mubr.bf16.mxu0 %v760
        %1108 = vmatmul.mubr.bf16.gmra.mxu0 %v759
        %v1109 = vpop.f32.mrf.mxu0
        %v1110 = vadd.f32 %v848, %v1109
        %v1111 = vpop.f32.mrf.mxu0
        %v1112 = vadd.f32 %v852, %v1111
        %v1113 = vpop.f32.mrf.mxu0
        %v1114 = vadd.f32 %v848, %v1113
        %v1115 = vpop.f32.mrf.mxu0
        %v1116 = vadd.f32 %v852, %v1115
        %1117 = vmatprep.mubr.bf16.mxu0 %v762
        %1118 = vmatmul.mubr.bf16.gmra.mxu0 %v761
        %v1119 = vpop.f32.mrf.mxu0
        %v1120 = vadd.f32 %v848, %v1119
        %v1121 = vpop.f32.mrf.mxu0
        %v1122 = vadd.f32 %v852, %v1121
        %v1123 = vpop.f32.mrf.mxu0
        %v1124 = vadd.f32 %v848, %v1123
        %v1125 = vpop.f32.mrf.mxu0
        %v1126 = vadd.f32 %v852, %v1125
        %1127 = vmatprep.mubr.bf16.mxu0 %v764
        %1128 = vmatmul.mubr.bf16.gmra.mxu0 %v763
        %v1129 = vpop.f32.mrf.mxu0
        %v1130 = vadd.f32 %v848, %v1129
        %v1131 = vpop.f32.mrf.mxu0
        %v1132 = vadd.f32 %v852, %v1131
        %v1133 = vpop.f32.mrf.mxu0
        %v1134 = vadd.f32 %v848, %v1133
        %v1135 = vpop.f32.mrf.mxu0
        %v1136 = vadd.f32 %v852, %v1135
        %1137 = vmatprep.mubr.bf16.mxu0 %v766
        %1138 = vmatmul.mubr.bf16.gmra.mxu0 %v765
        %v1139 = vpop.f32.mrf.mxu0
        %v1140 = vadd.f32 %v848, %v1139
        %v1141 = vpop.f32.mrf.mxu0
        %v1142 = vadd.f32 %v852, %v1141
        %v1143 = vpop.f32.mrf.mxu0
        %v1144 = vadd.f32 %v848, %v1143
        %v1145 = vpop.f32.mrf.mxu0
        %v1146 = vadd.f32 %v852, %v1145
        %1147 = vmatprep.mubr.bf16.mxu0 %v768
        %1148 = vmatmul.mubr.bf16.gmra.mxu0 %v767
        %v1149 = vpop.f32.mrf.mxu0
        %v1150 = vadd.f32 %v848, %v1149
        %v1151 = vpop.f32.mrf.mxu0
        %v1152 = vadd.f32 %v852, %v1151
        %v1153 = vpop.f32.mrf.mxu0
        %v1154 = vadd.f32 %v848, %v1153
        %v1155 = vpop.f32.mrf.mxu0
        %v1156 = vadd.f32 %v852, %v1155
        %1157 = vmatprep.mubr.bf16.mxu0 %v770
        %1158 = vmatmul.mubr.bf16.gmra.mxu0 %v769
        %v1159 = vpop.f32.mrf.mxu0
        %v1160 = vadd.f32 %v848, %v1159
        %v1161 = vpop.f32.mrf.mxu0
        %v1162 = vadd.f32 %v852, %v1161
        %v1163 = vpop.f32.mrf.mxu0
        %v1164 = vadd.f32 %v848, %v1163
        %v1165 = vpop.f32.mrf.mxu0
        %v1166 = vadd.f32 %v852, %v1165
        %1167 = vmatprep.mubr.bf16.mxu0 %v772
        %1168 = vmatmul.mubr.bf16.gmra.mxu0 %v771
        %v1169 = vpop.f32.mrf.mxu0
        %v1170 = vadd.f32 %v848, %v1169
        %v1171 = vpop.f32.mrf.mxu0
        %v1172 = vadd.f32 %v852, %v1171
        %v1173 = vpop.f32.mrf.mxu0
        %v1174 = vadd.f32 %v848, %v1173
        %v1175 = vpop.f32.mrf.mxu0
        %v1176 = vadd.f32 %v852, %v1175
        %1177 = vmatprep.mubr.bf16.mxu0 %v774
        %1178 = vmatmul.mubr.bf16.gmra.mxu0 %v773
        %v1179 = vpop.f32.mrf.mxu0
        %v1180 = vadd.f32 %v848, %v1179
        %v1181 = vpop.f32.mrf.mxu0
        %v1182 = vadd.f32 %v852, %v1181
        %v1183 = vpop.f32.mrf.mxu0
        %v1184 = vadd.f32 %v848, %v1183
        %v1185 = vpop.f32.mrf.mxu0
        %v1186 = vadd.f32 %v852, %v1185
        %1187 = vmatprep.mubr.bf16.mxu0 %v776
        %1188 = vmatmul.mubr.bf16.gmra.mxu0 %v775
        %v1189 = vpop.f32.mrf.mxu0
        %v1190 = vadd.f32 %v848, %v1189
        %v1191 = vpop.f32.mrf.mxu0
        %v1192 = vadd.f32 %v852, %v1191
        %v1193 = vpop.f32.mrf.mxu0
        %v1194 = vadd.f32 %v848, %v1193
        %v1195 = vpop.f32.mrf.mxu0
        %v1196 = vadd.f32 %v852, %v1195
        %1197 = vmatprep.mubr.bf16.mxu0 %v778
        %1198 = vmatmul.mubr.bf16.gmra.mxu0 %v777
        %v1199 = vpop.f32.mrf.mxu0
        %v1200 = vadd.f32 %v848, %v1199
        %v1201 = vpop.f32.mrf.mxu0
        %v1202 = vadd.f32 %v852, %v1201
        %v1203 = vpop.f32.mrf.mxu0
        %v1204 = vadd.f32 %v848, %v1203
        %v1205 = vpop.f32.mrf.mxu0
        %v1206 = vadd.f32 %v852, %v1205
        %1207 = vdwg.mxu0
        %v1208 = vld [vmem:[%s4] sm:$0xff]
        %v1209 = vld [vmem:[%s4 + $0x8] sm:$0xff]
        %v1210 = vld [vmem:[%s4 + $0x10] sm:$0xff]
        %v1211 = vld [vmem:[%s4 + $0x18] sm:$0xff]
        %v1212 = vld [vmem:[%s4 + $0x20] sm:$0xff]
        %v1213 = vld [vmem:[%s4 + $0x28] sm:$0xff]
        %v1214 = vld [vmem:[%s4 + $0x30] sm:$0xff]
        %v1215 = vld [vmem:[%s4 + $0x38] sm:$0xff]
        %v1216 = vld [vmem:[%s4 + $0x40] sm:$0xff]
        %v1217 = vld [vmem:[%s4 + $0x48] sm:$0xff]
        %v1218 = vld [vmem:[%s4 + $0x50] sm:$0xff]
        %v1219 = vld [vmem:[%s4 + $0x58] sm:$0xff]
        %v1220 = vld [vmem:[%s4 + $0x60] sm:$0xff]
        %v1221 = vld [vmem:[%s4 + $0x68] sm:$0xff]
        %v1222 = vld [vmem:[%s4 + $0x70] sm:$0xff]
        %v1223 = vld [vmem:[%s4 + $0x78] sm:$0xff]
        %v1224 = vld [vmem:[%s4 + $0x80] sm:$0xff]
        %v1225 = vld [vmem:[%s4 + $0x88] sm:$0xff]
        %v1226 = vld [vmem:[%s4 + $0x90] sm:$0xff]
        %v1227 = vld [vmem:[%s4 + $0x98] sm:$0xff]
        %v1228 = vld [vmem:[%s4 + $0xa0] sm:$0xff]
        %v1229 = vld [vmem:[%s4 + $0xa8] sm:$0xff]
        %v1230 = vld [vmem:[%s4 + $0xb0] sm:$0xff]
        %v1231 = vld [vmem:[%s4 + $0xb8] sm:$0xff]
        %v1232 = vld [vmem:[%s4 + $0xc0] sm:$0xff]
        %v1233 = vld [vmem:[%s4 + $0xc8] sm:$0xff]
        %v1234 = vld [vmem:[%s4 + $0xd0] sm:$0xff]
        %v1235 = vld [vmem:[%s4 + $0xd8] sm:$0xff]
        %v1236 = vld [vmem:[%s4 + $0xe0] sm:$0xff]
        %v1237 = vld [vmem:[%s4 + $0xe8] sm:$0xff]
        %v1238 = vld [vmem:[%s4 + $0xf0] sm:$0xff]
        %v1239 = vld [vmem:[%s4 + $0xf8] sm:$0xff]
        %v1240 = vld [vmem:[%s4 + $0x100] sm:$0xff]
        %v1241 = vld [vmem:[%s4 + $0x108] sm:$0xff]
        %v1242 = vld [vmem:[%s4 + $0x110] sm:$0xff]
        %v1243 = vld [vmem:[%s4 + $0x118] sm:$0xff]
        %v1244 = vld [vmem:[%s4 + $0x120] sm:$0xff]
        %v1245 = vld [vmem:[%s4 + $0x128] sm:$0xff]
        %v1246 = vld [vmem:[%s4 + $0x130] sm:$0xff]
        %v1247 = vld [vmem:[%s4 + $0x138] sm:$0xff]
        %v1248 = vld [vmem:[%s4 + $0x140] sm:$0xff]
        %v1249 = vld [vmem:[%s4 + $0x148] sm:$0xff]
        %v1250 = vld [vmem:[%s4 + $0x150] sm:$0xff]
        %v1251 = vld [vmem:[%s4 + $0x158] sm:$0xff]
        %v1252 = vld [vmem:[%s4 + $0x160] sm:$0xff]
        %v1253 = vld [vmem:[%s4 + $0x168] sm:$0xff]
        %v1254 = vld [vmem:[%s4 + $0x170] sm:$0xff]
        %v1255 = vld [vmem:[%s4 + $0x178] sm:$0xff]
        %v1256 = vld [vmem:[%s4 + $0x180] sm:$0xff]
        %v1257 = vld [vmem:[%s4 + $0x188] sm:$0xff]
        %v1258 = vld [vmem:[%s4 + $0x190] sm:$0xff]
        %v1259 = vld [vmem:[%s4 + $0x198] sm:$0xff]
        %v1260 = vld [vmem:[%s4 + $0x1a0] sm:$0xff]
        %v1261 = vld [vmem:[%s4 + $0x1a8] sm:$0xff]
        %v1262 = vld [vmem:[%s4 + $0x1b0] sm:$0xff]
        %v1263 = vld [vmem:[%s4 + $0x1b8] sm:$0xff]
        %v1264 = vld [vmem:[%s4 + $0x1c0] sm:$0xff]
        %v1265 = vld [vmem:[%s4 + $0x1c8] sm:$0xff]
        %v1266 = vld [vmem:[%s4 + $0x1d0] sm:$0xff]
        %v1267 = vld [vmem:[%s4 + $0x1d8] sm:$0xff]
        %v1268 = vld [vmem:[%s4 + $0x1e0] sm:$0xff]
        %v1269 = vld [vmem:[%s4 + $0x1e8] sm:$0xff]
        %v1270 = vld [vmem:[%s4 + $0x1f0] sm:$0xff]
        %v1271 = vld [vmem:[%s4 + $0x1f8] sm:$0xff]
        %v1272 = vld [vmem:[%s5] sm:$0xf]
        %v1274 = vlaneseq
        %v1275 = vshrl.u32 %v1274, 7
        %v1276 = vsub.s32 0, %v1275
        %v1277 = vrot.slane %v1272, %v1276
        %v1278 = vlaneseq
        %v1279 = vshrl.u32 %v1278, 7
        %v1280 = vsub.s32 1, %v1279
        %v1281 = vrot.slane %v1272, %v1280
        %v1282 = vlaneseq
        %v1283 = vshrl.u32 %v1282, 7
        %v1284 = vsub.s32 2, %v1283
        %v1285 = vrot.slane %v1272, %v1284
        %v1286 = vlaneseq
        %v1287 = vshrl.u32 %v1286, 7
        %v1288 = vsub.s32 3, %v1287
        %v1289 = vrot.slane %v1272, %v1288
        %v1358 = vunpack.c.l.b16 %v1208
        %v1359 = vunpack.c.h.b16 %v1208
        %v1360 = vunpack.c.l.b16 %v1209
        %v1361 = vunpack.c.h.b16 %v1209
        %v1362 = vunpack.c.l.b16 %v1210
        %v1363 = vunpack.c.h.b16 %v1210
        %v1364 = vunpack.c.l.b16 %v1211
        %v1365 = vunpack.c.h.b16 %v1211
        %v1366 = vunpack.c.l.b16 %v1212
        %v1367 = vunpack.c.h.b16 %v1212
        %v1368 = vunpack.c.l.b16 %v1213
        %v1369 = vunpack.c.h.b16 %v1213
        %v1370 = vunpack.c.l.b16 %v1214
        %v1371 = vunpack.c.h.b16 %v1214
        %v1372 = vunpack.c.l.b16 %v1215
        %v1373 = vunpack.c.h.b16 %v1215
        %v1374 = vunpack.c.l.b16 %v1216
        %v1375 = vunpack.c.h.b16 %v1216
        %v1376 = vunpack.c.l.b16 %v1217
        %v1377 = vunpack.c.h.b16 %v1217
        %v1378 = vunpack.c.l.b16 %v1218
        %v1379 = vunpack.c.h.b16 %v1218
        %v1380 = vunpack.c.l.b16 %v1219
        %v1381 = vunpack.c.h.b16 %v1219
        %v1382 = vunpack.c.l.b16 %v1220
        %v1383 = vunpack.c.h.b16 %v1220
        %v1384 = vunpack.c.l.b16 %v1221
        %v1385 = vunpack.c.h.b16 %v1221
        %v1386 = vunpack.c.l.b16 %v1222
        %v1387 = vunpack.c.h.b16 %v1222
        %v1388 = vunpack.c.l.b16 %v1223
        %v1389 = vunpack.c.h.b16 %v1223
        %v1390 = vunpack.c.l.b16 %v1224
        %v1391 = vunpack.c.h.b16 %v1224
        %v1392 = vunpack.c.l.b16 %v1225
        %v1393 = vunpack.c.h.b16 %v1225
        %v1394 = vunpack.c.l.b16 %v1226
        %v1395 = vunpack.c.h.b16 %v1226
        %v1396 = vunpack.c.l.b16 %v1227
        %v1397 = vunpack.c.h.b16 %v1227
        %v1398 = vunpack.c.l.b16 %v1228
        %v1399 = vunpack.c.h.b16 %v1228
        %v1400 = vunpack.c.l.b16 %v1229
        %v1401 = vunpack.c.h.b16 %v1229
        %v1402 = vunpack.c.l.b16 %v1230
        %v1403 = vunpack.c.h.b16 %v1230
        %v1404 = vunpack.c.l.b16 %v1231
        %v1405 = vunpack.c.h.b16 %v1231
        %v1406 = vunpack.c.l.b16 %v1232
        %v1407 = vunpack.c.h.b16 %v1232
        %v1408 = vunpack.c.l.b16 %v1233
        %v1409 = vunpack.c.h.b16 %v1233
        %v1410 = vunpack.c.l.b16 %v1234
        %v1411 = vunpack.c.h.b16 %v1234
        %v1412 = vunpack.c.l.b16 %v1235
        %v1413 = vunpack.c.h.b16 %v1235
        %v1414 = vunpack.c.l.b16 %v1236
        %v1415 = vunpack.c.h.b16 %v1236
        %v1416 = vunpack.c.l.b16 %v1237
        %v1417 = vunpack.c.h.b16 %v1237
        %v1418 = vunpack.c.l.b16 %v1238
        %v1419 = vunpack.c.h.b16 %v1238
        %v1420 = vunpack.c.l.b16 %v1239
        %v1421 = vunpack.c.h.b16 %v1239
        %v1422 = vunpack.c.l.b16 %v1240
        %v1423 = vunpack.c.h.b16 %v1240
        %v1424 = vunpack.c.l.b16 %v1241
        %v1425 = vunpack.c.h.b16 %v1241
        %v1426 = vunpack.c.l.b16 %v1242
        %v1427 = vunpack.c.h.b16 %v1242
        %v1428 = vunpack.c.l.b16 %v1243
        %v1429 = vunpack.c.h.b16 %v1243
        %v1430 = vunpack.c.l.b16 %v1244
        %v1431 = vunpack.c.h.b16 %v1244
        %v1432 = vunpack.c.l.b16 %v1245
        %v1433 = vunpack.c.h.b16 %v1245
        %v1434 = vunpack.c.l.b16 %v1246
        %v1435 = vunpack.c.h.b16 %v1246
        %v1436 = vunpack.c.l.b16 %v1247
        %v1437 = vunpack.c.h.b16 %v1247
        %v1438 = vunpack.c.l.b16 %v1248
        %v1439 = vunpack.c.h.b16 %v1248
        %v1440 = vunpack.c.l.b16 %v1249
        %v1441 = vunpack.c.h.b16 %v1249
        %v1442 = vunpack.c.l.b16 %v1250
        %v1443 = vunpack.c.h.b16 %v1250
        %v1444 = vunpack.c.l.b16 %v1251
        %v1445 = vunpack.c.h.b16 %v1251
        %v1446 = vunpack.c.l.b16 %v1252
        %v1447 = vunpack.c.h.b16 %v1252
        %v1448 = vunpack.c.l.b16 %v1253
        %v1449 = vunpack.c.h.b16 %v1253
        %v1450 = vunpack.c.l.b16 %v1254
        %v1451 = vunpack.c.h.b16 %v1254
        %v1452 = vunpack.c.l.b16 %v1255
        %v1453 = vunpack.c.h.b16 %v1255
        %v1454 = vunpack.c.l.b16 %v1256
        %v1455 = vunpack.c.h.b16 %v1256
        %v1456 = vunpack.c.l.b16 %v1257
        %v1457 = vunpack.c.h.b16 %v1257
        %v1458 = vunpack.c.l.b16 %v1258
        %v1459 = vunpack.c.h.b16 %v1258
        %v1460 = vunpack.c.l.b16 %v1259
        %v1461 = vunpack.c.h.b16 %v1259
        %v1462 = vunpack.c.l.b16 %v1260
        %v1463 = vunpack.c.h.b16 %v1260
        %v1464 = vunpack.c.l.b16 %v1261
        %v1465 = vunpack.c.h.b16 %v1261
        %v1466 = vunpack.c.l.b16 %v1262
        %v1467 = vunpack.c.h.b16 %v1262
        %v1468 = vunpack.c.l.b16 %v1263
        %v1469 = vunpack.c.h.b16 %v1263
        %v1470 = vunpack.c.l.b16 %v1264
        %v1471 = vunpack.c.h.b16 %v1264
        %v1472 = vunpack.c.l.b16 %v1265
        %v1473 = vunpack.c.h.b16 %v1265
        %v1474 = vunpack.c.l.b16 %v1266
        %v1475 = vunpack.c.h.b16 %v1266
        %v1476 = vunpack.c.l.b16 %v1267
        %v1477 = vunpack.c.h.b16 %v1267
        %v1478 = vunpack.c.l.b16 %v1268
        %v1479 = vunpack.c.h.b16 %v1268
        %v1480 = vunpack.c.l.b16 %v1269
        %v1481 = vunpack.c.h.b16 %v1269
        %v1482 = vunpack.c.l.b16 %v1270
        %v1483 = vunpack.c.h.b16 %v1270
        %v1484 = vunpack.c.l.b16 %v1271
        %v1485 = vunpack.c.h.b16 %v1271
        %v1486 = vpack.c.b16 %v1362, %v1358
        %v1487 = vpack.c.b16 %v1363, %v1359
        %v1488 = vpack.c.b16 %v1364, %v1360
        %v1489 = vpack.c.b16 %v1365, %v1361
        %v1490 = vpack.c.b16 %v1370, %v1366
        %v1491 = vpack.c.b16 %v1371, %v1367
        %v1492 = vpack.c.b16 %v1372, %v1368
        %v1493 = vpack.c.b16 %v1373, %v1369
        %v1494 = vpack.c.b16 %v1378, %v1374
        %v1495 = vpack.c.b16 %v1379, %v1375
        %v1496 = vpack.c.b16 %v1380, %v1376
        %v1497 = vpack.c.b16 %v1381, %v1377
        %v1498 = vpack.c.b16 %v1386, %v1382
        %v1499 = vpack.c.b16 %v1387, %v1383
        %v1500 = vpack.c.b16 %v1388, %v1384
        %v1501 = vpack.c.b16 %v1389, %v1385
        %v1502 = vpack.c.b16 %v1394, %v1390
        %v1503 = vpack.c.b16 %v1395, %v1391
        %v1504 = vpack.c.b16 %v1396, %v1392
        %v1505 = vpack.c.b16 %v1397, %v1393
        %v1506 = vpack.c.b16 %v1402, %v1398
        %v1507 = vpack.c.b16 %v1403, %v1399
        %v1508 = vpack.c.b16 %v1404, %v1400
        %v1509 = vpack.c.b16 %v1405, %v1401
        %v1510 = vpack.c.b16 %v1410, %v1406
        %v1511 = vpack.c.b16 %v1411, %v1407
        %v1512 = vpack.c.b16 %v1412, %v1408
        %v1513 = vpack.c.b16 %v1413, %v1409
        %v1514 = vpack.c.b16 %v1418, %v1414
        %v1515 = vpack.c.b16 %v1419, %v1415
        %v1516 = vpack.c.b16 %v1420, %v1416
        %v1517 = vpack.c.b16 %v1421, %v1417
        %v1518 = vpack.c.b16 %v1426, %v1422
        %v1519 = vpack.c.b16 %v1427, %v1423
        %v1520 = vpack.c.b16 %v1428, %v1424
        %v1521 = vpack.c.b16 %v1429, %v1425
        %v1522 = vpack.c.b16 %v1434, %v1430
        %v1523 = vpack.c.b16 %v1435, %v1431
        %v1524 = vpack.c.b16 %v1436, %v1432
        %v1525 = vpack.c.b16 %v1437, %v1433
        %v1526 = vpack.c.b16 %v1442, %v1438
        %v1527 = vpack.c.b16 %v1443, %v1439
        %v1528 = vpack.c.b16 %v1444, %v1440
        %v1529 = vpack.c.b16 %v1445, %v1441
        %v1530 = vpack.c.b16 %v1450, %v1446
        %v1531 = vpack.c.b16 %v1451, %v1447
        %v1532 = vpack.c.b16 %v1452, %v1448
        %v1533 = vpack.c.b16 %v1453, %v1449
        %v1534 = vpack.c.b16 %v1458, %v1454
        %v1535 = vpack.c.b16 %v1459, %v1455
        %v1536 = vpack.c.b16 %v1460, %v1456
        %v1537 = vpack.c.b16 %v1461, %v1457
        %v1538 = vpack.c.b16 %v1466, %v1462
        %v1539 = vpack.c.b16 %v1467, %v1463
        %v1540 = vpack.c.b16 %v1468, %v1464
        %v1541 = vpack.c.b16 %v1469, %v1465
        %v1542 = vpack.c.b16 %v1474, %v1470
        %v1543 = vpack.c.b16 %v1475, %v1471
        %v1544 = vpack.c.b16 %v1476, %v1472
        %v1545 = vpack.c.b16 %v1477, %v1473
        %v1546 = vpack.c.b16 %v1482, %v1478
        %v1547 = vpack.c.b16 %v1483, %v1479
        %v1548 = vpack.c.b16 %v1484, %v1480
        %v1549 = vpack.c.b16 %v1485, %v1481
        %1614 = vmatprep.subr.bf16.mxu0 %v1515
        %1615 = vmatpush1.bf16.msra.mxu0 %v1514
        %1616 = vmatprep.subr.bf16.mxu0 %v1511
        %1617 = vmatpush1.bf16.msra.mxu0 %v1510
        %1618 = vmatprep.subr.bf16.mxu0 %v1507
        %1619 = vmatpush1.bf16.msra.mxu0 %v1506
        %1620 = vmatprep.subr.bf16.mxu0 %v1503
        %1621 = vmatpush1.bf16.msra.mxu0 %v1502
        %1622 = vmatprep.subr.bf16.mxu0 %v1499
        %1623 = vmatpush1.bf16.msra.mxu0 %v1498
        %1624 = vmatprep.subr.bf16.mxu0 %v1495
        %1625 = vmatpush1.bf16.msra.mxu0 %v1494
        %1626 = vmatprep.subr.bf16.mxu0 %v1491
        %1627 = vmatpush1.bf16.msra.mxu0 %v1490
        %1628 = vmatprep.subr.bf16.mxu0 %v1487
        %1629 = vmatpush1.bf16.msra.mxu0 %v1486
        %1630 = vmatprep.subr.bf16.mxu0 %v1547
        %1631 = vmatpush2.bf16.msra.mxu0 %v1546
        %1632 = vmatprep.subr.bf16.mxu0 %v1543
        %1633 = vmatpush2.bf16.msra.mxu0 %v1542
        %1634 = vmatprep.subr.bf16.mxu0 %v1539
        %1635 = vmatpush2.bf16.msra.mxu0 %v1538
        %1636 = vmatprep.subr.bf16.mxu0 %v1535
        %1637 = vmatpush2.bf16.msra.mxu0 %v1534
        %1638 = vmatprep.subr.bf16.mxu0 %v1531
        %1639 = vmatpush2.bf16.msra.mxu0 %v1530
        %1640 = vmatprep.subr.bf16.mxu0 %v1527
        %1641 = vmatpush2.bf16.msra.mxu0 %v1526
        %1642 = vmatprep.subr.bf16.mxu0 %v1523
        %1643 = vmatpush2.bf16.msra.mxu0 %v1522
        %1644 = vmatprep.subr.bf16.mxu0 %v1519
        %1645 = vmatpush2.bf16.msra.mxu0 %v1518
        %1646 = vmatprep.mubr.bf16.mxu0 %v780
        %1647 = vmatmul.mubr.bf16.gmra.mxu0 %v779
        %v1648 = vpop.f32.mrf.mxu0
        %v1649 = vadd.f32 %v1277, %v1648
        %v1650 = vpop.f32.mrf.mxu0
        %v1651 = vadd.f32 %v1281, %v1650
        %v1652 = vpop.f32.mrf.mxu0
        %v1653 = vadd.f32 %v1277, %v1652
        %v1654 = vpop.f32.mrf.mxu0
        %v1655 = vadd.f32 %v1281, %v1654
        %1656 = vmatprep.mubr.bf16.mxu0 %v782
        %1657 = vmatmul.mubr.bf16.gmra.mxu0 %v781
        %v1658 = vpop.f32.mrf.mxu0
        %v1659 = vadd.f32 %v1277, %v1658
        %v1660 = vpop.f32.mrf.mxu0
        %v1661 = vadd.f32 %v1281, %v1660
        %v1662 = vpop.f32.mrf.mxu0
        %v1663 = vadd.f32 %v1277, %v1662
        %v1664 = vpop.f32.mrf.mxu0
        %v1665 = vadd.f32 %v1281, %v1664
        %1666 = vmatprep.mubr.bf16.mxu0 %v784
        %1667 = vmatmul.mubr.bf16.gmra.mxu0 %v783
        %v1668 = vpop.f32.mrf.mxu0
        %v1669 = vadd.f32 %v1277, %v1668
        %v1670 = vpop.f32.mrf.mxu0
        %v1671 = vadd.f32 %v1281, %v1670
        %v1672 = vpop.f32.mrf.mxu0
        %v1673 = vadd.f32 %v1277, %v1672
        %v1674 = vpop.f32.mrf.mxu0
        %v1675 = vadd.f32 %v1281, %v1674
        %1676 = vmatprep.mubr.bf16.mxu0 %v786
        %1677 = vmatmul.mubr.bf16.gmra.mxu0 %v785
        %v1678 = vpop.f32.mrf.mxu0
        %v1679 = vadd.f32 %v1277, %v1678
        %v1680 = vpop.f32.mrf.mxu0
        %v1681 = vadd.f32 %v1281, %v1680
        %v1682 = vpop.f32.mrf.mxu0
        %v1683 = vadd.f32 %v1277, %v1682
        %v1684 = vpop.f32.mrf.mxu0
        %v1685 = vadd.f32 %v1281, %v1684
        %1686 = vmatprep.mubr.bf16.mxu0 %v788
        %1687 = vmatmul.mubr.bf16.gmra.mxu0 %v787
        %v1688 = vpop.f32.mrf.mxu0
        %v1689 = vadd.f32 %v1277, %v1688
        %v1690 = vpop.f32.mrf.mxu0
        %v1691 = vadd.f32 %v1281, %v1690
        %v1692 = vpop.f32.mrf.mxu0
        %v1693 = vadd.f32 %v1277, %v1692
        %v1694 = vpop.f32.mrf.mxu0
        %v1695 = vadd.f32 %v1281, %v1694
        %1696 = vmatprep.mubr.bf16.mxu0 %v790
        %1697 = vmatmul.mubr.bf16.gmra.mxu0 %v789
        %v1698 = vpop.f32.mrf.mxu0
        %v1699 = vadd.f32 %v1277, %v1698
        %v1700 = vpop.f32.mrf.mxu0
        %v1701 = vadd.f32 %v1281, %v1700
        %v1702 = vpop.f32.mrf.mxu0
        %v1703 = vadd.f32 %v1277, %v1702
        %v1704 = vpop.f32.mrf.mxu0
        %v1705 = vadd.f32 %v1281, %v1704
        %1706 = vmatprep.mubr.bf16.mxu0 %v792
        %1707 = vmatmul.mubr.bf16.gmra.mxu0 %v791
        %v1708 = vpop.f32.mrf.mxu0
        %v1709 = vadd.f32 %v1277, %v1708
        %v1710 = vpop.f32.mrf.mxu0
        %v1711 = vadd.f32 %v1281, %v1710
        %v1712 = vpop.f32.mrf.mxu0
        %v1713 = vadd.f32 %v1277, %v1712
        %v1714 = vpop.f32.mrf.mxu0
        %v1715 = vadd.f32 %v1281, %v1714
        %1716 = vmatprep.mubr.bf16.mxu0 %v794
        %1717 = vmatmul.mubr.bf16.gmra.mxu0 %v793
        %v1718 = vpop.f32.mrf.mxu0
        %v1719 = vadd.f32 %v1277, %v1718
        %v1720 = vpop.f32.mrf.mxu0
        %v1721 = vadd.f32 %v1281, %v1720
        %v1722 = vpop.f32.mrf.mxu0
        %v1723 = vadd.f32 %v1277, %v1722
        %v1724 = vpop.f32.mrf.mxu0
        %v1725 = vadd.f32 %v1281, %v1724
        %1726 = vmatprep.mubr.bf16.mxu0 %v796
        %1727 = vmatmul.mubr.bf16.gmra.mxu0 %v795
        %v1728 = vpop.f32.mrf.mxu0
        %v1729 = vadd.f32 %v1277, %v1728
        %v1730 = vpop.f32.mrf.mxu0
        %v1731 = vadd.f32 %v1281, %v1730
        %v1732 = vpop.f32.mrf.mxu0
        %v1733 = vadd.f32 %v1277, %v1732
        %v1734 = vpop.f32.mrf.mxu0
        %v1735 = vadd.f32 %v1281, %v1734
        %1736 = vmatprep.mubr.bf16.mxu0 %v798
        %1737 = vmatmul.mubr.bf16.gmra.mxu0 %v797
        %v1738 = vpop.f32.mrf.mxu0
        %v1739 = vadd.f32 %v1277, %v1738
        %v1740 = vpop.f32.mrf.mxu0
        %v1741 = vadd.f32 %v1281, %v1740
        %v1742 = vpop.f32.mrf.mxu0
        %v1743 = vadd.f32 %v1277, %v1742
        %v1744 = vpop.f32.mrf.mxu0
        %v1745 = vadd.f32 %v1281, %v1744
        %1746 = vmatprep.mubr.bf16.mxu0 %v800
        %1747 = vmatmul.mubr.bf16.gmra.mxu0 %v799
        %v1748 = vpop.f32.mrf.mxu0
        %v1749 = vadd.f32 %v1277, %v1748
        %v1750 = vpop.f32.mrf.mxu0
        %v1751 = vadd.f32 %v1281, %v1750
        %v1752 = vpop.f32.mrf.mxu0
        %v1753 = vadd.f32 %v1277, %v1752
        %v1754 = vpop.f32.mrf.mxu0
        %v1755 = vadd.f32 %v1281, %v1754
        %1756 = vmatprep.mubr.bf16.mxu0 %v802
        %1757 = vmatmul.mubr.bf16.gmra.mxu0 %v801
        %v1758 = vpop.f32.mrf.mxu0
        %v1759 = vadd.f32 %v1277, %v1758
        %v1760 = vpop.f32.mrf.mxu0
        %v1761 = vadd.f32 %v1281, %v1760
        %v1762 = vpop.f32.mrf.mxu0
        %v1763 = vadd.f32 %v1277, %v1762
        %v1764 = vpop.f32.mrf.mxu0
        %v1765 = vadd.f32 %v1281, %v1764
        %1766 = vmatprep.mubr.bf16.mxu0 %v804
        %1767 = vmatmul.mubr.bf16.gmra.mxu0 %v803
        %v1768 = vpop.f32.mrf.mxu0
        %v1769 = vadd.f32 %v1277, %v1768
        %v1770 = vpop.f32.mrf.mxu0
        %v1771 = vadd.f32 %v1281, %v1770
        %v1772 = vpop.f32.mrf.mxu0
        %v1773 = vadd.f32 %v1277, %v1772
        %v1774 = vpop.f32.mrf.mxu0
        %v1775 = vadd.f32 %v1281, %v1774
        %1776 = vmatprep.mubr.bf16.mxu0 %v806
        %1777 = vmatmul.mubr.bf16.gmra.mxu0 %v805
        %v1778 = vpop.f32.mrf.mxu0
        %v1779 = vadd.f32 %v1277, %v1778
        %v1780 = vpop.f32.mrf.mxu0
        %v1781 = vadd.f32 %v1281, %v1780
        %v1782 = vpop.f32.mrf.mxu0
        %v1783 = vadd.f32 %v1277, %v1782
        %v1784 = vpop.f32.mrf.mxu0
        %v1785 = vadd.f32 %v1281, %v1784
        %1786 = vmatprep.mubr.bf16.mxu0 %v808
        %1787 = vmatmul.mubr.bf16.gmra.mxu0 %v807
        %v1788 = vpop.f32.mrf.mxu0
        %v1789 = vadd.f32 %v1277, %v1788
        %v1790 = vpop.f32.mrf.mxu0
        %v1791 = vadd.f32 %v1281, %v1790
        %v1792 = vpop.f32.mrf.mxu0
        %v1793 = vadd.f32 %v1277, %v1792
        %v1794 = vpop.f32.mrf.mxu0
        %v1795 = vadd.f32 %v1281, %v1794
        %1796 = vmatprep.mubr.bf16.mxu0 %v810
        %1797 = vmatmul.mubr.bf16.gmra.mxu0 %v809
        %v1798 = vpop.f32.mrf.mxu0
        %v1799 = vadd.f32 %v1277, %v1798
        %v1800 = vpop.f32.mrf.mxu0
        %v1801 = vadd.f32 %v1281, %v1800
        %v1802 = vpop.f32.mrf.mxu0
        %v1803 = vadd.f32 %v1277, %v1802
        %v1804 = vpop.f32.mrf.mxu0
        %v1805 = vadd.f32 %v1281, %v1804
        %1806 = vdwg.mxu0
        %1807 = vmatprep.subr.bf16.mxu0 %v1517
        %1808 = vmatpush1.bf16.msra.mxu0 %v1516
        %1809 = vmatprep.subr.bf16.mxu0 %v1513
        %1810 = vmatpush1.bf16.msra.mxu0 %v1512
        %1811 = vmatprep.subr.bf16.mxu0 %v1509
        %1812 = vmatpush1.bf16.msra.mxu0 %v1508
        %1813 = vmatprep.subr.bf16.mxu0 %v1505
        %1814 = vmatpush1.bf16.msra.mxu0 %v1504
        %1815 = vmatprep.subr.bf16.mxu0 %v1501
        %1816 = vmatpush1.bf16.msra.mxu0 %v1500
        %1817 = vmatprep.subr.bf16.mxu0 %v1497
        %1818 = vmatpush1.bf16.msra.mxu0 %v1496
        %1819 = vmatprep.subr.bf16.mxu0 %v1493
        %1820 = vmatpush1.bf16.msra.mxu0 %v1492
        %1821 = vmatprep.subr.bf16.mxu0 %v1489
        %1822 = vmatpush1.bf16.msra.mxu0 %v1488
        %1823 = vmatprep.subr.bf16.mxu0 %v1549
        %1824 = vmatpush2.bf16.msra.mxu0 %v1548
        %1825 = vmatprep.subr.bf16.mxu0 %v1545
        %1826 = vmatpush2.bf16.msra.mxu0 %v1544
        %1827 = vmatprep.subr.bf16.mxu0 %v1541
        %1828 = vmatpush2.bf16.msra.mxu0 %v1540
        %1829 = vmatprep.subr.bf16.mxu0 %v1537
        %1830 = vmatpush2.bf16.msra.mxu0 %v1536
        %1831 = vmatprep.subr.bf16.mxu0 %v1533
        %1832 = vmatpush2.bf16.msra.mxu0 %v1532
        %1833 = vmatprep.subr.bf16.mxu0 %v1529
        %1834 = vmatpush2.bf16.msra.mxu0 %v1528
        %1835 = vmatprep.subr.bf16.mxu0 %v1525
        %1836 = vmatpush2.bf16.msra.mxu0 %v1524
        %1837 = vmatprep.subr.bf16.mxu0 %v1521
        %1838 = vmatpush2.bf16.msra.mxu0 %v1520
        %1839 = vmatprep.mubr.bf16.mxu0 %v780
        %1840 = vmatmul.mubr.bf16.gmra.mxu0 %v779
        %v1841 = vpop.f32.mrf.mxu0
        %v1842 = vadd.f32 %v1285, %v1841
        %v1843 = vpop.f32.mrf.mxu0
        %v1844 = vadd.f32 %v1289, %v1843
        %v1845 = vpop.f32.mrf.mxu0
        %v1846 = vadd.f32 %v1285, %v1845
        %v1847 = vpop.f32.mrf.mxu0
        %v1848 = vadd.f32 %v1289, %v1847
        %1849 = vmatprep.mubr.bf16.mxu0 %v782
        %1850 = vmatmul.mubr.bf16.gmra.mxu0 %v781
        %v1851 = vpop.f32.mrf.mxu0
        %v1852 = vadd.f32 %v1285, %v1851
        %v1853 = vpop.f32.mrf.mxu0
        %v1854 = vadd.f32 %v1289, %v1853
        %v1855 = vpop.f32.mrf.mxu0
        %v1856 = vadd.f32 %v1285, %v1855
        %v1857 = vpop.f32.mrf.mxu0
        %v1858 = vadd.f32 %v1289, %v1857
        %1859 = vmatprep.mubr.bf16.mxu0 %v784
        %1860 = vmatmul.mubr.bf16.gmra.mxu0 %v783
        %v1861 = vpop.f32.mrf.mxu0
        %v1862 = vadd.f32 %v1285, %v1861
        %v1863 = vpop.f32.mrf.mxu0
        %v1864 = vadd.f32 %v1289, %v1863
        %v1865 = vpop.f32.mrf.mxu0
        %v1866 = vadd.f32 %v1285, %v1865
        %v1867 = vpop.f32.mrf.mxu0
        %v1868 = vadd.f32 %v1289, %v1867
        %1869 = vmatprep.mubr.bf16.mxu0 %v786
        %1870 = vmatmul.mubr.bf16.gmra.mxu0 %v785
        %v1871 = vpop.f32.mrf.mxu0
        %v1872 = vadd.f32 %v1285, %v1871
        %v1873 = vpop.f32.mrf.mxu0
        %v1874 = vadd.f32 %v1289, %v1873
        %v1875 = vpop.f32.mrf.mxu0
        %v1876 = vadd.f32 %v1285, %v1875
        %v1877 = vpop.f32.mrf.mxu0
        %v1878 = vadd.f32 %v1289, %v1877
        %1879 = vmatprep.mubr.bf16.mxu0 %v788
        %1880 = vmatmul.mubr.bf16.gmra.mxu0 %v787
        %v1881 = vpop.f32.mrf.mxu0
        %v1882 = vadd.f32 %v1285, %v1881
        %v1883 = vpop.f32.mrf.mxu0
        %v1884 = vadd.f32 %v1289, %v1883
        %v1885 = vpop.f32.mrf.mxu0
        %v1886 = vadd.f32 %v1285, %v1885
        %v1887 = vpop.f32.mrf.mxu0
        %v1888 = vadd.f32 %v1289, %v1887
        %1889 = vmatprep.mubr.bf16.mxu0 %v790
        %1890 = vmatmul.mubr.bf16.gmra.mxu0 %v789
        %v1891 = vpop.f32.mrf.mxu0
        %v1892 = vadd.f32 %v1285, %v1891
        %v1893 = vpop.f32.mrf.mxu0
        %v1894 = vadd.f32 %v1289, %v1893
        %v1895 = vpop.f32.mrf.mxu0
        %v1896 = vadd.f32 %v1285, %v1895
        %v1897 = vpop.f32.mrf.mxu0
        %v1898 = vadd.f32 %v1289, %v1897
        %1899 = vmatprep.mubr.bf16.mxu0 %v792
        %1900 = vmatmul.mubr.bf16.gmra.mxu0 %v791
        %v1901 = vpop.f32.mrf.mxu0
        %v1902 = vadd.f32 %v1285, %v1901
        %v1903 = vpop.f32.mrf.mxu0
        %v1904 = vadd.f32 %v1289, %v1903
        %v1905 = vpop.f32.mrf.mxu0
        %v1906 = vadd.f32 %v1285, %v1905
        %v1907 = vpop.f32.mrf.mxu0
        %v1908 = vadd.f32 %v1289, %v1907
        %1909 = vmatprep.mubr.bf16.mxu0 %v794
        %1910 = vmatmul.mubr.bf16.gmra.mxu0 %v793
        %v1911 = vpop.f32.mrf.mxu0
        %v1912 = vadd.f32 %v1285, %v1911
        %v1913 = vpop.f32.mrf.mxu0
        %v1914 = vadd.f32 %v1289, %v1913
        %v1915 = vpop.f32.mrf.mxu0
        %v1916 = vadd.f32 %v1285, %v1915
        %v1917 = vpop.f32.mrf.mxu0
        %v1918 = vadd.f32 %v1289, %v1917
        %1919 = vmatprep.mubr.bf16.mxu0 %v796
        %1920 = vmatmul.mubr.bf16.gmra.mxu0 %v795
        %v1921 = vpop.f32.mrf.mxu0
        %v1922 = vadd.f32 %v1285, %v1921
        %v1923 = vpop.f32.mrf.mxu0
        %v1924 = vadd.f32 %v1289, %v1923
        %v1925 = vpop.f32.mrf.mxu0
        %v1926 = vadd.f32 %v1285, %v1925
        %v1927 = vpop.f32.mrf.mxu0
        %v1928 = vadd.f32 %v1289, %v1927
        %1929 = vmatprep.mubr.bf16.mxu0 %v798
        %1930 = vmatmul.mubr.bf16.gmra.mxu0 %v797
        %v1931 = vpop.f32.mrf.mxu0
        %v1932 = vadd.f32 %v1285, %v1931
        %v1933 = vpop.f32.mrf.mxu0
        %v1934 = vadd.f32 %v1289, %v1933
        %v1935 = vpop.f32.mrf.mxu0
        %v1936 = vadd.f32 %v1285, %v1935
        %v1937 = vpop.f32.mrf.mxu0
        %v1938 = vadd.f32 %v1289, %v1937
        %1939 = vmatprep.mubr.bf16.mxu0 %v800
        %1940 = vmatmul.mubr.bf16.gmra.mxu0 %v799
        %v1941 = vpop.f32.mrf.mxu0
        %v1942 = vadd.f32 %v1285, %v1941
        %v1943 = vpop.f32.mrf.mxu0
        %v1944 = vadd.f32 %v1289, %v1943
        %v1945 = vpop.f32.mrf.mxu0
        %v1946 = vadd.f32 %v1285, %v1945
        %v1947 = vpop.f32.mrf.mxu0
        %v1948 = vadd.f32 %v1289, %v1947
        %1949 = vmatprep.mubr.bf16.mxu0 %v802
        %1950 = vmatmul.mubr.bf16.gmra.mxu0 %v801
        %v1951 = vpop.f32.mrf.mxu0
        %v1952 = vadd.f32 %v1285, %v1951
        %v1953 = vpop.f32.mrf.mxu0
        %v1954 = vadd.f32 %v1289, %v1953
        %v1955 = vpop.f32.mrf.mxu0
        %v1956 = vadd.f32 %v1285, %v1955
        %v1957 = vpop.f32.mrf.mxu0
        %v1958 = vadd.f32 %v1289, %v1957
        %1959 = vmatprep.mubr.bf16.mxu0 %v804
        %1960 = vmatmul.mubr.bf16.gmra.mxu0 %v803
        %v1961 = vpop.f32.mrf.mxu0
        %v1962 = vadd.f32 %v1285, %v1961
        %v1963 = vpop.f32.mrf.mxu0
        %v1964 = vadd.f32 %v1289, %v1963
        %v1965 = vpop.f32.mrf.mxu0
        %v1966 = vadd.f32 %v1285, %v1965
        %v1967 = vpop.f32.mrf.mxu0
        %v1968 = vadd.f32 %v1289, %v1967
        %1969 = vmatprep.mubr.bf16.mxu0 %v806
        %1970 = vmatmul.mubr.bf16.gmra.mxu0 %v805
        %v1971 = vpop.f32.mrf.mxu0
        %v1972 = vadd.f32 %v1285, %v1971
        %v1973 = vpop.f32.mrf.mxu0
        %v1974 = vadd.f32 %v1289, %v1973
        %v1975 = vpop.f32.mrf.mxu0
        %v1976 = vadd.f32 %v1285, %v1975
        %v1977 = vpop.f32.mrf.mxu0
        %v1978 = vadd.f32 %v1289, %v1977
        %1979 = vmatprep.mubr.bf16.mxu0 %v808
        %1980 = vmatmul.mubr.bf16.gmra.mxu0 %v807
        %v1981 = vpop.f32.mrf.mxu0
        %v1982 = vadd.f32 %v1285, %v1981
        %v1983 = vpop.f32.mrf.mxu0
        %v1984 = vadd.f32 %v1289, %v1983
        %v1985 = vpop.f32.mrf.mxu0
        %v1986 = vadd.f32 %v1285, %v1985
        %v1987 = vpop.f32.mrf.mxu0
        %v1988 = vadd.f32 %v1289, %v1987
        %1989 = vmatprep.mubr.bf16.mxu0 %v810
        %1990 = vmatmul.mubr.bf16.gmra.mxu0 %v809
        %v1991 = vpop.f32.mrf.mxu0
        %v1992 = vadd.f32 %v1285, %v1991
        %v1993 = vpop.f32.mrf.mxu0
        %v1994 = vadd.f32 %v1289, %v1993
        %v1995 = vpop.f32.mrf.mxu0
        %v1996 = vadd.f32 %v1285, %v1995
        %v1997 = vpop.f32.mrf.mxu0
        %v1998 = vadd.f32 %v1289, %v1997
        %1999 = vdwg.mxu0
        %v2000 = vpack.c.bf16 %v1054, %v1050
        %v2001 = vpack.c.bf16 %v1064, %v1060
        %v2002 = vpack.c.bf16 %v1074, %v1070
        %v2003 = vpack.c.bf16 %v1084, %v1080
        %v2004 = vpack.c.bf16 %v1094, %v1090
        %v2005 = vpack.c.bf16 %v1104, %v1100
        %v2006 = vpack.c.bf16 %v1114, %v1110
        %v2007 = vpack.c.bf16 %v1124, %v1120
        %v2008 = vpack.c.bf16 %v1134, %v1130
        %v2009 = vpack.c.bf16 %v1144, %v1140
        %v2010 = vpack.c.bf16 %v1154, %v1150
        %v2011 = vpack.c.bf16 %v1164, %v1160
        %v2012 = vpack.c.bf16 %v1174, %v1170
        %v2013 = vpack.c.bf16 %v1184, %v1180
        %v2014 = vpack.c.bf16 %v1194, %v1190
        %v2015 = vpack.c.bf16 %v1204, %v1200
        %v2032 = vunpack.c.l.b16 %v2000
        %v2033 = vunpack.c.h.b16 %v2000
        %v2034 = vunpack.c.l.b16 %v2001
        %v2035 = vunpack.c.h.b16 %v2001
        %v2036 = vunpack.c.l.b16 %v2002
        %v2037 = vunpack.c.h.b16 %v2002
        %v2038 = vunpack.c.l.b16 %v2003
        %v2039 = vunpack.c.h.b16 %v2003
        %v2040 = vunpack.c.l.b16 %v2004
        %v2041 = vunpack.c.h.b16 %v2004
        %v2042 = vunpack.c.l.b16 %v2005
        %v2043 = vunpack.c.h.b16 %v2005
        %v2044 = vunpack.c.l.b16 %v2006
        %v2045 = vunpack.c.h.b16 %v2006
        %v2046 = vunpack.c.l.b16 %v2007
        %v2047 = vunpack.c.h.b16 %v2007
        %v2048 = vunpack.c.l.b16 %v2008
        %v2049 = vunpack.c.h.b16 %v2008
        %v2050 = vunpack.c.l.b16 %v2009
        %v2051 = vunpack.c.h.b16 %v2009
        %v2052 = vunpack.c.l.b16 %v2010
        %v2053 = vunpack.c.h.b16 %v2010
        %v2054 = vunpack.c.l.b16 %v2011
        %v2055 = vunpack.c.h.b16 %v2011
        %v2056 = vunpack.c.l.b16 %v2012
        %v2057 = vunpack.c.h.b16 %v2012
        %v2058 = vunpack.c.l.b16 %v2013
        %v2059 = vunpack.c.h.b16 %v2013
        %v2060 = vunpack.c.l.b16 %v2014
        %v2061 = vunpack.c.h.b16 %v2014
        %v2062 = vunpack.c.l.b16 %v2015
        %v2063 = vunpack.c.h.b16 %v2015
        %v2064 = vpack.c.b16 %v2032, %v2032
        %v2065 = vpack.c.b16 %v2033, %v2033
        %v2066 = vpack.c.b16 %v2034, %v2034
        %v2067 = vpack.c.b16 %v2035, %v2035
        %v2068 = vpack.c.b16 %v2036, %v2036
        %v2069 = vpack.c.b16 %v2037, %v2037
        %v2070 = vpack.c.b16 %v2038, %v2038
        %v2071 = vpack.c.b16 %v2039, %v2039
        %v2072 = vpack.c.b16 %v2040, %v2040
        %v2073 = vpack.c.b16 %v2041, %v2041
        %v2074 = vpack.c.b16 %v2042, %v2042
        %v2075 = vpack.c.b16 %v2043, %v2043
        %v2076 = vpack.c.b16 %v2044, %v2044
        %v2077 = vpack.c.b16 %v2045, %v2045
        %v2078 = vpack.c.b16 %v2046, %v2046
        %v2079 = vpack.c.b16 %v2047, %v2047
        %v2080 = vpack.c.b16 %v2048, %v2048
        %v2081 = vpack.c.b16 %v2049, %v2049
        %v2082 = vpack.c.b16 %v2050, %v2050
        %v2083 = vpack.c.b16 %v2051, %v2051
        %v2084 = vpack.c.b16 %v2052, %v2052
        %v2085 = vpack.c.b16 %v2053, %v2053
        %v2086 = vpack.c.b16 %v2054, %v2054
        %v2087 = vpack.c.b16 %v2055, %v2055
        %v2088 = vpack.c.b16 %v2056, %v2056
        %v2089 = vpack.c.b16 %v2057, %v2057
        %v2090 = vpack.c.b16 %v2058, %v2058
        %v2091 = vpack.c.b16 %v2059, %v2059
        %v2092 = vpack.c.b16 %v2060, %v2060
        %v2093 = vpack.c.b16 %v2061, %v2061
        %v2094 = vpack.c.b16 %v2062, %v2062
        %v2095 = vpack.c.b16 %v2063, %v2063
        %vm2128 = vcmask 257024
        %2129 = vst.msk [vmem:[#allocation2] sm:$0xf] %vm2128, %v2064
        %2130 = vst.msk [vmem:[#allocation2 + $0x4] sm:$0xf] %vm2128, %v2065
        %2131 = vst.msk [vmem:[#allocation2 + $0x8] sm:$0xf] %vm2128, %v2066
        %2132 = vst.msk [vmem:[#allocation2 + $0xc] sm:$0xf] %vm2128, %v2067
        %2133 = vst.msk [vmem:[#allocation2 + $0x10] sm:$0xf] %vm2128, %v2068
        %2134 = vst.msk [vmem:[#allocation2 + $0x14] sm:$0xf] %vm2128, %v2069
        %2135 = vst.msk [vmem:[#allocation2 + $0x18] sm:$0xf] %vm2128, %v2070
        %2136 = vst.msk [vmem:[#allocation2 + $0x1c] sm:$0xf] %vm2128, %v2071
        %2137 = vst.msk [vmem:[#allocation2 + $0x20] sm:$0xf] %vm2128, %v2072
        %2138 = vst.msk [vmem:[#allocation2 + $0x24] sm:$0xf] %vm2128, %v2073
        %2139 = vst.msk [vmem:[#allocation2 + $0x28] sm:$0xf] %vm2128, %v2074
        %2140 = vst.msk [vmem:[#allocation2 + $0x2c] sm:$0xf] %vm2128, %v2075
        %2141 = vst.msk [vmem:[#allocation2 + $0x30] sm:$0xf] %vm2128, %v2076
        %2142 = vst.msk [vmem:[#allocation2 + $0x34] sm:$0xf] %vm2128, %v2077
        %2143 = vst.msk [vmem:[#allocation2 + $0x38] sm:$0xf] %vm2128, %v2078
        %2144 = vst.msk [vmem:[#allocation2 + $0x3c] sm:$0xf] %vm2128, %v2079
        %2145 = vst.msk [vmem:[#allocation2 + $0x40] sm:$0xf] %vm2128, %v2080
        %2146 = vst.msk [vmem:[#allocation2 + $0x44] sm:$0xf] %vm2128, %v2081
        %2147 = vst.msk [vmem:[#allocation2 + $0x48] sm:$0xf] %vm2128, %v2082
        %2148 = vst.msk [vmem:[#allocation2 + $0x4c] sm:$0xf] %vm2128, %v2083
        %2149 = vst.msk [vmem:[#allocation2 + $0x50] sm:$0xf] %vm2128, %v2084
        %2150 = vst.msk [vmem:[#allocation2 + $0x54] sm:$0xf] %vm2128, %v2085
        %2151 = vst.msk [vmem:[#allocation2 + $0x58] sm:$0xf] %vm2128, %v2086
        %2152 = vst.msk [vmem:[#allocation2 + $0x5c] sm:$0xf] %vm2128, %v2087
        %2153 = vst.msk [vmem:[#allocation2 + $0x60] sm:$0xf] %vm2128, %v2088
        %2154 = vst.msk [vmem:[#allocation2 + $0x64] sm:$0xf] %vm2128, %v2089
        %2155 = vst.msk [vmem:[#allocation2 + $0x68] sm:$0xf] %vm2128, %v2090
        %2156 = vst.msk [vmem:[#allocation2 + $0x6c] sm:$0xf] %vm2128, %v2091
        %2157 = vst.msk [vmem:[#allocation2 + $0x70] sm:$0xf] %vm2128, %v2092
        %2158 = vst.msk [vmem:[#allocation2 + $0x74] sm:$0xf] %vm2128, %v2093
        %2159 = vst.msk [vmem:[#allocation2 + $0x78] sm:$0xf] %vm2128, %v2094
        %2160 = vst.msk [vmem:[#allocation2 + $0x7c] sm:$0xf] %vm2128, %v2095
        %v2161 = vpack.c.bf16 %v1653, %v1649
        %v2162 = vpack.c.bf16 %v1663, %v1659
        %v2163 = vpack.c.bf16 %v1673, %v1669
        %v2164 = vpack.c.bf16 %v1683, %v1679
        %v2165 = vpack.c.bf16 %v1693, %v1689
        %v2166 = vpack.c.bf16 %v1703, %v1699
        %v2167 = vpack.c.bf16 %v1713, %v1709
        %v2168 = vpack.c.bf16 %v1723, %v1719
        %v2169 = vpack.c.bf16 %v1733, %v1729
        %v2170 = vpack.c.bf16 %v1743, %v1739
        %v2171 = vpack.c.bf16 %v1753, %v1749
        %v2172 = vpack.c.bf16 %v1763, %v1759
        %v2173 = vpack.c.bf16 %v1773, %v1769
        %v2174 = vpack.c.bf16 %v1783, %v1779
        %v2175 = vpack.c.bf16 %v1793, %v1789
        %v2176 = vpack.c.bf16 %v1803, %v1799
        %v2193 = vunpack.c.l.b16 %v2161
        %v2194 = vunpack.c.h.b16 %v2161
        %v2195 = vunpack.c.l.b16 %v2162
        %v2196 = vunpack.c.h.b16 %v2162
        %v2197 = vunpack.c.l.b16 %v2163
        %v2198 = vunpack.c.h.b16 %v2163
        %v2199 = vunpack.c.l.b16 %v2164
        %v2200 = vunpack.c.h.b16 %v2164
        %v2201 = vunpack.c.l.b16 %v2165
        %v2202 = vunpack.c.h.b16 %v2165
        %v2203 = vunpack.c.l.b16 %v2166
        %v2204 = vunpack.c.h.b16 %v2166
        %v2205 = vunpack.c.l.b16 %v2167
        %v2206 = vunpack.c.h.b16 %v2167
        %v2207 = vunpack.c.l.b16 %v2168
        %v2208 = vunpack.c.h.b16 %v2168
        %v2209 = vunpack.c.l.b16 %v2169
        %v2210 = vunpack.c.h.b16 %v2169
        %v2211 = vunpack.c.l.b16 %v2170
        %v2212 = vunpack.c.h.b16 %v2170
        %v2213 = vunpack.c.l.b16 %v2171
        %v2214 = vunpack.c.h.b16 %v2171
        %v2215 = vunpack.c.l.b16 %v2172
        %v2216 = vunpack.c.h.b16 %v2172
        %v2217 = vunpack.c.l.b16 %v2173
        %v2218 = vunpack.c.h.b16 %v2173
        %v2219 = vunpack.c.l.b16 %v2174
        %v2220 = vunpack.c.h.b16 %v2174
        %v2221 = vunpack.c.l.b16 %v2175
        %v2222 = vunpack.c.h.b16 %v2175
        %v2223 = vunpack.c.l.b16 %v2176
        %v2224 = vunpack.c.h.b16 %v2176
        %v2225 = vpack.c.b16 %v2193, %v2193
        %v2226 = vpack.c.b16 %v2194, %v2194
        %v2227 = vpack.c.b16 %v2195, %v2195
        %v2228 = vpack.c.b16 %v2196, %v2196
        %v2229 = vpack.c.b16 %v2197, %v2197
        %v2230 = vpack.c.b16 %v2198, %v2198
        %v2231 = vpack.c.b16 %v2199, %v2199
        %v2232 = vpack.c.b16 %v2200, %v2200
        %v2233 = vpack.c.b16 %v2201, %v2201
        %v2234 = vpack.c.b16 %v2202, %v2202
        %v2235 = vpack.c.b16 %v2203, %v2203
        %v2236 = vpack.c.b16 %v2204, %v2204
        %v2237 = vpack.c.b16 %v2205, %v2205
        %v2238 = vpack.c.b16 %v2206, %v2206
        %v2239 = vpack.c.b16 %v2207, %v2207
        %v2240 = vpack.c.b16 %v2208, %v2208
        %v2241 = vpack.c.b16 %v2209, %v2209
        %v2242 = vpack.c.b16 %v2210, %v2210
        %v2243 = vpack.c.b16 %v2211, %v2211
        %v2244 = vpack.c.b16 %v2212, %v2212
        %v2245 = vpack.c.b16 %v2213, %v2213
        %v2246 = vpack.c.b16 %v2214, %v2214
        %v2247 = vpack.c.b16 %v2215, %v2215
        %v2248 = vpack.c.b16 %v2216, %v2216
        %v2249 = vpack.c.b16 %v2217, %v2217
        %v2250 = vpack.c.b16 %v2218, %v2218
        %v2251 = vpack.c.b16 %v2219, %v2219
        %v2252 = vpack.c.b16 %v2220, %v2220
        %v2253 = vpack.c.b16 %v2221, %v2221
        %v2254 = vpack.c.b16 %v2222, %v2222
        %v2255 = vpack.c.b16 %v2223, %v2223
        %v2256 = vpack.c.b16 %v2224, %v2224
        %2289 = vst.msk [vmem:[#allocation3] sm:$0xf] %vm2128, %v2225
        %2290 = vst.msk [vmem:[#allocation3 + $0x4] sm:$0xf] %vm2128, %v2226
        %2291 = vst.msk [vmem:[#allocation3 + $0x8] sm:$0xf] %vm2128, %v2227
        %2292 = vst.msk [vmem:[#allocation3 + $0xc] sm:$0xf] %vm2128, %v2228
        %2293 = vst.msk [vmem:[#allocation3 + $0x10] sm:$0xf] %vm2128, %v2229
        %2294 = vst.msk [vmem:[#allocation3 + $0x14] sm:$0xf] %vm2128, %v2230
        %2295 = vst.msk [vmem:[#allocation3 + $0x18] sm:$0xf] %vm2128, %v2231
        %2296 = vst.msk [vmem:[#allocation3 + $0x1c] sm:$0xf] %vm2128, %v2232
        %2297 = vst.msk [vmem:[#allocation3 + $0x20] sm:$0xf] %vm2128, %v2233
        %2298 = vst.msk [vmem:[#allocation3 + $0x24] sm:$0xf] %vm2128, %v2234
        %2299 = vst.msk [vmem:[#allocation3 + $0x28] sm:$0xf] %vm2128, %v2235
        %2300 = vst.msk [vmem:[#allocation3 + $0x2c] sm:$0xf] %vm2128, %v2236
        %2301 = vst.msk [vmem:[#allocation3 + $0x30] sm:$0xf] %vm2128, %v2237
        %2302 = vst.msk [vmem:[#allocation3 + $0x34] sm:$0xf] %vm2128, %v2238
        %2303 = vst.msk [vmem:[#allocation3 + $0x38] sm:$0xf] %vm2128, %v2239
        %2304 = vst.msk [vmem:[#allocation3 + $0x3c] sm:$0xf] %vm2128, %v2240
        %2305 = vst.msk [vmem:[#allocation3 + $0x40] sm:$0xf] %vm2128, %v2241
        %2306 = vst.msk [vmem:[#allocation3 + $0x44] sm:$0xf] %vm2128, %v2242
        %2307 = vst.msk [vmem:[#allocation3 + $0x48] sm:$0xf] %vm2128, %v2243
        %2308 = vst.msk [vmem:[#allocation3 + $0x4c] sm:$0xf] %vm2128, %v2244
        %2309 = vst.msk [vmem:[#allocation3 + $0x50] sm:$0xf] %vm2128, %v2245
        %2310 = vst.msk [vmem:[#allocation3 + $0x54] sm:$0xf] %vm2128, %v2246
        %2311 = vst.msk [vmem:[#allocation3 + $0x58] sm:$0xf] %vm2128, %v2247
        %2312 = vst.msk [vmem:[#allocation3 + $0x5c] sm:$0xf] %vm2128, %v2248
        %2313 = vst.msk [vmem:[#allocation3 + $0x60] sm:$0xf] %vm2128, %v2249
        %2314 = vst.msk [vmem:[#allocation3 + $0x64] sm:$0xf] %vm2128, %v2250
        %2315 = vst.msk [vmem:[#allocation3 + $0x68] sm:$0xf] %vm2128, %v2251
        %2316 = vst.msk [vmem:[#allocation3 + $0x6c] sm:$0xf] %vm2128, %v2252
        %2317 = vst.msk [vmem:[#allocation3 + $0x70] sm:$0xf] %vm2128, %v2253
        %2318 = vst.msk [vmem:[#allocation3 + $0x74] sm:$0xf] %vm2128, %v2254
        %2319 = vst.msk [vmem:[#allocation3 + $0x78] sm:$0xf] %vm2128, %v2255
        %2320 = vst.msk [vmem:[#allocation3 + $0x7c] sm:$0xf] %vm2128, %v2256
        %v2321 = vpack.c.bf16 %v1846, %v1842
        %v2322 = vpack.c.bf16 %v1856, %v1852
        %v2323 = vpack.c.bf16 %v1866, %v1862
        %v2324 = vpack.c.bf16 %v1876, %v1872
        %v2325 = vpack.c.bf16 %v1886, %v1882
        %v2326 = vpack.c.bf16 %v1896, %v1892
        %v2327 = vpack.c.bf16 %v1906, %v1902
        %v2328 = vpack.c.bf16 %v1916, %v1912
        %v2329 = vpack.c.bf16 %v1926, %v1922
        %v2330 = vpack.c.bf16 %v1936, %v1932
        %v2331 = vpack.c.bf16 %v1946, %v1942
        %v2332 = vpack.c.bf16 %v1956, %v1952
        %v2333 = vpack.c.bf16 %v1966, %v1962
        %v2334 = vpack.c.bf16 %v1976, %v1972
        %v2335 = vpack.c.bf16 %v1986, %v1982
        %v2336 = vpack.c.bf16 %v1996, %v1992
        %v2353 = vunpack.c.l.b16 %v2321
        %v2354 = vunpack.c.h.b16 %v2321
        %v2355 = vunpack.c.l.b16 %v2322
        %v2356 = vunpack.c.h.b16 %v2322
        %v2357 = vunpack.c.l.b16 %v2323
        %v2358 = vunpack.c.h.b16 %v2323
        %v2359 = vunpack.c.l.b16 %v2324
        %v2360 = vunpack.c.h.b16 %v2324
        %v2361 = vunpack.c.l.b16 %v2325
        %v2362 = vunpack.c.h.b16 %v2325
        %v2363 = vunpack.c.l.b16 %v2326
        %v2364 = vunpack.c.h.b16 %v2326
        %v2365 = vunpack.c.l.b16 %v2327
        %v2366 = vunpack.c.h.b16 %v2327
        %v2367 = vunpack.c.l.b16 %v2328
        %v2368 = vunpack.c.h.b16 %v2328
        %v2369 = vunpack.c.l.b16 %v2329
        %v2370 = vunpack.c.h.b16 %v2329
        %v2371 = vunpack.c.l.b16 %v2330
        %v2372 = vunpack.c.h.b16 %v2330
        %v2373 = vunpack.c.l.b16 %v2331
        %v2374 = vunpack.c.h.b16 %v2331
        %v2375 = vunpack.c.l.b16 %v2332
        %v2376 = vunpack.c.h.b16 %v2332
        %v2377 = vunpack.c.l.b16 %v2333
        %v2378 = vunpack.c.h.b16 %v2333
        %v2379 = vunpack.c.l.b16 %v2334
        %v2380 = vunpack.c.h.b16 %v2334
        %v2381 = vunpack.c.l.b16 %v2335
        %v2382 = vunpack.c.h.b16 %v2335
        %v2383 = vunpack.c.l.b16 %v2336
        %v2384 = vunpack.c.h.b16 %v2336
        %v2385 = vpack.c.b16 %v2353, %v2353
        %v2386 = vpack.c.b16 %v2354, %v2354
        %v2387 = vpack.c.b16 %v2355, %v2355
        %v2388 = vpack.c.b16 %v2356, %v2356
        %v2389 = vpack.c.b16 %v2357, %v2357
        %v2390 = vpack.c.b16 %v2358, %v2358
        %v2391 = vpack.c.b16 %v2359, %v2359
        %v2392 = vpack.c.b16 %v2360, %v2360
        %v2393 = vpack.c.b16 %v2361, %v2361
        %v2394 = vpack.c.b16 %v2362, %v2362
        %v2395 = vpack.c.b16 %v2363, %v2363
        %v2396 = vpack.c.b16 %v2364, %v2364
        %v2397 = vpack.c.b16 %v2365, %v2365
        %v2398 = vpack.c.b16 %v2366, %v2366
        %v2399 = vpack.c.b16 %v2367, %v2367
        %v2400 = vpack.c.b16 %v2368, %v2368
        %v2401 = vpack.c.b16 %v2369, %v2369
        %v2402 = vpack.c.b16 %v2370, %v2370
        %v2403 = vpack.c.b16 %v2371, %v2371
        %v2404 = vpack.c.b16 %v2372, %v2372
        %v2405 = vpack.c.b16 %v2373, %v2373
        %v2406 = vpack.c.b16 %v2374, %v2374
        %v2407 = vpack.c.b16 %v2375, %v2375
        %v2408 = vpack.c.b16 %v2376, %v2376
        %v2409 = vpack.c.b16 %v2377, %v2377
        %v2410 = vpack.c.b16 %v2378, %v2378
        %v2411 = vpack.c.b16 %v2379, %v2379
        %v2412 = vpack.c.b16 %v2380, %v2380
        %v2413 = vpack.c.b16 %v2381, %v2381
        %v2414 = vpack.c.b16 %v2382, %v2382
        %v2415 = vpack.c.b16 %v2383, %v2383
        %v2416 = vpack.c.b16 %v2384, %v2384
        %2449 = vst.msk [vmem:[#allocation4] sm:$0xf] %vm2128, %v2385
        %2450 = vst.msk [vmem:[#allocation4 + $0x4] sm:$0xf] %vm2128, %v2386
        %2451 = vst.msk [vmem:[#allocation4 + $0x8] sm:$0xf] %vm2128, %v2387
        %2452 = vst.msk [vmem:[#allocation4 + $0xc] sm:$0xf] %vm2128, %v2388
        %2453 = vst.msk [vmem:[#allocation4 + $0x10] sm:$0xf] %vm2128, %v2389
        %2454 = vst.msk [vmem:[#allocation4 + $0x14] sm:$0xf] %vm2128, %v2390
        %2455 = vst.msk [vmem:[#allocation4 + $0x18] sm:$0xf] %vm2128, %v2391
        %2456 = vst.msk [vmem:[#allocation4 + $0x1c] sm:$0xf] %vm2128, %v2392
        %2457 = vst.msk [vmem:[#allocation4 + $0x20] sm:$0xf] %vm2128, %v2393
        %2458 = vst.msk [vmem:[#allocation4 + $0x24] sm:$0xf] %vm2128, %v2394
        %2459 = vst.msk [vmem:[#allocation4 + $0x28] sm:$0xf] %vm2128, %v2395
        %2460 = vst.msk [vmem:[#allocation4 + $0x2c] sm:$0xf] %vm2128, %v2396
        %2461 = vst.msk [vmem:[#allocation4 + $0x30] sm:$0xf] %vm2128, %v2397
        %2462 = vst.msk [vmem:[#allocation4 + $0x34] sm:$0xf] %vm2128, %v2398
        %2463 = vst.msk [vmem:[#allocation4 + $0x38] sm:$0xf] %vm2128, %v2399
        %2464 = vst.msk [vmem:[#allocation4 + $0x3c] sm:$0xf] %vm2128, %v2400
        %2465 = vst.msk [vmem:[#allocation4 + $0x40] sm:$0xf] %vm2128, %v2401
        %2466 = vst.msk [vmem:[#allocation4 + $0x44] sm:$0xf] %vm2128, %v2402
        %2467 = vst.msk [vmem:[#allocation4 + $0x48] sm:$0xf] %vm2128, %v2403
        %2468 = vst.msk [vmem:[#allocation4 + $0x4c] sm:$0xf] %vm2128, %v2404
        %2469 = vst.msk [vmem:[#allocation4 + $0x50] sm:$0xf] %vm2128, %v2405
        %2470 = vst.msk [vmem:[#allocation4 + $0x54] sm:$0xf] %vm2128, %v2406
        %2471 = vst.msk [vmem:[#allocation4 + $0x58] sm:$0xf] %vm2128, %v2407
        %2472 = vst.msk [vmem:[#allocation4 + $0x5c] sm:$0xf] %vm2128, %v2408
        %2473 = vst.msk [vmem:[#allocation4 + $0x60] sm:$0xf] %vm2128, %v2409
        %2474 = vst.msk [vmem:[#allocation4 + $0x64] sm:$0xf] %vm2128, %v2410
        %2475 = vst.msk [vmem:[#allocation4 + $0x68] sm:$0xf] %vm2128, %v2411
        %2476 = vst.msk [vmem:[#allocation4 + $0x6c] sm:$0xf] %vm2128, %v2412
        %2477 = vst.msk [vmem:[#allocation4 + $0x70] sm:$0xf] %vm2128, %v2413
        %2478 = vst.msk [vmem:[#allocation4 + $0x74] sm:$0xf] %vm2128, %v2414
        %2479 = vst.msk [vmem:[#allocation4 + $0x78] sm:$0xf] %vm2128, %v2415
        %2480 = vst.msk [vmem:[#allocation4 + $0x7c] sm:$0xf] %vm2128, %v2416
        %2481 = vrot.lane.b32.xlu0 %v2064, 96
        %v2482 = vpop.permute.xlu0 %2481
        %2483 = vrot.lane.b32.xlu0 %v2065, 96
        %v2484 = vpop.permute.xlu0 %2483
        %2485 = vrot.lane.b32.xlu0 %v2066, 96
        %v2486 = vpop.permute.xlu0 %2485
        %2487 = vrot.lane.b32.xlu0 %v2067, 96
        %v2488 = vpop.permute.xlu0 %2487
        %2489 = vrot.lane.b32.xlu0 %v2068, 96
        %v2490 = vpop.permute.xlu0 %2489
        %2491 = vrot.lane.b32.xlu0 %v2069, 96
        %v2492 = vpop.permute.xlu0 %2491
        %2493 = vrot.lane.b32.xlu0 %v2070, 96
        %v2494 = vpop.permute.xlu0 %2493
        %2495 = vrot.lane.b32.xlu0 %v2071, 96
        %v2496 = vpop.permute.xlu0 %2495
        %2497 = vrot.lane.b32.xlu0 %v2072, 96
        %v2498 = vpop.permute.xlu0 %2497
        %2499 = vrot.lane.b32.xlu0 %v2073, 96
        %v2500 = vpop.permute.xlu0 %2499
        %2501 = vrot.lane.b32.xlu0 %v2074, 96
        %v2502 = vpop.permute.xlu0 %2501
        %2503 = vrot.lane.b32.xlu0 %v2075, 96
        %v2504 = vpop.permute.xlu0 %2503
        %2505 = vrot.lane.b32.xlu0 %v2076, 96
        %v2506 = vpop.permute.xlu0 %2505
        %2507 = vrot.lane.b32.xlu0 %v2077, 96
        %v2508 = vpop.permute.xlu0 %2507
        %2509 = vrot.lane.b32.xlu0 %v2078, 96
        %v2510 = vpop.permute.xlu0 %2509
        %2511 = vrot.lane.b32.xlu0 %v2079, 96
        %v2512 = vpop.permute.xlu0 %2511
        %2513 = vrot.lane.b32.xlu0 %v2080, 96
        %v2514 = vpop.permute.xlu0 %2513
        %2515 = vrot.lane.b32.xlu0 %v2081, 96
        %v2516 = vpop.permute.xlu0 %2515
        %2517 = vrot.lane.b32.xlu0 %v2082, 96
        %v2518 = vpop.permute.xlu0 %2517
        %2519 = vrot.lane.b32.xlu0 %v2083, 96
        %v2520 = vpop.permute.xlu0 %2519
        %2521 = vrot.lane.b32.xlu0 %v2084, 96
        %v2522 = vpop.permute.xlu0 %2521
        %2523 = vrot.lane.b32.xlu0 %v2085, 96
        %v2524 = vpop.permute.xlu0 %2523
        %2525 = vrot.lane.b32.xlu0 %v2086, 96
        %v2526 = vpop.permute.xlu0 %2525
        %2527 = vrot.lane.b32.xlu0 %v2087, 96
        %v2528 = vpop.permute.xlu0 %2527
        %2529 = vrot.lane.b32.xlu0 %v2088, 96
        %v2530 = vpop.permute.xlu0 %2529
        %2531 = vrot.lane.b32.xlu0 %v2089, 96
        %v2532 = vpop.permute.xlu0 %2531
        %2533 = vrot.lane.b32.xlu0 %v2090, 96
        %v2534 = vpop.permute.xlu0 %2533
        %2535 = vrot.lane.b32.xlu0 %v2091, 96
        %v2536 = vpop.permute.xlu0 %2535
        %2537 = vrot.lane.b32.xlu0 %v2092, 96
        %v2538 = vpop.permute.xlu0 %2537
        %2539 = vrot.lane.b32.xlu0 %v2093, 96
        %v2540 = vpop.permute.xlu0 %2539
        %2541 = vrot.lane.b32.xlu0 %v2094, 96
        %v2542 = vpop.permute.xlu0 %2541
        %2543 = vrot.lane.b32.xlu0 %v2095, 96
        %v2544 = vpop.permute.xlu0 %2543
        %s2577 = scalar_lea.vmem [#allocation2], 128
        %2578 = vst.msk [vmem:[%s2577] sm:$0xf] %vm2128, %v2482
        %2579 = vst.msk [vmem:[%s2577 + $0x4] sm:$0xf] %vm2128, %v2484
        %2580 = vst.msk [vmem:[%s2577 + $0x8] sm:$0xf] %vm2128, %v2486
        %2581 = vst.msk [vmem:[%s2577 + $0xc] sm:$0xf] %vm2128, %v2488
        %2582 = vst.msk [vmem:[%s2577 + $0x10] sm:$0xf] %vm2128, %v2490
        %2583 = vst.msk [vmem:[%s2577 + $0x14] sm:$0xf] %vm2128, %v2492
        %2584 = vst.msk [vmem:[%s2577 + $0x18] sm:$0xf] %vm2128, %v2494
        %2585 = vst.msk [vmem:[%s2577 + $0x1c] sm:$0xf] %vm2128, %v2496
        %2586 = vst.msk [vmem:[%s2577 + $0x20] sm:$0xf] %vm2128, %v2498
        %2587 = vst.msk [vmem:[%s2577 + $0x24] sm:$0xf] %vm2128, %v2500
        %2588 = vst.msk [vmem:[%s2577 + $0x28] sm:$0xf] %vm2128, %v2502
        %2589 = vst.msk [vmem:[%s2577 + $0x2c] sm:$0xf] %vm2128, %v2504
        %2590 = vst.msk [vmem:[%s2577 + $0x30] sm:$0xf] %vm2128, %v2506
        %2591 = vst.msk [vmem:[%s2577 + $0x34] sm:$0xf] %vm2128, %v2508
        %2592 = vst.msk [vmem:[%s2577 + $0x38] sm:$0xf] %vm2128, %v2510
        %2593 = vst.msk [vmem:[%s2577 + $0x3c] sm:$0xf] %vm2128, %v2512
        %2594 = vst.msk [vmem:[%s2577 + $0x40] sm:$0xf] %vm2128, %v2514
        %2595 = vst.msk [vmem:[%s2577 + $0x44] sm:$0xf] %vm2128, %v2516
        %2596 = vst.msk [vmem:[%s2577 + $0x48] sm:$0xf] %vm2128, %v2518
        %2597 = vst.msk [vmem:[%s2577 + $0x4c] sm:$0xf] %vm2128, %v2520
        %2598 = vst.msk [vmem:[%s2577 + $0x50] sm:$0xf] %vm2128, %v2522
        %2599 = vst.msk [vmem:[%s2577 + $0x54] sm:$0xf] %vm2128, %v2524
        %2600 = vst.msk [vmem:[%s2577 + $0x58] sm:$0xf] %vm2128, %v2526
        %2601 = vst.msk [vmem:[%s2577 + $0x5c] sm:$0xf] %vm2128, %v2528
        %2602 = vst.msk [vmem:[%s2577 + $0x60] sm:$0xf] %vm2128, %v2530
        %2603 = vst.msk [vmem:[%s2577 + $0x64] sm:$0xf] %vm2128, %v2532
        %2604 = vst.msk [vmem:[%s2577 + $0x68] sm:$0xf] %vm2128, %v2534
        %2605 = vst.msk [vmem:[%s2577 + $0x6c] sm:$0xf] %vm2128, %v2536
        %2606 = vst.msk [vmem:[%s2577 + $0x70] sm:$0xf] %vm2128, %v2538
        %2607 = vst.msk [vmem:[%s2577 + $0x74] sm:$0xf] %vm2128, %v2540
        %2608 = vst.msk [vmem:[%s2577 + $0x78] sm:$0xf] %vm2128, %v2542
        %2609 = vst.msk [vmem:[%s2577 + $0x7c] sm:$0xf] %vm2128, %v2544
        %2610 = vrot.lane.b32.xlu0 %v2225, 96
        %v2611 = vpop.permute.xlu0 %2610
        %2612 = vrot.lane.b32.xlu0 %v2226, 96
        %v2613 = vpop.permute.xlu0 %2612
        %2614 = vrot.lane.b32.xlu0 %v2227, 96
        %v2615 = vpop.permute.xlu0 %2614
        %2616 = vrot.lane.b32.xlu0 %v2228, 96
        %v2617 = vpop.permute.xlu0 %2616
        %2618 = vrot.lane.b32.xlu0 %v2229, 96
        %v2619 = vpop.permute.xlu0 %2618
        %2620 = vrot.lane.b32.xlu0 %v2230, 96
        %v2621 = vpop.permute.xlu0 %2620
        %2622 = vrot.lane.b32.xlu0 %v2231, 96
        %v2623 = vpop.permute.xlu0 %2622
        %2624 = vrot.lane.b32.xlu0 %v2232, 96
        %v2625 = vpop.permute.xlu0 %2624
        %2626 = vrot.lane.b32.xlu0 %v2233, 96
        %v2627 = vpop.permute.xlu0 %2626
        %2628 = vrot.lane.b32.xlu0 %v2234, 96
        %v2629 = vpop.permute.xlu0 %2628
        %2630 = vrot.lane.b32.xlu0 %v2235, 96
        %v2631 = vpop.permute.xlu0 %2630
        %2632 = vrot.lane.b32.xlu0 %v2236, 96
        %v2633 = vpop.permute.xlu0 %2632
        %2634 = vrot.lane.b32.xlu0 %v2237, 96
        %v2635 = vpop.permute.xlu0 %2634
        %2636 = vrot.lane.b32.xlu0 %v2238, 96
        %v2637 = vpop.permute.xlu0 %2636
        %2638 = vrot.lane.b32.xlu0 %v2239, 96
        %v2639 = vpop.permute.xlu0 %2638
        %2640 = vrot.lane.b32.xlu0 %v2240, 96
        %v2641 = vpop.permute.xlu0 %2640
        %2642 = vrot.lane.b32.xlu0 %v2241, 96
        %v2643 = vpop.permute.xlu0 %2642
        %2644 = vrot.lane.b32.xlu0 %v2242, 96
        %v2645 = vpop.permute.xlu0 %2644
        %2646 = vrot.lane.b32.xlu0 %v2243, 96
        %v2647 = vpop.permute.xlu0 %2646
        %2648 = vrot.lane.b32.xlu0 %v2244, 96
        %v2649 = vpop.permute.xlu0 %2648
        %2650 = vrot.lane.b32.xlu0 %v2245, 96
        %v2651 = vpop.permute.xlu0 %2650
        %2652 = vrot.lane.b32.xlu0 %v2246, 96
        %v2653 = vpop.permute.xlu0 %2652
        %2654 = vrot.lane.b32.xlu0 %v2247, 96
        %v2655 = vpop.permute.xlu0 %2654
        %2656 = vrot.lane.b32.xlu0 %v2248, 96
        %v2657 = vpop.permute.xlu0 %2656
        %2658 = vrot.lane.b32.xlu0 %v2249, 96
        %v2659 = vpop.permute.xlu0 %2658
        %2660 = vrot.lane.b32.xlu0 %v2250, 96
        %v2661 = vpop.permute.xlu0 %2660
        %2662 = vrot.lane.b32.xlu0 %v2251, 96
        %v2663 = vpop.permute.xlu0 %2662
        %2664 = vrot.lane.b32.xlu0 %v2252, 96
        %v2665 = vpop.permute.xlu0 %2664
        %2666 = vrot.lane.b32.xlu0 %v2253, 96
        %v2667 = vpop.permute.xlu0 %2666
        %2668 = vrot.lane.b32.xlu0 %v2254, 96
        %v2669 = vpop.permute.xlu0 %2668
        %2670 = vrot.lane.b32.xlu0 %v2255, 96
        %v2671 = vpop.permute.xlu0 %2670
        %2672 = vrot.lane.b32.xlu0 %v2256, 96
        %v2673 = vpop.permute.xlu0 %2672
        %s2706 = scalar_lea.vmem [#allocation3], 128
        %2707 = vst.msk [vmem:[%s2706] sm:$0xf] %vm2128, %v2611
        %2708 = vst.msk [vmem:[%s2706 + $0x4] sm:$0xf] %vm2128, %v2613
        %2709 = vst.msk [vmem:[%s2706 + $0x8] sm:$0xf] %vm2128, %v2615
        %2710 = vst.msk [vmem:[%s2706 + $0xc] sm:$0xf] %vm2128, %v2617
        %2711 = vst.msk [vmem:[%s2706 + $0x10] sm:$0xf] %vm2128, %v2619
        %2712 = vst.msk [vmem:[%s2706 + $0x14] sm:$0xf] %vm2128, %v2621
        %2713 = vst.msk [vmem:[%s2706 + $0x18] sm:$0xf] %vm2128, %v2623
        %2714 = vst.msk [vmem:[%s2706 + $0x1c] sm:$0xf] %vm2128, %v2625
        %2715 = vst.msk [vmem:[%s2706 + $0x20] sm:$0xf] %vm2128, %v2627
        %2716 = vst.msk [vmem:[%s2706 + $0x24] sm:$0xf] %vm2128, %v2629
        %2717 = vst.msk [vmem:[%s2706 + $0x28] sm:$0xf] %vm2128, %v2631
        %2718 = vst.msk [vmem:[%s2706 + $0x2c] sm:$0xf] %vm2128, %v2633
        %2719 = vst.msk [vmem:[%s2706 + $0x30] sm:$0xf] %vm2128, %v2635
        %2720 = vst.msk [vmem:[%s2706 + $0x34] sm:$0xf] %vm2128, %v2637
        %2721 = vst.msk [vmem:[%s2706 + $0x38] sm:$0xf] %vm2128, %v2639
        %2722 = vst.msk [vmem:[%s2706 + $0x3c] sm:$0xf] %vm2128, %v2641
        %2723 = vst.msk [vmem:[%s2706 + $0x40] sm:$0xf] %vm2128, %v2643
        %2724 = vst.msk [vmem:[%s2706 + $0x44] sm:$0xf] %vm2128, %v2645
        %2725 = vst.msk [vmem:[%s2706 + $0x48] sm:$0xf] %vm2128, %v2647
        %2726 = vst.msk [vmem:[%s2706 + $0x4c] sm:$0xf] %vm2128, %v2649
        %2727 = vst.msk [vmem:[%s2706 + $0x50] sm:$0xf] %vm2128, %v2651
        %2728 = vst.msk [vmem:[%s2706 + $0x54] sm:$0xf] %vm2128, %v2653
        %2729 = vst.msk [vmem:[%s2706 + $0x58] sm:$0xf] %vm2128, %v2655
        %2730 = vst.msk [vmem:[%s2706 + $0x5c] sm:$0xf] %vm2128, %v2657
        %2731 = vst.msk [vmem:[%s2706 + $0x60] sm:$0xf] %vm2128, %v2659
        %2732 = vst.msk [vmem:[%s2706 + $0x64] sm:$0xf] %vm2128, %v2661
        %2733 = vst.msk [vmem:[%s2706 + $0x68] sm:$0xf] %vm2128, %v2663
        %2734 = vst.msk [vmem:[%s2706 + $0x6c] sm:$0xf] %vm2128, %v2665
        %2735 = vst.msk [vmem:[%s2706 + $0x70] sm:$0xf] %vm2128, %v2667
        %2736 = vst.msk [vmem:[%s2706 + $0x74] sm:$0xf] %vm2128, %v2669
        %2737 = vst.msk [vmem:[%s2706 + $0x78] sm:$0xf] %vm2128, %v2671
        %2738 = vst.msk [vmem:[%s2706 + $0x7c] sm:$0xf] %vm2128, %v2673
        %2739 = vrot.lane.b32.xlu0 %v2385, 96
        %v2740 = vpop.permute.xlu0 %2739
        %2741 = vrot.lane.b32.xlu0 %v2386, 96
        %v2742 = vpop.permute.xlu0 %2741
        %2743 = vrot.lane.b32.xlu0 %v2387, 96
        %v2744 = vpop.permute.xlu0 %2743
        %2745 = vrot.lane.b32.xlu0 %v2388, 96
        %v2746 = vpop.permute.xlu0 %2745
        %2747 = vrot.lane.b32.xlu0 %v2389, 96
        %v2748 = vpop.permute.xlu0 %2747
        %2749 = vrot.lane.b32.xlu0 %v2390, 96
        %v2750 = vpop.permute.xlu0 %2749
        %2751 = vrot.lane.b32.xlu0 %v2391, 96
        %v2752 = vpop.permute.xlu0 %2751
        %2753 = vrot.lane.b32.xlu0 %v2392, 96
        %v2754 = vpop.permute.xlu0 %2753
        %2755 = vrot.lane.b32.xlu0 %v2393, 96
        %v2756 = vpop.permute.xlu0 %2755
        %2757 = vrot.lane.b32.xlu0 %v2394, 96
        %v2758 = vpop.permute.xlu0 %2757
        %2759 = vrot.lane.b32.xlu0 %v2395, 96
        %v2760 = vpop.permute.xlu0 %2759
        %2761 = vrot.lane.b32.xlu0 %v2396, 96
        %v2762 = vpop.permute.xlu0 %2761
        %2763 = vrot.lane.b32.xlu0 %v2397, 96
        %v2764 = vpop.permute.xlu0 %2763
        %2765 = vrot.lane.b32.xlu0 %v2398, 96
        %v2766 = vpop.permute.xlu0 %2765
        %2767 = vrot.lane.b32.xlu0 %v2399, 96
        %v2768 = vpop.permute.xlu0 %2767
        %2769 = vrot.lane.b32.xlu0 %v2400, 96
        %v2770 = vpop.permute.xlu0 %2769
        %2771 = vrot.lane.b32.xlu0 %v2401, 96
        %v2772 = vpop.permute.xlu0 %2771
        %2773 = vrot.lane.b32.xlu0 %v2402, 96
        %v2774 = vpop.permute.xlu0 %2773
        %2775 = vrot.lane.b32.xlu0 %v2403, 96
        %v2776 = vpop.permute.xlu0 %2775
        %2777 = vrot.lane.b32.xlu0 %v2404, 96
        %v2778 = vpop.permute.xlu0 %2777
        %2779 = vrot.lane.b32.xlu0 %v2405, 96
        %v2780 = vpop.permute.xlu0 %2779
        %2781 = vrot.lane.b32.xlu0 %v2406, 96
        %v2782 = vpop.permute.xlu0 %2781
        %2783 = vrot.lane.b32.xlu0 %v2407, 96
        %v2784 = vpop.permute.xlu0 %2783
        %2785 = vrot.lane.b32.xlu0 %v2408, 96
        %v2786 = vpop.permute.xlu0 %2785
        %2787 = vrot.lane.b32.xlu0 %v2409, 96
        %v2788 = vpop.permute.xlu0 %2787
        %2789 = vrot.lane.b32.xlu0 %v2410, 96
        %v2790 = vpop.permute.xlu0 %2789
        %2791 = vrot.lane.b32.xlu0 %v2411, 96
        %v2792 = vpop.permute.xlu0 %2791
        %2793 = vrot.lane.b32.xlu0 %v2412, 96
        %v2794 = vpop.permute.xlu0 %2793
        %2795 = vrot.lane.b32.xlu0 %v2413, 96
        %v2796 = vpop.permute.xlu0 %2795
        %2797 = vrot.lane.b32.xlu0 %v2414, 96
        %v2798 = vpop.permute.xlu0 %2797
        %2799 = vrot.lane.b32.xlu0 %v2415, 96
        %v2800 = vpop.permute.xlu0 %2799
        %2801 = vrot.lane.b32.xlu0 %v2416, 96
        %v2802 = vpop.permute.xlu0 %2801
        %s2835 = scalar_lea.vmem [#allocation4], 128
        %2836 = vst.msk [vmem:[%s2835] sm:$0xf] %vm2128, %v2740
        %2837 = vst.msk [vmem:[%s2835 + $0x4] sm:$0xf] %vm2128, %v2742
        %2838 = vst.msk [vmem:[%s2835 + $0x8] sm:$0xf] %vm2128, %v2744
        %2839 = vst.msk [vmem:[%s2835 + $0xc] sm:$0xf] %vm2128, %v2746
        %2840 = vst.msk [vmem:[%s2835 + $0x10] sm:$0xf] %vm2128, %v2748
        %2841 = vst.msk [vmem:[%s2835 + $0x14] sm:$0xf] %vm2128, %v2750
        %2842 = vst.msk [vmem:[%s2835 + $0x18] sm:$0xf] %vm2128, %v2752
        %2843 = vst.msk [vmem:[%s2835 + $0x1c] sm:$0xf] %vm2128, %v2754
        %2844 = vst.msk [vmem:[%s2835 + $0x20] sm:$0xf] %vm2128, %v2756
        %2845 = vst.msk [vmem:[%s2835 + $0x24] sm:$0xf] %vm2128, %v2758
        %2846 = vst.msk [vmem:[%s2835 + $0x28] sm:$0xf] %vm2128, %v2760
        %2847 = vst.msk [vmem:[%s2835 + $0x2c] sm:$0xf] %vm2128, %v2762
        %2848 = vst.msk [vmem:[%s2835 + $0x30] sm:$0xf] %vm2128, %v2764
        %2849 = vst.msk [vmem:[%s2835 + $0x34] sm:$0xf] %vm2128, %v2766
        %2850 = vst.msk [vmem:[%s2835 + $0x38] sm:$0xf] %vm2128, %v2768
        %2851 = vst.msk [vmem:[%s2835 + $0x3c] sm:$0xf] %vm2128, %v2770
        %2852 = vst.msk [vmem:[%s2835 + $0x40] sm:$0xf] %vm2128, %v2772
        %2853 = vst.msk [vmem:[%s2835 + $0x44] sm:$0xf] %vm2128, %v2774
        %2854 = vst.msk [vmem:[%s2835 + $0x48] sm:$0xf] %vm2128, %v2776
        %2855 = vst.msk [vmem:[%s2835 + $0x4c] sm:$0xf] %vm2128, %v2778
        %2856 = vst.msk [vmem:[%s2835 + $0x50] sm:$0xf] %vm2128, %v2780
        %2857 = vst.msk [vmem:[%s2835 + $0x54] sm:$0xf] %vm2128, %v2782
        %2858 = vst.msk [vmem:[%s2835 + $0x58] sm:$0xf] %vm2128, %v2784
        %2859 = vst.msk [vmem:[%s2835 + $0x5c] sm:$0xf] %vm2128, %v2786
        %2860 = vst.msk [vmem:[%s2835 + $0x60] sm:$0xf] %vm2128, %v2788
        %2861 = vst.msk [vmem:[%s2835 + $0x64] sm:$0xf] %vm2128, %v2790
        %2862 = vst.msk [vmem:[%s2835 + $0x68] sm:$0xf] %vm2128, %v2792
        %2863 = vst.msk [vmem:[%s2835 + $0x6c] sm:$0xf] %vm2128, %v2794
        %2864 = vst.msk [vmem:[%s2835 + $0x70] sm:$0xf] %vm2128, %v2796
        %2865 = vst.msk [vmem:[%s2835 + $0x74] sm:$0xf] %vm2128, %v2798
        %2866 = vst.msk [vmem:[%s2835 + $0x78] sm:$0xf] %vm2128, %v2800
        %2867 = vst.msk [vmem:[%s2835 + $0x7c] sm:$0xf] %vm2128, %v2802
        %2868 = vrot.lane.b32.xlu0 %v2064, 64
        %v2869 = vpop.permute.xlu0 %2868
        %2870 = vrot.lane.b32.xlu0 %v2065, 64
        %v2871 = vpop.permute.xlu0 %2870
        %2872 = vrot.lane.b32.xlu0 %v2066, 64
        %v2873 = vpop.permute.xlu0 %2872
        %2874 = vrot.lane.b32.xlu0 %v2067, 64
        %v2875 = vpop.permute.xlu0 %2874
        %2876 = vrot.lane.b32.xlu0 %v2068, 64
        %v2877 = vpop.permute.xlu0 %2876
        %2878 = vrot.lane.b32.xlu0 %v2069, 64
        %v2879 = vpop.permute.xlu0 %2878
        %2880 = vrot.lane.b32.xlu0 %v2070, 64
        %v2881 = vpop.permute.xlu0 %2880
        %2882 = vrot.lane.b32.xlu0 %v2071, 64
        %v2883 = vpop.permute.xlu0 %2882
        %2884 = vrot.lane.b32.xlu0 %v2072, 64
        %v2885 = vpop.permute.xlu0 %2884
        %2886 = vrot.lane.b32.xlu0 %v2073, 64
        %v2887 = vpop.permute.xlu0 %2886
        %2888 = vrot.lane.b32.xlu0 %v2074, 64
        %v2889 = vpop.permute.xlu0 %2888
        %2890 = vrot.lane.b32.xlu0 %v2075, 64
        %v2891 = vpop.permute.xlu0 %2890
        %2892 = vrot.lane.b32.xlu0 %v2076, 64
        %v2893 = vpop.permute.xlu0 %2892
        %2894 = vrot.lane.b32.xlu0 %v2077, 64
        %v2895 = vpop.permute.xlu0 %2894
        %2896 = vrot.lane.b32.xlu0 %v2078, 64
        %v2897 = vpop.permute.xlu0 %2896
        %2898 = vrot.lane.b32.xlu0 %v2079, 64
        %v2899 = vpop.permute.xlu0 %2898
        %2900 = vrot.lane.b32.xlu0 %v2080, 64
        %v2901 = vpop.permute.xlu0 %2900
        %2902 = vrot.lane.b32.xlu0 %v2081, 64
        %v2903 = vpop.permute.xlu0 %2902
        %2904 = vrot.lane.b32.xlu0 %v2082, 64
        %v2905 = vpop.permute.xlu0 %2904
        %2906 = vrot.lane.b32.xlu0 %v2083, 64
        %v2907 = vpop.permute.xlu0 %2906
        %2908 = vrot.lane.b32.xlu0 %v2084, 64
        %v2909 = vpop.permute.xlu0 %2908
        %2910 = vrot.lane.b32.xlu0 %v2085, 64
        %v2911 = vpop.permute.xlu0 %2910
        %2912 = vrot.lane.b32.xlu0 %v2086, 64
        %v2913 = vpop.permute.xlu0 %2912
        %2914 = vrot.lane.b32.xlu0 %v2087, 64
        %v2915 = vpop.permute.xlu0 %2914
        %2916 = vrot.lane.b32.xlu0 %v2088, 64
        %v2917 = vpop.permute.xlu0 %2916
        %2918 = vrot.lane.b32.xlu0 %v2089, 64
        %v2919 = vpop.permute.xlu0 %2918
        %2920 = vrot.lane.b32.xlu0 %v2090, 64
        %v2921 = vpop.permute.xlu0 %2920
        %2922 = vrot.lane.b32.xlu0 %v2091, 64
        %v2923 = vpop.permute.xlu0 %2922
        %2924 = vrot.lane.b32.xlu0 %v2092, 64
        %v2925 = vpop.permute.xlu0 %2924
        %2926 = vrot.lane.b32.xlu0 %v2093, 64
        %v2927 = vpop.permute.xlu0 %2926
        %2928 = vrot.lane.b32.xlu0 %v2094, 64
        %v2929 = vpop.permute.xlu0 %2928
        %2930 = vrot.lane.b32.xlu0 %v2095, 64
        %v2931 = vpop.permute.xlu0 %2930
        %s2964 = scalar_lea.vmem [#allocation2], 256
        %2965 = vst.msk [vmem:[%s2964] sm:$0xf] %vm2128, %v2869
        %2966 = vst.msk [vmem:[%s2964 + $0x4] sm:$0xf] %vm2128, %v2871
        %2967 = vst.msk [vmem:[%s2964 + $0x8] sm:$0xf] %vm2128, %v2873
        %2968 = vst.msk [vmem:[%s2964 + $0xc] sm:$0xf] %vm2128, %v2875
        %2969 = vst.msk [vmem:[%s2964 + $0x10] sm:$0xf] %vm2128, %v2877
        %2970 = vst.msk [vmem:[%s2964 + $0x14] sm:$0xf] %vm2128, %v2879
        %2971 = vst.msk [vmem:[%s2964 + $0x18] sm:$0xf] %vm2128, %v2881
        %2972 = vst.msk [vmem:[%s2964 + $0x1c] sm:$0xf] %vm2128, %v2883
        %2973 = vst.msk [vmem:[%s2964 + $0x20] sm:$0xf] %vm2128, %v2885
        %2974 = vst.msk [vmem:[%s2964 + $0x24] sm:$0xf] %vm2128, %v2887
        %2975 = vst.msk [vmem:[%s2964 + $0x28] sm:$0xf] %vm2128, %v2889
        %2976 = vst.msk [vmem:[%s2964 + $0x2c] sm:$0xf] %vm2128, %v2891
        %2977 = vst.msk [vmem:[%s2964 + $0x30] sm:$0xf] %vm2128, %v2893
        %2978 = vst.msk [vmem:[%s2964 + $0x34] sm:$0xf] %vm2128, %v2895
        %2979 = vst.msk [vmem:[%s2964 + $0x38] sm:$0xf] %vm2128, %v2897
        %2980 = vst.msk [vmem:[%s2964 + $0x3c] sm:$0xf] %vm2128, %v2899
        %2981 = vst.msk [vmem:[%s2964 + $0x40] sm:$0xf] %vm2128, %v2901
        %2982 = vst.msk [vmem:[%s2964 + $0x44] sm:$0xf] %vm2128, %v2903
        %2983 = vst.msk [vmem:[%s2964 + $0x48] sm:$0xf] %vm2128, %v2905
        %2984 = vst.msk [vmem:[%s2964 + $0x4c] sm:$0xf] %vm2128, %v2907
        %2985 = vst.msk [vmem:[%s2964 + $0x50] sm:$0xf] %vm2128, %v2909
        %2986 = vst.msk [vmem:[%s2964 + $0x54] sm:$0xf] %vm2128, %v2911
        %2987 = vst.msk [vmem:[%s2964 + $0x58] sm:$0xf] %vm2128, %v2913
        %2988 = vst.msk [vmem:[%s2964 + $0x5c] sm:$0xf] %vm2128, %v2915
        %2989 = vst.msk [vmem:[%s2964 + $0x60] sm:$0xf] %vm2128, %v2917
        %2990 = vst.msk [vmem:[%s2964 + $0x64] sm:$0xf] %vm2128, %v2919
        %2991 = vst.msk [vmem:[%s2964 + $0x68] sm:$0xf] %vm2128, %v2921
        %2992 = vst.msk [vmem:[%s2964 + $0x6c] sm:$0xf] %vm2128, %v2923
        %2993 = vst.msk [vmem:[%s2964 + $0x70] sm:$0xf] %vm2128, %v2925
        %2994 = vst.msk [vmem:[%s2964 + $0x74] sm:$0xf] %vm2128, %v2927
        %2995 = vst.msk [vmem:[%s2964 + $0x78] sm:$0xf] %vm2128, %v2929
        %2996 = vst.msk [vmem:[%s2964 + $0x7c] sm:$0xf] %vm2128, %v2931
        %2997 = vrot.lane.b32.xlu0 %v2225, 64
        %v2998 = vpop.permute.xlu0 %2997
        %2999 = vrot.lane.b32.xlu0 %v2226, 64
        %v3000 = vpop.permute.xlu0 %2999
        %3001 = vrot.lane.b32.xlu0 %v2227, 64
        %v3002 = vpop.permute.xlu0 %3001
        %3003 = vrot.lane.b32.xlu0 %v2228, 64
        %v3004 = vpop.permute.xlu0 %3003
        %3005 = vrot.lane.b32.xlu0 %v2229, 64
        %v3006 = vpop.permute.xlu0 %3005
        %3007 = vrot.lane.b32.xlu0 %v2230, 64
        %v3008 = vpop.permute.xlu0 %3007
        %3009 = vrot.lane.b32.xlu0 %v2231, 64
        %v3010 = vpop.permute.xlu0 %3009
        %3011 = vrot.lane.b32.xlu0 %v2232, 64
        %v3012 = vpop.permute.xlu0 %3011
        %3013 = vrot.lane.b32.xlu0 %v2233, 64
        %v3014 = vpop.permute.xlu0 %3013
        %3015 = vrot.lane.b32.xlu0 %v2234, 64
        %v3016 = vpop.permute.xlu0 %3015
        %3017 = vrot.lane.b32.xlu0 %v2235, 64
        %v3018 = vpop.permute.xlu0 %3017
        %3019 = vrot.lane.b32.xlu0 %v2236, 64
        %v3020 = vpop.permute.xlu0 %3019
        %3021 = vrot.lane.b32.xlu0 %v2237, 64
        %v3022 = vpop.permute.xlu0 %3021
        %3023 = vrot.lane.b32.xlu0 %v2238, 64
        %v3024 = vpop.permute.xlu0 %3023
        %3025 = vrot.lane.b32.xlu0 %v2239, 64
        %v3026 = vpop.permute.xlu0 %3025
        %3027 = vrot.lane.b32.xlu0 %v2240, 64
        %v3028 = vpop.permute.xlu0 %3027
        %3029 = vrot.lane.b32.xlu0 %v2241, 64
        %v3030 = vpop.permute.xlu0 %3029
        %3031 = vrot.lane.b32.xlu0 %v2242, 64
        %v3032 = vpop.permute.xlu0 %3031
        %3033 = vrot.lane.b32.xlu0 %v2243, 64
        %v3034 = vpop.permute.xlu0 %3033
        %3035 = vrot.lane.b32.xlu0 %v2244, 64
        %v3036 = vpop.permute.xlu0 %3035
        %3037 = vrot.lane.b32.xlu0 %v2245, 64
        %v3038 = vpop.permute.xlu0 %3037
        %3039 = vrot.lane.b32.xlu0 %v2246, 64
        %v3040 = vpop.permute.xlu0 %3039
        %3041 = vrot.lane.b32.xlu0 %v2247, 64
        %v3042 = vpop.permute.xlu0 %3041
        %3043 = vrot.lane.b32.xlu0 %v2248, 64
        %v3044 = vpop.permute.xlu0 %3043
        %3045 = vrot.lane.b32.xlu0 %v2249, 64
        %v3046 = vpop.permute.xlu0 %3045
        %3047 = vrot.lane.b32.xlu0 %v2250, 64
        %v3048 = vpop.permute.xlu0 %3047
        %3049 = vrot.lane.b32.xlu0 %v2251, 64
        %v3050 = vpop.permute.xlu0 %3049
        %3051 = vrot.lane.b32.xlu0 %v2252, 64
        %v3052 = vpop.permute.xlu0 %3051
        %3053 = vrot.lane.b32.xlu0 %v2253, 64
        %v3054 = vpop.permute.xlu0 %3053
        %3055 = vrot.lane.b32.xlu0 %v2254, 64
        %v3056 = vpop.permute.xlu0 %3055
        %3057 = vrot.lane.b32.xlu0 %v2255, 64
        %v3058 = vpop.permute.xlu0 %3057
        %3059 = vrot.lane.b32.xlu0 %v2256, 64
        %v3060 = vpop.permute.xlu0 %3059
        %s3093 = scalar_lea.vmem [#allocation3], 256
        %3094 = vst.msk [vmem:[%s3093] sm:$0xf] %vm2128, %v2998
        %3095 = vst.msk [vmem:[%s3093 + $0x4] sm:$0xf] %vm2128, %v3000
        %3096 = vst.msk [vmem:[%s3093 + $0x8] sm:$0xf] %vm2128, %v3002
        %3097 = vst.msk [vmem:[%s3093 + $0xc] sm:$0xf] %vm2128, %v3004
        %3098 = vst.msk [vmem:[%s3093 + $0x10] sm:$0xf] %vm2128, %v3006
        %3099 = vst.msk [vmem:[%s3093 + $0x14] sm:$0xf] %vm2128, %v3008
        %3100 = vst.msk [vmem:[%s3093 + $0x18] sm:$0xf] %vm2128, %v3010
        %3101 = vst.msk [vmem:[%s3093 + $0x1c] sm:$0xf] %vm2128, %v3012
        %3102 = vst.msk [vmem:[%s3093 + $0x20] sm:$0xf] %vm2128, %v3014
        %3103 = vst.msk [vmem:[%s3093 + $0x24] sm:$0xf] %vm2128, %v3016
        %3104 = vst.msk [vmem:[%s3093 + $0x28] sm:$0xf] %vm2128, %v3018
        %3105 = vst.msk [vmem:[%s3093 + $0x2c] sm:$0xf] %vm2128, %v3020
        %3106 = vst.msk [vmem:[%s3093 + $0x30] sm:$0xf] %vm2128, %v3022
        %3107 = vst.msk [vmem:[%s3093 + $0x34] sm:$0xf] %vm2128, %v3024
        %3108 = vst.msk [vmem:[%s3093 + $0x38] sm:$0xf] %vm2128, %v3026
        %3109 = vst.msk [vmem:[%s3093 + $0x3c] sm:$0xf] %vm2128, %v3028
        %3110 = vst.msk [vmem:[%s3093 + $0x40] sm:$0xf] %vm2128, %v3030
        %3111 = vst.msk [vmem:[%s3093 + $0x44] sm:$0xf] %vm2128, %v3032
        %3112 = vst.msk [vmem:[%s3093 + $0x48] sm:$0xf] %vm2128, %v3034
        %3113 = vst.msk [vmem:[%s3093 + $0x4c] sm:$0xf] %vm2128, %v3036
        %3114 = vst.msk [vmem:[%s3093 + $0x50] sm:$0xf] %vm2128, %v3038
        %3115 = vst.msk [vmem:[%s3093 + $0x54] sm:$0xf] %vm2128, %v3040
        %3116 = vst.msk [vmem:[%s3093 + $0x58] sm:$0xf] %vm2128, %v3042
        %3117 = vst.msk [vmem:[%s3093 + $0x5c] sm:$0xf] %vm2128, %v3044
        %3118 = vst.msk [vmem:[%s3093 + $0x60] sm:$0xf] %vm2128, %v3046
        %3119 = vst.msk [vmem:[%s3093 + $0x64] sm:$0xf] %vm2128, %v3048
        %3120 = vst.msk [vmem:[%s3093 + $0x68] sm:$0xf] %vm2128, %v3050
        %3121 = vst.msk [vmem:[%s3093 + $0x6c] sm:$0xf] %vm2128, %v3052
        %3122 = vst.msk [vmem:[%s3093 + $0x70] sm:$0xf] %vm2128, %v3054
        %3123 = vst.msk [vmem:[%s3093 + $0x74] sm:$0xf] %vm2128, %v3056
        %3124 = vst.msk [vmem:[%s3093 + $0x78] sm:$0xf] %vm2128, %v3058
        %3125 = vst.msk [vmem:[%s3093 + $0x7c] sm:$0xf] %vm2128, %v3060
        %3126 = vrot.lane.b32.xlu0 %v2385, 64
        %v3127 = vpop.permute.xlu0 %3126
        %3128 = vrot.lane.b32.xlu0 %v2386, 64
        %v3129 = vpop.permute.xlu0 %3128
        %3130 = vrot.lane.b32.xlu0 %v2387, 64
        %v3131 = vpop.permute.xlu0 %3130
        %3132 = vrot.lane.b32.xlu0 %v2388, 64
        %v3133 = vpop.permute.xlu0 %3132
        %3134 = vrot.lane.b32.xlu0 %v2389, 64
        %v3135 = vpop.permute.xlu0 %3134
        %3136 = vrot.lane.b32.xlu0 %v2390, 64
        %v3137 = vpop.permute.xlu0 %3136
        %3138 = vrot.lane.b32.xlu0 %v2391, 64
        %v3139 = vpop.permute.xlu0 %3138
        %3140 = vrot.lane.b32.xlu0 %v2392, 64
        %v3141 = vpop.permute.xlu0 %3140
        %3142 = vrot.lane.b32.xlu0 %v2393, 64
        %v3143 = vpop.permute.xlu0 %3142
        %3144 = vrot.lane.b32.xlu0 %v2394, 64
        %v3145 = vpop.permute.xlu0 %3144
        %3146 = vrot.lane.b32.xlu0 %v2395, 64
        %v3147 = vpop.permute.xlu0 %3146
        %3148 = vrot.lane.b32.xlu0 %v2396, 64
        %v3149 = vpop.permute.xlu0 %3148
        %3150 = vrot.lane.b32.xlu0 %v2397, 64
        %v3151 = vpop.permute.xlu0 %3150
        %3152 = vrot.lane.b32.xlu0 %v2398, 64
        %v3153 = vpop.permute.xlu0 %3152
        %3154 = vrot.lane.b32.xlu0 %v2399, 64
        %v3155 = vpop.permute.xlu0 %3154
        %3156 = vrot.lane.b32.xlu0 %v2400, 64
        %v3157 = vpop.permute.xlu0 %3156
        %3158 = vrot.lane.b32.xlu0 %v2401, 64
        %v3159 = vpop.permute.xlu0 %3158
        %3160 = vrot.lane.b32.xlu0 %v2402, 64
        %v3161 = vpop.permute.xlu0 %3160
        %3162 = vrot.lane.b32.xlu0 %v2403, 64
        %v3163 = vpop.permute.xlu0 %3162
        %3164 = vrot.lane.b32.xlu0 %v2404, 64
        %v3165 = vpop.permute.xlu0 %3164
        %3166 = vrot.lane.b32.xlu0 %v2405, 64
        %v3167 = vpop.permute.xlu0 %3166
        %3168 = vrot.lane.b32.xlu0 %v2406, 64
        %v3169 = vpop.permute.xlu0 %3168
        %3170 = vrot.lane.b32.xlu0 %v2407, 64
        %v3171 = vpop.permute.xlu0 %3170
        %3172 = vrot.lane.b32.xlu0 %v2408, 64
        %v3173 = vpop.permute.xlu0 %3172
        %3174 = vrot.lane.b32.xlu0 %v2409, 64
        %v3175 = vpop.permute.xlu0 %3174
        %3176 = vrot.lane.b32.xlu0 %v2410, 64
        %v3177 = vpop.permute.xlu0 %3176
        %3178 = vrot.lane.b32.xlu0 %v2411, 64
        %v3179 = vpop.permute.xlu0 %3178
        %3180 = vrot.lane.b32.xlu0 %v2412, 64
        %v3181 = vpop.permute.xlu0 %3180
        %3182 = vrot.lane.b32.xlu0 %v2413, 64
        %v3183 = vpop.permute.xlu0 %3182
        %3184 = vrot.lane.b32.xlu0 %v2414, 64
        %v3185 = vpop.permute.xlu0 %3184
        %3186 = vrot.lane.b32.xlu0 %v2415, 64
        %v3187 = vpop.permute.xlu0 %3186
        %3188 = vrot.lane.b32.xlu0 %v2416, 64
        %v3189 = vpop.permute.xlu0 %3188
        %s3222 = scalar_lea.vmem [#allocation4], 256
        %3223 = vst.msk [vmem:[%s3222] sm:$0xf] %vm2128, %v3127
        %3224 = vst.msk [vmem:[%s3222 + $0x4] sm:$0xf] %vm2128, %v3129
        %3225 = vst.msk [vmem:[%s3222 + $0x8] sm:$0xf] %vm2128, %v3131
        %3226 = vst.msk [vmem:[%s3222 + $0xc] sm:$0xf] %vm2128, %v3133
        %3227 = vst.msk [vmem:[%s3222 + $0x10] sm:$0xf] %vm2128, %v3135
        %3228 = vst.msk [vmem:[%s3222 + $0x14] sm:$0xf] %vm2128, %v3137
        %3229 = vst.msk [vmem:[%s3222 + $0x18] sm:$0xf] %vm2128, %v3139
        %3230 = vst.msk [vmem:[%s3222 + $0x1c] sm:$0xf] %vm2128, %v3141
        %3231 = vst.msk [vmem:[%s3222 + $0x20] sm:$0xf] %vm2128, %v3143
        %3232 = vst.msk [vmem:[%s3222 + $0x24] sm:$0xf] %vm2128, %v3145
        %3233 = vst.msk [vmem:[%s3222 + $0x28] sm:$0xf] %vm2128, %v3147
        %3234 = vst.msk [vmem:[%s3222 + $0x2c] sm:$0xf] %vm2128, %v3149
        %3235 = vst.msk [vmem:[%s3222 + $0x30] sm:$0xf] %vm2128, %v3151
        %3236 = vst.msk [vmem:[%s3222 + $0x34] sm:$0xf] %vm2128, %v3153
        %3237 = vst.msk [vmem:[%s3222 + $0x38] sm:$0xf] %vm2128, %v3155
        %3238 = vst.msk [vmem:[%s3222 + $0x3c] sm:$0xf] %vm2128, %v3157
        %3239 = vst.msk [vmem:[%s3222 + $0x40] sm:$0xf] %vm2128, %v3159
        %3240 = vst.msk [vmem:[%s3222 + $0x44] sm:$0xf] %vm2128, %v3161
        %3241 = vst.msk [vmem:[%s3222 + $0x48] sm:$0xf] %vm2128, %v3163
        %3242 = vst.msk [vmem:[%s3222 + $0x4c] sm:$0xf] %vm2128, %v3165
        %3243 = vst.msk [vmem:[%s3222 + $0x50] sm:$0xf] %vm2128, %v3167
        %3244 = vst.msk [vmem:[%s3222 + $0x54] sm:$0xf] %vm2128, %v3169
        %3245 = vst.msk [vmem:[%s3222 + $0x58] sm:$0xf] %vm2128, %v3171
        %3246 = vst.msk [vmem:[%s3222 + $0x5c] sm:$0xf] %vm2128, %v3173
        %3247 = vst.msk [vmem:[%s3222 + $0x60] sm:$0xf] %vm2128, %v3175
        %3248 = vst.msk [vmem:[%s3222 + $0x64] sm:$0xf] %vm2128, %v3177
        %3249 = vst.msk [vmem:[%s3222 + $0x68] sm:$0xf] %vm2128, %v3179
        %3250 = vst.msk [vmem:[%s3222 + $0x6c] sm:$0xf] %vm2128, %v3181
        %3251 = vst.msk [vmem:[%s3222 + $0x70] sm:$0xf] %vm2128, %v3183
        %3252 = vst.msk [vmem:[%s3222 + $0x74] sm:$0xf] %vm2128, %v3185
        %3253 = vst.msk [vmem:[%s3222 + $0x78] sm:$0xf] %vm2128, %v3187
        %3254 = vst.msk [vmem:[%s3222 + $0x7c] sm:$0xf] %vm2128, %v3189
        %3255 = vrot.lane.b32.xlu0 %v2064, 32
        %v3256 = vpop.permute.xlu0 %3255
        %3257 = vrot.lane.b32.xlu0 %v2065, 32
        %v3258 = vpop.permute.xlu0 %3257
        %3259 = vrot.lane.b32.xlu0 %v2066, 32
        %v3260 = vpop.permute.xlu0 %3259
        %3261 = vrot.lane.b32.xlu0 %v2067, 32
        %v3262 = vpop.permute.xlu0 %3261
        %3263 = vrot.lane.b32.xlu0 %v2068, 32
        %v3264 = vpop.permute.xlu0 %3263
        %3265 = vrot.lane.b32.xlu0 %v2069, 32
        %v3266 = vpop.permute.xlu0 %3265
        %3267 = vrot.lane.b32.xlu0 %v2070, 32
        %v3268 = vpop.permute.xlu0 %3267
        %3269 = vrot.lane.b32.xlu0 %v2071, 32
        %v3270 = vpop.permute.xlu0 %3269
        %3271 = vrot.lane.b32.xlu0 %v2072, 32
        %v3272 = vpop.permute.xlu0 %3271
        %3273 = vrot.lane.b32.xlu0 %v2073, 32
        %v3274 = vpop.permute.xlu0 %3273
        %3275 = vrot.lane.b32.xlu0 %v2074, 32
        %v3276 = vpop.permute.xlu0 %3275
        %3277 = vrot.lane.b32.xlu0 %v2075, 32
        %v3278 = vpop.permute.xlu0 %3277
        %3279 = vrot.lane.b32.xlu0 %v2076, 32
        %v3280 = vpop.permute.xlu0 %3279
        %3281 = vrot.lane.b32.xlu0 %v2077, 32
        %v3282 = vpop.permute.xlu0 %3281
        %3283 = vrot.lane.b32.xlu0 %v2078, 32
        %v3284 = vpop.permute.xlu0 %3283
        %3285 = vrot.lane.b32.xlu0 %v2079, 32
        %v3286 = vpop.permute.xlu0 %3285
        %3287 = vrot.lane.b32.xlu0 %v2080, 32
        %v3288 = vpop.permute.xlu0 %3287
        %3289 = vrot.lane.b32.xlu0 %v2081, 32
        %v3290 = vpop.permute.xlu0 %3289
        %3291 = vrot.lane.b32.xlu0 %v2082, 32
        %v3292 = vpop.permute.xlu0 %3291
        %3293 = vrot.lane.b32.xlu0 %v2083, 32
        %v3294 = vpop.permute.xlu0 %3293
        %3295 = vrot.lane.b32.xlu0 %v2084, 32
        %v3296 = vpop.permute.xlu0 %3295
        %3297 = vrot.lane.b32.xlu0 %v2085, 32
        %v3298 = vpop.permute.xlu0 %3297
        %3299 = vrot.lane.b32.xlu0 %v2086, 32
        %v3300 = vpop.permute.xlu0 %3299
        %3301 = vrot.lane.b32.xlu0 %v2087, 32
        %v3302 = vpop.permute.xlu0 %3301
        %3303 = vrot.lane.b32.xlu0 %v2088, 32
        %v3304 = vpop.permute.xlu0 %3303
        %3305 = vrot.lane.b32.xlu0 %v2089, 32
        %v3306 = vpop.permute.xlu0 %3305
        %3307 = vrot.lane.b32.xlu0 %v2090, 32
        %v3308 = vpop.permute.xlu0 %3307
        %3309 = vrot.lane.b32.xlu0 %v2091, 32
        %v3310 = vpop.permute.xlu0 %3309
        %3311 = vrot.lane.b32.xlu0 %v2092, 32
        %v3312 = vpop.permute.xlu0 %3311
        %3313 = vrot.lane.b32.xlu0 %v2093, 32
        %v3314 = vpop.permute.xlu0 %3313
        %3315 = vrot.lane.b32.xlu0 %v2094, 32
        %v3316 = vpop.permute.xlu0 %3315
        %3317 = vrot.lane.b32.xlu0 %v2095, 32
        %v3318 = vpop.permute.xlu0 %3317
        %s3351 = scalar_lea.vmem [#allocation2], 384
        %3352 = vst.msk [vmem:[%s3351] sm:$0xf] %vm2128, %v3256
        %3353 = vst.msk [vmem:[%s3351 + $0x4] sm:$0xf] %vm2128, %v3258
        %3354 = vst.msk [vmem:[%s3351 + $0x8] sm:$0xf] %vm2128, %v3260
        %3355 = vst.msk [vmem:[%s3351 + $0xc] sm:$0xf] %vm2128, %v3262
        %3356 = vst.msk [vmem:[%s3351 + $0x10] sm:$0xf] %vm2128, %v3264
        %3357 = vst.msk [vmem:[%s3351 + $0x14] sm:$0xf] %vm2128, %v3266
        %3358 = vst.msk [vmem:[%s3351 + $0x18] sm:$0xf] %vm2128, %v3268
        %3359 = vst.msk [vmem:[%s3351 + $0x1c] sm:$0xf] %vm2128, %v3270
        %3360 = vst.msk [vmem:[%s3351 + $0x20] sm:$0xf] %vm2128, %v3272
        %3361 = vst.msk [vmem:[%s3351 + $0x24] sm:$0xf] %vm2128, %v3274
        %3362 = vst.msk [vmem:[%s3351 + $0x28] sm:$0xf] %vm2128, %v3276
        %3363 = vst.msk [vmem:[%s3351 + $0x2c] sm:$0xf] %vm2128, %v3278
        %3364 = vst.msk [vmem:[%s3351 + $0x30] sm:$0xf] %vm2128, %v3280
        %3365 = vst.msk [vmem:[%s3351 + $0x34] sm:$0xf] %vm2128, %v3282
        %3366 = vst.msk [vmem:[%s3351 + $0x38] sm:$0xf] %vm2128, %v3284
        %3367 = vst.msk [vmem:[%s3351 + $0x3c] sm:$0xf] %vm2128, %v3286
        %3368 = vst.msk [vmem:[%s3351 + $0x40] sm:$0xf] %vm2128, %v3288
        %3369 = vst.msk [vmem:[%s3351 + $0x44] sm:$0xf] %vm2128, %v3290
        %3370 = vst.msk [vmem:[%s3351 + $0x48] sm:$0xf] %vm2128, %v3292
        %3371 = vst.msk [vmem:[%s3351 + $0x4c] sm:$0xf] %vm2128, %v3294
        %3372 = vst.msk [vmem:[%s3351 + $0x50] sm:$0xf] %vm2128, %v3296
        %3373 = vst.msk [vmem:[%s3351 + $0x54] sm:$0xf] %vm2128, %v3298
        %3374 = vst.msk [vmem:[%s3351 + $0x58] sm:$0xf] %vm2128, %v3300
        %3375 = vst.msk [vmem:[%s3351 + $0x5c] sm:$0xf] %vm2128, %v3302
        %3376 = vst.msk [vmem:[%s3351 + $0x60] sm:$0xf] %vm2128, %v3304
        %3377 = vst.msk [vmem:[%s3351 + $0x64] sm:$0xf] %vm2128, %v3306
        %3378 = vst.msk [vmem:[%s3351 + $0x68] sm:$0xf] %vm2128, %v3308
        %3379 = vst.msk [vmem:[%s3351 + $0x6c] sm:$0xf] %vm2128, %v3310
        %3380 = vst.msk [vmem:[%s3351 + $0x70] sm:$0xf] %vm2128, %v3312
        %3381 = vst.msk [vmem:[%s3351 + $0x74] sm:$0xf] %vm2128, %v3314
        %3382 = vst.msk [vmem:[%s3351 + $0x78] sm:$0xf] %vm2128, %v3316
        %3383 = vst.msk [vmem:[%s3351 + $0x7c] sm:$0xf] %vm2128, %v3318
        %3384 = vrot.lane.b32.xlu0 %v2225, 32
        %v3385 = vpop.permute.xlu0 %3384
        %3386 = vrot.lane.b32.xlu0 %v2226, 32
        %v3387 = vpop.permute.xlu0 %3386
        %3388 = vrot.lane.b32.xlu0 %v2227, 32
        %v3389 = vpop.permute.xlu0 %3388
        %3390 = vrot.lane.b32.xlu0 %v2228, 32
        %v3391 = vpop.permute.xlu0 %3390
        %3392 = vrot.lane.b32.xlu0 %v2229, 32
        %v3393 = vpop.permute.xlu0 %3392
        %3394 = vrot.lane.b32.xlu0 %v2230, 32
        %v3395 = vpop.permute.xlu0 %3394
        %3396 = vrot.lane.b32.xlu0 %v2231, 32
        %v3397 = vpop.permute.xlu0 %3396
        %3398 = vrot.lane.b32.xlu0 %v2232, 32
        %v3399 = vpop.permute.xlu0 %3398
        %3400 = vrot.lane.b32.xlu0 %v2233, 32
        %v3401 = vpop.permute.xlu0 %3400
        %3402 = vrot.lane.b32.xlu0 %v2234, 32
        %v3403 = vpop.permute.xlu0 %3402
        %3404 = vrot.lane.b32.xlu0 %v2235, 32
        %v3405 = vpop.permute.xlu0 %3404
        %3406 = vrot.lane.b32.xlu0 %v2236, 32
        %v3407 = vpop.permute.xlu0 %3406
        %3408 = vrot.lane.b32.xlu0 %v2237, 32
        %v3409 = vpop.permute.xlu0 %3408
        %3410 = vrot.lane.b32.xlu0 %v2238, 32
        %v3411 = vpop.permute.xlu0 %3410
        %3412 = vrot.lane.b32.xlu0 %v2239, 32
        %v3413 = vpop.permute.xlu0 %3412
        %3414 = vrot.lane.b32.xlu0 %v2240, 32
        %v3415 = vpop.permute.xlu0 %3414
        %3416 = vrot.lane.b32.xlu0 %v2241, 32
        %v3417 = vpop.permute.xlu0 %3416
        %3418 = vrot.lane.b32.xlu0 %v2242, 32
        %v3419 = vpop.permute.xlu0 %3418
        %3420 = vrot.lane.b32.xlu0 %v2243, 32
        %v3421 = vpop.permute.xlu0 %3420
        %3422 = vrot.lane.b32.xlu0 %v2244, 32
        %v3423 = vpop.permute.xlu0 %3422
        %3424 = vrot.lane.b32.xlu0 %v2245, 32
        %v3425 = vpop.permute.xlu0 %3424
        %3426 = vrot.lane.b32.xlu0 %v2246, 32
        %v3427 = vpop.permute.xlu0 %3426
        %3428 = vrot.lane.b32.xlu0 %v2247, 32
        %v3429 = vpop.permute.xlu0 %3428
        %3430 = vrot.lane.b32.xlu0 %v2248, 32
        %v3431 = vpop.permute.xlu0 %3430
        %3432 = vrot.lane.b32.xlu0 %v2249, 32
        %v3433 = vpop.permute.xlu0 %3432
        %3434 = vrot.lane.b32.xlu0 %v2250, 32
        %v3435 = vpop.permute.xlu0 %3434
        %3436 = vrot.lane.b32.xlu0 %v2251, 32
        %v3437 = vpop.permute.xlu0 %3436
        %3438 = vrot.lane.b32.xlu0 %v2252, 32
        %v3439 = vpop.permute.xlu0 %3438
        %3440 = vrot.lane.b32.xlu0 %v2253, 32
        %v3441 = vpop.permute.xlu0 %3440
        %3442 = vrot.lane.b32.xlu0 %v2254, 32
        %v3443 = vpop.permute.xlu0 %3442
        %3444 = vrot.lane.b32.xlu0 %v2255, 32
        %v3445 = vpop.permute.xlu0 %3444
        %3446 = vrot.lane.b32.xlu0 %v2256, 32
        %v3447 = vpop.permute.xlu0 %3446
        %s3480 = scalar_lea.vmem [#allocation3], 384
        %3481 = vst.msk [vmem:[%s3480] sm:$0xf] %vm2128, %v3385
        %3482 = vst.msk [vmem:[%s3480 + $0x4] sm:$0xf] %vm2128, %v3387
        %3483 = vst.msk [vmem:[%s3480 + $0x8] sm:$0xf] %vm2128, %v3389
        %3484 = vst.msk [vmem:[%s3480 + $0xc] sm:$0xf] %vm2128, %v3391
        %3485 = vst.msk [vmem:[%s3480 + $0x10] sm:$0xf] %vm2128, %v3393
        %3486 = vst.msk [vmem:[%s3480 + $0x14] sm:$0xf] %vm2128, %v3395
        %3487 = vst.msk [vmem:[%s3480 + $0x18] sm:$0xf] %vm2128, %v3397
        %3488 = vst.msk [vmem:[%s3480 + $0x1c] sm:$0xf] %vm2128, %v3399
        %3489 = vst.msk [vmem:[%s3480 + $0x20] sm:$0xf] %vm2128, %v3401
        %3490 = vst.msk [vmem:[%s3480 + $0x24] sm:$0xf] %vm2128, %v3403
        %3491 = vst.msk [vmem:[%s3480 + $0x28] sm:$0xf] %vm2128, %v3405
        %3492 = vst.msk [vmem:[%s3480 + $0x2c] sm:$0xf] %vm2128, %v3407
        %3493 = vst.msk [vmem:[%s3480 + $0x30] sm:$0xf] %vm2128, %v3409
        %3494 = vst.msk [vmem:[%s3480 + $0x34] sm:$0xf] %vm2128, %v3411
        %3495 = vst.msk [vmem:[%s3480 + $0x38] sm:$0xf] %vm2128, %v3413
        %3496 = vst.msk [vmem:[%s3480 + $0x3c] sm:$0xf] %vm2128, %v3415
        %3497 = vst.msk [vmem:[%s3480 + $0x40] sm:$0xf] %vm2128, %v3417
        %3498 = vst.msk [vmem:[%s3480 + $0x44] sm:$0xf] %vm2128, %v3419
        %3499 = vst.msk [vmem:[%s3480 + $0x48] sm:$0xf] %vm2128, %v3421
        %3500 = vst.msk [vmem:[%s3480 + $0x4c] sm:$0xf] %vm2128, %v3423
        %3501 = vst.msk [vmem:[%s3480 + $0x50] sm:$0xf] %vm2128, %v3425
        %3502 = vst.msk [vmem:[%s3480 + $0x54] sm:$0xf] %vm2128, %v3427
        %3503 = vst.msk [vmem:[%s3480 + $0x58] sm:$0xf] %vm2128, %v3429
        %3504 = vst.msk [vmem:[%s3480 + $0x5c] sm:$0xf] %vm2128, %v3431
        %3505 = vst.msk [vmem:[%s3480 + $0x60] sm:$0xf] %vm2128, %v3433
        %3506 = vst.msk [vmem:[%s3480 + $0x64] sm:$0xf] %vm2128, %v3435
        %3507 = vst.msk [vmem:[%s3480 + $0x68] sm:$0xf] %vm2128, %v3437
        %3508 = vst.msk [vmem:[%s3480 + $0x6c] sm:$0xf] %vm2128, %v3439
        %3509 = vst.msk [vmem:[%s3480 + $0x70] sm:$0xf] %vm2128, %v3441
        %3510 = vst.msk [vmem:[%s3480 + $0x74] sm:$0xf] %vm2128, %v3443
        %3511 = vst.msk [vmem:[%s3480 + $0x78] sm:$0xf] %vm2128, %v3445
        %3512 = vst.msk [vmem:[%s3480 + $0x7c] sm:$0xf] %vm2128, %v3447
        %3513 = vrot.lane.b32.xlu0 %v2385, 32
        %v3514 = vpop.permute.xlu0 %3513
        %3515 = vrot.lane.b32.xlu0 %v2386, 32
        %v3516 = vpop.permute.xlu0 %3515
        %3517 = vrot.lane.b32.xlu0 %v2387, 32
        %v3518 = vpop.permute.xlu0 %3517
        %3519 = vrot.lane.b32.xlu0 %v2388, 32
        %v3520 = vpop.permute.xlu0 %3519
        %3521 = vrot.lane.b32.xlu0 %v2389, 32
        %v3522 = vpop.permute.xlu0 %3521
        %3523 = vrot.lane.b32.xlu0 %v2390, 32
        %v3524 = vpop.permute.xlu0 %3523
        %3525 = vrot.lane.b32.xlu0 %v2391, 32
        %v3526 = vpop.permute.xlu0 %3525
        %3527 = vrot.lane.b32.xlu0 %v2392, 32
        %v3528 = vpop.permute.xlu0 %3527
        %3529 = vrot.lane.b32.xlu0 %v2393, 32
        %v3530 = vpop.permute.xlu0 %3529
        %3531 = vrot.lane.b32.xlu0 %v2394, 32
        %v3532 = vpop.permute.xlu0 %3531
        %3533 = vrot.lane.b32.xlu0 %v2395, 32
        %v3534 = vpop.permute.xlu0 %3533
        %3535 = vrot.lane.b32.xlu0 %v2396, 32
        %v3536 = vpop.permute.xlu0 %3535
        %3537 = vrot.lane.b32.xlu0 %v2397, 32
        %v3538 = vpop.permute.xlu0 %3537
        %3539 = vrot.lane.b32.xlu0 %v2398, 32
        %v3540 = vpop.permute.xlu0 %3539
        %3541 = vrot.lane.b32.xlu0 %v2399, 32
        %v3542 = vpop.permute.xlu0 %3541
        %3543 = vrot.lane.b32.xlu0 %v2400, 32
        %v3544 = vpop.permute.xlu0 %3543
        %3545 = vrot.lane.b32.xlu0 %v2401, 32
        %v3546 = vpop.permute.xlu0 %3545
        %3547 = vrot.lane.b32.xlu0 %v2402, 32
        %v3548 = vpop.permute.xlu0 %3547
        %3549 = vrot.lane.b32.xlu0 %v2403, 32
        %v3550 = vpop.permute.xlu0 %3549
        %3551 = vrot.lane.b32.xlu0 %v2404, 32
        %v3552 = vpop.permute.xlu0 %3551
        %3553 = vrot.lane.b32.xlu0 %v2405, 32
        %v3554 = vpop.permute.xlu0 %3553
        %3555 = vrot.lane.b32.xlu0 %v2406, 32
        %v3556 = vpop.permute.xlu0 %3555
        %3557 = vrot.lane.b32.xlu0 %v2407, 32
        %v3558 = vpop.permute.xlu0 %3557
        %3559 = vrot.lane.b32.xlu0 %v2408, 32
        %v3560 = vpop.permute.xlu0 %3559
        %3561 = vrot.lane.b32.xlu0 %v2409, 32
        %v3562 = vpop.permute.xlu0 %3561
        %3563 = vrot.lane.b32.xlu0 %v2410, 32
        %v3564 = vpop.permute.xlu0 %3563
        %3565 = vrot.lane.b32.xlu0 %v2411, 32
        %v3566 = vpop.permute.xlu0 %3565
        %3567 = vrot.lane.b32.xlu0 %v2412, 32
        %v3568 = vpop.permute.xlu0 %3567
        %3569 = vrot.lane.b32.xlu0 %v2413, 32
        %v3570 = vpop.permute.xlu0 %3569
        %3571 = vrot.lane.b32.xlu0 %v2414, 32
        %v3572 = vpop.permute.xlu0 %3571
        %3573 = vrot.lane.b32.xlu0 %v2415, 32
        %v3574 = vpop.permute.xlu0 %3573
        %3575 = vrot.lane.b32.xlu0 %v2416, 32
        %v3576 = vpop.permute.xlu0 %3575
        %s3609 = scalar_lea.vmem [#allocation4], 384
        %3610 = vst.msk [vmem:[%s3609] sm:$0xf] %vm2128, %v3514
        %3611 = vst.msk [vmem:[%s3609 + $0x4] sm:$0xf] %vm2128, %v3516
        %3612 = vst.msk [vmem:[%s3609 + $0x8] sm:$0xf] %vm2128, %v3518
        %3613 = vst.msk [vmem:[%s3609 + $0xc] sm:$0xf] %vm2128, %v3520
        %3614 = vst.msk [vmem:[%s3609 + $0x10] sm:$0xf] %vm2128, %v3522
        %3615 = vst.msk [vmem:[%s3609 + $0x14] sm:$0xf] %vm2128, %v3524
        %3616 = vst.msk [vmem:[%s3609 + $0x18] sm:$0xf] %vm2128, %v3526
        %3617 = vst.msk [vmem:[%s3609 + $0x1c] sm:$0xf] %vm2128, %v3528
        %3618 = vst.msk [vmem:[%s3609 + $0x20] sm:$0xf] %vm2128, %v3530
        %3619 = vst.msk [vmem:[%s3609 + $0x24] sm:$0xf] %vm2128, %v3532
        %3620 = vst.msk [vmem:[%s3609 + $0x28] sm:$0xf] %vm2128, %v3534
        %3621 = vst.msk [vmem:[%s3609 + $0x2c] sm:$0xf] %vm2128, %v3536
        %3622 = vst.msk [vmem:[%s3609 + $0x30] sm:$0xf] %vm2128, %v3538
        %3623 = vst.msk [vmem:[%s3609 + $0x34] sm:$0xf] %vm2128, %v3540
        %3624 = vst.msk [vmem:[%s3609 + $0x38] sm:$0xf] %vm2128, %v3542
        %3625 = vst.msk [vmem:[%s3609 + $0x3c] sm:$0xf] %vm2128, %v3544
        %3626 = vst.msk [vmem:[%s3609 + $0x40] sm:$0xf] %vm2128, %v3546
        %3627 = vst.msk [vmem:[%s3609 + $0x44] sm:$0xf] %vm2128, %v3548
        %3628 = vst.msk [vmem:[%s3609 + $0x48] sm:$0xf] %vm2128, %v3550
        %3629 = vst.msk [vmem:[%s3609 + $0x4c] sm:$0xf] %vm2128, %v3552
        %3630 = vst.msk [vmem:[%s3609 + $0x50] sm:$0xf] %vm2128, %v3554
        %3631 = vst.msk [vmem:[%s3609 + $0x54] sm:$0xf] %vm2128, %v3556
        %3632 = vst.msk [vmem:[%s3609 + $0x58] sm:$0xf] %vm2128, %v3558
        %3633 = vst.msk [vmem:[%s3609 + $0x5c] sm:$0xf] %vm2128, %v3560
        %3634 = vst.msk [vmem:[%s3609 + $0x60] sm:$0xf] %vm2128, %v3562
        %3635 = vst.msk [vmem:[%s3609 + $0x64] sm:$0xf] %vm2128, %v3564
        %3636 = vst.msk [vmem:[%s3609 + $0x68] sm:$0xf] %vm2128, %v3566
        %3637 = vst.msk [vmem:[%s3609 + $0x6c] sm:$0xf] %vm2128, %v3568
        %3638 = vst.msk [vmem:[%s3609 + $0x70] sm:$0xf] %vm2128, %v3570
        %3639 = vst.msk [vmem:[%s3609 + $0x74] sm:$0xf] %vm2128, %v3572
        %3640 = vst.msk [vmem:[%s3609 + $0x78] sm:$0xf] %vm2128, %v3574
        %3641 = vst.msk [vmem:[%s3609 + $0x7c] sm:$0xf] %vm2128, %v3576
        %v3642 = vpack.c.bf16 %v1056, %v1052
        %v3643 = vpack.c.bf16 %v1066, %v1062
        %v3644 = vpack.c.bf16 %v1076, %v1072
        %v3645 = vpack.c.bf16 %v1086, %v1082
        %v3646 = vpack.c.bf16 %v1096, %v1092
        %v3647 = vpack.c.bf16 %v1106, %v1102
        %v3648 = vpack.c.bf16 %v1116, %v1112
        %v3649 = vpack.c.bf16 %v1126, %v1122
        %v3650 = vpack.c.bf16 %v1136, %v1132
        %v3651 = vpack.c.bf16 %v1146, %v1142
        %v3652 = vpack.c.bf16 %v1156, %v1152
        %v3653 = vpack.c.bf16 %v1166, %v1162
        %v3654 = vpack.c.bf16 %v1176, %v1172
        %v3655 = vpack.c.bf16 %v1186, %v1182
        %v3656 = vpack.c.bf16 %v1196, %v1192
        %v3657 = vpack.c.bf16 %v1206, %v1202
        %v3674 = vunpack.c.l.b16 %v3642
        %v3675 = vunpack.c.h.b16 %v3642
        %v3676 = vunpack.c.l.b16 %v3643
        %v3677 = vunpack.c.h.b16 %v3643
        %v3678 = vunpack.c.l.b16 %v3644
        %v3679 = vunpack.c.h.b16 %v3644
        %v3680 = vunpack.c.l.b16 %v3645
        %v3681 = vunpack.c.h.b16 %v3645
        %v3682 = vunpack.c.l.b16 %v3646
        %v3683 = vunpack.c.h.b16 %v3646
        %v3684 = vunpack.c.l.b16 %v3647
        %v3685 = vunpack.c.h.b16 %v3647
        %v3686 = vunpack.c.l.b16 %v3648
        %v3687 = vunpack.c.h.b16 %v3648
        %v3688 = vunpack.c.l.b16 %v3649
        %v3689 = vunpack.c.h.b16 %v3649
        %v3690 = vunpack.c.l.b16 %v3650
        %v3691 = vunpack.c.h.b16 %v3650
        %v3692 = vunpack.c.l.b16 %v3651
        %v3693 = vunpack.c.h.b16 %v3651
        %v3694 = vunpack.c.l.b16 %v3652
        %v3695 = vunpack.c.h.b16 %v3652
        %v3696 = vunpack.c.l.b16 %v3653
        %v3697 = vunpack.c.h.b16 %v3653
        %v3698 = vunpack.c.l.b16 %v3654
        %v3699 = vunpack.c.h.b16 %v3654
        %v3700 = vunpack.c.l.b16 %v3655
        %v3701 = vunpack.c.h.b16 %v3655
        %v3702 = vunpack.c.l.b16 %v3656
        %v3703 = vunpack.c.h.b16 %v3656
        %v3704 = vunpack.c.l.b16 %v3657
        %v3705 = vunpack.c.h.b16 %v3657
        %v3706 = vpack.c.b16 %v3674, %v3674
        %v3707 = vpack.c.b16 %v3675, %v3675
        %v3708 = vpack.c.b16 %v3676, %v3676
        %v3709 = vpack.c.b16 %v3677, %v3677
        %v3710 = vpack.c.b16 %v3678, %v3678
        %v3711 = vpack.c.b16 %v3679, %v3679
        %v3712 = vpack.c.b16 %v3680, %v3680
        %v3713 = vpack.c.b16 %v3681, %v3681
        %v3714 = vpack.c.b16 %v3682, %v3682
        %v3715 = vpack.c.b16 %v3683, %v3683
        %v3716 = vpack.c.b16 %v3684, %v3684
        %v3717 = vpack.c.b16 %v3685, %v3685
        %v3718 = vpack.c.b16 %v3686, %v3686
        %v3719 = vpack.c.b16 %v3687, %v3687
        %v3720 = vpack.c.b16 %v3688, %v3688
        %v3721 = vpack.c.b16 %v3689, %v3689
        %v3722 = vpack.c.b16 %v3690, %v3690
        %v3723 = vpack.c.b16 %v3691, %v3691
        %v3724 = vpack.c.b16 %v3692, %v3692
        %v3725 = vpack.c.b16 %v3693, %v3693
        %v3726 = vpack.c.b16 %v3694, %v3694
        %v3727 = vpack.c.b16 %v3695, %v3695
        %v3728 = vpack.c.b16 %v3696, %v3696
        %v3729 = vpack.c.b16 %v3697, %v3697
        %v3730 = vpack.c.b16 %v3698, %v3698
        %v3731 = vpack.c.b16 %v3699, %v3699
        %v3732 = vpack.c.b16 %v3700, %v3700
        %v3733 = vpack.c.b16 %v3701, %v3701
        %v3734 = vpack.c.b16 %v3702, %v3702
        %v3735 = vpack.c.b16 %v3703, %v3703
        %v3736 = vpack.c.b16 %v3704, %v3704
        %v3737 = vpack.c.b16 %v3705, %v3705
        %s3770 = scalar_lea.vmem [#allocation2], 512
        %3771 = vst.msk [vmem:[%s3770] sm:$0xf] %vm2128, %v3706
        %3772 = vst.msk [vmem:[%s3770 + $0x4] sm:$0xf] %vm2128, %v3707
        %3773 = vst.msk [vmem:[%s3770 + $0x8] sm:$0xf] %vm2128, %v3708
        %3774 = vst.msk [vmem:[%s3770 + $0xc] sm:$0xf] %vm2128, %v3709
        %3775 = vst.msk [vmem:[%s3770 + $0x10] sm:$0xf] %vm2128, %v3710
        %3776 = vst.msk [vmem:[%s3770 + $0x14] sm:$0xf] %vm2128, %v3711
        %3777 = vst.msk [vmem:[%s3770 + $0x18] sm:$0xf] %vm2128, %v3712
        %3778 = vst.msk [vmem:[%s3770 + $0x1c] sm:$0xf] %vm2128, %v3713
        %3779 = vst.msk [vmem:[%s3770 + $0x20] sm:$0xf] %vm2128, %v3714
        %3780 = vst.msk [vmem:[%s3770 + $0x24] sm:$0xf] %vm2128, %v3715
        %3781 = vst.msk [vmem:[%s3770 + $0x28] sm:$0xf] %vm2128, %v3716
        %3782 = vst.msk [vmem:[%s3770 + $0x2c] sm:$0xf] %vm2128, %v3717
        %3783 = vst.msk [vmem:[%s3770 + $0x30] sm:$0xf] %vm2128, %v3718
        %3784 = vst.msk [vmem:[%s3770 + $0x34] sm:$0xf] %vm2128, %v3719
        %3785 = vst.msk [vmem:[%s3770 + $0x38] sm:$0xf] %vm2128, %v3720
        %3786 = vst.msk [vmem:[%s3770 + $0x3c] sm:$0xf] %vm2128, %v3721
        %3787 = vst.msk [vmem:[%s3770 + $0x40] sm:$0xf] %vm2128, %v3722
        %3788 = vst.msk [vmem:[%s3770 + $0x44] sm:$0xf] %vm2128, %v3723
        %3789 = vst.msk [vmem:[%s3770 + $0x48] sm:$0xf] %vm2128, %v3724
        %3790 = vst.msk [vmem:[%s3770 + $0x4c] sm:$0xf] %vm2128, %v3725
        %3791 = vst.msk [vmem:[%s3770 + $0x50] sm:$0xf] %vm2128, %v3726
        %3792 = vst.msk [vmem:[%s3770 + $0x54] sm:$0xf] %vm2128, %v3727
        %3793 = vst.msk [vmem:[%s3770 + $0x58] sm:$0xf] %vm2128, %v3728
        %3794 = vst.msk [vmem:[%s3770 + $0x5c] sm:$0xf] %vm2128, %v3729
        %3795 = vst.msk [vmem:[%s3770 + $0x60] sm:$0xf] %vm2128, %v3730
        %3796 = vst.msk [vmem:[%s3770 + $0x64] sm:$0xf] %vm2128, %v3731
        %3797 = vst.msk [vmem:[%s3770 + $0x68] sm:$0xf] %vm2128, %v3732
        %3798 = vst.msk [vmem:[%s3770 + $0x6c] sm:$0xf] %vm2128, %v3733
        %3799 = vst.msk [vmem:[%s3770 + $0x70] sm:$0xf] %vm2128, %v3734
        %3800 = vst.msk [vmem:[%s3770 + $0x74] sm:$0xf] %vm2128, %v3735
        %3801 = vst.msk [vmem:[%s3770 + $0x78] sm:$0xf] %vm2128, %v3736
        %3802 = vst.msk [vmem:[%s3770 + $0x7c] sm:$0xf] %vm2128, %v3737
        %v3803 = vpack.c.bf16 %v1655, %v1651
        %v3804 = vpack.c.bf16 %v1665, %v1661
        %v3805 = vpack.c.bf16 %v1675, %v1671
        %v3806 = vpack.c.bf16 %v1685, %v1681
        %v3807 = vpack.c.bf16 %v1695, %v1691
        %v3808 = vpack.c.bf16 %v1705, %v1701
        %v3809 = vpack.c.bf16 %v1715, %v1711
        %v3810 = vpack.c.bf16 %v1725, %v1721
        %v3811 = vpack.c.bf16 %v1735, %v1731
        %v3812 = vpack.c.bf16 %v1745, %v1741
        %v3813 = vpack.c.bf16 %v1755, %v1751
        %v3814 = vpack.c.bf16 %v1765, %v1761
        %v3815 = vpack.c.bf16 %v1775, %v1771
        %v3816 = vpack.c.bf16 %v1785, %v1781
        %v3817 = vpack.c.bf16 %v1795, %v1791
        %v3818 = vpack.c.bf16 %v1805, %v1801
        %v3835 = vunpack.c.l.b16 %v3803
        %v3836 = vunpack.c.h.b16 %v3803
        %v3837 = vunpack.c.l.b16 %v3804
        %v3838 = vunpack.c.h.b16 %v3804
        %v3839 = vunpack.c.l.b16 %v3805
        %v3840 = vunpack.c.h.b16 %v3805
        %v3841 = vunpack.c.l.b16 %v3806
        %v3842 = vunpack.c.h.b16 %v3806
        %v3843 = vunpack.c.l.b16 %v3807
        %v3844 = vunpack.c.h.b16 %v3807
        %v3845 = vunpack.c.l.b16 %v3808
        %v3846 = vunpack.c.h.b16 %v3808
        %v3847 = vunpack.c.l.b16 %v3809
        %v3848 = vunpack.c.h.b16 %v3809
        %v3849 = vunpack.c.l.b16 %v3810
        %v3850 = vunpack.c.h.b16 %v3810
        %v3851 = vunpack.c.l.b16 %v3811
        %v3852 = vunpack.c.h.b16 %v3811
        %v3853 = vunpack.c.l.b16 %v3812
        %v3854 = vunpack.c.h.b16 %v3812
        %v3855 = vunpack.c.l.b16 %v3813
        %v3856 = vunpack.c.h.b16 %v3813
        %v3857 = vunpack.c.l.b16 %v3814
        %v3858 = vunpack.c.h.b16 %v3814
        %v3859 = vunpack.c.l.b16 %v3815
        %v3860 = vunpack.c.h.b16 %v3815
        %v3861 = vunpack.c.l.b16 %v3816
        %v3862 = vunpack.c.h.b16 %v3816
        %v3863 = vunpack.c.l.b16 %v3817
        %v3864 = vunpack.c.h.b16 %v3817
        %v3865 = vunpack.c.l.b16 %v3818
        %v3866 = vunpack.c.h.b16 %v3818
        %v3867 = vpack.c.b16 %v3835, %v3835
        %v3868 = vpack.c.b16 %v3836, %v3836
        %v3869 = vpack.c.b16 %v3837, %v3837
        %v3870 = vpack.c.b16 %v3838, %v3838
        %v3871 = vpack.c.b16 %v3839, %v3839
        %v3872 = vpack.c.b16 %v3840, %v3840
        %v3873 = vpack.c.b16 %v3841, %v3841
        %v3874 = vpack.c.b16 %v3842, %v3842
        %v3875 = vpack.c.b16 %v3843, %v3843
        %v3876 = vpack.c.b16 %v3844, %v3844
        %v3877 = vpack.c.b16 %v3845, %v3845
        %v3878 = vpack.c.b16 %v3846, %v3846
        %v3879 = vpack.c.b16 %v3847, %v3847
        %v3880 = vpack.c.b16 %v3848, %v3848
        %v3881 = vpack.c.b16 %v3849, %v3849
        %v3882 = vpack.c.b16 %v3850, %v3850
        %v3883 = vpack.c.b16 %v3851, %v3851
        %v3884 = vpack.c.b16 %v3852, %v3852
        %v3885 = vpack.c.b16 %v3853, %v3853
        %v3886 = vpack.c.b16 %v3854, %v3854
        %v3887 = vpack.c.b16 %v3855, %v3855
        %v3888 = vpack.c.b16 %v3856, %v3856
        %v3889 = vpack.c.b16 %v3857, %v3857
        %v3890 = vpack.c.b16 %v3858, %v3858
        %v3891 = vpack.c.b16 %v3859, %v3859
        %v3892 = vpack.c.b16 %v3860, %v3860
        %v3893 = vpack.c.b16 %v3861, %v3861
        %v3894 = vpack.c.b16 %v3862, %v3862
        %v3895 = vpack.c.b16 %v3863, %v3863
        %v3896 = vpack.c.b16 %v3864, %v3864
        %v3897 = vpack.c.b16 %v3865, %v3865
        %v3898 = vpack.c.b16 %v3866, %v3866
        %s3931 = scalar_lea.vmem [#allocation3], 512
        %3932 = vst.msk [vmem:[%s3931] sm:$0xf] %vm2128, %v3867
        %3933 = vst.msk [vmem:[%s3931 + $0x4] sm:$0xf] %vm2128, %v3868
        %3934 = vst.msk [vmem:[%s3931 + $0x8] sm:$0xf] %vm2128, %v3869
        %3935 = vst.msk [vmem:[%s3931 + $0xc] sm:$0xf] %vm2128, %v3870
        %3936 = vst.msk [vmem:[%s3931 + $0x10] sm:$0xf] %vm2128, %v3871
        %3937 = vst.msk [vmem:[%s3931 + $0x14] sm:$0xf] %vm2128, %v3872
        %3938 = vst.msk [vmem:[%s3931 + $0x18] sm:$0xf] %vm2128, %v3873
        %3939 = vst.msk [vmem:[%s3931 + $0x1c] sm:$0xf] %vm2128, %v3874
        %3940 = vst.msk [vmem:[%s3931 + $0x20] sm:$0xf] %vm2128, %v3875
        %3941 = vst.msk [vmem:[%s3931 + $0x24] sm:$0xf] %vm2128, %v3876
        %3942 = vst.msk [vmem:[%s3931 + $0x28] sm:$0xf] %vm2128, %v3877
        %3943 = vst.msk [vmem:[%s3931 + $0x2c] sm:$0xf] %vm2128, %v3878
        %3944 = vst.msk [vmem:[%s3931 + $0x30] sm:$0xf] %vm2128, %v3879
        %3945 = vst.msk [vmem:[%s3931 + $0x34] sm:$0xf] %vm2128, %v3880
        %3946 = vst.msk [vmem:[%s3931 + $0x38] sm:$0xf] %vm2128, %v3881
        %3947 = vst.msk [vmem:[%s3931 + $0x3c] sm:$0xf] %vm2128, %v3882
        %3948 = vst.msk [vmem:[%s3931 + $0x40] sm:$0xf] %vm2128, %v3883
        %3949 = vst.msk [vmem:[%s3931 + $0x44] sm:$0xf] %vm2128, %v3884
        %3950 = vst.msk [vmem:[%s3931 + $0x48] sm:$0xf] %vm2128, %v3885
        %3951 = vst.msk [vmem:[%s3931 + $0x4c] sm:$0xf] %vm2128, %v3886
        %3952 = vst.msk [vmem:[%s3931 + $0x50] sm:$0xf] %vm2128, %v3887
        %3953 = vst.msk [vmem:[%s3931 + $0x54] sm:$0xf] %vm2128, %v3888
        %3954 = vst.msk [vmem:[%s3931 + $0x58] sm:$0xf] %vm2128, %v3889
        %3955 = vst.msk [vmem:[%s3931 + $0x5c] sm:$0xf] %vm2128, %v3890
        %3956 = vst.msk [vmem:[%s3931 + $0x60] sm:$0xf] %vm2128, %v3891
        %3957 = vst.msk [vmem:[%s3931 + $0x64] sm:$0xf] %vm2128, %v3892
        %3958 = vst.msk [vmem:[%s3931 + $0x68] sm:$0xf] %vm2128, %v3893
        %3959 = vst.msk [vmem:[%s3931 + $0x6c] sm:$0xf] %vm2128, %v3894
        %3960 = vst.msk [vmem:[%s3931 + $0x70] sm:$0xf] %vm2128, %v3895
        %3961 = vst.msk [vmem:[%s3931 + $0x74] sm:$0xf] %vm2128, %v3896
        %3962 = vst.msk [vmem:[%s3931 + $0x78] sm:$0xf] %vm2128, %v3897
        %3963 = vst.msk [vmem:[%s3931 + $0x7c] sm:$0xf] %vm2128, %v3898
        %v3964 = vpack.c.bf16 %v1848, %v1844
        %v3965 = vpack.c.bf16 %v1858, %v1854
        %v3966 = vpack.c.bf16 %v1868, %v1864
        %v3967 = vpack.c.bf16 %v1878, %v1874
        %v3968 = vpack.c.bf16 %v1888, %v1884
        %v3969 = vpack.c.bf16 %v1898, %v1894
        %v3970 = vpack.c.bf16 %v1908, %v1904
        %v3971 = vpack.c.bf16 %v1918, %v1914
        %v3972 = vpack.c.bf16 %v1928, %v1924
        %v3973 = vpack.c.bf16 %v1938, %v1934
        %v3974 = vpack.c.bf16 %v1948, %v1944
        %v3975 = vpack.c.bf16 %v1958, %v1954
        %v3976 = vpack.c.bf16 %v1968, %v1964
        %v3977 = vpack.c.bf16 %v1978, %v1974
        %v3978 = vpack.c.bf16 %v1988, %v1984
        %v3979 = vpack.c.bf16 %v1998, %v1994
        %v3996 = vunpack.c.l.b16 %v3964
        %v3997 = vunpack.c.h.b16 %v3964
        %v3998 = vunpack.c.l.b16 %v3965
        %v3999 = vunpack.c.h.b16 %v3965
        %v4000 = vunpack.c.l.b16 %v3966
        %v4001 = vunpack.c.h.b16 %v3966
        %v4002 = vunpack.c.l.b16 %v3967
        %v4003 = vunpack.c.h.b16 %v3967
        %v4004 = vunpack.c.l.b16 %v3968
        %v4005 = vunpack.c.h.b16 %v3968
        %v4006 = vunpack.c.l.b16 %v3969
        %v4007 = vunpack.c.h.b16 %v3969
        %v4008 = vunpack.c.l.b16 %v3970
        %v4009 = vunpack.c.h.b16 %v3970
        %v4010 = vunpack.c.l.b16 %v3971
        %v4011 = vunpack.c.h.b16 %v3971
        %v4012 = vunpack.c.l.b16 %v3972
        %v4013 = vunpack.c.h.b16 %v3972
        %v4014 = vunpack.c.l.b16 %v3973
        %v4015 = vunpack.c.h.b16 %v3973
        %v4016 = vunpack.c.l.b16 %v3974
        %v4017 = vunpack.c.h.b16 %v3974
        %v4018 = vunpack.c.l.b16 %v3975
        %v4019 = vunpack.c.h.b16 %v3975
        %v4020 = vunpack.c.l.b16 %v3976
        %v4021 = vunpack.c.h.b16 %v3976
        %v4022 = vunpack.c.l.b16 %v3977
        %v4023 = vunpack.c.h.b16 %v3977
        %v4024 = vunpack.c.l.b16 %v3978
        %v4025 = vunpack.c.h.b16 %v3978
        %v4026 = vunpack.c.l.b16 %v3979
        %v4027 = vunpack.c.h.b16 %v3979
        %v4028 = vpack.c.b16 %v3996, %v3996
        %v4029 = vpack.c.b16 %v3997, %v3997
        %v4030 = vpack.c.b16 %v3998, %v3998
        %v4031 = vpack.c.b16 %v3999, %v3999
        %v4032 = vpack.c.b16 %v4000, %v4000
        %v4033 = vpack.c.b16 %v4001, %v4001
        %v4034 = vpack.c.b16 %v4002, %v4002
        %v4035 = vpack.c.b16 %v4003, %v4003
        %v4036 = vpack.c.b16 %v4004, %v4004
        %v4037 = vpack.c.b16 %v4005, %v4005
        %v4038 = vpack.c.b16 %v4006, %v4006
        %v4039 = vpack.c.b16 %v4007, %v4007
        %v4040 = vpack.c.b16 %v4008, %v4008
        %v4041 = vpack.c.b16 %v4009, %v4009
        %v4042 = vpack.c.b16 %v4010, %v4010
        %v4043 = vpack.c.b16 %v4011, %v4011
        %v4044 = vpack.c.b16 %v4012, %v4012
        %v4045 = vpack.c.b16 %v4013, %v4013
        %v4046 = vpack.c.b16 %v4014, %v4014
        %v4047 = vpack.c.b16 %v4015, %v4015
        %v4048 = vpack.c.b16 %v4016, %v4016
        %v4049 = vpack.c.b16 %v4017, %v4017
        %v4050 = vpack.c.b16 %v4018, %v4018
        %v4051 = vpack.c.b16 %v4019, %v4019
        %v4052 = vpack.c.b16 %v4020, %v4020
        %v4053 = vpack.c.b16 %v4021, %v4021
        %v4054 = vpack.c.b16 %v4022, %v4022
        %v4055 = vpack.c.b16 %v4023, %v4023
        %v4056 = vpack.c.b16 %v4024, %v4024
        %v4057 = vpack.c.b16 %v4025, %v4025
        %v4058 = vpack.c.b16 %v4026, %v4026
        %v4059 = vpack.c.b16 %v4027, %v4027
        %s4092 = scalar_lea.vmem [#allocation4], 512
        %4093 = vst.msk [vmem:[%s4092] sm:$0xf] %vm2128, %v4028
        %4094 = vst.msk [vmem:[%s4092 + $0x4] sm:$0xf] %vm2128, %v4029
        %4095 = vst.msk [vmem:[%s4092 + $0x8] sm:$0xf] %vm2128, %v4030
        %4096 = vst.msk [vmem:[%s4092 + $0xc] sm:$0xf] %vm2128, %v4031
        %4097 = vst.msk [vmem:[%s4092 + $0x10] sm:$0xf] %vm2128, %v4032
        %4098 = vst.msk [vmem:[%s4092 + $0x14] sm:$0xf] %vm2128, %v4033
        %4099 = vst.msk [vmem:[%s4092 + $0x18] sm:$0xf] %vm2128, %v4034
        %4100 = vst.msk [vmem:[%s4092 + $0x1c] sm:$0xf] %vm2128, %v4035
        %4101 = vst.msk [vmem:[%s4092 + $0x20] sm:$0xf] %vm2128, %v4036
        %4102 = vst.msk [vmem:[%s4092 + $0x24] sm:$0xf] %vm2128, %v4037
        %4103 = vst.msk [vmem:[%s4092 + $0x28] sm:$0xf] %vm2128, %v4038
        %4104 = vst.msk [vmem:[%s4092 + $0x2c] sm:$0xf] %vm2128, %v4039
        %4105 = vst.msk [vmem:[%s4092 + $0x30] sm:$0xf] %vm2128, %v4040
        %4106 = vst.msk [vmem:[%s4092 + $0x34] sm:$0xf] %vm2128, %v4041
        %4107 = vst.msk [vmem:[%s4092 + $0x38] sm:$0xf] %vm2128, %v4042
        %4108 = vst.msk [vmem:[%s4092 + $0x3c] sm:$0xf] %vm2128, %v4043
        %4109 = vst.msk [vmem:[%s4092 + $0x40] sm:$0xf] %vm2128, %v4044
        %4110 = vst.msk [vmem:[%s4092 + $0x44] sm:$0xf] %vm2128, %v4045
        %4111 = vst.msk [vmem:[%s4092 + $0x48] sm:$0xf] %vm2128, %v4046
        %4112 = vst.msk [vmem:[%s4092 + $0x4c] sm:$0xf] %vm2128, %v4047
        %4113 = vst.msk [vmem:[%s4092 + $0x50] sm:$0xf] %vm2128, %v4048
        %4114 = vst.msk [vmem:[%s4092 + $0x54] sm:$0xf] %vm2128, %v4049
        %4115 = vst.msk [vmem:[%s4092 + $0x58] sm:$0xf] %vm2128, %v4050
        %4116 = vst.msk [vmem:[%s4092 + $0x5c] sm:$0xf] %vm2128, %v4051
        %4117 = vst.msk [vmem:[%s4092 + $0x60] sm:$0xf] %vm2128, %v4052
        %4118 = vst.msk [vmem:[%s4092 + $0x64] sm:$0xf] %vm2128, %v4053
        %4119 = vst.msk [vmem:[%s4092 + $0x68] sm:$0xf] %vm2128, %v4054
        %4120 = vst.msk [vmem:[%s4092 + $0x6c] sm:$0xf] %vm2128, %v4055
        %4121 = vst.msk [vmem:[%s4092 + $0x70] sm:$0xf] %vm2128, %v4056
        %4122 = vst.msk [vmem:[%s4092 + $0x74] sm:$0xf] %vm2128, %v4057
        %4123 = vst.msk [vmem:[%s4092 + $0x78] sm:$0xf] %vm2128, %v4058
        %4124 = vst.msk [vmem:[%s4092 + $0x7c] sm:$0xf] %vm2128, %v4059
        %4125 = vrot.lane.b32.xlu0 %v3706, 96
        %v4126 = vpop.permute.xlu0 %4125
        %4127 = vrot.lane.b32.xlu0 %v3707, 96
        %v4128 = vpop.permute.xlu0 %4127
        %4129 = vrot.lane.b32.xlu0 %v3708, 96
        %v4130 = vpop.permute.xlu0 %4129
        %4131 = vrot.lane.b32.xlu0 %v3709, 96
        %v4132 = vpop.permute.xlu0 %4131
        %4133 = vrot.lane.b32.xlu0 %v3710, 96
        %v4134 = vpop.permute.xlu0 %4133
        %4135 = vrot.lane.b32.xlu0 %v3711, 96
        %v4136 = vpop.permute.xlu0 %4135
        %4137 = vrot.lane.b32.xlu0 %v3712, 96
        %v4138 = vpop.permute.xlu0 %4137
        %4139 = vrot.lane.b32.xlu0 %v3713, 96
        %v4140 = vpop.permute.xlu0 %4139
        %4141 = vrot.lane.b32.xlu0 %v3714, 96
        %v4142 = vpop.permute.xlu0 %4141
        %4143 = vrot.lane.b32.xlu0 %v3715, 96
        %v4144 = vpop.permute.xlu0 %4143
        %4145 = vrot.lane.b32.xlu0 %v3716, 96
        %v4146 = vpop.permute.xlu0 %4145
        %4147 = vrot.lane.b32.xlu0 %v3717, 96
        %v4148 = vpop.permute.xlu0 %4147
        %4149 = vrot.lane.b32.xlu0 %v3718, 96
        %v4150 = vpop.permute.xlu0 %4149
        %4151 = vrot.lane.b32.xlu0 %v3719, 96
        %v4152 = vpop.permute.xlu0 %4151
        %4153 = vrot.lane.b32.xlu0 %v3720, 96
        %v4154 = vpop.permute.xlu0 %4153
        %4155 = vrot.lane.b32.xlu0 %v3721, 96
        %v4156 = vpop.permute.xlu0 %4155
        %4157 = vrot.lane.b32.xlu0 %v3722, 96
        %v4158 = vpop.permute.xlu0 %4157
        %4159 = vrot.lane.b32.xlu0 %v3723, 96
        %v4160 = vpop.permute.xlu0 %4159
        %4161 = vrot.lane.b32.xlu0 %v3724, 96
        %v4162 = vpop.permute.xlu0 %4161
        %4163 = vrot.lane.b32.xlu0 %v3725, 96
        %v4164 = vpop.permute.xlu0 %4163
        %4165 = vrot.lane.b32.xlu0 %v3726, 96
        %v4166 = vpop.permute.xlu0 %4165
        %4167 = vrot.lane.b32.xlu0 %v3727, 96
        %v4168 = vpop.permute.xlu0 %4167
        %4169 = vrot.lane.b32.xlu0 %v3728, 96
        %v4170 = vpop.permute.xlu0 %4169
        %4171 = vrot.lane.b32.xlu0 %v3729, 96
        %v4172 = vpop.permute.xlu0 %4171
        %4173 = vrot.lane.b32.xlu0 %v3730, 96
        %v4174 = vpop.permute.xlu0 %4173
        %4175 = vrot.lane.b32.xlu0 %v3731, 96
        %v4176 = vpop.permute.xlu0 %4175
        %4177 = vrot.lane.b32.xlu0 %v3732, 96
        %v4178 = vpop.permute.xlu0 %4177
        %4179 = vrot.lane.b32.xlu0 %v3733, 96
        %v4180 = vpop.permute.xlu0 %4179
        %4181 = vrot.lane.b32.xlu0 %v3734, 96
        %v4182 = vpop.permute.xlu0 %4181
        %4183 = vrot.lane.b32.xlu0 %v3735, 96
        %v4184 = vpop.permute.xlu0 %4183
        %4185 = vrot.lane.b32.xlu0 %v3736, 96
        %v4186 = vpop.permute.xlu0 %4185
        %4187 = vrot.lane.b32.xlu0 %v3737, 96
        %v4188 = vpop.permute.xlu0 %4187
        %s4221 = scalar_lea.vmem [#allocation2], 640
        %4222 = vst.msk [vmem:[%s4221] sm:$0xf] %vm2128, %v4126
        %4223 = vst.msk [vmem:[%s4221 + $0x4] sm:$0xf] %vm2128, %v4128
        %4224 = vst.msk [vmem:[%s4221 + $0x8] sm:$0xf] %vm2128, %v4130
        %4225 = vst.msk [vmem:[%s4221 + $0xc] sm:$0xf] %vm2128, %v4132
        %4226 = vst.msk [vmem:[%s4221 + $0x10] sm:$0xf] %vm2128, %v4134
        %4227 = vst.msk [vmem:[%s4221 + $0x14] sm:$0xf] %vm2128, %v4136
        %4228 = vst.msk [vmem:[%s4221 + $0x18] sm:$0xf] %vm2128, %v4138
        %4229 = vst.msk [vmem:[%s4221 + $0x1c] sm:$0xf] %vm2128, %v4140
        %4230 = vst.msk [vmem:[%s4221 + $0x20] sm:$0xf] %vm2128, %v4142
        %4231 = vst.msk [vmem:[%s4221 + $0x24] sm:$0xf] %vm2128, %v4144
        %4232 = vst.msk [vmem:[%s4221 + $0x28] sm:$0xf] %vm2128, %v4146
        %4233 = vst.msk [vmem:[%s4221 + $0x2c] sm:$0xf] %vm2128, %v4148
        %4234 = vst.msk [vmem:[%s4221 + $0x30] sm:$0xf] %vm2128, %v4150
        %4235 = vst.msk [vmem:[%s4221 + $0x34] sm:$0xf] %vm2128, %v4152
        %4236 = vst.msk [vmem:[%s4221 + $0x38] sm:$0xf] %vm2128, %v4154
        %4237 = vst.msk [vmem:[%s4221 + $0x3c] sm:$0xf] %vm2128, %v4156
        %4238 = vst.msk [vmem:[%s4221 + $0x40] sm:$0xf] %vm2128, %v4158
        %4239 = vst.msk [vmem:[%s4221 + $0x44] sm:$0xf] %vm2128, %v4160
        %4240 = vst.msk [vmem:[%s4221 + $0x48] sm:$0xf] %vm2128, %v4162
        %4241 = vst.msk [vmem:[%s4221 + $0x4c] sm:$0xf] %vm2128, %v4164
        %4242 = vst.msk [vmem:[%s4221 + $0x50] sm:$0xf] %vm2128, %v4166
        %4243 = vst.msk [vmem:[%s4221 + $0x54] sm:$0xf] %vm2128, %v4168
        %4244 = vst.msk [vmem:[%s4221 + $0x58] sm:$0xf] %vm2128, %v4170
        %4245 = vst.msk [vmem:[%s4221 + $0x5c] sm:$0xf] %vm2128, %v4172
        %4246 = vst.msk [vmem:[%s4221 + $0x60] sm:$0xf] %vm2128, %v4174
        %4247 = vst.msk [vmem:[%s4221 + $0x64] sm:$0xf] %vm2128, %v4176
        %4248 = vst.msk [vmem:[%s4221 + $0x68] sm:$0xf] %vm2128, %v4178
        %4249 = vst.msk [vmem:[%s4221 + $0x6c] sm:$0xf] %vm2128, %v4180
        %4250 = vst.msk [vmem:[%s4221 + $0x70] sm:$0xf] %vm2128, %v4182
        %4251 = vst.msk [vmem:[%s4221 + $0x74] sm:$0xf] %vm2128, %v4184
        %4252 = vst.msk [vmem:[%s4221 + $0x78] sm:$0xf] %vm2128, %v4186
        %4253 = vst.msk [vmem:[%s4221 + $0x7c] sm:$0xf] %vm2128, %v4188
        %4254 = vrot.lane.b32.xlu0 %v3867, 96
        %v4255 = vpop.permute.xlu0 %4254
        %4256 = vrot.lane.b32.xlu0 %v3868, 96
        %v4257 = vpop.permute.xlu0 %4256
        %4258 = vrot.lane.b32.xlu0 %v3869, 96
        %v4259 = vpop.permute.xlu0 %4258
        %4260 = vrot.lane.b32.xlu0 %v3870, 96
        %v4261 = vpop.permute.xlu0 %4260
        %4262 = vrot.lane.b32.xlu0 %v3871, 96
        %v4263 = vpop.permute.xlu0 %4262
        %4264 = vrot.lane.b32.xlu0 %v3872, 96
        %v4265 = vpop.permute.xlu0 %4264
        %4266 = vrot.lane.b32.xlu0 %v3873, 96
        %v4267 = vpop.permute.xlu0 %4266
        %4268 = vrot.lane.b32.xlu0 %v3874, 96
        %v4269 = vpop.permute.xlu0 %4268
        %4270 = vrot.lane.b32.xlu0 %v3875, 96
        %v4271 = vpop.permute.xlu0 %4270
        %4272 = vrot.lane.b32.xlu0 %v3876, 96
        %v4273 = vpop.permute.xlu0 %4272
        %4274 = vrot.lane.b32.xlu0 %v3877, 96
        %v4275 = vpop.permute.xlu0 %4274
        %4276 = vrot.lane.b32.xlu0 %v3878, 96
        %v4277 = vpop.permute.xlu0 %4276
        %4278 = vrot.lane.b32.xlu0 %v3879, 96
        %v4279 = vpop.permute.xlu0 %4278
        %4280 = vrot.lane.b32.xlu0 %v3880, 96
        %v4281 = vpop.permute.xlu0 %4280
        %4282 = vrot.lane.b32.xlu0 %v3881, 96
        %v4283 = vpop.permute.xlu0 %4282
        %4284 = vrot.lane.b32.xlu0 %v3882, 96
        %v4285 = vpop.permute.xlu0 %4284
        %4286 = vrot.lane.b32.xlu0 %v3883, 96
        %v4287 = vpop.permute.xlu0 %4286
        %4288 = vrot.lane.b32.xlu0 %v3884, 96
        %v4289 = vpop.permute.xlu0 %4288
        %4290 = vrot.lane.b32.xlu0 %v3885, 96
        %v4291 = vpop.permute.xlu0 %4290
        %4292 = vrot.lane.b32.xlu0 %v3886, 96
        %v4293 = vpop.permute.xlu0 %4292
        %4294 = vrot.lane.b32.xlu0 %v3887, 96
        %v4295 = vpop.permute.xlu0 %4294
        %4296 = vrot.lane.b32.xlu0 %v3888, 96
        %v4297 = vpop.permute.xlu0 %4296
        %4298 = vrot.lane.b32.xlu0 %v3889, 96
        %v4299 = vpop.permute.xlu0 %4298
        %4300 = vrot.lane.b32.xlu0 %v3890, 96
        %v4301 = vpop.permute.xlu0 %4300
        %4302 = vrot.lane.b32.xlu0 %v3891, 96
        %v4303 = vpop.permute.xlu0 %4302
        %4304 = vrot.lane.b32.xlu0 %v3892, 96
        %v4305 = vpop.permute.xlu0 %4304
        %4306 = vrot.lane.b32.xlu0 %v3893, 96
        %v4307 = vpop.permute.xlu0 %4306
        %4308 = vrot.lane.b32.xlu0 %v3894, 96
        %v4309 = vpop.permute.xlu0 %4308
        %4310 = vrot.lane.b32.xlu0 %v3895, 96
        %v4311 = vpop.permute.xlu0 %4310
        %4312 = vrot.lane.b32.xlu0 %v3896, 96
        %v4313 = vpop.permute.xlu0 %4312
        %4314 = vrot.lane.b32.xlu0 %v3897, 96
        %v4315 = vpop.permute.xlu0 %4314
        %4316 = vrot.lane.b32.xlu0 %v3898, 96
        %v4317 = vpop.permute.xlu0 %4316
        %s4350 = scalar_lea.vmem [#allocation3], 640
        %4351 = vst.msk [vmem:[%s4350] sm:$0xf] %vm2128, %v4255
        %4352 = vst.msk [vmem:[%s4350 + $0x4] sm:$0xf] %vm2128, %v4257
        %4353 = vst.msk [vmem:[%s4350 + $0x8] sm:$0xf] %vm2128, %v4259
        %4354 = vst.msk [vmem:[%s4350 + $0xc] sm:$0xf] %vm2128, %v4261
        %4355 = vst.msk [vmem:[%s4350 + $0x10] sm:$0xf] %vm2128, %v4263
        %4356 = vst.msk [vmem:[%s4350 + $0x14] sm:$0xf] %vm2128, %v4265
        %4357 = vst.msk [vmem:[%s4350 + $0x18] sm:$0xf] %vm2128, %v4267
        %4358 = vst.msk [vmem:[%s4350 + $0x1c] sm:$0xf] %vm2128, %v4269
        %4359 = vst.msk [vmem:[%s4350 + $0x20] sm:$0xf] %vm2128, %v4271
        %4360 = vst.msk [vmem:[%s4350 + $0x24] sm:$0xf] %vm2128, %v4273
        %4361 = vst.msk [vmem:[%s4350 + $0x28] sm:$0xf] %vm2128, %v4275
        %4362 = vst.msk [vmem:[%s4350 + $0x2c] sm:$0xf] %vm2128, %v4277
        %4363 = vst.msk [vmem:[%s4350 + $0x30] sm:$0xf] %vm2128, %v4279
        %4364 = vst.msk [vmem:[%s4350 + $0x34] sm:$0xf] %vm2128, %v4281
        %4365 = vst.msk [vmem:[%s4350 + $0x38] sm:$0xf] %vm2128, %v4283
        %4366 = vst.msk [vmem:[%s4350 + $0x3c] sm:$0xf] %vm2128, %v4285
        %4367 = vst.msk [vmem:[%s4350 + $0x40] sm:$0xf] %vm2128, %v4287
        %4368 = vst.msk [vmem:[%s4350 + $0x44] sm:$0xf] %vm2128, %v4289
        %4369 = vst.msk [vmem:[%s4350 + $0x48] sm:$0xf] %vm2128, %v4291
        %4370 = vst.msk [vmem:[%s4350 + $0x4c] sm:$0xf] %vm2128, %v4293
        %4371 = vst.msk [vmem:[%s4350 + $0x50] sm:$0xf] %vm2128, %v4295
        %4372 = vst.msk [vmem:[%s4350 + $0x54] sm:$0xf] %vm2128, %v4297
        %4373 = vst.msk [vmem:[%s4350 + $0x58] sm:$0xf] %vm2128, %v4299
        %4374 = vst.msk [vmem:[%s4350 + $0x5c] sm:$0xf] %vm2128, %v4301
        %4375 = vst.msk [vmem:[%s4350 + $0x60] sm:$0xf] %vm2128, %v4303
        %4376 = vst.msk [vmem:[%s4350 + $0x64] sm:$0xf] %vm2128, %v4305
        %4377 = vst.msk [vmem:[%s4350 + $0x68] sm:$0xf] %vm2128, %v4307
        %4378 = vst.msk [vmem:[%s4350 + $0x6c] sm:$0xf] %vm2128, %v4309
        %4379 = vst.msk [vmem:[%s4350 + $0x70] sm:$0xf] %vm2128, %v4311
        %4380 = vst.msk [vmem:[%s4350 + $0x74] sm:$0xf] %vm2128, %v4313
        %4381 = vst.msk [vmem:[%s4350 + $0x78] sm:$0xf] %vm2128, %v4315
        %4382 = vst.msk [vmem:[%s4350 + $0x7c] sm:$0xf] %vm2128, %v4317
        %4383 = vrot.lane.b32.xlu0 %v4028, 96
        %v4384 = vpop.permute.xlu0 %4383
        %4385 = vrot.lane.b32.xlu0 %v4029, 96
        %v4386 = vpop.permute.xlu0 %4385
        %4387 = vrot.lane.b32.xlu0 %v4030, 96
        %v4388 = vpop.permute.xlu0 %4387
        %4389 = vrot.lane.b32.xlu0 %v4031, 96
        %v4390 = vpop.permute.xlu0 %4389
        %4391 = vrot.lane.b32.xlu0 %v4032, 96
        %v4392 = vpop.permute.xlu0 %4391
        %4393 = vrot.lane.b32.xlu0 %v4033, 96
        %v4394 = vpop.permute.xlu0 %4393
        %4395 = vrot.lane.b32.xlu0 %v4034, 96
        %v4396 = vpop.permute.xlu0 %4395
        %4397 = vrot.lane.b32.xlu0 %v4035, 96
        %v4398 = vpop.permute.xlu0 %4397
        %4399 = vrot.lane.b32.xlu0 %v4036, 96
        %v4400 = vpop.permute.xlu0 %4399
        %4401 = vrot.lane.b32.xlu0 %v4037, 96
        %v4402 = vpop.permute.xlu0 %4401
        %4403 = vrot.lane.b32.xlu0 %v4038, 96
        %v4404 = vpop.permute.xlu0 %4403
        %4405 = vrot.lane.b32.xlu0 %v4039, 96
        %v4406 = vpop.permute.xlu0 %4405
        %4407 = vrot.lane.b32.xlu0 %v4040, 96
        %v4408 = vpop.permute.xlu0 %4407
        %4409 = vrot.lane.b32.xlu0 %v4041, 96
        %v4410 = vpop.permute.xlu0 %4409
        %4411 = vrot.lane.b32.xlu0 %v4042, 96
        %v4412 = vpop.permute.xlu0 %4411
        %4413 = vrot.lane.b32.xlu0 %v4043, 96
        %v4414 = vpop.permute.xlu0 %4413
        %4415 = vrot.lane.b32.xlu0 %v4044, 96
        %v4416 = vpop.permute.xlu0 %4415
        %4417 = vrot.lane.b32.xlu0 %v4045, 96
        %v4418 = vpop.permute.xlu0 %4417
        %4419 = vrot.lane.b32.xlu0 %v4046, 96
        %v4420 = vpop.permute.xlu0 %4419
        %4421 = vrot.lane.b32.xlu0 %v4047, 96
        %v4422 = vpop.permute.xlu0 %4421
        %4423 = vrot.lane.b32.xlu0 %v4048, 96
        %v4424 = vpop.permute.xlu0 %4423
        %4425 = vrot.lane.b32.xlu0 %v4049, 96
        %v4426 = vpop.permute.xlu0 %4425
        %4427 = vrot.lane.b32.xlu0 %v4050, 96
        %v4428 = vpop.permute.xlu0 %4427
        %4429 = vrot.lane.b32.xlu0 %v4051, 96
        %v4430 = vpop.permute.xlu0 %4429
        %4431 = vrot.lane.b32.xlu0 %v4052, 96
        %v4432 = vpop.permute.xlu0 %4431
        %4433 = vrot.lane.b32.xlu0 %v4053, 96
        %v4434 = vpop.permute.xlu0 %4433
        %4435 = vrot.lane.b32.xlu0 %v4054, 96
        %v4436 = vpop.permute.xlu0 %4435
        %4437 = vrot.lane.b32.xlu0 %v4055, 96
        %v4438 = vpop.permute.xlu0 %4437
        %4439 = vrot.lane.b32.xlu0 %v4056, 96
        %v4440 = vpop.permute.xlu0 %4439
        %4441 = vrot.lane.b32.xlu0 %v4057, 96
        %v4442 = vpop.permute.xlu0 %4441
        %4443 = vrot.lane.b32.xlu0 %v4058, 96
        %v4444 = vpop.permute.xlu0 %4443
        %4445 = vrot.lane.b32.xlu0 %v4059, 96
        %v4446 = vpop.permute.xlu0 %4445
        %s4479 = scalar_lea.vmem [#allocation4], 640
        %4480 = vst.msk [vmem:[%s4479] sm:$0xf] %vm2128, %v4384
        %4481 = vst.msk [vmem:[%s4479 + $0x4] sm:$0xf] %vm2128, %v4386
        %4482 = vst.msk [vmem:[%s4479 + $0x8] sm:$0xf] %vm2128, %v4388
        %4483 = vst.msk [vmem:[%s4479 + $0xc] sm:$0xf] %vm2128, %v4390
        %4484 = vst.msk [vmem:[%s4479 + $0x10] sm:$0xf] %vm2128, %v4392
        %4485 = vst.msk [vmem:[%s4479 + $0x14] sm:$0xf] %vm2128, %v4394
        %4486 = vst.msk [vmem:[%s4479 + $0x18] sm:$0xf] %vm2128, %v4396
        %4487 = vst.msk [vmem:[%s4479 + $0x1c] sm:$0xf] %vm2128, %v4398
        %4488 = vst.msk [vmem:[%s4479 + $0x20] sm:$0xf] %vm2128, %v4400
        %4489 = vst.msk [vmem:[%s4479 + $0x24] sm:$0xf] %vm2128, %v4402
        %4490 = vst.msk [vmem:[%s4479 + $0x28] sm:$0xf] %vm2128, %v4404
        %4491 = vst.msk [vmem:[%s4479 + $0x2c] sm:$0xf] %vm2128, %v4406
        %4492 = vst.msk [vmem:[%s4479 + $0x30] sm:$0xf] %vm2128, %v4408
        %4493 = vst.msk [vmem:[%s4479 + $0x34] sm:$0xf] %vm2128, %v4410
        %4494 = vst.msk [vmem:[%s4479 + $0x38] sm:$0xf] %vm2128, %v4412
        %4495 = vst.msk [vmem:[%s4479 + $0x3c] sm:$0xf] %vm2128, %v4414
        %4496 = vst.msk [vmem:[%s4479 + $0x40] sm:$0xf] %vm2128, %v4416
        %4497 = vst.msk [vmem:[%s4479 + $0x44] sm:$0xf] %vm2128, %v4418
        %4498 = vst.msk [vmem:[%s4479 + $0x48] sm:$0xf] %vm2128, %v4420
        %4499 = vst.msk [vmem:[%s4479 + $0x4c] sm:$0xf] %vm2128, %v4422
        %4500 = vst.msk [vmem:[%s4479 + $0x50] sm:$0xf] %vm2128, %v4424
        %4501 = vst.msk [vmem:[%s4479 + $0x54] sm:$0xf] %vm2128, %v4426
        %4502 = vst.msk [vmem:[%s4479 + $0x58] sm:$0xf] %vm2128, %v4428
        %4503 = vst.msk [vmem:[%s4479 + $0x5c] sm:$0xf] %vm2128, %v4430
        %4504 = vst.msk [vmem:[%s4479 + $0x60] sm:$0xf] %vm2128, %v4432
        %4505 = vst.msk [vmem:[%s4479 + $0x64] sm:$0xf] %vm2128, %v4434
        %4506 = vst.msk [vmem:[%s4479 + $0x68] sm:$0xf] %vm2128, %v4436
        %4507 = vst.msk [vmem:[%s4479 + $0x6c] sm:$0xf] %vm2128, %v4438
        %4508 = vst.msk [vmem:[%s4479 + $0x70] sm:$0xf] %vm2128, %v4440
        %4509 = vst.msk [vmem:[%s4479 + $0x74] sm:$0xf] %vm2128, %v4442
        %4510 = vst.msk [vmem:[%s4479 + $0x78] sm:$0xf] %vm2128, %v4444
        %4511 = vst.msk [vmem:[%s4479 + $0x7c] sm:$0xf] %vm2128, %v4446
        %4512 = vrot.lane.b32.xlu0 %v3706, 64
        %v4513 = vpop.permute.xlu0 %4512
        %4514 = vrot.lane.b32.xlu0 %v3707, 64
        %v4515 = vpop.permute.xlu0 %4514
        %4516 = vrot.lane.b32.xlu0 %v3708, 64
        %v4517 = vpop.permute.xlu0 %4516
        %4518 = vrot.lane.b32.xlu0 %v3709, 64
        %v4519 = vpop.permute.xlu0 %4518
        %4520 = vrot.lane.b32.xlu0 %v3710, 64
        %v4521 = vpop.permute.xlu0 %4520
        %4522 = vrot.lane.b32.xlu0 %v3711, 64
        %v4523 = vpop.permute.xlu0 %4522
        %4524 = vrot.lane.b32.xlu0 %v3712, 64
        %v4525 = vpop.permute.xlu0 %4524
        %4526 = vrot.lane.b32.xlu0 %v3713, 64
        %v4527 = vpop.permute.xlu0 %4526
        %4528 = vrot.lane.b32.xlu0 %v3714, 64
        %v4529 = vpop.permute.xlu0 %4528
        %4530 = vrot.lane.b32.xlu0 %v3715, 64
        %v4531 = vpop.permute.xlu0 %4530
        %4532 = vrot.lane.b32.xlu0 %v3716, 64
        %v4533 = vpop.permute.xlu0 %4532
        %4534 = vrot.lane.b32.xlu0 %v3717, 64
        %v4535 = vpop.permute.xlu0 %4534
        %4536 = vrot.lane.b32.xlu0 %v3718, 64
        %v4537 = vpop.permute.xlu0 %4536
        %4538 = vrot.lane.b32.xlu0 %v3719, 64
        %v4539 = vpop.permute.xlu0 %4538
        %4540 = vrot.lane.b32.xlu0 %v3720, 64
        %v4541 = vpop.permute.xlu0 %4540
        %4542 = vrot.lane.b32.xlu0 %v3721, 64
        %v4543 = vpop.permute.xlu0 %4542
        %4544 = vrot.lane.b32.xlu0 %v3722, 64
        %v4545 = vpop.permute.xlu0 %4544
        %4546 = vrot.lane.b32.xlu0 %v3723, 64
        %v4547 = vpop.permute.xlu0 %4546
        %4548 = vrot.lane.b32.xlu0 %v3724, 64
        %v4549 = vpop.permute.xlu0 %4548
        %4550 = vrot.lane.b32.xlu0 %v3725, 64
        %v4551 = vpop.permute.xlu0 %4550
        %4552 = vrot.lane.b32.xlu0 %v3726, 64
        %v4553 = vpop.permute.xlu0 %4552
        %4554 = vrot.lane.b32.xlu0 %v3727, 64
        %v4555 = vpop.permute.xlu0 %4554
        %4556 = vrot.lane.b32.xlu0 %v3728, 64
        %v4557 = vpop.permute.xlu0 %4556
        %4558 = vrot.lane.b32.xlu0 %v3729, 64
        %v4559 = vpop.permute.xlu0 %4558
        %4560 = vrot.lane.b32.xlu0 %v3730, 64
        %v4561 = vpop.permute.xlu0 %4560
        %4562 = vrot.lane.b32.xlu0 %v3731, 64
        %v4563 = vpop.permute.xlu0 %4562
        %4564 = vrot.lane.b32.xlu0 %v3732, 64
        %v4565 = vpop.permute.xlu0 %4564
        %4566 = vrot.lane.b32.xlu0 %v3733, 64
        %v4567 = vpop.permute.xlu0 %4566
        %4568 = vrot.lane.b32.xlu0 %v3734, 64
        %v4569 = vpop.permute.xlu0 %4568
        %4570 = vrot.lane.b32.xlu0 %v3735, 64
        %v4571 = vpop.permute.xlu0 %4570
        %4572 = vrot.lane.b32.xlu0 %v3736, 64
        %v4573 = vpop.permute.xlu0 %4572
        %4574 = vrot.lane.b32.xlu0 %v3737, 64
        %v4575 = vpop.permute.xlu0 %4574
        %s4608 = scalar_lea.vmem [#allocation2], 768
        %4609 = vst.msk [vmem:[%s4608] sm:$0xf] %vm2128, %v4513
        %4610 = vst.msk [vmem:[%s4608 + $0x4] sm:$0xf] %vm2128, %v4515
        %4611 = vst.msk [vmem:[%s4608 + $0x8] sm:$0xf] %vm2128, %v4517
        %4612 = vst.msk [vmem:[%s4608 + $0xc] sm:$0xf] %vm2128, %v4519
        %4613 = vst.msk [vmem:[%s4608 + $0x10] sm:$0xf] %vm2128, %v4521
        %4614 = vst.msk [vmem:[%s4608 + $0x14] sm:$0xf] %vm2128, %v4523
        %4615 = vst.msk [vmem:[%s4608 + $0x18] sm:$0xf] %vm2128, %v4525
        %4616 = vst.msk [vmem:[%s4608 + $0x1c] sm:$0xf] %vm2128, %v4527
        %4617 = vst.msk [vmem:[%s4608 + $0x20] sm:$0xf] %vm2128, %v4529
        %4618 = vst.msk [vmem:[%s4608 + $0x24] sm:$0xf] %vm2128, %v4531
        %4619 = vst.msk [vmem:[%s4608 + $0x28] sm:$0xf] %vm2128, %v4533
        %4620 = vst.msk [vmem:[%s4608 + $0x2c] sm:$0xf] %vm2128, %v4535
        %4621 = vst.msk [vmem:[%s4608 + $0x30] sm:$0xf] %vm2128, %v4537
        %4622 = vst.msk [vmem:[%s4608 + $0x34] sm:$0xf] %vm2128, %v4539
        %4623 = vst.msk [vmem:[%s4608 + $0x38] sm:$0xf] %vm2128, %v4541
        %4624 = vst.msk [vmem:[%s4608 + $0x3c] sm:$0xf] %vm2128, %v4543
        %4625 = vst.msk [vmem:[%s4608 + $0x40] sm:$0xf] %vm2128, %v4545
        %4626 = vst.msk [vmem:[%s4608 + $0x44] sm:$0xf] %vm2128, %v4547
        %4627 = vst.msk [vmem:[%s4608 + $0x48] sm:$0xf] %vm2128, %v4549
        %4628 = vst.msk [vmem:[%s4608 + $0x4c] sm:$0xf] %vm2128, %v4551
        %4629 = vst.msk [vmem:[%s4608 + $0x50] sm:$0xf] %vm2128, %v4553
        %4630 = vst.msk [vmem:[%s4608 + $0x54] sm:$0xf] %vm2128, %v4555
        %4631 = vst.msk [vmem:[%s4608 + $0x58] sm:$0xf] %vm2128, %v4557
        %4632 = vst.msk [vmem:[%s4608 + $0x5c] sm:$0xf] %vm2128, %v4559
        %4633 = vst.msk [vmem:[%s4608 + $0x60] sm:$0xf] %vm2128, %v4561
        %4634 = vst.msk [vmem:[%s4608 + $0x64] sm:$0xf] %vm2128, %v4563
        %4635 = vst.msk [vmem:[%s4608 + $0x68] sm:$0xf] %vm2128, %v4565
        %4636 = vst.msk [vmem:[%s4608 + $0x6c] sm:$0xf] %vm2128, %v4567
        %4637 = vst.msk [vmem:[%s4608 + $0x70] sm:$0xf] %vm2128, %v4569
        %4638 = vst.msk [vmem:[%s4608 + $0x74] sm:$0xf] %vm2128, %v4571
        %4639 = vst.msk [vmem:[%s4608 + $0x78] sm:$0xf] %vm2128, %v4573
        %4640 = vst.msk [vmem:[%s4608 + $0x7c] sm:$0xf] %vm2128, %v4575
        %4641 = vrot.lane.b32.xlu0 %v3867, 64
        %v4642 = vpop.permute.xlu0 %4641
        %4643 = vrot.lane.b32.xlu0 %v3868, 64
        %v4644 = vpop.permute.xlu0 %4643
        %4645 = vrot.lane.b32.xlu0 %v3869, 64
        %v4646 = vpop.permute.xlu0 %4645
        %4647 = vrot.lane.b32.xlu0 %v3870, 64
        %v4648 = vpop.permute.xlu0 %4647
        %4649 = vrot.lane.b32.xlu0 %v3871, 64
        %v4650 = vpop.permute.xlu0 %4649
        %4651 = vrot.lane.b32.xlu0 %v3872, 64
        %v4652 = vpop.permute.xlu0 %4651
        %4653 = vrot.lane.b32.xlu0 %v3873, 64
        %v4654 = vpop.permute.xlu0 %4653
        %4655 = vrot.lane.b32.xlu0 %v3874, 64
        %v4656 = vpop.permute.xlu0 %4655
        %4657 = vrot.lane.b32.xlu0 %v3875, 64
        %v4658 = vpop.permute.xlu0 %4657
        %4659 = vrot.lane.b32.xlu0 %v3876, 64
        %v4660 = vpop.permute.xlu0 %4659
        %4661 = vrot.lane.b32.xlu0 %v3877, 64
        %v4662 = vpop.permute.xlu0 %4661
        %4663 = vrot.lane.b32.xlu0 %v3878, 64
        %v4664 = vpop.permute.xlu0 %4663
        %4665 = vrot.lane.b32.xlu0 %v3879, 64
        %v4666 = vpop.permute.xlu0 %4665
        %4667 = vrot.lane.b32.xlu0 %v3880, 64
        %v4668 = vpop.permute.xlu0 %4667
        %4669 = vrot.lane.b32.xlu0 %v3881, 64
        %v4670 = vpop.permute.xlu0 %4669
        %4671 = vrot.lane.b32.xlu0 %v3882, 64
        %v4672 = vpop.permute.xlu0 %4671
        %4673 = vrot.lane.b32.xlu0 %v3883, 64
        %v4674 = vpop.permute.xlu0 %4673
        %4675 = vrot.lane.b32.xlu0 %v3884, 64
        %v4676 = vpop.permute.xlu0 %4675
        %4677 = vrot.lane.b32.xlu0 %v3885, 64
        %v4678 = vpop.permute.xlu0 %4677
        %4679 = vrot.lane.b32.xlu0 %v3886, 64
        %v4680 = vpop.permute.xlu0 %4679
        %4681 = vrot.lane.b32.xlu0 %v3887, 64
        %v4682 = vpop.permute.xlu0 %4681
        %4683 = vrot.lane.b32.xlu0 %v3888, 64
        %v4684 = vpop.permute.xlu0 %4683
        %4685 = vrot.lane.b32.xlu0 %v3889, 64
        %v4686 = vpop.permute.xlu0 %4685
        %4687 = vrot.lane.b32.xlu0 %v3890, 64
        %v4688 = vpop.permute.xlu0 %4687
        %4689 = vrot.lane.b32.xlu0 %v3891, 64
        %v4690 = vpop.permute.xlu0 %4689
        %4691 = vrot.lane.b32.xlu0 %v3892, 64
        %v4692 = vpop.permute.xlu0 %4691
        %4693 = vrot.lane.b32.xlu0 %v3893, 64
        %v4694 = vpop.permute.xlu0 %4693
        %4695 = vrot.lane.b32.xlu0 %v3894, 64
        %v4696 = vpop.permute.xlu0 %4695
        %4697 = vrot.lane.b32.xlu0 %v3895, 64
        %v4698 = vpop.permute.xlu0 %4697
        %4699 = vrot.lane.b32.xlu0 %v3896, 64
        %v4700 = vpop.permute.xlu0 %4699
        %4701 = vrot.lane.b32.xlu0 %v3897, 64
        %v4702 = vpop.permute.xlu0 %4701
        %4703 = vrot.lane.b32.xlu0 %v3898, 64
        %v4704 = vpop.permute.xlu0 %4703
        %s4737 = scalar_lea.vmem [#allocation3], 768
        %4738 = vst.msk [vmem:[%s4737] sm:$0xf] %vm2128, %v4642
        %4739 = vst.msk [vmem:[%s4737 + $0x4] sm:$0xf] %vm2128, %v4644
        %4740 = vst.msk [vmem:[%s4737 + $0x8] sm:$0xf] %vm2128, %v4646
        %4741 = vst.msk [vmem:[%s4737 + $0xc] sm:$0xf] %vm2128, %v4648
        %4742 = vst.msk [vmem:[%s4737 + $0x10] sm:$0xf] %vm2128, %v4650
        %4743 = vst.msk [vmem:[%s4737 + $0x14] sm:$0xf] %vm2128, %v4652
        %4744 = vst.msk [vmem:[%s4737 + $0x18] sm:$0xf] %vm2128, %v4654
        %4745 = vst.msk [vmem:[%s4737 + $0x1c] sm:$0xf] %vm2128, %v4656
        %4746 = vst.msk [vmem:[%s4737 + $0x20] sm:$0xf] %vm2128, %v4658
        %4747 = vst.msk [vmem:[%s4737 + $0x24] sm:$0xf] %vm2128, %v4660
        %4748 = vst.msk [vmem:[%s4737 + $0x28] sm:$0xf] %vm2128, %v4662
        %4749 = vst.msk [vmem:[%s4737 + $0x2c] sm:$0xf] %vm2128, %v4664
        %4750 = vst.msk [vmem:[%s4737 + $0x30] sm:$0xf] %vm2128, %v4666
        %4751 = vst.msk [vmem:[%s4737 + $0x34] sm:$0xf] %vm2128, %v4668
        %4752 = vst.msk [vmem:[%s4737 + $0x38] sm:$0xf] %vm2128, %v4670
        %4753 = vst.msk [vmem:[%s4737 + $0x3c] sm:$0xf] %vm2128, %v4672
        %4754 = vst.msk [vmem:[%s4737 + $0x40] sm:$0xf] %vm2128, %v4674
        %4755 = vst.msk [vmem:[%s4737 + $0x44] sm:$0xf] %vm2128, %v4676
        %4756 = vst.msk [vmem:[%s4737 + $0x48] sm:$0xf] %vm2128, %v4678
        %4757 = vst.msk [vmem:[%s4737 + $0x4c] sm:$0xf] %vm2128, %v4680
        %4758 = vst.msk [vmem:[%s4737 + $0x50] sm:$0xf] %vm2128, %v4682
        %4759 = vst.msk [vmem:[%s4737 + $0x54] sm:$0xf] %vm2128, %v4684
        %4760 = vst.msk [vmem:[%s4737 + $0x58] sm:$0xf] %vm2128, %v4686
        %4761 = vst.msk [vmem:[%s4737 + $0x5c] sm:$0xf] %vm2128, %v4688
        %4762 = vst.msk [vmem:[%s4737 + $0x60] sm:$0xf] %vm2128, %v4690
        %4763 = vst.msk [vmem:[%s4737 + $0x64] sm:$0xf] %vm2128, %v4692
        %4764 = vst.msk [vmem:[%s4737 + $0x68] sm:$0xf] %vm2128, %v4694
        %4765 = vst.msk [vmem:[%s4737 + $0x6c] sm:$0xf] %vm2128, %v4696
        %4766 = vst.msk [vmem:[%s4737 + $0x70] sm:$0xf] %vm2128, %v4698
        %4767 = vst.msk [vmem:[%s4737 + $0x74] sm:$0xf] %vm2128, %v4700
        %4768 = vst.msk [vmem:[%s4737 + $0x78] sm:$0xf] %vm2128, %v4702
        %4769 = vst.msk [vmem:[%s4737 + $0x7c] sm:$0xf] %vm2128, %v4704
        %4770 = vrot.lane.b32.xlu0 %v4028, 64
        %v4771 = vpop.permute.xlu0 %4770
        %4772 = vrot.lane.b32.xlu0 %v4029, 64
        %v4773 = vpop.permute.xlu0 %4772
        %4774 = vrot.lane.b32.xlu0 %v4030, 64
        %v4775 = vpop.permute.xlu0 %4774
        %4776 = vrot.lane.b32.xlu0 %v4031, 64
        %v4777 = vpop.permute.xlu0 %4776
        %4778 = vrot.lane.b32.xlu0 %v4032, 64
        %v4779 = vpop.permute.xlu0 %4778
        %4780 = vrot.lane.b32.xlu0 %v4033, 64
        %v4781 = vpop.permute.xlu0 %4780
        %4782 = vrot.lane.b32.xlu0 %v4034, 64
        %v4783 = vpop.permute.xlu0 %4782
        %4784 = vrot.lane.b32.xlu0 %v4035, 64
        %v4785 = vpop.permute.xlu0 %4784
        %4786 = vrot.lane.b32.xlu0 %v4036, 64
        %v4787 = vpop.permute.xlu0 %4786
        %4788 = vrot.lane.b32.xlu0 %v4037, 64
        %v4789 = vpop.permute.xlu0 %4788
        %4790 = vrot.lane.b32.xlu0 %v4038, 64
        %v4791 = vpop.permute.xlu0 %4790
        %4792 = vrot.lane.b32.xlu0 %v4039, 64
        %v4793 = vpop.permute.xlu0 %4792
        %4794 = vrot.lane.b32.xlu0 %v4040, 64
        %v4795 = vpop.permute.xlu0 %4794
        %4796 = vrot.lane.b32.xlu0 %v4041, 64
        %v4797 = vpop.permute.xlu0 %4796
        %4798 = vrot.lane.b32.xlu0 %v4042, 64
        %v4799 = vpop.permute.xlu0 %4798
        %4800 = vrot.lane.b32.xlu0 %v4043, 64
        %v4801 = vpop.permute.xlu0 %4800
        %4802 = vrot.lane.b32.xlu0 %v4044, 64
        %v4803 = vpop.permute.xlu0 %4802
        %4804 = vrot.lane.b32.xlu0 %v4045, 64
        %v4805 = vpop.permute.xlu0 %4804
        %4806 = vrot.lane.b32.xlu0 %v4046, 64
        %v4807 = vpop.permute.xlu0 %4806
        %4808 = vrot.lane.b32.xlu0 %v4047, 64
        %v4809 = vpop.permute.xlu0 %4808
        %4810 = vrot.lane.b32.xlu0 %v4048, 64
        %v4811 = vpop.permute.xlu0 %4810
        %4812 = vrot.lane.b32.xlu0 %v4049, 64
        %v4813 = vpop.permute.xlu0 %4812
        %4814 = vrot.lane.b32.xlu0 %v4050, 64
        %v4815 = vpop.permute.xlu0 %4814
        %4816 = vrot.lane.b32.xlu0 %v4051, 64
        %v4817 = vpop.permute.xlu0 %4816
        %4818 = vrot.lane.b32.xlu0 %v4052, 64
        %v4819 = vpop.permute.xlu0 %4818
        %4820 = vrot.lane.b32.xlu0 %v4053, 64
        %v4821 = vpop.permute.xlu0 %4820
        %4822 = vrot.lane.b32.xlu0 %v4054, 64
        %v4823 = vpop.permute.xlu0 %4822
        %4824 = vrot.lane.b32.xlu0 %v4055, 64
        %v4825 = vpop.permute.xlu0 %4824
        %4826 = vrot.lane.b32.xlu0 %v4056, 64
        %v4827 = vpop.permute.xlu0 %4826
        %4828 = vrot.lane.b32.xlu0 %v4057, 64
        %v4829 = vpop.permute.xlu0 %4828
        %4830 = vrot.lane.b32.xlu0 %v4058, 64
        %v4831 = vpop.permute.xlu0 %4830
        %4832 = vrot.lane.b32.xlu0 %v4059, 64
        %v4833 = vpop.permute.xlu0 %4832
        %s4866 = scalar_lea.vmem [#allocation4], 768
        %4867 = vst.msk [vmem:[%s4866] sm:$0xf] %vm2128, %v4771
        %4868 = vst.msk [vmem:[%s4866 + $0x4] sm:$0xf] %vm2128, %v4773
        %4869 = vst.msk [vmem:[%s4866 + $0x8] sm:$0xf] %vm2128, %v4775
        %4870 = vst.msk [vmem:[%s4866 + $0xc] sm:$0xf] %vm2128, %v4777
        %4871 = vst.msk [vmem:[%s4866 + $0x10] sm:$0xf] %vm2128, %v4779
        %4872 = vst.msk [vmem:[%s4866 + $0x14] sm:$0xf] %vm2128, %v4781
        %4873 = vst.msk [vmem:[%s4866 + $0x18] sm:$0xf] %vm2128, %v4783
        %4874 = vst.msk [vmem:[%s4866 + $0x1c] sm:$0xf] %vm2128, %v4785
        %4875 = vst.msk [vmem:[%s4866 + $0x20] sm:$0xf] %vm2128, %v4787
        %4876 = vst.msk [vmem:[%s4866 + $0x24] sm:$0xf] %vm2128, %v4789
        %4877 = vst.msk [vmem:[%s4866 + $0x28] sm:$0xf] %vm2128, %v4791
        %4878 = vst.msk [vmem:[%s4866 + $0x2c] sm:$0xf] %vm2128, %v4793
        %4879 = vst.msk [vmem:[%s4866 + $0x30] sm:$0xf] %vm2128, %v4795
        %4880 = vst.msk [vmem:[%s4866 + $0x34] sm:$0xf] %vm2128, %v4797
        %4881 = vst.msk [vmem:[%s4866 + $0x38] sm:$0xf] %vm2128, %v4799
        %4882 = vst.msk [vmem:[%s4866 + $0x3c] sm:$0xf] %vm2128, %v4801
        %4883 = vst.msk [vmem:[%s4866 + $0x40] sm:$0xf] %vm2128, %v4803
        %4884 = vst.msk [vmem:[%s4866 + $0x44] sm:$0xf] %vm2128, %v4805
        %4885 = vst.msk [vmem:[%s4866 + $0x48] sm:$0xf] %vm2128, %v4807
        %4886 = vst.msk [vmem:[%s4866 + $0x4c] sm:$0xf] %vm2128, %v4809
        %4887 = vst.msk [vmem:[%s4866 + $0x50] sm:$0xf] %vm2128, %v4811
        %4888 = vst.msk [vmem:[%s4866 + $0x54] sm:$0xf] %vm2128, %v4813
        %4889 = vst.msk [vmem:[%s4866 + $0x58] sm:$0xf] %vm2128, %v4815
        %4890 = vst.msk [vmem:[%s4866 + $0x5c] sm:$0xf] %vm2128, %v4817
        %4891 = vst.msk [vmem:[%s4866 + $0x60] sm:$0xf] %vm2128, %v4819
        %4892 = vst.msk [vmem:[%s4866 + $0x64] sm:$0xf] %vm2128, %v4821
        %4893 = vst.msk [vmem:[%s4866 + $0x68] sm:$0xf] %vm2128, %v4823
        %4894 = vst.msk [vmem:[%s4866 + $0x6c] sm:$0xf] %vm2128, %v4825
        %4895 = vst.msk [vmem:[%s4866 + $0x70] sm:$0xf] %vm2128, %v4827
        %4896 = vst.msk [vmem:[%s4866 + $0x74] sm:$0xf] %vm2128, %v4829
        %4897 = vst.msk [vmem:[%s4866 + $0x78] sm:$0xf] %vm2128, %v4831
        %4898 = vst.msk [vmem:[%s4866 + $0x7c] sm:$0xf] %vm2128, %v4833
        %4899 = vrot.lane.b32.xlu0 %v3706, 32
        %v4900 = vpop.permute.xlu0 %4899
        %4901 = vrot.lane.b32.xlu0 %v3707, 32
        %v4902 = vpop.permute.xlu0 %4901
        %4903 = vrot.lane.b32.xlu0 %v3708, 32
        %v4904 = vpop.permute.xlu0 %4903
        %4905 = vrot.lane.b32.xlu0 %v3709, 32
        %v4906 = vpop.permute.xlu0 %4905
        %4907 = vrot.lane.b32.xlu0 %v3710, 32
        %v4908 = vpop.permute.xlu0 %4907
        %4909 = vrot.lane.b32.xlu0 %v3711, 32
        %v4910 = vpop.permute.xlu0 %4909
        %4911 = vrot.lane.b32.xlu0 %v3712, 32
        %v4912 = vpop.permute.xlu0 %4911
        %4913 = vrot.lane.b32.xlu0 %v3713, 32
        %v4914 = vpop.permute.xlu0 %4913
        %4915 = vrot.lane.b32.xlu0 %v3714, 32
        %v4916 = vpop.permute.xlu0 %4915
        %4917 = vrot.lane.b32.xlu0 %v3715, 32
        %v4918 = vpop.permute.xlu0 %4917
        %4919 = vrot.lane.b32.xlu0 %v3716, 32
        %v4920 = vpop.permute.xlu0 %4919
        %4921 = vrot.lane.b32.xlu0 %v3717, 32
        %v4922 = vpop.permute.xlu0 %4921
        %4923 = vrot.lane.b32.xlu0 %v3718, 32
        %v4924 = vpop.permute.xlu0 %4923
        %4925 = vrot.lane.b32.xlu0 %v3719, 32
        %v4926 = vpop.permute.xlu0 %4925
        %4927 = vrot.lane.b32.xlu0 %v3720, 32
        %v4928 = vpop.permute.xlu0 %4927
        %4929 = vrot.lane.b32.xlu0 %v3721, 32
        %v4930 = vpop.permute.xlu0 %4929
        %4931 = vrot.lane.b32.xlu0 %v3722, 32
        %v4932 = vpop.permute.xlu0 %4931
        %4933 = vrot.lane.b32.xlu0 %v3723, 32
        %v4934 = vpop.permute.xlu0 %4933
        %4935 = vrot.lane.b32.xlu0 %v3724, 32
        %v4936 = vpop.permute.xlu0 %4935
        %4937 = vrot.lane.b32.xlu0 %v3725, 32
        %v4938 = vpop.permute.xlu0 %4937
        %4939 = vrot.lane.b32.xlu0 %v3726, 32
        %v4940 = vpop.permute.xlu0 %4939
        %4941 = vrot.lane.b32.xlu0 %v3727, 32
        %v4942 = vpop.permute.xlu0 %4941
        %4943 = vrot.lane.b32.xlu0 %v3728, 32
        %v4944 = vpop.permute.xlu0 %4943
        %4945 = vrot.lane.b32.xlu0 %v3729, 32
        %v4946 = vpop.permute.xlu0 %4945
        %4947 = vrot.lane.b32.xlu0 %v3730, 32
        %v4948 = vpop.permute.xlu0 %4947
        %4949 = vrot.lane.b32.xlu0 %v3731, 32
        %v4950 = vpop.permute.xlu0 %4949
        %4951 = vrot.lane.b32.xlu0 %v3732, 32
        %v4952 = vpop.permute.xlu0 %4951
        %4953 = vrot.lane.b32.xlu0 %v3733, 32
        %v4954 = vpop.permute.xlu0 %4953
        %4955 = vrot.lane.b32.xlu0 %v3734, 32
        %v4956 = vpop.permute.xlu0 %4955
        %4957 = vrot.lane.b32.xlu0 %v3735, 32
        %v4958 = vpop.permute.xlu0 %4957
        %4959 = vrot.lane.b32.xlu0 %v3736, 32
        %v4960 = vpop.permute.xlu0 %4959
        %4961 = vrot.lane.b32.xlu0 %v3737, 32
        %v4962 = vpop.permute.xlu0 %4961
        %s4995 = scalar_lea.vmem [#allocation2], 896
        %4996 = vst.msk [vmem:[%s4995] sm:$0xf] %vm2128, %v4900
        %4997 = vst.msk [vmem:[%s4995 + $0x4] sm:$0xf] %vm2128, %v4902
        %4998 = vst.msk [vmem:[%s4995 + $0x8] sm:$0xf] %vm2128, %v4904
        %4999 = vst.msk [vmem:[%s4995 + $0xc] sm:$0xf] %vm2128, %v4906
        %5000 = vst.msk [vmem:[%s4995 + $0x10] sm:$0xf] %vm2128, %v4908
        %5001 = vst.msk [vmem:[%s4995 + $0x14] sm:$0xf] %vm2128, %v4910
        %5002 = vst.msk [vmem:[%s4995 + $0x18] sm:$0xf] %vm2128, %v4912
        %5003 = vst.msk [vmem:[%s4995 + $0x1c] sm:$0xf] %vm2128, %v4914
        %5004 = vst.msk [vmem:[%s4995 + $0x20] sm:$0xf] %vm2128, %v4916
        %5005 = vst.msk [vmem:[%s4995 + $0x24] sm:$0xf] %vm2128, %v4918
        %5006 = vst.msk [vmem:[%s4995 + $0x28] sm:$0xf] %vm2128, %v4920
        %5007 = vst.msk [vmem:[%s4995 + $0x2c] sm:$0xf] %vm2128, %v4922
        %5008 = vst.msk [vmem:[%s4995 + $0x30] sm:$0xf] %vm2128, %v4924
        %5009 = vst.msk [vmem:[%s4995 + $0x34] sm:$0xf] %vm2128, %v4926
        %5010 = vst.msk [vmem:[%s4995 + $0x38] sm:$0xf] %vm2128, %v4928
        %5011 = vst.msk [vmem:[%s4995 + $0x3c] sm:$0xf] %vm2128, %v4930
        %5012 = vst.msk [vmem:[%s4995 + $0x40] sm:$0xf] %vm2128, %v4932
        %5013 = vst.msk [vmem:[%s4995 + $0x44] sm:$0xf] %vm2128, %v4934
        %5014 = vst.msk [vmem:[%s4995 + $0x48] sm:$0xf] %vm2128, %v4936
        %5015 = vst.msk [vmem:[%s4995 + $0x4c] sm:$0xf] %vm2128, %v4938
        %5016 = vst.msk [vmem:[%s4995 + $0x50] sm:$0xf] %vm2128, %v4940
        %5017 = vst.msk [vmem:[%s4995 + $0x54] sm:$0xf] %vm2128, %v4942
        %5018 = vst.msk [vmem:[%s4995 + $0x58] sm:$0xf] %vm2128, %v4944
        %5019 = vst.msk [vmem:[%s4995 + $0x5c] sm:$0xf] %vm2128, %v4946
        %5020 = vst.msk [vmem:[%s4995 + $0x60] sm:$0xf] %vm2128, %v4948
        %5021 = vst.msk [vmem:[%s4995 + $0x64] sm:$0xf] %vm2128, %v4950
        %5022 = vst.msk [vmem:[%s4995 + $0x68] sm:$0xf] %vm2128, %v4952
        %5023 = vst.msk [vmem:[%s4995 + $0x6c] sm:$0xf] %vm2128, %v4954
        %5024 = vst.msk [vmem:[%s4995 + $0x70] sm:$0xf] %vm2128, %v4956
        %5025 = vst.msk [vmem:[%s4995 + $0x74] sm:$0xf] %vm2128, %v4958
        %5026 = vst.msk [vmem:[%s4995 + $0x78] sm:$0xf] %vm2128, %v4960
        %5027 = vst.msk [vmem:[%s4995 + $0x7c] sm:$0xf] %vm2128, %v4962
        %5028 = vrot.lane.b32.xlu0 %v3867, 32
        %v5029 = vpop.permute.xlu0 %5028
        %5030 = vrot.lane.b32.xlu0 %v3868, 32
        %v5031 = vpop.permute.xlu0 %5030
        %5032 = vrot.lane.b32.xlu0 %v3869, 32
        %v5033 = vpop.permute.xlu0 %5032
        %5034 = vrot.lane.b32.xlu0 %v3870, 32
        %v5035 = vpop.permute.xlu0 %5034
        %5036 = vrot.lane.b32.xlu0 %v3871, 32
        %v5037 = vpop.permute.xlu0 %5036
        %5038 = vrot.lane.b32.xlu0 %v3872, 32
        %v5039 = vpop.permute.xlu0 %5038
        %5040 = vrot.lane.b32.xlu0 %v3873, 32
        %v5041 = vpop.permute.xlu0 %5040
        %5042 = vrot.lane.b32.xlu0 %v3874, 32
        %v5043 = vpop.permute.xlu0 %5042
        %5044 = vrot.lane.b32.xlu0 %v3875, 32
        %v5045 = vpop.permute.xlu0 %5044
        %5046 = vrot.lane.b32.xlu0 %v3876, 32
        %v5047 = vpop.permute.xlu0 %5046
        %5048 = vrot.lane.b32.xlu0 %v3877, 32
        %v5049 = vpop.permute.xlu0 %5048
        %5050 = vrot.lane.b32.xlu0 %v3878, 32
        %v5051 = vpop.permute.xlu0 %5050
        %5052 = vrot.lane.b32.xlu0 %v3879, 32
        %v5053 = vpop.permute.xlu0 %5052
        %5054 = vrot.lane.b32.xlu0 %v3880, 32
        %v5055 = vpop.permute.xlu0 %5054
        %5056 = vrot.lane.b32.xlu0 %v3881, 32
        %v5057 = vpop.permute.xlu0 %5056
        %5058 = vrot.lane.b32.xlu0 %v3882, 32
        %v5059 = vpop.permute.xlu0 %5058
        %5060 = vrot.lane.b32.xlu0 %v3883, 32
        %v5061 = vpop.permute.xlu0 %5060
        %5062 = vrot.lane.b32.xlu0 %v3884, 32
        %v5063 = vpop.permute.xlu0 %5062
        %5064 = vrot.lane.b32.xlu0 %v3885, 32
        %v5065 = vpop.permute.xlu0 %5064
        %5066 = vrot.lane.b32.xlu0 %v3886, 32
        %v5067 = vpop.permute.xlu0 %5066
        %5068 = vrot.lane.b32.xlu0 %v3887, 32
        %v5069 = vpop.permute.xlu0 %5068
        %5070 = vrot.lane.b32.xlu0 %v3888, 32
        %v5071 = vpop.permute.xlu0 %5070
        %5072 = vrot.lane.b32.xlu0 %v3889, 32
        %v5073 = vpop.permute.xlu0 %5072
        %5074 = vrot.lane.b32.xlu0 %v3890, 32
        %v5075 = vpop.permute.xlu0 %5074
        %5076 = vrot.lane.b32.xlu0 %v3891, 32
        %v5077 = vpop.permute.xlu0 %5076
        %5078 = vrot.lane.b32.xlu0 %v3892, 32
        %v5079 = vpop.permute.xlu0 %5078
        %5080 = vrot.lane.b32.xlu0 %v3893, 32
        %v5081 = vpop.permute.xlu0 %5080
        %5082 = vrot.lane.b32.xlu0 %v3894, 32
        %v5083 = vpop.permute.xlu0 %5082
        %5084 = vrot.lane.b32.xlu0 %v3895, 32
        %v5085 = vpop.permute.xlu0 %5084
        %5086 = vrot.lane.b32.xlu0 %v3896, 32
        %v5087 = vpop.permute.xlu0 %5086
        %5088 = vrot.lane.b32.xlu0 %v3897, 32
        %v5089 = vpop.permute.xlu0 %5088
        %5090 = vrot.lane.b32.xlu0 %v3898, 32
        %v5091 = vpop.permute.xlu0 %5090
        %s5124 = scalar_lea.vmem [#allocation3], 896
        %5125 = vst.msk [vmem:[%s5124] sm:$0xf] %vm2128, %v5029
        %5126 = vst.msk [vmem:[%s5124 + $0x4] sm:$0xf] %vm2128, %v5031
        %5127 = vst.msk [vmem:[%s5124 + $0x8] sm:$0xf] %vm2128, %v5033
        %5128 = vst.msk [vmem:[%s5124 + $0xc] sm:$0xf] %vm2128, %v5035
        %5129 = vst.msk [vmem:[%s5124 + $0x10] sm:$0xf] %vm2128, %v5037
        %5130 = vst.msk [vmem:[%s5124 + $0x14] sm:$0xf] %vm2128, %v5039
        %5131 = vst.msk [vmem:[%s5124 + $0x18] sm:$0xf] %vm2128, %v5041
        %5132 = vst.msk [vmem:[%s5124 + $0x1c] sm:$0xf] %vm2128, %v5043
        %5133 = vst.msk [vmem:[%s5124 + $0x20] sm:$0xf] %vm2128, %v5045
        %5134 = vst.msk [vmem:[%s5124 + $0x24] sm:$0xf] %vm2128, %v5047
        %5135 = vst.msk [vmem:[%s5124 + $0x28] sm:$0xf] %vm2128, %v5049
        %5136 = vst.msk [vmem:[%s5124 + $0x2c] sm:$0xf] %vm2128, %v5051
        %5137 = vst.msk [vmem:[%s5124 + $0x30] sm:$0xf] %vm2128, %v5053
        %5138 = vst.msk [vmem:[%s5124 + $0x34] sm:$0xf] %vm2128, %v5055
        %5139 = vst.msk [vmem:[%s5124 + $0x38] sm:$0xf] %vm2128, %v5057
        %5140 = vst.msk [vmem:[%s5124 + $0x3c] sm:$0xf] %vm2128, %v5059
        %5141 = vst.msk [vmem:[%s5124 + $0x40] sm:$0xf] %vm2128, %v5061
        %5142 = vst.msk [vmem:[%s5124 + $0x44] sm:$0xf] %vm2128, %v5063
        %5143 = vst.msk [vmem:[%s5124 + $0x48] sm:$0xf] %vm2128, %v5065
        %5144 = vst.msk [vmem:[%s5124 + $0x4c] sm:$0xf] %vm2128, %v5067
        %5145 = vst.msk [vmem:[%s5124 + $0x50] sm:$0xf] %vm2128, %v5069
        %5146 = vst.msk [vmem:[%s5124 + $0x54] sm:$0xf] %vm2128, %v5071
        %5147 = vst.msk [vmem:[%s5124 + $0x58] sm:$0xf] %vm2128, %v5073
        %5148 = vst.msk [vmem:[%s5124 + $0x5c] sm:$0xf] %vm2128, %v5075
        %5149 = vst.msk [vmem:[%s5124 + $0x60] sm:$0xf] %vm2128, %v5077
        %5150 = vst.msk [vmem:[%s5124 + $0x64] sm:$0xf] %vm2128, %v5079
        %5151 = vst.msk [vmem:[%s5124 + $0x68] sm:$0xf] %vm2128, %v5081
        %5152 = vst.msk [vmem:[%s5124 + $0x6c] sm:$0xf] %vm2128, %v5083
        %5153 = vst.msk [vmem:[%s5124 + $0x70] sm:$0xf] %vm2128, %v5085
        %5154 = vst.msk [vmem:[%s5124 + $0x74] sm:$0xf] %vm2128, %v5087
        %5155 = vst.msk [vmem:[%s5124 + $0x78] sm:$0xf] %vm2128, %v5089
        %5156 = vst.msk [vmem:[%s5124 + $0x7c] sm:$0xf] %vm2128, %v5091
        %5157 = vrot.lane.b32.xlu0 %v4028, 32
        %v5158 = vpop.permute.xlu0 %5157
        %5159 = vrot.lane.b32.xlu0 %v4029, 32
        %v5160 = vpop.permute.xlu0 %5159
        %5161 = vrot.lane.b32.xlu0 %v4030, 32
        %v5162 = vpop.permute.xlu0 %5161
        %5163 = vrot.lane.b32.xlu0 %v4031, 32
        %v5164 = vpop.permute.xlu0 %5163
        %5165 = vrot.lane.b32.xlu0 %v4032, 32
        %v5166 = vpop.permute.xlu0 %5165
        %5167 = vrot.lane.b32.xlu0 %v4033, 32
        %v5168 = vpop.permute.xlu0 %5167
        %5169 = vrot.lane.b32.xlu0 %v4034, 32
        %v5170 = vpop.permute.xlu0 %5169
        %5171 = vrot.lane.b32.xlu0 %v4035, 32
        %v5172 = vpop.permute.xlu0 %5171
        %5173 = vrot.lane.b32.xlu0 %v4036, 32
        %v5174 = vpop.permute.xlu0 %5173
        %5175 = vrot.lane.b32.xlu0 %v4037, 32
        %v5176 = vpop.permute.xlu0 %5175
        %5177 = vrot.lane.b32.xlu0 %v4038, 32
        %v5178 = vpop.permute.xlu0 %5177
        %5179 = vrot.lane.b32.xlu0 %v4039, 32
        %v5180 = vpop.permute.xlu0 %5179
        %5181 = vrot.lane.b32.xlu0 %v4040, 32
        %v5182 = vpop.permute.xlu0 %5181
        %5183 = vrot.lane.b32.xlu0 %v4041, 32
        %v5184 = vpop.permute.xlu0 %5183
        %5185 = vrot.lane.b32.xlu0 %v4042, 32
        %v5186 = vpop.permute.xlu0 %5185
        %5187 = vrot.lane.b32.xlu0 %v4043, 32
        %v5188 = vpop.permute.xlu0 %5187
        %5189 = vrot.lane.b32.xlu0 %v4044, 32
        %v5190 = vpop.permute.xlu0 %5189
        %5191 = vrot.lane.b32.xlu0 %v4045, 32
        %v5192 = vpop.permute.xlu0 %5191
        %5193 = vrot.lane.b32.xlu0 %v4046, 32
        %v5194 = vpop.permute.xlu0 %5193
        %5195 = vrot.lane.b32.xlu0 %v4047, 32
        %v5196 = vpop.permute.xlu0 %5195
        %5197 = vrot.lane.b32.xlu0 %v4048, 32
        %v5198 = vpop.permute.xlu0 %5197
        %5199 = vrot.lane.b32.xlu0 %v4049, 32
        %v5200 = vpop.permute.xlu0 %5199
        %5201 = vrot.lane.b32.xlu0 %v4050, 32
        %v5202 = vpop.permute.xlu0 %5201
        %5203 = vrot.lane.b32.xlu0 %v4051, 32
        %v5204 = vpop.permute.xlu0 %5203
        %5205 = vrot.lane.b32.xlu0 %v4052, 32
        %v5206 = vpop.permute.xlu0 %5205
        %5207 = vrot.lane.b32.xlu0 %v4053, 32
        %v5208 = vpop.permute.xlu0 %5207
        %5209 = vrot.lane.b32.xlu0 %v4054, 32
        %v5210 = vpop.permute.xlu0 %5209
        %5211 = vrot.lane.b32.xlu0 %v4055, 32
        %v5212 = vpop.permute.xlu0 %5211
        %5213 = vrot.lane.b32.xlu0 %v4056, 32
        %v5214 = vpop.permute.xlu0 %5213
        %5215 = vrot.lane.b32.xlu0 %v4057, 32
        %v5216 = vpop.permute.xlu0 %5215
        %5217 = vrot.lane.b32.xlu0 %v4058, 32
        %v5218 = vpop.permute.xlu0 %5217
        %5219 = vrot.lane.b32.xlu0 %v4059, 32
        %v5220 = vpop.permute.xlu0 %5219
        %s5253 = scalar_lea.vmem [#allocation4], 896
        %5254 = vst.msk [vmem:[%s5253] sm:$0xf] %vm2128, %v5158
        %5255 = vst.msk [vmem:[%s5253 + $0x4] sm:$0xf] %vm2128, %v5160
        %5256 = vst.msk [vmem:[%s5253 + $0x8] sm:$0xf] %vm2128, %v5162
        %5257 = vst.msk [vmem:[%s5253 + $0xc] sm:$0xf] %vm2128, %v5164
        %5258 = vst.msk [vmem:[%s5253 + $0x10] sm:$0xf] %vm2128, %v5166
        %5259 = vst.msk [vmem:[%s5253 + $0x14] sm:$0xf] %vm2128, %v5168
        %5260 = vst.msk [vmem:[%s5253 + $0x18] sm:$0xf] %vm2128, %v5170
        %5261 = vst.msk [vmem:[%s5253 + $0x1c] sm:$0xf] %vm2128, %v5172
        %5262 = vst.msk [vmem:[%s5253 + $0x20] sm:$0xf] %vm2128, %v5174
        %5263 = vst.msk [vmem:[%s5253 + $0x24] sm:$0xf] %vm2128, %v5176
        %5264 = vst.msk [vmem:[%s5253 + $0x28] sm:$0xf] %vm2128, %v5178
        %5265 = vst.msk [vmem:[%s5253 + $0x2c] sm:$0xf] %vm2128, %v5180
        %5266 = vst.msk [vmem:[%s5253 + $0x30] sm:$0xf] %vm2128, %v5182
        %5267 = vst.msk [vmem:[%s5253 + $0x34] sm:$0xf] %vm2128, %v5184
        %5268 = vst.msk [vmem:[%s5253 + $0x38] sm:$0xf] %vm2128, %v5186
        %5269 = vst.msk [vmem:[%s5253 + $0x3c] sm:$0xf] %vm2128, %v5188
        %5270 = vst.msk [vmem:[%s5253 + $0x40] sm:$0xf] %vm2128, %v5190
        %5271 = vst.msk [vmem:[%s5253 + $0x44] sm:$0xf] %vm2128, %v5192
        %5272 = vst.msk [vmem:[%s5253 + $0x48] sm:$0xf] %vm2128, %v5194
        %5273 = vst.msk [vmem:[%s5253 + $0x4c] sm:$0xf] %vm2128, %v5196
        %5274 = vst.msk [vmem:[%s5253 + $0x50] sm:$0xf] %vm2128, %v5198
        %5275 = vst.msk [vmem:[%s5253 + $0x54] sm:$0xf] %vm2128, %v5200
        %5276 = vst.msk [vmem:[%s5253 + $0x58] sm:$0xf] %vm2128, %v5202
        %5277 = vst.msk [vmem:[%s5253 + $0x5c] sm:$0xf] %vm2128, %v5204
        %5278 = vst.msk [vmem:[%s5253 + $0x60] sm:$0xf] %vm2128, %v5206
        %5279 = vst.msk [vmem:[%s5253 + $0x64] sm:$0xf] %vm2128, %v5208
        %5280 = vst.msk [vmem:[%s5253 + $0x68] sm:$0xf] %vm2128, %v5210
        %5281 = vst.msk [vmem:[%s5253 + $0x6c] sm:$0xf] %vm2128, %v5212
        %5282 = vst.msk [vmem:[%s5253 + $0x70] sm:$0xf] %vm2128, %v5214
        %5283 = vst.msk [vmem:[%s5253 + $0x74] sm:$0xf] %vm2128, %v5216
        %5284 = vst.msk [vmem:[%s5253 + $0x78] sm:$0xf] %vm2128, %v5218
        %5285 = vst.msk [vmem:[%s5253 + $0x7c] sm:$0xf] %vm2128, %v5220
        %5286 = vst [vmem:[#allocation5] sm:$0xff] 0.0
        %5287 = vst [vmem:[#allocation5 + $0x8] sm:$0xff] 0.0
        %5288 = vst [vmem:[#allocation5 + $0x10] sm:$0xff] 0.0
        %5289 = vst [vmem:[#allocation5 + $0x18] sm:$0xff] 0.0
        %5290 = vst [vmem:[#allocation5 + $0x20] sm:$0xff] 0.0
        %5291 = vst [vmem:[#allocation5 + $0x28] sm:$0xff] 0.0
        %5292 = vst [vmem:[#allocation5 + $0x30] sm:$0xff] 0.0
        %5293 = vst [vmem:[#allocation5 + $0x38] sm:$0xff] 0.0
        %5294 = vst [vmem:[#allocation5 + $0x40] sm:$0xff] 0.0
        %5295 = vst [vmem:[#allocation5 + $0x48] sm:$0xff] 0.0
        %5296 = vst [vmem:[#allocation5 + $0x50] sm:$0xff] 0.0
        %5297 = vst [vmem:[#allocation5 + $0x58] sm:$0xff] 0.0
        %5298 = vst [vmem:[#allocation5 + $0x60] sm:$0xff] 0.0
        %5299 = vst [vmem:[#allocation5 + $0x68] sm:$0xff] 0.0
        %5300 = vst [vmem:[#allocation5 + $0x70] sm:$0xff] 0.0
        %5301 = vst [vmem:[#allocation5 + $0x78] sm:$0xff] 0.0
        %5302 = vst [vmem:[#allocation5 + $0x80] sm:$0xff] 0.0
        %5303 = vst [vmem:[#allocation5 + $0x88] sm:$0xff] 0.0
        %5304 = vst [vmem:[#allocation5 + $0x90] sm:$0xff] 0.0
        %5305 = vst [vmem:[#allocation5 + $0x98] sm:$0xff] 0.0
        %5306 = vst [vmem:[#allocation5 + $0xa0] sm:$0xff] 0.0
        %5307 = vst [vmem:[#allocation5 + $0xa8] sm:$0xff] 0.0
        %5308 = vst [vmem:[#allocation5 + $0xb0] sm:$0xff] 0.0
        %5309 = vst [vmem:[#allocation5 + $0xb8] sm:$0xff] 0.0
        %5310 = vst [vmem:[#allocation5 + $0xc0] sm:$0xff] 0.0
        %5311 = vst [vmem:[#allocation5 + $0xc8] sm:$0xff] 0.0
        %5312 = vst [vmem:[#allocation5 + $0xd0] sm:$0xff] 0.0
        %5313 = vst [vmem:[#allocation5 + $0xd8] sm:$0xff] 0.0
        %5314 = vst [vmem:[#allocation5 + $0xe0] sm:$0xff] 0.0
        %5315 = vst [vmem:[#allocation5 + $0xe8] sm:$0xff] 0.0
        %5316 = vst [vmem:[#allocation5 + $0xf0] sm:$0xff] 0.0
        %5317 = vst [vmem:[#allocation5 + $0xf8] sm:$0xff] 0.0
        %5318 = vst [vmem:[#allocation5 + $0x100] sm:$0xff] 0.0
        %5319 = vst [vmem:[#allocation5 + $0x108] sm:$0xff] 0.0
        %5320 = vst [vmem:[#allocation5 + $0x110] sm:$0xff] 0.0
        %5321 = vst [vmem:[#allocation5 + $0x118] sm:$0xff] 0.0
        %5322 = vst [vmem:[#allocation5 + $0x120] sm:$0xff] 0.0
        %5323 = vst [vmem:[#allocation5 + $0x128] sm:$0xff] 0.0
        %5324 = vst [vmem:[#allocation5 + $0x130] sm:$0xff] 0.0
        %5325 = vst [vmem:[#allocation5 + $0x138] sm:$0xff] 0.0
        %5326 = vst [vmem:[#allocation5 + $0x140] sm:$0xff] 0.0
        %5327 = vst [vmem:[#allocation5 + $0x148] sm:$0xff] 0.0
        %5328 = vst [vmem:[#allocation5 + $0x150] sm:$0xff] 0.0
        %5329 = vst [vmem:[#allocation5 + $0x158] sm:$0xff] 0.0
        %5330 = vst [vmem:[#allocation5 + $0x160] sm:$0xff] 0.0
        %5331 = vst [vmem:[#allocation5 + $0x168] sm:$0xff] 0.0
        %5332 = vst [vmem:[#allocation5 + $0x170] sm:$0xff] 0.0
        %5333 = vst [vmem:[#allocation5 + $0x178] sm:$0xff] 0.0
        %5334 = vst [vmem:[#allocation5 + $0x180] sm:$0xff] 0.0
        %5335 = vst [vmem:[#allocation5 + $0x188] sm:$0xff] 0.0
        %5336 = vst [vmem:[#allocation5 + $0x190] sm:$0xff] 0.0
        %5337 = vst [vmem:[#allocation5 + $0x198] sm:$0xff] 0.0
        %5338 = vst [vmem:[#allocation5 + $0x1a0] sm:$0xff] 0.0
        %5339 = vst [vmem:[#allocation5 + $0x1a8] sm:$0xff] 0.0
        %5340 = vst [vmem:[#allocation5 + $0x1b0] sm:$0xff] 0.0
        %5341 = vst [vmem:[#allocation5 + $0x1b8] sm:$0xff] 0.0
        %5342 = vst [vmem:[#allocation5 + $0x1c0] sm:$0xff] 0.0
        %5343 = vst [vmem:[#allocation5 + $0x1c8] sm:$0xff] 0.0
        %5344 = vst [vmem:[#allocation5 + $0x1d0] sm:$0xff] 0.0
        %5345 = vst [vmem:[#allocation5 + $0x1d8] sm:$0xff] 0.0
        %5346 = vst [vmem:[#allocation5 + $0x1e0] sm:$0xff] 0.0
        %5347 = vst [vmem:[#allocation5 + $0x1e8] sm:$0xff] 0.0
        %5348 = vst [vmem:[#allocation5 + $0x1f0] sm:$0xff] 0.0
        %5349 = vst [vmem:[#allocation5 + $0x1f8] sm:$0xff] 0.0
      $region56: #{_lambda_.1} parent=51 // pred_fallthru
        _
      %s5350 = smul.u32 %s24, 32
      %s5351 = smul.addr %s5350, 4
      %s5352 = scalar_lea.vmem [#allocation2], %s5351
      %v5353 = vld [vmem:[%s5352] sm:$0xf]
      %v5354 = vld [vmem:[%s5352 + $0x4] sm:$0xf]
      %v5355 = vld [vmem:[%s5352 + $0x8] sm:$0xf]
      %v5356 = vld [vmem:[%s5352 + $0xc] sm:$0xf]
      %v5357 = vld [vmem:[%s5352 + $0x10] sm:$0xf]
      %v5358 = vld [vmem:[%s5352 + $0x14] sm:$0xf]
      %v5359 = vld [vmem:[%s5352 + $0x18] sm:$0xf]
      %v5360 = vld [vmem:[%s5352 + $0x1c] sm:$0xf]
      %v5361 = vld [vmem:[%s5352 + $0x20] sm:$0xf]
      %v5362 = vld [vmem:[%s5352 + $0x24] sm:$0xf]
      %v5363 = vld [vmem:[%s5352 + $0x28] sm:$0xf]
      %v5364 = vld [vmem:[%s5352 + $0x2c] sm:$0xf]
      %v5365 = vld [vmem:[%s5352 + $0x30] sm:$0xf]
      %v5366 = vld [vmem:[%s5352 + $0x34] sm:$0xf]
      %v5367 = vld [vmem:[%s5352 + $0x38] sm:$0xf]
      %v5368 = vld [vmem:[%s5352 + $0x3c] sm:$0xf]
      %v5369 = vld [vmem:[%s5352 + $0x40] sm:$0xf]
      %v5370 = vld [vmem:[%s5352 + $0x44] sm:$0xf]
      %v5371 = vld [vmem:[%s5352 + $0x48] sm:$0xf]
      %v5372 = vld [vmem:[%s5352 + $0x4c] sm:$0xf]
      %v5373 = vld [vmem:[%s5352 + $0x50] sm:$0xf]
      %v5374 = vld [vmem:[%s5352 + $0x54] sm:$0xf]
      %v5375 = vld [vmem:[%s5352 + $0x58] sm:$0xf]
      %v5376 = vld [vmem:[%s5352 + $0x5c] sm:$0xf]
      %v5377 = vld [vmem:[%s5352 + $0x60] sm:$0xf]
      %v5378 = vld [vmem:[%s5352 + $0x64] sm:$0xf]
      %v5379 = vld [vmem:[%s5352 + $0x68] sm:$0xf]
      %v5380 = vld [vmem:[%s5352 + $0x6c] sm:$0xf]
      %v5381 = vld [vmem:[%s5352 + $0x70] sm:$0xf]
      %v5382 = vld [vmem:[%s5352 + $0x74] sm:$0xf]
      %v5383 = vld [vmem:[%s5352 + $0x78] sm:$0xf]
      %v5384 = vld [vmem:[%s5352 + $0x7c] sm:$0xf]
      %s5385 = smul.addr %s5350, 4
      %s5386 = scalar_lea.vmem [#allocation3], %s5385
      %v5387 = vld [vmem:[%s5386] sm:$0xf]
      %v5388 = vld [vmem:[%s5386 + $0x4] sm:$0xf]
      %v5389 = vld [vmem:[%s5386 + $0x8] sm:$0xf]
      %v5390 = vld [vmem:[%s5386 + $0xc] sm:$0xf]
      %v5391 = vld [vmem:[%s5386 + $0x10] sm:$0xf]
      %v5392 = vld [vmem:[%s5386 + $0x14] sm:$0xf]
      %v5393 = vld [vmem:[%s5386 + $0x18] sm:$0xf]
      %v5394 = vld [vmem:[%s5386 + $0x1c] sm:$0xf]
      %v5395 = vld [vmem:[%s5386 + $0x20] sm:$0xf]
      %v5396 = vld [vmem:[%s5386 + $0x24] sm:$0xf]
      %v5397 = vld [vmem:[%s5386 + $0x28] sm:$0xf]
      %v5398 = vld [vmem:[%s5386 + $0x2c] sm:$0xf]
      %v5399 = vld [vmem:[%s5386 + $0x30] sm:$0xf]
      %v5400 = vld [vmem:[%s5386 + $0x34] sm:$0xf]
      %v5401 = vld [vmem:[%s5386 + $0x38] sm:$0xf]
      %v5402 = vld [vmem:[%s5386 + $0x3c] sm:$0xf]
      %v5403 = vld [vmem:[%s5386 + $0x40] sm:$0xf]
      %v5404 = vld [vmem:[%s5386 + $0x44] sm:$0xf]
      %v5405 = vld [vmem:[%s5386 + $0x48] sm:$0xf]
      %v5406 = vld [vmem:[%s5386 + $0x4c] sm:$0xf]
      %v5407 = vld [vmem:[%s5386 + $0x50] sm:$0xf]
      %v5408 = vld [vmem:[%s5386 + $0x54] sm:$0xf]
      %v5409 = vld [vmem:[%s5386 + $0x58] sm:$0xf]
      %v5410 = vld [vmem:[%s5386 + $0x5c] sm:$0xf]
      %v5411 = vld [vmem:[%s5386 + $0x60] sm:$0xf]
      %v5412 = vld [vmem:[%s5386 + $0x64] sm:$0xf]
      %v5413 = vld [vmem:[%s5386 + $0x68] sm:$0xf]
      %v5414 = vld [vmem:[%s5386 + $0x6c] sm:$0xf]
      %v5415 = vld [vmem:[%s5386 + $0x70] sm:$0xf]
      %v5416 = vld [vmem:[%s5386 + $0x74] sm:$0xf]
      %v5417 = vld [vmem:[%s5386 + $0x78] sm:$0xf]
      %v5418 = vld [vmem:[%s5386 + $0x7c] sm:$0xf]
      %s5419 = smul.addr %s5350, 4
      %s5420 = scalar_lea.vmem [#allocation4], %s5419
      %v5421 = vld [vmem:[%s5420] sm:$0xf]
      %v5422 = vld [vmem:[%s5420 + $0x4] sm:$0xf]
      %v5423 = vld [vmem:[%s5420 + $0x8] sm:$0xf]
      %v5424 = vld [vmem:[%s5420 + $0xc] sm:$0xf]
      %v5425 = vld [vmem:[%s5420 + $0x10] sm:$0xf]
      %v5426 = vld [vmem:[%s5420 + $0x14] sm:$0xf]
      %v5427 = vld [vmem:[%s5420 + $0x18] sm:$0xf]
      %v5428 = vld [vmem:[%s5420 + $0x1c] sm:$0xf]
      %v5429 = vld [vmem:[%s5420 + $0x20] sm:$0xf]
      %v5430 = vld [vmem:[%s5420 + $0x24] sm:$0xf]
      %v5431 = vld [vmem:[%s5420 + $0x28] sm:$0xf]
      %v5432 = vld [vmem:[%s5420 + $0x2c] sm:$0xf]
      %v5433 = vld [vmem:[%s5420 + $0x30] sm:$0xf]
      %v5434 = vld [vmem:[%s5420 + $0x34] sm:$0xf]
      %v5435 = vld [vmem:[%s5420 + $0x38] sm:$0xf]
      %v5436 = vld [vmem:[%s5420 + $0x3c] sm:$0xf]
      %v5437 = vld [vmem:[%s5420 + $0x40] sm:$0xf]
      %v5438 = vld [vmem:[%s5420 + $0x44] sm:$0xf]
      %v5439 = vld [vmem:[%s5420 + $0x48] sm:$0xf]
      %v5440 = vld [vmem:[%s5420 + $0x4c] sm:$0xf]
      %v5441 = vld [vmem:[%s5420 + $0x50] sm:$0xf]
      %v5442 = vld [vmem:[%s5420 + $0x54] sm:$0xf]
      %v5443 = vld [vmem:[%s5420 + $0x58] sm:$0xf]
      %v5444 = vld [vmem:[%s5420 + $0x5c] sm:$0xf]
      %v5445 = vld [vmem:[%s5420 + $0x60] sm:$0xf]
      %v5446 = vld [vmem:[%s5420 + $0x64] sm:$0xf]
      %v5447 = vld [vmem:[%s5420 + $0x68] sm:$0xf]
      %v5448 = vld [vmem:[%s5420 + $0x6c] sm:$0xf]
      %v5449 = vld [vmem:[%s5420 + $0x70] sm:$0xf]
      %v5450 = vld [vmem:[%s5420 + $0x74] sm:$0xf]
      %v5451 = vld [vmem:[%s5420 + $0x78] sm:$0xf]
      %v5452 = vld [vmem:[%s5420 + $0x7c] sm:$0xf]
      %v5485 = vunpack.c.l.b16 %v5353
      %v5486 = vunpack.c.l.b16 %v5354
      %v5487 = vunpack.c.l.b16 %v5355
      %v5488 = vunpack.c.l.b16 %v5356
      %v5489 = vunpack.c.l.b16 %v5357
      %v5490 = vunpack.c.l.b16 %v5358
      %v5491 = vunpack.c.l.b16 %v5359
      %v5492 = vunpack.c.l.b16 %v5360
      %v5493 = vunpack.c.l.b16 %v5361
      %v5494 = vunpack.c.l.b16 %v5362
      %v5495 = vunpack.c.l.b16 %v5363
      %v5496 = vunpack.c.l.b16 %v5364
      %v5497 = vunpack.c.l.b16 %v5365
      %v5498 = vunpack.c.l.b16 %v5366
      %v5499 = vunpack.c.l.b16 %v5367
      %v5500 = vunpack.c.l.b16 %v5368
      %v5501 = vunpack.c.l.b16 %v5369
      %v5502 = vunpack.c.l.b16 %v5370
      %v5503 = vunpack.c.l.b16 %v5371
      %v5504 = vunpack.c.l.b16 %v5372
      %v5505 = vunpack.c.l.b16 %v5373
      %v5506 = vunpack.c.l.b16 %v5374
      %v5507 = vunpack.c.l.b16 %v5375
      %v5508 = vunpack.c.l.b16 %v5376
      %v5509 = vunpack.c.l.b16 %v5377
      %v5510 = vunpack.c.l.b16 %v5378
      %v5511 = vunpack.c.l.b16 %v5379
      %v5512 = vunpack.c.l.b16 %v5380
      %v5513 = vunpack.c.l.b16 %v5381
      %v5514 = vunpack.c.l.b16 %v5382
      %v5515 = vunpack.c.l.b16 %v5383
      %v5516 = vunpack.c.l.b16 %v5384
      %v5517 = vpack.c.b16 %v5486, %v5485
      %v5518 = vpack.c.b16 %v5488, %v5487
      %v5519 = vpack.c.b16 %v5490, %v5489
      %v5520 = vpack.c.b16 %v5492, %v5491
      %v5521 = vpack.c.b16 %v5494, %v5493
      %v5522 = vpack.c.b16 %v5496, %v5495
      %v5523 = vpack.c.b16 %v5498, %v5497
      %v5524 = vpack.c.b16 %v5500, %v5499
      %v5525 = vpack.c.b16 %v5502, %v5501
      %v5526 = vpack.c.b16 %v5504, %v5503
      %v5527 = vpack.c.b16 %v5506, %v5505
      %v5528 = vpack.c.b16 %v5508, %v5507
      %v5529 = vpack.c.b16 %v5510, %v5509
      %v5530 = vpack.c.b16 %v5512, %v5511
      %v5531 = vpack.c.b16 %v5514, %v5513
      %v5532 = vpack.c.b16 %v5516, %v5515
      %v5565 = vunpack.c.l.b16 %v5387
      %v5566 = vunpack.c.l.b16 %v5388
      %v5567 = vunpack.c.l.b16 %v5389
      %v5568 = vunpack.c.l.b16 %v5390
      %v5569 = vunpack.c.l.b16 %v5391
      %v5570 = vunpack.c.l.b16 %v5392
      %v5571 = vunpack.c.l.b16 %v5393
      %v5572 = vunpack.c.l.b16 %v5394
      %v5573 = vunpack.c.l.b16 %v5395
      %v5574 = vunpack.c.l.b16 %v5396
      %v5575 = vunpack.c.l.b16 %v5397
      %v5576 = vunpack.c.l.b16 %v5398
      %v5577 = vunpack.c.l.b16 %v5399
      %v5578 = vunpack.c.l.b16 %v5400
      %v5579 = vunpack.c.l.b16 %v5401
      %v5580 = vunpack.c.l.b16 %v5402
      %v5581 = vunpack.c.l.b16 %v5403
      %v5582 = vunpack.c.l.b16 %v5404
      %v5583 = vunpack.c.l.b16 %v5405
      %v5584 = vunpack.c.l.b16 %v5406
      %v5585 = vunpack.c.l.b16 %v5407
      %v5586 = vunpack.c.l.b16 %v5408
      %v5587 = vunpack.c.l.b16 %v5409
      %v5588 = vunpack.c.l.b16 %v5410
      %v5589 = vunpack.c.l.b16 %v5411
      %v5590 = vunpack.c.l.b16 %v5412
      %v5591 = vunpack.c.l.b16 %v5413
      %v5592 = vunpack.c.l.b16 %v5414
      %v5593 = vunpack.c.l.b16 %v5415
      %v5594 = vunpack.c.l.b16 %v5416
      %v5595 = vunpack.c.l.b16 %v5417
      %v5596 = vunpack.c.l.b16 %v5418
      %v5597 = vpack.c.b16 %v5566, %v5565
      %v5598 = vpack.c.b16 %v5568, %v5567
      %v5599 = vpack.c.b16 %v5570, %v5569
      %v5600 = vpack.c.b16 %v5572, %v5571
      %v5601 = vpack.c.b16 %v5574, %v5573
      %v5602 = vpack.c.b16 %v5576, %v5575
      %v5603 = vpack.c.b16 %v5578, %v5577
      %v5604 = vpack.c.b16 %v5580, %v5579
      %v5605 = vpack.c.b16 %v5582, %v5581
      %v5606 = vpack.c.b16 %v5584, %v5583
      %v5607 = vpack.c.b16 %v5586, %v5585
      %v5608 = vpack.c.b16 %v5588, %v5587
      %v5609 = vpack.c.b16 %v5590, %v5589
      %v5610 = vpack.c.b16 %v5592, %v5591
      %v5611 = vpack.c.b16 %v5594, %v5593
      %v5612 = vpack.c.b16 %v5596, %v5595
      %vm5613 = vcmask 261120
      %v5615 = vsel %vm5613, %v5517, 0
      %v5618 = vsel %vm5613, %v5518, 0
      %v5621 = vsel %vm5613, %v5519, 0
      %v5624 = vsel %vm5613, %v5520, 0
      %v5627 = vsel %vm5613, %v5521, 0
      %v5630 = vsel %vm5613, %v5522, 0
      %v5633 = vsel %vm5613, %v5523, 0
      %v5636 = vsel %vm5613, %v5524, 0
      %v5639 = vsel %vm5613, %v5525, 0
      %v5642 = vsel %vm5613, %v5526, 0
      %v5645 = vsel %vm5613, %v5527, 0
      %v5648 = vsel %vm5613, %v5528, 0
      %v5651 = vsel %vm5613, %v5529, 0
      %v5654 = vsel %vm5613, %v5530, 0
      %v5657 = vsel %vm5613, %v5531, 0
      %v5660 = vsel %vm5613, %v5532, 0
      %v5663 = vsel %vm5613, %v5597, 0
      %v5666 = vsel %vm5613, %v5598, 0
      %v5669 = vsel %vm5613, %v5599, 0
      %v5672 = vsel %vm5613, %v5600, 0
      %v5675 = vsel %vm5613, %v5601, 0
      %v5678 = vsel %vm5613, %v5602, 0
      %v5681 = vsel %vm5613, %v5603, 0
      %v5684 = vsel %vm5613, %v5604, 0
      %v5687 = vsel %vm5613, %v5605, 0
      %v5690 = vsel %vm5613, %v5606, 0
      %v5693 = vsel %vm5613, %v5607, 0
      %v5696 = vsel %vm5613, %v5608, 0
      %v5699 = vsel %vm5613, %v5609, 0
      %v5702 = vsel %vm5613, %v5610, 0
      %v5705 = vsel %vm5613, %v5611, 0
      %v5708 = vsel %vm5613, %v5612, 0
      %5710 = vmatprep.subr.bf16.mxu0 0
      %5711 = vmatpush1.bf16.xpose.msra.mxu0 %v5684
      %5712 = vmatprep.subr.bf16.mxu0 0
      %5713 = vmatpush1.bf16.xpose.msra.mxu0 %v5681
      %5714 = vmatprep.subr.bf16.mxu0 0
      %5715 = vmatpush1.bf16.xpose.msra.mxu0 %v5678
      %5716 = vmatprep.subr.bf16.mxu0 0
      %5717 = vmatpush1.bf16.xpose.msra.mxu0 %v5675
      %5718 = vmatprep.subr.bf16.mxu0 0
      %5719 = vmatpush1.bf16.xpose.msra.mxu0 %v5672
      %5720 = vmatprep.subr.bf16.mxu0 0
      %5721 = vmatpush1.bf16.xpose.msra.mxu0 %v5669
      %5722 = vmatprep.subr.bf16.mxu0 0
      %5723 = vmatpush1.bf16.xpose.msra.mxu0 %v5666
      %5724 = vmatprep.subr.bf16.mxu0 0
      %5725 = vmatpush1.bf16.xpose.msra.mxu0 %v5663
      %5726 = vmatprep.subr.bf16.mxu0 0
      %5727 = vmatpush2.bf16.xpose.msra.mxu0 %v5708
      %5728 = vmatprep.subr.bf16.mxu0 0
      %5729 = vmatpush2.bf16.xpose.msra.mxu0 %v5705
      %5730 = vmatprep.subr.bf16.mxu0 0
      %5731 = vmatpush2.bf16.xpose.msra.mxu0 %v5702
      %5732 = vmatprep.subr.bf16.mxu0 0
      %5733 = vmatpush2.bf16.xpose.msra.mxu0 %v5699
      %5734 = vmatprep.subr.bf16.mxu0 0
      %5735 = vmatpush2.bf16.xpose.msra.mxu0 %v5696
      %5736 = vmatprep.subr.bf16.mxu0 0
      %5737 = vmatpush2.bf16.xpose.msra.mxu0 %v5693
      %5738 = vmatprep.subr.bf16.mxu0 0
      %5739 = vmatpush2.bf16.xpose.msra.mxu0 %v5690
      %5740 = vmatprep.subr.bf16.mxu0 0
      %5741 = vmatpush2.bf16.xpose.msra.mxu0 %v5687
      %5742 = vmatprep.mubr.bf16.mxu0 0
      %5743 = vmatmul.mubr.bf16.gmra.mxu0 %v5615
      %v5744 = vpop.f32.mrf.mxu0
      %v5745 = vadd.f32 0.0, %v5744
      %v5746 = vpop.f32.mrf.mxu0
      %v5747 = vadd.f32 0.0, %v5746
      %v5748 = vpop.f32.mrf.mxu0
      %v5749 = vadd.f32 0.0, %v5748
      %v5750 = vpop.f32.mrf.mxu0
      %v5751 = vadd.f32 0.0, %v5750
      %5752 = vmatprep.mubr.bf16.mxu0 0
      %5753 = vmatmul.mubr.bf16.gmra.mxu0 %v5618
      %v5754 = vpop.f32.mrf.mxu0
      %v5755 = vadd.f32 0.0, %v5754
      %v5756 = vpop.f32.mrf.mxu0
      %v5757 = vadd.f32 0.0, %v5756
      %v5758 = vpop.f32.mrf.mxu0
      %v5759 = vadd.f32 0.0, %v5758
      %v5760 = vpop.f32.mrf.mxu0
      %v5761 = vadd.f32 0.0, %v5760
      %5762 = vmatprep.mubr.bf16.mxu0 0
      %5763 = vmatmul.mubr.bf16.gmra.mxu0 %v5621
      %v5764 = vpop.f32.mrf.mxu0
      %v5765 = vadd.f32 0.0, %v5764
      %v5766 = vpop.f32.mrf.mxu0
      %v5767 = vadd.f32 0.0, %v5766
      %v5768 = vpop.f32.mrf.mxu0
      %v5769 = vadd.f32 0.0, %v5768
      %v5770 = vpop.f32.mrf.mxu0
      %v5771 = vadd.f32 0.0, %v5770
      %5772 = vmatprep.mubr.bf16.mxu0 0
      %5773 = vmatmul.mubr.bf16.gmra.mxu0 %v5624
      %v5774 = vpop.f32.mrf.mxu0
      %v5775 = vadd.f32 0.0, %v5774
      %v5776 = vpop.f32.mrf.mxu0
      %v5777 = vadd.f32 0.0, %v5776
      %v5778 = vpop.f32.mrf.mxu0
      %v5779 = vadd.f32 0.0, %v5778
      %v5780 = vpop.f32.mrf.mxu0
      %v5781 = vadd.f32 0.0, %v5780
      %5782 = vmatprep.mubr.bf16.mxu0 0
      %5783 = vmatmul.mubr.bf16.gmra.mxu0 %v5627
      %v5784 = vpop.f32.mrf.mxu0
      %v5785 = vadd.f32 0.0, %v5784
      %v5786 = vpop.f32.mrf.mxu0
      %v5787 = vadd.f32 0.0, %v5786
      %v5788 = vpop.f32.mrf.mxu0
      %v5789 = vadd.f32 0.0, %v5788
      %v5790 = vpop.f32.mrf.mxu0
      %v5791 = vadd.f32 0.0, %v5790
      %5792 = vmatprep.mubr.bf16.mxu0 0
      %5793 = vmatmul.mubr.bf16.gmra.mxu0 %v5630
      %v5794 = vpop.f32.mrf.mxu0
      %v5795 = vadd.f32 0.0, %v5794
      %v5796 = vpop.f32.mrf.mxu0
      %v5797 = vadd.f32 0.0, %v5796
      %v5798 = vpop.f32.mrf.mxu0
      %v5799 = vadd.f32 0.0, %v5798
      %v5800 = vpop.f32.mrf.mxu0
      %v5801 = vadd.f32 0.0, %v5800
      %5802 = vmatprep.mubr.bf16.mxu0 0
      %5803 = vmatmul.mubr.bf16.gmra.mxu0 %v5633
      %v5804 = vpop.f32.mrf.mxu0
      %v5805 = vadd.f32 0.0, %v5804
      %v5806 = vpop.f32.mrf.mxu0
      %v5807 = vadd.f32 0.0, %v5806
      %v5808 = vpop.f32.mrf.mxu0
      %v5809 = vadd.f32 0.0, %v5808
      %v5810 = vpop.f32.mrf.mxu0
      %v5811 = vadd.f32 0.0, %v5810
      %5812 = vmatprep.mubr.bf16.mxu0 0
      %5813 = vmatmul.mubr.bf16.gmra.mxu0 %v5636
      %v5814 = vpop.f32.mrf.mxu0
      %v5815 = vadd.f32 0.0, %v5814
      %v5816 = vpop.f32.mrf.mxu0
      %v5817 = vadd.f32 0.0, %v5816
      %v5818 = vpop.f32.mrf.mxu0
      %v5819 = vadd.f32 0.0, %v5818
      %v5820 = vpop.f32.mrf.mxu0
      %v5821 = vadd.f32 0.0, %v5820
      %5822 = vmatprep.mubr.bf16.mxu0 0
      %5823 = vmatmul.mubr.bf16.gmra.mxu0 %v5639
      %v5824 = vpop.f32.mrf.mxu0
      %v5825 = vadd.f32 0.0, %v5824
      %v5826 = vpop.f32.mrf.mxu0
      %v5827 = vadd.f32 0.0, %v5826
      %v5828 = vpop.f32.mrf.mxu0
      %v5829 = vadd.f32 0.0, %v5828
      %v5830 = vpop.f32.mrf.mxu0
      %v5831 = vadd.f32 0.0, %v5830
      %5832 = vmatprep.mubr.bf16.mxu0 0
      %5833 = vmatmul.mubr.bf16.gmra.mxu0 %v5642
      %v5834 = vpop.f32.mrf.mxu0
      %v5835 = vadd.f32 0.0, %v5834
      %v5836 = vpop.f32.mrf.mxu0
      %v5837 = vadd.f32 0.0, %v5836
      %v5838 = vpop.f32.mrf.mxu0
      %v5839 = vadd.f32 0.0, %v5838
      %v5840 = vpop.f32.mrf.mxu0
      %v5841 = vadd.f32 0.0, %v5840
      %5842 = vmatprep.mubr.bf16.mxu0 0
      %5843 = vmatmul.mubr.bf16.gmra.mxu0 %v5645
      %v5844 = vpop.f32.mrf.mxu0
      %v5845 = vadd.f32 0.0, %v5844
      %v5846 = vpop.f32.mrf.mxu0
      %v5847 = vadd.f32 0.0, %v5846
      %v5848 = vpop.f32.mrf.mxu0
      %v5849 = vadd.f32 0.0, %v5848
      %v5850 = vpop.f32.mrf.mxu0
      %v5851 = vadd.f32 0.0, %v5850
      %5852 = vmatprep.mubr.bf16.mxu0 0
      %5853 = vmatmul.mubr.bf16.gmra.mxu0 %v5648
      %v5854 = vpop.f32.mrf.mxu0
      %v5855 = vadd.f32 0.0, %v5854
      %v5856 = vpop.f32.mrf.mxu0
      %v5857 = vadd.f32 0.0, %v5856
      %v5858 = vpop.f32.mrf.mxu0
      %v5859 = vadd.f32 0.0, %v5858
      %v5860 = vpop.f32.mrf.mxu0
      %v5861 = vadd.f32 0.0, %v5860
      %5862 = vmatprep.mubr.bf16.mxu0 0
      %5863 = vmatmul.mubr.bf16.gmra.mxu0 %v5651
      %v5864 = vpop.f32.mrf.mxu0
      %v5865 = vadd.f32 0.0, %v5864
      %v5866 = vpop.f32.mrf.mxu0
      %v5867 = vadd.f32 0.0, %v5866
      %v5868 = vpop.f32.mrf.mxu0
      %v5869 = vadd.f32 0.0, %v5868
      %v5870 = vpop.f32.mrf.mxu0
      %v5871 = vadd.f32 0.0, %v5870
      %5872 = vmatprep.mubr.bf16.mxu0 0
      %5873 = vmatmul.mubr.bf16.gmra.mxu0 %v5654
      %v5874 = vpop.f32.mrf.mxu0
      %v5875 = vadd.f32 0.0, %v5874
      %v5876 = vpop.f32.mrf.mxu0
      %v5877 = vadd.f32 0.0, %v5876
      %v5878 = vpop.f32.mrf.mxu0
      %v5879 = vadd.f32 0.0, %v5878
      %v5880 = vpop.f32.mrf.mxu0
      %v5881 = vadd.f32 0.0, %v5880
      %5882 = vmatprep.mubr.bf16.mxu0 0
      %5883 = vmatmul.mubr.bf16.gmra.mxu0 %v5657
      %v5884 = vpop.f32.mrf.mxu0
      %v5885 = vadd.f32 0.0, %v5884
      %v5886 = vpop.f32.mrf.mxu0
      %v5887 = vadd.f32 0.0, %v5886
      %v5888 = vpop.f32.mrf.mxu0
      %v5889 = vadd.f32 0.0, %v5888
      %v5890 = vpop.f32.mrf.mxu0
      %v5891 = vadd.f32 0.0, %v5890
      %5892 = vmatprep.mubr.bf16.mxu0 0
      %5893 = vmatmul.mubr.bf16.gmra.mxu0 %v5660
      %v5894 = vpop.f32.mrf.mxu0
      %v5895 = vadd.f32 0.0, %v5894
      %v5896 = vpop.f32.mrf.mxu0
      %v5897 = vadd.f32 0.0, %v5896
      %v5898 = vpop.f32.mrf.mxu0
      %v5899 = vadd.f32 0.0, %v5898
      %v5900 = vpop.f32.mrf.mxu0
      %v5901 = vadd.f32 0.0, %v5900
      %5902 = vdwg.mxu0
      %v5903 = vmax.f32 %v5745, %v5747
      %5904 = vmax.xlane.f32.xlu0 %v5903
      %v5905 = vpop.xlane.xlu0 %5904
      %v5906 = vmax.f32 %v5749, %v5751
      %5907 = vmax.xlane.f32.xlu0 %v5906
      %v5908 = vpop.xlane.xlu0 %5907
      %v5909 = vmax.f32 %v5755, %v5757
      %5910 = vmax.xlane.f32.xlu0 %v5909
      %v5911 = vpop.xlane.xlu0 %5910
      %v5912 = vmax.f32 %v5759, %v5761
      %5913 = vmax.xlane.f32.xlu0 %v5912
      %v5914 = vpop.xlane.xlu0 %5913
      %v5915 = vmax.f32 %v5765, %v5767
      %5916 = vmax.xlane.f32.xlu0 %v5915
      %v5917 = vpop.xlane.xlu0 %5916
      %v5918 = vmax.f32 %v5769, %v5771
      %5919 = vmax.xlane.f32.xlu0 %v5918
      %v5920 = vpop.xlane.xlu0 %5919
      %v5921 = vmax.f32 %v5775, %v5777
      %5922 = vmax.xlane.f32.xlu0 %v5921
      %v5923 = vpop.xlane.xlu0 %5922
      %v5924 = vmax.f32 %v5779, %v5781
      %5925 = vmax.xlane.f32.xlu0 %v5924
      %v5926 = vpop.xlane.xlu0 %5925
      %v5927 = vmax.f32 %v5785, %v5787
      %5928 = vmax.xlane.f32.xlu0 %v5927
      %v5929 = vpop.xlane.xlu0 %5928
      %v5930 = vmax.f32 %v5789, %v5791
      %5931 = vmax.xlane.f32.xlu0 %v5930
      %v5932 = vpop.xlane.xlu0 %5931
      %v5933 = vmax.f32 %v5795, %v5797
      %5934 = vmax.xlane.f32.xlu0 %v5933
      %v5935 = vpop.xlane.xlu0 %5934
      %v5936 = vmax.f32 %v5799, %v5801
      %5937 = vmax.xlane.f32.xlu0 %v5936
      %v5938 = vpop.xlane.xlu0 %5937
      %v5939 = vmax.f32 %v5805, %v5807
      %5940 = vmax.xlane.f32.xlu0 %v5939
      %v5941 = vpop.xlane.xlu0 %5940
      %v5942 = vmax.f32 %v5809, %v5811
      %5943 = vmax.xlane.f32.xlu0 %v5942
      %v5944 = vpop.xlane.xlu0 %5943
      %v5945 = vmax.f32 %v5815, %v5817
      %5946 = vmax.xlane.f32.xlu0 %v5945
      %v5947 = vpop.xlane.xlu0 %5946
      %v5948 = vmax.f32 %v5819, %v5821
      %5949 = vmax.xlane.f32.xlu0 %v5948
      %v5950 = vpop.xlane.xlu0 %5949
      %v5951 = vmax.f32 %v5825, %v5827
      %5952 = vmax.xlane.f32.xlu0 %v5951
      %v5953 = vpop.xlane.xlu0 %5952
      %v5954 = vmax.f32 %v5829, %v5831
      %5955 = vmax.xlane.f32.xlu0 %v5954
      %v5956 = vpop.xlane.xlu0 %5955
      %v5957 = vmax.f32 %v5835, %v5837
      %5958 = vmax.xlane.f32.xlu0 %v5957
      %v5959 = vpop.xlane.xlu0 %5958
      %v5960 = vmax.f32 %v5839, %v5841
      %5961 = vmax.xlane.f32.xlu0 %v5960
      %v5962 = vpop.xlane.xlu0 %5961
      %v5963 = vmax.f32 %v5845, %v5847
      %5964 = vmax.xlane.f32.xlu0 %v5963
      %v5965 = vpop.xlane.xlu0 %5964
      %v5966 = vmax.f32 %v5849, %v5851
      %5967 = vmax.xlane.f32.xlu0 %v5966
      %v5968 = vpop.xlane.xlu0 %5967
      %v5969 = vmax.f32 %v5855, %v5857
      %5970 = vmax.xlane.f32.xlu0 %v5969
      %v5971 = vpop.xlane.xlu0 %5970
      %v5972 = vmax.f32 %v5859, %v5861
      %5973 = vmax.xlane.f32.xlu0 %v5972
      %v5974 = vpop.xlane.xlu0 %5973
      %v5975 = vmax.f32 %v5865, %v5867
      %5976 = vmax.xlane.f32.xlu0 %v5975
      %v5977 = vpop.xlane.xlu0 %5976
      %v5978 = vmax.f32 %v5869, %v5871
      %5979 = vmax.xlane.f32.xlu0 %v5978
      %v5980 = vpop.xlane.xlu0 %5979
      %v5981 = vmax.f32 %v5875, %v5877
      %5982 = vmax.xlane.f32.xlu0 %v5981
      %v5983 = vpop.xlane.xlu0 %5982
      %v5984 = vmax.f32 %v5879, %v5881
      %5985 = vmax.xlane.f32.xlu0 %v5984
      %v5986 = vpop.xlane.xlu0 %5985
      %v5987 = vmax.f32 %v5885, %v5887
      %5988 = vmax.xlane.f32.xlu0 %v5987
      %v5989 = vpop.xlane.xlu0 %5988
      %v5990 = vmax.f32 %v5889, %v5891
      %5991 = vmax.xlane.f32.xlu0 %v5990
      %v5992 = vpop.xlane.xlu0 %5991
      %v5993 = vmax.f32 %v5895, %v5897
      %5994 = vmax.xlane.f32.xlu0 %v5993
      %v5995 = vpop.xlane.xlu0 %5994
      %v5996 = vmax.f32 %v5899, %v5901
      %5997 = vmax.xlane.f32.xlu0 %v5996
      %v5998 = vpop.xlane.xlu0 %5997
      %v5999 = vsub.f32 %v5745, %v5905
      %v6000 = vsub.f32 %v5747, %v5905
      %v6001 = vsub.f32 %v5749, %v5908
      %v6002 = vsub.f32 %v5751, %v5908
      %v6003 = vsub.f32 %v5755, %v5911
      %v6004 = vsub.f32 %v5757, %v5911
      %v6005 = vsub.f32 %v5759, %v5914
      %v6006 = vsub.f32 %v5761, %v5914
      %v6007 = vsub.f32 %v5765, %v5917
      %v6008 = vsub.f32 %v5767, %v5917
      %v6009 = vsub.f32 %v5769, %v5920
      %v6010 = vsub.f32 %v5771, %v5920
      %v6011 = vsub.f32 %v5775, %v5923
      %v6012 = vsub.f32 %v5777, %v5923
      %v6013 = vsub.f32 %v5779, %v5926
      %v6014 = vsub.f32 %v5781, %v5926
      %v6015 = vsub.f32 %v5785, %v5929
      %v6016 = vsub.f32 %v5787, %v5929
      %v6017 = vsub.f32 %v5789, %v5932
      %v6018 = vsub.f32 %v5791, %v5932
      %v6019 = vsub.f32 %v5795, %v5935
      %v6020 = vsub.f32 %v5797, %v5935
      %v6021 = vsub.f32 %v5799, %v5938
      %v6022 = vsub.f32 %v5801, %v5938
      %v6023 = vsub.f32 %v5805, %v5941
      %v6024 = vsub.f32 %v5807, %v5941
      %v6025 = vsub.f32 %v5809, %v5944
      %v6026 = vsub.f32 %v5811, %v5944
      %v6027 = vsub.f32 %v5815, %v5947
      %v6028 = vsub.f32 %v5817, %v5947
      %v6029 = vsub.f32 %v5819, %v5950
      %v6030 = vsub.f32 %v5821, %v5950
      %v6031 = vsub.f32 %v5825, %v5953
      %v6032 = vsub.f32 %v5827, %v5953
      %v6033 = vsub.f32 %v5829, %v5956
      %v6034 = vsub.f32 %v5831, %v5956
      %v6035 = vsub.f32 %v5835, %v5959
      %v6036 = vsub.f32 %v5837, %v5959
      %v6037 = vsub.f32 %v5839, %v5962
      %v6038 = vsub.f32 %v5841, %v5962
      %v6039 = vsub.f32 %v5845, %v5965
      %v6040 = vsub.f32 %v5847, %v5965
      %v6041 = vsub.f32 %v5849, %v5968
      %v6042 = vsub.f32 %v5851, %v5968
      %v6043 = vsub.f32 %v5855, %v5971
      %v6044 = vsub.f32 %v5857, %v5971
      %v6045 = vsub.f32 %v5859, %v5974
      %v6046 = vsub.f32 %v5861, %v5974
      %v6047 = vsub.f32 %v5865, %v5977
      %v6048 = vsub.f32 %v5867, %v5977
      %v6049 = vsub.f32 %v5869, %v5980
      %v6050 = vsub.f32 %v5871, %v5980
      %v6051 = vsub.f32 %v5875, %v5983
      %v6052 = vsub.f32 %v5877, %v5983
      %v6053 = vsub.f32 %v5879, %v5986
      %v6054 = vsub.f32 %v5881, %v5986
      %v6055 = vsub.f32 %v5885, %v5989
      %v6056 = vsub.f32 %v5887, %v5989
      %v6057 = vsub.f32 %v5889, %v5992
      %v6058 = vsub.f32 %v5891, %v5992
      %v6059 = vsub.f32 %v5895, %v5995
      %v6060 = vsub.f32 %v5897, %v5995
      %v6061 = vsub.f32 %v5899, %v5998
      %v6062 = vsub.f32 %v5901, %v5998
      %v6063 = vmul.f32 %v5999, 1.442695
      %v6064 = vpow.pop %v6063
      %v6065 = vmul.f32 %v6000, 1.442695
      %v6066 = vpow.pop %v6065
      %v6067 = vmul.f32 %v6001, 1.442695
      %v6068 = vpow.pop %v6067
      %v6069 = vmul.f32 %v6002, 1.442695
      %v6070 = vpow.pop %v6069
      %v6071 = vmul.f32 %v6003, 1.442695
      %v6072 = vpow.pop %v6071
      %v6073 = vmul.f32 %v6004, 1.442695
      %v6074 = vpow.pop %v6073
      %v6075 = vmul.f32 %v6005, 1.442695
      %v6076 = vpow.pop %v6075
      %v6077 = vmul.f32 %v6006, 1.442695
      %v6078 = vpow.pop %v6077
      %v6079 = vmul.f32 %v6007, 1.442695
      %v6080 = vpow.pop %v6079
      %v6081 = vmul.f32 %v6008, 1.442695
      %v6082 = vpow.pop %v6081
      %v6083 = vmul.f32 %v6009, 1.442695
      %v6084 = vpow.pop %v6083
      %v6085 = vmul.f32 %v6010, 1.442695
      %v6086 = vpow.pop %v6085
      %v6087 = vmul.f32 %v6011, 1.442695
      %v6088 = vpow.pop %v6087
      %v6089 = vmul.f32 %v6012, 1.442695
      %v6090 = vpow.pop %v6089
      %v6091 = vmul.f32 %v6013, 1.442695
      %v6092 = vpow.pop %v6091
      %v6093 = vmul.f32 %v6014, 1.442695
      %v6094 = vpow.pop %v6093
      %v6095 = vmul.f32 %v6015, 1.442695
      %v6096 = vpow.pop %v6095
      %v6097 = vmul.f32 %v6016, 1.442695
      %v6098 = vpow.pop %v6097
      %v6099 = vmul.f32 %v6017, 1.442695
      %v6100 = vpow.pop %v6099
      %v6101 = vmul.f32 %v6018, 1.442695
      %v6102 = vpow.pop %v6101
      %v6103 = vmul.f32 %v6019, 1.442695
      %v6104 = vpow.pop %v6103
      %v6105 = vmul.f32 %v6020, 1.442695
      %v6106 = vpow.pop %v6105
      %v6107 = vmul.f32 %v6021, 1.442695
      %v6108 = vpow.pop %v6107
      %v6109 = vmul.f32 %v6022, 1.442695
      %v6110 = vpow.pop %v6109
      %v6111 = vmul.f32 %v6023, 1.442695
      %v6112 = vpow.pop %v6111
      %v6113 = vmul.f32 %v6024, 1.442695
      %v6114 = vpow.pop %v6113
      %v6115 = vmul.f32 %v6025, 1.442695
      %v6116 = vpow.pop %v6115
      %v6117 = vmul.f32 %v6026, 1.442695
      %v6118 = vpow.pop %v6117
      %v6119 = vmul.f32 %v6027, 1.442695
      %v6120 = vpow.pop %v6119
      %v6121 = vmul.f32 %v6028, 1.442695
      %v6122 = vpow.pop %v6121
      %v6123 = vmul.f32 %v6029, 1.442695
      %v6124 = vpow.pop %v6123
      %v6125 = vmul.f32 %v6030, 1.442695
      %v6126 = vpow.pop %v6125
      %v6127 = vmul.f32 %v6031, 1.442695
      %v6128 = vpow.pop %v6127
      %v6129 = vmul.f32 %v6032, 1.442695
      %v6130 = vpow.pop %v6129
      %v6131 = vmul.f32 %v6033, 1.442695
      %v6132 = vpow.pop %v6131
      %v6133 = vmul.f32 %v6034, 1.442695
      %v6134 = vpow.pop %v6133
      %v6135 = vmul.f32 %v6035, 1.442695
      %v6136 = vpow.pop %v6135
      %v6137 = vmul.f32 %v6036, 1.442695
      %v6138 = vpow.pop %v6137
      %v6139 = vmul.f32 %v6037, 1.442695
      %v6140 = vpow.pop %v6139
      %v6141 = vmul.f32 %v6038, 1.442695
      %v6142 = vpow.pop %v6141
      %v6143 = vmul.f32 %v6039, 1.442695
      %v6144 = vpow.pop %v6143
      %v6145 = vmul.f32 %v6040, 1.442695
      %v6146 = vpow.pop %v6145
      %v6147 = vmul.f32 %v6041, 1.442695
      %v6148 = vpow.pop %v6147
      %v6149 = vmul.f32 %v6042, 1.442695
      %v6150 = vpow.pop %v6149
      %v6151 = vmul.f32 %v6043, 1.442695
      %v6152 = vpow.pop %v6151
      %v6153 = vmul.f32 %v6044, 1.442695
      %v6154 = vpow.pop %v6153
      %v6155 = vmul.f32 %v6045, 1.442695
      %v6156 = vpow.pop %v6155
      %v6157 = vmul.f32 %v6046, 1.442695
      %v6158 = vpow.pop %v6157
      %v6159 = vmul.f32 %v6047, 1.442695
      %v6160 = vpow.pop %v6159
      %v6161 = vmul.f32 %v6048, 1.442695
      %v6162 = vpow.pop %v6161
      %v6163 = vmul.f32 %v6049, 1.442695
      %v6164 = vpow.pop %v6163
      %v6165 = vmul.f32 %v6050, 1.442695
      %v6166 = vpow.pop %v6165
      %v6167 = vmul.f32 %v6051, 1.442695
      %v6168 = vpow.pop %v6167
      %v6169 = vmul.f32 %v6052, 1.442695
      %v6170 = vpow.pop %v6169
      %v6171 = vmul.f32 %v6053, 1.442695
      %v6172 = vpow.pop %v6171
      %v6173 = vmul.f32 %v6054, 1.442695
      %v6174 = vpow.pop %v6173
      %v6175 = vmul.f32 %v6055, 1.442695
      %v6176 = vpow.pop %v6175
      %v6177 = vmul.f32 %v6056, 1.442695
      %v6178 = vpow.pop %v6177
      %v6179 = vmul.f32 %v6057, 1.442695
      %v6180 = vpow.pop %v6179
      %v6181 = vmul.f32 %v6058, 1.442695
      %v6182 = vpow.pop %v6181
      %v6183 = vmul.f32 %v6059, 1.442695
      %v6184 = vpow.pop %v6183
      %v6185 = vmul.f32 %v6060, 1.442695
      %v6186 = vpow.pop %v6185
      %v6187 = vmul.f32 %v6061, 1.442695
      %v6188 = vpow.pop %v6187
      %v6189 = vmul.f32 %v6062, 1.442695
      %v6190 = vpow.pop %v6189
      %v6191 = vadd.f32 %v6064, %v6066
      %6192 = vadd.xlane.f32.xlu0 %v6191
      %v6193 = vpop.xlane.xlu0 %6192
      %v6194 = vadd.f32 %v6068, %v6070
      %6195 = vadd.xlane.f32.xlu0 %v6194
      %v6196 = vpop.xlane.xlu0 %6195
      %v6197 = vadd.f32 %v6072, %v6074
      %6198 = vadd.xlane.f32.xlu0 %v6197
      %v6199 = vpop.xlane.xlu0 %6198
      %v6200 = vadd.f32 %v6076, %v6078
      %6201 = vadd.xlane.f32.xlu0 %v6200
      %v6202 = vpop.xlane.xlu0 %6201
      %v6203 = vadd.f32 %v6080, %v6082
      %6204 = vadd.xlane.f32.xlu0 %v6203
      %v6205 = vpop.xlane.xlu0 %6204
      %v6206 = vadd.f32 %v6084, %v6086
      %6207 = vadd.xlane.f32.xlu0 %v6206
      %v6208 = vpop.xlane.xlu0 %6207
      %v6209 = vadd.f32 %v6088, %v6090
      %6210 = vadd.xlane.f32.xlu0 %v6209
      %v6211 = vpop.xlane.xlu0 %6210
      %v6212 = vadd.f32 %v6092, %v6094
      %6213 = vadd.xlane.f32.xlu0 %v6212
      %v6214 = vpop.xlane.xlu0 %6213
      %v6215 = vadd.f32 %v6096, %v6098
      %6216 = vadd.xlane.f32.xlu0 %v6215
      %v6217 = vpop.xlane.xlu0 %6216
      %v6218 = vadd.f32 %v6100, %v6102
      %6219 = vadd.xlane.f32.xlu0 %v6218
      %v6220 = vpop.xlane.xlu0 %6219
      %v6221 = vadd.f32 %v6104, %v6106
      %6222 = vadd.xlane.f32.xlu0 %v6221
      %v6223 = vpop.xlane.xlu0 %6222
      %v6224 = vadd.f32 %v6108, %v6110
      %6225 = vadd.xlane.f32.xlu0 %v6224
      %v6226 = vpop.xlane.xlu0 %6225
      %v6227 = vadd.f32 %v6112, %v6114
      %6228 = vadd.xlane.f32.xlu0 %v6227
      %v6229 = vpop.xlane.xlu0 %6228
      %v6230 = vadd.f32 %v6116, %v6118
      %6231 = vadd.xlane.f32.xlu0 %v6230
      %v6232 = vpop.xlane.xlu0 %6231
      %v6233 = vadd.f32 %v6120, %v6122
      %6234 = vadd.xlane.f32.xlu0 %v6233
      %v6235 = vpop.xlane.xlu0 %6234
      %v6236 = vadd.f32 %v6124, %v6126
      %6237 = vadd.xlane.f32.xlu0 %v6236
      %v6238 = vpop.xlane.xlu0 %6237
      %v6239 = vadd.f32 %v6128, %v6130
      %6240 = vadd.xlane.f32.xlu0 %v6239
      %v6241 = vpop.xlane.xlu0 %6240
      %v6242 = vadd.f32 %v6132, %v6134
      %6243 = vadd.xlane.f32.xlu0 %v6242
      %v6244 = vpop.xlane.xlu0 %6243
      %v6245 = vadd.f32 %v6136, %v6138
      %6246 = vadd.xlane.f32.xlu0 %v6245
      %v6247 = vpop.xlane.xlu0 %6246
      %v6248 = vadd.f32 %v6140, %v6142
      %6249 = vadd.xlane.f32.xlu0 %v6248
      %v6250 = vpop.xlane.xlu0 %6249
      %v6251 = vadd.f32 %v6144, %v6146
      %6252 = vadd.xlane.f32.xlu0 %v6251
      %v6253 = vpop.xlane.xlu0 %6252
      %v6254 = vadd.f32 %v6148, %v6150
      %6255 = vadd.xlane.f32.xlu0 %v6254
      %v6256 = vpop.xlane.xlu0 %6255
      %v6257 = vadd.f32 %v6152, %v6154
      %6258 = vadd.xlane.f32.xlu0 %v6257
      %v6259 = vpop.xlane.xlu0 %6258
      %v6260 = vadd.f32 %v6156, %v6158
      %6261 = vadd.xlane.f32.xlu0 %v6260
      %v6262 = vpop.xlane.xlu0 %6261
      %v6263 = vadd.f32 %v6160, %v6162
      %6264 = vadd.xlane.f32.xlu0 %v6263
      %v6265 = vpop.xlane.xlu0 %6264
      %v6266 = vadd.f32 %v6164, %v6166
      %6267 = vadd.xlane.f32.xlu0 %v6266
      %v6268 = vpop.xlane.xlu0 %6267
      %v6269 = vadd.f32 %v6168, %v6170
      %6270 = vadd.xlane.f32.xlu0 %v6269
      %v6271 = vpop.xlane.xlu0 %6270
      %v6272 = vadd.f32 %v6172, %v6174
      %6273 = vadd.xlane.f32.xlu0 %v6272
      %v6274 = vpop.xlane.xlu0 %6273
      %v6275 = vadd.f32 %v6176, %v6178
      %6276 = vadd.xlane.f32.xlu0 %v6275
      %v6277 = vpop.xlane.xlu0 %6276
      %v6278 = vadd.f32 %v6180, %v6182
      %6279 = vadd.xlane.f32.xlu0 %v6278
      %v6280 = vpop.xlane.xlu0 %6279
      %v6281 = vadd.f32 %v6184, %v6186
      %6282 = vadd.xlane.f32.xlu0 %v6281
      %v6283 = vpop.xlane.xlu0 %6282
      %v6284 = vadd.f32 %v6188, %v6190
      %6285 = vadd.xlane.f32.xlu0 %v6284
      %v6286 = vpop.xlane.xlu0 %6285
      %v6287 = vrcp.pop %v6193
      %v6288 = vrcp.pop %v6196
      %v6289 = vrcp.pop %v6199
      %v6290 = vrcp.pop %v6202
      %v6291 = vrcp.pop %v6205
      %v6292 = vrcp.pop %v6208
      %v6293 = vrcp.pop %v6211
      %v6294 = vrcp.pop %v6214
      %v6295 = vrcp.pop %v6217
      %v6296 = vrcp.pop %v6220
      %v6297 = vrcp.pop %v6223
      %v6298 = vrcp.pop %v6226
      %v6299 = vrcp.pop %v6229
      %v6300 = vrcp.pop %v6232
      %v6301 = vrcp.pop %v6235
      %v6302 = vrcp.pop %v6238
      %v6303 = vrcp.pop %v6241
      %v6304 = vrcp.pop %v6244
      %v6305 = vrcp.pop %v6247
      %v6306 = vrcp.pop %v6250
      %v6307 = vrcp.pop %v6253
      %v6308 = vrcp.pop %v6256
      %v6309 = vrcp.pop %v6259
      %v6310 = vrcp.pop %v6262
      %v6311 = vrcp.pop %v6265
      %v6312 = vrcp.pop %v6268
      %v6313 = vrcp.pop %v6271
      %v6314 = vrcp.pop %v6274
      %v6315 = vrcp.pop %v6277
      %v6316 = vrcp.pop %v6280
      %v6317 = vrcp.pop %v6283
      %v6318 = vrcp.pop %v6286
      %v6319 = vmul.f32 %v6064, %v6287
      %v6320 = vmul.f32 %v6066, %v6287
      %v6321 = vmul.f32 %v6068, %v6288
      %v6322 = vmul.f32 %v6070, %v6288
      %v6323 = vmul.f32 %v6072, %v6289
      %v6324 = vmul.f32 %v6074, %v6289
      %v6325 = vmul.f32 %v6076, %v6290
      %v6326 = vmul.f32 %v6078, %v6290
      %v6327 = vmul.f32 %v6080, %v6291
      %v6328 = vmul.f32 %v6082, %v6291
      %v6329 = vmul.f32 %v6084, %v6292
      %v6330 = vmul.f32 %v6086, %v6292
      %v6331 = vmul.f32 %v6088, %v6293
      %v6332 = vmul.f32 %v6090, %v6293
      %v6333 = vmul.f32 %v6092, %v6294
      %v6334 = vmul.f32 %v6094, %v6294
      %v6335 = vmul.f32 %v6096, %v6295
      %v6336 = vmul.f32 %v6098, %v6295
      %v6337 = vmul.f32 %v6100, %v6296
      %v6338 = vmul.f32 %v6102, %v6296
      %v6339 = vmul.f32 %v6104, %v6297
      %v6340 = vmul.f32 %v6106, %v6297
      %v6341 = vmul.f32 %v6108, %v6298
      %v6342 = vmul.f32 %v6110, %v6298
      %v6343 = vmul.f32 %v6112, %v6299
      %v6344 = vmul.f32 %v6114, %v6299
      %v6345 = vmul.f32 %v6116, %v6300
      %v6346 = vmul.f32 %v6118, %v6300
      %v6347 = vmul.f32 %v6120, %v6301
      %v6348 = vmul.f32 %v6122, %v6301
      %v6349 = vmul.f32 %v6124, %v6302
      %v6350 = vmul.f32 %v6126, %v6302
      %v6351 = vmul.f32 %v6128, %v6303
      %v6352 = vmul.f32 %v6130, %v6303
      %v6353 = vmul.f32 %v6132, %v6304
      %v6354 = vmul.f32 %v6134, %v6304
      %v6355 = vmul.f32 %v6136, %v6305
      %v6356 = vmul.f32 %v6138, %v6305
      %v6357 = vmul.f32 %v6140, %v6306
      %v6358 = vmul.f32 %v6142, %v6306
      %v6359 = vmul.f32 %v6144, %v6307
      %v6360 = vmul.f32 %v6146, %v6307
      %v6361 = vmul.f32 %v6148, %v6308
      %v6362 = vmul.f32 %v6150, %v6308
      %v6363 = vmul.f32 %v6152, %v6309
      %v6364 = vmul.f32 %v6154, %v6309
      %v6365 = vmul.f32 %v6156, %v6310
      %v6366 = vmul.f32 %v6158, %v6310
      %v6367 = vmul.f32 %v6160, %v6311
      %v6368 = vmul.f32 %v6162, %v6311
      %v6369 = vmul.f32 %v6164, %v6312
      %v6370 = vmul.f32 %v6166, %v6312
      %v6371 = vmul.f32 %v6168, %v6313
      %v6372 = vmul.f32 %v6170, %v6313
      %v6373 = vmul.f32 %v6172, %v6314
      %v6374 = vmul.f32 %v6174, %v6314
      %v6375 = vmul.f32 %v6176, %v6315
      %v6376 = vmul.f32 %v6178, %v6315
      %v6377 = vmul.f32 %v6180, %v6316
      %v6378 = vmul.f32 %v6182, %v6316
      %v6379 = vmul.f32 %v6184, %v6317
      %v6380 = vmul.f32 %v6186, %v6317
      %v6381 = vmul.f32 %v6188, %v6318
      %v6382 = vmul.f32 %v6190, %v6318
      %v6383 = vpack.c.bf16 %v6321, %v6319
      %v6384 = vpack.c.bf16 %v6322, %v6320
      %v6385 = vpack.c.bf16 %v6325, %v6323
      %v6386 = vpack.c.bf16 %v6326, %v6324
      %v6387 = vpack.c.bf16 %v6329, %v6327
      %v6388 = vpack.c.bf16 %v6330, %v6328
      %v6389 = vpack.c.bf16 %v6333, %v6331
      %v6390 = vpack.c.bf16 %v6334, %v6332
      %v6391 = vpack.c.bf16 %v6337, %v6335
      %v6392 = vpack.c.bf16 %v6338, %v6336
      %v6393 = vpack.c.bf16 %v6341, %v6339
      %v6394 = vpack.c.bf16 %v6342, %v6340
      %v6395 = vpack.c.bf16 %v6345, %v6343
      %v6396 = vpack.c.bf16 %v6346, %v6344
      %v6397 = vpack.c.bf16 %v6349, %v6347
      %v6398 = vpack.c.bf16 %v6350, %v6348
      %v6399 = vpack.c.bf16 %v6353, %v6351
      %v6400 = vpack.c.bf16 %v6354, %v6352
      %v6401 = vpack.c.bf16 %v6357, %v6355
      %v6402 = vpack.c.bf16 %v6358, %v6356
      %v6403 = vpack.c.bf16 %v6361, %v6359
      %v6404 = vpack.c.bf16 %v6362, %v6360
      %v6405 = vpack.c.bf16 %v6365, %v6363
      %v6406 = vpack.c.bf16 %v6366, %v6364
      %v6407 = vpack.c.bf16 %v6369, %v6367
      %v6408 = vpack.c.bf16 %v6370, %v6368
      %v6409 = vpack.c.bf16 %v6373, %v6371
      %v6410 = vpack.c.bf16 %v6374, %v6372
      %v6411 = vpack.c.bf16 %v6377, %v6375
      %v6412 = vpack.c.bf16 %v6378, %v6376
      %v6413 = vpack.c.bf16 %v6381, %v6379
      %v6414 = vpack.c.bf16 %v6382, %v6380
      %v6447 = vunpack.c.l.b16 %v5421
      %v6448 = vunpack.c.l.b16 %v5422
      %v6449 = vunpack.c.l.b16 %v5423
      %v6450 = vunpack.c.l.b16 %v5424
      %v6451 = vunpack.c.l.b16 %v5425
      %v6452 = vunpack.c.l.b16 %v5426
      %v6453 = vunpack.c.l.b16 %v5427
      %v6454 = vunpack.c.l.b16 %v5428
      %v6455 = vunpack.c.l.b16 %v5429
      %v6456 = vunpack.c.l.b16 %v5430
      %v6457 = vunpack.c.l.b16 %v5431
      %v6458 = vunpack.c.l.b16 %v5432
      %v6459 = vunpack.c.l.b16 %v5433
      %v6460 = vunpack.c.l.b16 %v5434
      %v6461 = vunpack.c.l.b16 %v5435
      %v6462 = vunpack.c.l.b16 %v5436
      %v6463 = vunpack.c.l.b16 %v5437
      %v6464 = vunpack.c.l.b16 %v5438
      %v6465 = vunpack.c.l.b16 %v5439
      %v6466 = vunpack.c.l.b16 %v5440
      %v6467 = vunpack.c.l.b16 %v5441
      %v6468 = vunpack.c.l.b16 %v5442
      %v6469 = vunpack.c.l.b16 %v5443
      %v6470 = vunpack.c.l.b16 %v5444
      %v6471 = vunpack.c.l.b16 %v5445
      %v6472 = vunpack.c.l.b16 %v5446
      %v6473 = vunpack.c.l.b16 %v5447
      %v6474 = vunpack.c.l.b16 %v5448
      %v6475 = vunpack.c.l.b16 %v5449
      %v6476 = vunpack.c.l.b16 %v5450
      %v6477 = vunpack.c.l.b16 %v5451
      %v6478 = vunpack.c.l.b16 %v5452
      %v6479 = vpack.c.b16 %v6448, %v6447
      %v6480 = vpack.c.b16 %v6450, %v6449
      %v6481 = vpack.c.b16 %v6452, %v6451
      %v6482 = vpack.c.b16 %v6454, %v6453
      %v6483 = vpack.c.b16 %v6456, %v6455
      %v6484 = vpack.c.b16 %v6458, %v6457
      %v6485 = vpack.c.b16 %v6460, %v6459
      %v6486 = vpack.c.b16 %v6462, %v6461
      %v6487 = vpack.c.b16 %v6464, %v6463
      %v6488 = vpack.c.b16 %v6466, %v6465
      %v6489 = vpack.c.b16 %v6468, %v6467
      %v6490 = vpack.c.b16 %v6470, %v6469
      %v6491 = vpack.c.b16 %v6472, %v6471
      %v6492 = vpack.c.b16 %v6474, %v6473
      %v6493 = vpack.c.b16 %v6476, %v6475
      %v6494 = vpack.c.b16 %v6478, %v6477
      %6511 = vmatprep.subr.bf16.mxu0 0
      %6512 = vmatpush1.bf16.msra.mxu0 %v6486
      %6513 = vmatprep.subr.bf16.mxu0 0
      %6514 = vmatpush1.bf16.msra.mxu0 %v6485
      %6515 = vmatprep.subr.bf16.mxu0 0
      %6516 = vmatpush1.bf16.msra.mxu0 %v6484
      %6517 = vmatprep.subr.bf16.mxu0 0
      %6518 = vmatpush1.bf16.msra.mxu0 %v6483
      %6519 = vmatprep.subr.bf16.mxu0 0
      %6520 = vmatpush1.bf16.msra.mxu0 %v6482
      %6521 = vmatprep.subr.bf16.mxu0 0
      %6522 = vmatpush1.bf16.msra.mxu0 %v6481
      %6523 = vmatprep.subr.bf16.mxu0 0
      %6524 = vmatpush1.bf16.msra.mxu0 %v6480
      %6525 = vmatprep.subr.bf16.mxu0 0
      %6526 = vmatpush1.bf16.msra.mxu0 %v6479
      %6527 = vmatprep.subr.bf16.mxu0 0
      %6528 = vmatpush2.bf16.msra.mxu0 %v6494
      %6529 = vmatprep.subr.bf16.mxu0 0
      %6530 = vmatpush2.bf16.msra.mxu0 %v6493
      %6531 = vmatprep.subr.bf16.mxu0 0
      %6532 = vmatpush2.bf16.msra.mxu0 %v6492
      %6533 = vmatprep.subr.bf16.mxu0 0
      %6534 = vmatpush2.bf16.msra.mxu0 %v6491
      %6535 = vmatprep.subr.bf16.mxu0 0
      %6536 = vmatpush2.bf16.msra.mxu0 %v6490
      %6537 = vmatprep.subr.bf16.mxu0 0
      %6538 = vmatpush2.bf16.msra.mxu0 %v6489
      %6539 = vmatprep.subr.bf16.mxu0 0
      %6540 = vmatpush2.bf16.msra.mxu0 %v6488
      %6541 = vmatprep.subr.bf16.mxu0 0
      %6542 = vmatpush2.bf16.msra.mxu0 %v6487
      %6543 = vmatprep.mubr.bf16.mxu0 %v6384
      %6544 = vmatmul.mubr.bf16.gmra.mxu0 %v6383
      %v6545 = vpop.f32.mrf.mxu0
      %v6546 = vadd.f32 0.0, %v6545
      %v6547 = vpop.f32.mrf.mxu0
      %v6548 = vpop.f32.mrf.mxu0
      %v6549 = vadd.f32 0.0, %v6548
      %v6550 = vpop.f32.mrf.mxu0
      %6551 = vmatprep.mubr.bf16.mxu0 %v6386
      %6552 = vmatmul.mubr.bf16.gmra.mxu0 %v6385
      %v6553 = vpop.f32.mrf.mxu0
      %v6554 = vadd.f32 0.0, %v6553
      %v6555 = vpop.f32.mrf.mxu0
      %v6556 = vpop.f32.mrf.mxu0
      %v6557 = vadd.f32 0.0, %v6556
      %v6558 = vpop.f32.mrf.mxu0
      %6559 = vmatprep.mubr.bf16.mxu0 %v6388
      %6560 = vmatmul.mubr.bf16.gmra.mxu0 %v6387
      %v6561 = vpop.f32.mrf.mxu0
      %v6562 = vadd.f32 0.0, %v6561
      %v6563 = vpop.f32.mrf.mxu0
      %v6564 = vpop.f32.mrf.mxu0
      %v6565 = vadd.f32 0.0, %v6564
      %v6566 = vpop.f32.mrf.mxu0
      %6567 = vmatprep.mubr.bf16.mxu0 %v6390
      %6568 = vmatmul.mubr.bf16.gmra.mxu0 %v6389
      %v6569 = vpop.f32.mrf.mxu0
      %v6570 = vadd.f32 0.0, %v6569
      %v6571 = vpop.f32.mrf.mxu0
      %v6572 = vpop.f32.mrf.mxu0
      %v6573 = vadd.f32 0.0, %v6572
      %v6574 = vpop.f32.mrf.mxu0
      %6575 = vmatprep.mubr.bf16.mxu0 %v6392
      %6576 = vmatmul.mubr.bf16.gmra.mxu0 %v6391
      %v6577 = vpop.f32.mrf.mxu0
      %v6578 = vadd.f32 0.0, %v6577
      %v6579 = vpop.f32.mrf.mxu0
      %v6580 = vpop.f32.mrf.mxu0
      %v6581 = vadd.f32 0.0, %v6580
      %v6582 = vpop.f32.mrf.mxu0
      %6583 = vmatprep.mubr.bf16.mxu0 %v6394
      %6584 = vmatmul.mubr.bf16.gmra.mxu0 %v6393
      %v6585 = vpop.f32.mrf.mxu0
      %v6586 = vadd.f32 0.0, %v6585
      %v6587 = vpop.f32.mrf.mxu0
      %v6588 = vpop.f32.mrf.mxu0
      %v6589 = vadd.f32 0.0, %v6588
      %v6590 = vpop.f32.mrf.mxu0
      %6591 = vmatprep.mubr.bf16.mxu0 %v6396
      %6592 = vmatmul.mubr.bf16.gmra.mxu0 %v6395
      %v6593 = vpop.f32.mrf.mxu0
      %v6594 = vadd.f32 0.0, %v6593
      %v6595 = vpop.f32.mrf.mxu0
      %v6596 = vpop.f32.mrf.mxu0
      %v6597 = vadd.f32 0.0, %v6596
      %v6598 = vpop.f32.mrf.mxu0
      %6599 = vmatprep.mubr.bf16.mxu0 %v6398
      %6600 = vmatmul.mubr.bf16.gmra.mxu0 %v6397
      %v6601 = vpop.f32.mrf.mxu0
      %v6602 = vadd.f32 0.0, %v6601
      %v6603 = vpop.f32.mrf.mxu0
      %v6604 = vpop.f32.mrf.mxu0
      %v6605 = vadd.f32 0.0, %v6604
      %v6606 = vpop.f32.mrf.mxu0
      %6607 = vmatprep.mubr.bf16.mxu0 %v6400
      %6608 = vmatmul.mubr.bf16.gmra.mxu0 %v6399
      %v6609 = vpop.f32.mrf.mxu0
      %v6610 = vadd.f32 0.0, %v6609
      %v6611 = vpop.f32.mrf.mxu0
      %v6612 = vpop.f32.mrf.mxu0
      %v6613 = vadd.f32 0.0, %v6612
      %v6614 = vpop.f32.mrf.mxu0
      %6615 = vmatprep.mubr.bf16.mxu0 %v6402
      %6616 = vmatmul.mubr.bf16.gmra.mxu0 %v6401
      %v6617 = vpop.f32.mrf.mxu0
      %v6618 = vadd.f32 0.0, %v6617
      %v6619 = vpop.f32.mrf.mxu0
      %v6620 = vpop.f32.mrf.mxu0
      %v6621 = vadd.f32 0.0, %v6620
      %v6622 = vpop.f32.mrf.mxu0
      %6623 = vmatprep.mubr.bf16.mxu0 %v6404
      %6624 = vmatmul.mubr.bf16.gmra.mxu0 %v6403
      %v6625 = vpop.f32.mrf.mxu0
      %v6626 = vadd.f32 0.0, %v6625
      %v6627 = vpop.f32.mrf.mxu0
      %v6628 = vpop.f32.mrf.mxu0
      %v6629 = vadd.f32 0.0, %v6628
      %v6630 = vpop.f32.mrf.mxu0
      %6631 = vmatprep.mubr.bf16.mxu0 %v6406
      %6632 = vmatmul.mubr.bf16.gmra.mxu0 %v6405
      %v6633 = vpop.f32.mrf.mxu0
      %v6634 = vadd.f32 0.0, %v6633
      %v6635 = vpop.f32.mrf.mxu0
      %v6636 = vpop.f32.mrf.mxu0
      %v6637 = vadd.f32 0.0, %v6636
      %v6638 = vpop.f32.mrf.mxu0
      %6639 = vmatprep.mubr.bf16.mxu0 %v6408
      %6640 = vmatmul.mubr.bf16.gmra.mxu0 %v6407
      %v6641 = vpop.f32.mrf.mxu0
      %v6642 = vadd.f32 0.0, %v6641
      %v6643 = vpop.f32.mrf.mxu0
      %v6644 = vpop.f32.mrf.mxu0
      %v6645 = vadd.f32 0.0, %v6644
      %v6646 = vpop.f32.mrf.mxu0
      %6647 = vmatprep.mubr.bf16.mxu0 %v6410
      %6648 = vmatmul.mubr.bf16.gmra.mxu0 %v6409
      %v6649 = vpop.f32.mrf.mxu0
      %v6650 = vadd.f32 0.0, %v6649
      %v6651 = vpop.f32.mrf.mxu0
      %v6652 = vpop.f32.mrf.mxu0
      %v6653 = vadd.f32 0.0, %v6652
      %v6654 = vpop.f32.mrf.mxu0
      %6655 = vmatprep.mubr.bf16.mxu0 %v6412
      %6656 = vmatmul.mubr.bf16.gmra.mxu0 %v6411
      %v6657 = vpop.f32.mrf.mxu0
      %v6658 = vadd.f32 0.0, %v6657
      %v6659 = vpop.f32.mrf.mxu0
      %v6660 = vpop.f32.mrf.mxu0
      %v6661 = vadd.f32 0.0, %v6660
      %v6662 = vpop.f32.mrf.mxu0
      %6663 = vmatprep.mubr.bf16.mxu0 %v6414
      %6664 = vmatmul.mubr.bf16.gmra.mxu0 %v6413
      %v6665 = vpop.f32.mrf.mxu0
      %v6666 = vadd.f32 0.0, %v6665
      %v6667 = vpop.f32.mrf.mxu0
      %v6668 = vpop.f32.mrf.mxu0
      %v6669 = vadd.f32 0.0, %v6668
      %v6670 = vpop.f32.mrf.mxu0
      %6671 = vdwg.mxu0
      %v6672 = vld [vmem:[#allocation5] sm:$0xff]
      %v6673 = vld [vmem:[#allocation5 + $0x8] sm:$0xff]
      %v6674 = vld [vmem:[#allocation5 + $0x10] sm:$0xff]
      %v6675 = vld [vmem:[#allocation5 + $0x18] sm:$0xff]
      %v6676 = vld [vmem:[#allocation5 + $0x20] sm:$0xff]
      %v6677 = vld [vmem:[#allocation5 + $0x28] sm:$0xff]
      %v6678 = vld [vmem:[#allocation5 + $0x30] sm:$0xff]
      %v6679 = vld [vmem:[#allocation5 + $0x38] sm:$0xff]
      %v6680 = vld [vmem:[#allocation5 + $0x40] sm:$0xff]
      %v6681 = vld [vmem:[#allocation5 + $0x48] sm:$0xff]
      %v6682 = vld [vmem:[#allocation5 + $0x50] sm:$0xff]
      %v6683 = vld [vmem:[#allocation5 + $0x58] sm:$0xff]
      %v6684 = vld [vmem:[#allocation5 + $0x60] sm:$0xff]
      %v6685 = vld [vmem:[#allocation5 + $0x68] sm:$0xff]
      %v6686 = vld [vmem:[#allocation5 + $0x70] sm:$0xff]
      %v6687 = vld [vmem:[#allocation5 + $0x78] sm:$0xff]
      %v6688 = vld [vmem:[#allocation5 + $0x80] sm:$0xff]
      %v6689 = vld [vmem:[#allocation5 + $0x88] sm:$0xff]
      %v6690 = vld [vmem:[#allocation5 + $0x90] sm:$0xff]
      %v6691 = vld [vmem:[#allocation5 + $0x98] sm:$0xff]
      %v6692 = vld [vmem:[#allocation5 + $0xa0] sm:$0xff]
      %v6693 = vld [vmem:[#allocation5 + $0xa8] sm:$0xff]
      %v6694 = vld [vmem:[#allocation5 + $0xb0] sm:$0xff]
      %v6695 = vld [vmem:[#allocation5 + $0xb8] sm:$0xff]
      %v6696 = vld [vmem:[#allocation5 + $0xc0] sm:$0xff]
      %v6697 = vld [vmem:[#allocation5 + $0xc8] sm:$0xff]
      %v6698 = vld [vmem:[#allocation5 + $0xd0] sm:$0xff]
      %v6699 = vld [vmem:[#allocation5 + $0xd8] sm:$0xff]
      %v6700 = vld [vmem:[#allocation5 + $0xe0] sm:$0xff]
      %v6701 = vld [vmem:[#allocation5 + $0xe8] sm:$0xff]
      %v6702 = vld [vmem:[#allocation5 + $0xf0] sm:$0xff]
      %v6703 = vld [vmem:[#allocation5 + $0xf8] sm:$0xff]
      %v6704 = vld [vmem:[#allocation5 + $0x100] sm:$0xff]
      %v6705 = vld [vmem:[#allocation5 + $0x108] sm:$0xff]
      %v6706 = vld [vmem:[#allocation5 + $0x110] sm:$0xff]
      %v6707 = vld [vmem:[#allocation5 + $0x118] sm:$0xff]
      %v6708 = vld [vmem:[#allocation5 + $0x120] sm:$0xff]
      %v6709 = vld [vmem:[#allocation5 + $0x128] sm:$0xff]
      %v6710 = vld [vmem:[#allocation5 + $0x130] sm:$0xff]
      %v6711 = vld [vmem:[#allocation5 + $0x138] sm:$0xff]
      %v6712 = vld [vmem:[#allocation5 + $0x140] sm:$0xff]
      %v6713 = vld [vmem:[#allocation5 + $0x148] sm:$0xff]
      %v6714 = vld [vmem:[#allocation5 + $0x150] sm:$0xff]
      %v6715 = vld [vmem:[#allocation5 + $0x158] sm:$0xff]
      %v6716 = vld [vmem:[#allocation5 + $0x160] sm:$0xff]
      %v6717 = vld [vmem:[#allocation5 + $0x168] sm:$0xff]
      %v6718 = vld [vmem:[#allocation5 + $0x170] sm:$0xff]
      %v6719 = vld [vmem:[#allocation5 + $0x178] sm:$0xff]
      %v6720 = vld [vmem:[#allocation5 + $0x180] sm:$0xff]
      %v6721 = vld [vmem:[#allocation5 + $0x188] sm:$0xff]
      %v6722 = vld [vmem:[#allocation5 + $0x190] sm:$0xff]
      %v6723 = vld [vmem:[#allocation5 + $0x198] sm:$0xff]
      %v6724 = vld [vmem:[#allocation5 + $0x1a0] sm:$0xff]
      %v6725 = vld [vmem:[#allocation5 + $0x1a8] sm:$0xff]
      %v6726 = vld [vmem:[#allocation5 + $0x1b0] sm:$0xff]
      %v6727 = vld [vmem:[#allocation5 + $0x1b8] sm:$0xff]
      %v6728 = vld [vmem:[#allocation5 + $0x1c0] sm:$0xff]
      %v6729 = vld [vmem:[#allocation5 + $0x1c8] sm:$0xff]
      %v6730 = vld [vmem:[#allocation5 + $0x1d0] sm:$0xff]
      %v6731 = vld [vmem:[#allocation5 + $0x1d8] sm:$0xff]
      %v6732 = vld [vmem:[#allocation5 + $0x1e0] sm:$0xff]
      %v6733 = vld [vmem:[#allocation5 + $0x1e8] sm:$0xff]
      %v6734 = vld [vmem:[#allocation5 + $0x1f0] sm:$0xff]
      %v6735 = vld [vmem:[#allocation5 + $0x1f8] sm:$0xff]
      %v6736 = vpack.c.bf16 %v6549, %v6546
      %v6737 = vpack.c.bf16 %v6557, %v6554
      %v6738 = vpack.c.bf16 %v6565, %v6562
      %v6739 = vpack.c.bf16 %v6573, %v6570
      %v6740 = vpack.c.bf16 %v6581, %v6578
      %v6741 = vpack.c.bf16 %v6589, %v6586
      %v6742 = vpack.c.bf16 %v6597, %v6594
      %v6743 = vpack.c.bf16 %v6605, %v6602
      %v6744 = vpack.c.bf16 %v6613, %v6610
      %v6745 = vpack.c.bf16 %v6621, %v6618
      %v6746 = vpack.c.bf16 %v6629, %v6626
      %v6747 = vpack.c.bf16 %v6637, %v6634
      %v6748 = vpack.c.bf16 %v6645, %v6642
      %v6749 = vpack.c.bf16 %v6653, %v6650
      %v6750 = vpack.c.bf16 %v6661, %v6658
      %v6751 = vpack.c.bf16 %v6669, %v6666
      %v6752 = vld [vmem:[%s352] sm:$0xff]
      %v6753 = vld [vmem:[%s352 + $0x8] sm:$0xff]
      %v6754 = vld [vmem:[%s352 + $0x10] sm:$0xff]
      %v6755 = vld [vmem:[%s352 + $0x18] sm:$0xff]
      %v6760 = vunpack.c.l.b16 %v6752
      %v6761 = vunpack.c.h.b16 %v6752
      %v6762 = vunpack.c.l.b16 %v6753
      %v6763 = vunpack.c.h.b16 %v6753
      %v6764 = vunpack.c.l.b16 %v6754
      %v6765 = vunpack.c.h.b16 %v6754
      %v6766 = vunpack.c.l.b16 %v6755
      %v6767 = vunpack.c.h.b16 %v6755
      %v6768 = vpack.c.b16 %v6762, %v6760
      %v6769 = vpack.c.b16 %v6763, %v6761
      %v6770 = vpack.c.b16 %v6766, %v6764
      %v6771 = vpack.c.b16 %v6767, %v6765
      %v6777 = vsel %vm5613, %v6736, 0
      %v6780 = vsel %vm5613, %v6737, 0
      %v6783 = vsel %vm5613, %v6738, 0
      %v6786 = vsel %vm5613, %v6739, 0
      %v6789 = vsel %vm5613, %v6740, 0
      %v6792 = vsel %vm5613, %v6741, 0
      %v6795 = vsel %vm5613, %v6742, 0
      %v6798 = vsel %vm5613, %v6743, 0
      %v6801 = vsel %vm5613, %v6744, 0
      %v6804 = vsel %vm5613, %v6745, 0
      %v6807 = vsel %vm5613, %v6746, 0
      %v6810 = vsel %vm5613, %v6747, 0
      %v6813 = vsel %vm5613, %v6748, 0
      %v6816 = vsel %vm5613, %v6749, 0
      %v6819 = vsel %vm5613, %v6750, 0
      %v6822 = vsel %vm5613, %v6751, 0
      %6824 = vmatprep.subr.bf16.mxu0 0
      %6825 = vmatpush1.bf16.msra.mxu0 0
      %6826 = vmatprep.subr.bf16.mxu0 0
      %6827 = vmatpush1.bf16.msra.mxu0 0
      %6828 = vmatprep.subr.bf16.mxu0 0
      %6829 = vmatpush1.bf16.msra.mxu0 0
      %6830 = vmatprep.subr.bf16.mxu0 0
      %6831 = vmatpush1.bf16.msra.mxu0 0
      %6832 = vmatprep.subr.bf16.mxu0 0
      %6833 = vmatpush1.bf16.msra.mxu0 0
      %6834 = vmatprep.subr.bf16.mxu0 0
      %6835 = vmatpush1.bf16.msra.mxu0 0
      %6836 = vmatprep.subr.bf16.mxu0 %v6771
      %6837 = vmatpush1.bf16.msra.mxu0 %v6770
      %6838 = vmatprep.subr.bf16.mxu0 %v6769
      %6839 = vmatpush1.bf16.msra.mxu0 %v6768
      %6840 = vmatprep.subr.bf16.mxu0 0
      %6841 = vmatpush2.bf16.msra.mxu0 0
      %6842 = vmatprep.subr.bf16.mxu0 0
      %6843 = vmatpush2.bf16.msra.mxu0 0
      %6844 = vmatprep.subr.bf16.mxu0 0
      %6845 = vmatpush2.bf16.msra.mxu0 0
      %6846 = vmatprep.subr.bf16.mxu0 0
      %6847 = vmatpush2.bf16.msra.mxu0 0
      %6848 = vmatprep.subr.bf16.mxu0 0
      %6849 = vmatpush2.bf16.msra.mxu0 0
      %6850 = vmatprep.subr.bf16.mxu0 0
      %6851 = vmatpush2.bf16.msra.mxu0 0
      %6852 = vmatprep.subr.bf16.mxu0 0
      %6853 = vmatpush2.bf16.msra.mxu0 0
      %6854 = vmatprep.subr.bf16.mxu0 0
      %6855 = vmatpush2.bf16.msra.mxu0 0
      %6856 = vmatprep.mubr.bf16.mxu0 0
      %6857 = vmatmul.mubr.bf16.gmra.mxu0 %v6777
      %v6858 = vpop.f32.mrf.mxu0
      %v6859 = vadd.f32 0.0, %v6858
      %v6860 = vpop.f32.mrf.mxu0
      %v6861 = vadd.f32 0.0, %v6860
      %v6862 = vpop.f32.mrf.mxu0
      %v6863 = vadd.f32 0.0, %v6862
      %v6864 = vpop.f32.mrf.mxu0
      %v6865 = vadd.f32 0.0, %v6864
      %6866 = vmatprep.mubr.bf16.mxu0 0
      %6867 = vmatmul.mubr.bf16.gmra.mxu0 %v6780
      %v6868 = vpop.f32.mrf.mxu0
      %v6869 = vadd.f32 0.0, %v6868
      %v6870 = vpop.f32.mrf.mxu0
      %v6871 = vadd.f32 0.0, %v6870
      %v6872 = vpop.f32.mrf.mxu0
      %v6873 = vadd.f32 0.0, %v6872
      %v6874 = vpop.f32.mrf.mxu0
      %v6875 = vadd.f32 0.0, %v6874
      %6876 = vmatprep.mubr.bf16.mxu0 0
      %6877 = vmatmul.mubr.bf16.gmra.mxu0 %v6783
      %v6878 = vpop.f32.mrf.mxu0
      %v6879 = vadd.f32 0.0, %v6878
      %v6880 = vpop.f32.mrf.mxu0
      %v6881 = vadd.f32 0.0, %v6880
      %v6882 = vpop.f32.mrf.mxu0
      %v6883 = vadd.f32 0.0, %v6882
      %v6884 = vpop.f32.mrf.mxu0
      %v6885 = vadd.f32 0.0, %v6884
      %6886 = vmatprep.mubr.bf16.mxu0 0
      %6887 = vmatmul.mubr.bf16.gmra.mxu0 %v6786
      %v6888 = vpop.f32.mrf.mxu0
      %v6889 = vadd.f32 0.0, %v6888
      %v6890 = vpop.f32.mrf.mxu0
      %v6891 = vadd.f32 0.0, %v6890
      %v6892 = vpop.f32.mrf.mxu0
      %v6893 = vadd.f32 0.0, %v6892
      %v6894 = vpop.f32.mrf.mxu0
      %v6895 = vadd.f32 0.0, %v6894
      %6896 = vmatprep.mubr.bf16.mxu0 0
      %6897 = vmatmul.mubr.bf16.gmra.mxu0 %v6789
      %v6898 = vpop.f32.mrf.mxu0
      %v6899 = vadd.f32 0.0, %v6898
      %v6900 = vpop.f32.mrf.mxu0
      %v6901 = vadd.f32 0.0, %v6900
      %v6902 = vpop.f32.mrf.mxu0
      %v6903 = vadd.f32 0.0, %v6902
      %v6904 = vpop.f32.mrf.mxu0
      %v6905 = vadd.f32 0.0, %v6904
      %6906 = vmatprep.mubr.bf16.mxu0 0
      %6907 = vmatmul.mubr.bf16.gmra.mxu0 %v6792
      %v6908 = vpop.f32.mrf.mxu0
      %v6909 = vadd.f32 0.0, %v6908
      %v6910 = vpop.f32.mrf.mxu0
      %v6911 = vadd.f32 0.0, %v6910
      %v6912 = vpop.f32.mrf.mxu0
      %v6913 = vadd.f32 0.0, %v6912
      %v6914 = vpop.f32.mrf.mxu0
      %v6915 = vadd.f32 0.0, %v6914
      %6916 = vmatprep.mubr.bf16.mxu0 0
      %6917 = vmatmul.mubr.bf16.gmra.mxu0 %v6795
      %v6918 = vpop.f32.mrf.mxu0
      %v6919 = vadd.f32 0.0, %v6918
      %v6920 = vpop.f32.mrf.mxu0
      %v6921 = vadd.f32 0.0, %v6920
      %v6922 = vpop.f32.mrf.mxu0
      %v6923 = vadd.f32 0.0, %v6922
      %v6924 = vpop.f32.mrf.mxu0
      %v6925 = vadd.f32 0.0, %v6924
      %6926 = vmatprep.mubr.bf16.mxu0 0
      %6927 = vmatmul.mubr.bf16.gmra.mxu0 %v6798
      %v6928 = vpop.f32.mrf.mxu0
      %v6929 = vadd.f32 0.0, %v6928
      %v6930 = vpop.f32.mrf.mxu0
      %v6931 = vadd.f32 0.0, %v6930
      %v6932 = vpop.f32.mrf.mxu0
      %v6933 = vadd.f32 0.0, %v6932
      %v6934 = vpop.f32.mrf.mxu0
      %v6935 = vadd.f32 0.0, %v6934
      %6936 = vmatprep.mubr.bf16.mxu0 0
      %6937 = vmatmul.mubr.bf16.gmra.mxu0 %v6801
      %v6938 = vpop.f32.mrf.mxu0
      %v6939 = vadd.f32 0.0, %v6938
      %v6940 = vpop.f32.mrf.mxu0
      %v6941 = vadd.f32 0.0, %v6940
      %v6942 = vpop.f32.mrf.mxu0
      %v6943 = vadd.f32 0.0, %v6942
      %v6944 = vpop.f32.mrf.mxu0
      %v6945 = vadd.f32 0.0, %v6944
      %6946 = vmatprep.mubr.bf16.mxu0 0
      %6947 = vmatmul.mubr.bf16.gmra.mxu0 %v6804
      %v6948 = vpop.f32.mrf.mxu0
      %v6949 = vadd.f32 0.0, %v6948
      %v6950 = vpop.f32.mrf.mxu0
      %v6951 = vadd.f32 0.0, %v6950
      %v6952 = vpop.f32.mrf.mxu0
      %v6953 = vadd.f32 0.0, %v6952
      %v6954 = vpop.f32.mrf.mxu0
      %v6955 = vadd.f32 0.0, %v6954
      %6956 = vmatprep.mubr.bf16.mxu0 0
      %6957 = vmatmul.mubr.bf16.gmra.mxu0 %v6807
      %v6958 = vpop.f32.mrf.mxu0
      %v6959 = vadd.f32 0.0, %v6958
      %v6960 = vpop.f32.mrf.mxu0
      %v6961 = vadd.f32 0.0, %v6960
      %v6962 = vpop.f32.mrf.mxu0
      %v6963 = vadd.f32 0.0, %v6962
      %v6964 = vpop.f32.mrf.mxu0
      %v6965 = vadd.f32 0.0, %v6964
      %6966 = vmatprep.mubr.bf16.mxu0 0
      %6967 = vmatmul.mubr.bf16.gmra.mxu0 %v6810
      %v6968 = vpop.f32.mrf.mxu0
      %v6969 = vadd.f32 0.0, %v6968
      %v6970 = vpop.f32.mrf.mxu0
      %v6971 = vadd.f32 0.0, %v6970
      %v6972 = vpop.f32.mrf.mxu0
      %v6973 = vadd.f32 0.0, %v6972
      %v6974 = vpop.f32.mrf.mxu0
      %v6975 = vadd.f32 0.0, %v6974
      %6976 = vmatprep.mubr.bf16.mxu0 0
      %6977 = vmatmul.mubr.bf16.gmra.mxu0 %v6813
      %v6978 = vpop.f32.mrf.mxu0
      %v6979 = vadd.f32 0.0, %v6978
      %v6980 = vpop.f32.mrf.mxu0
      %v6981 = vadd.f32 0.0, %v6980
      %v6982 = vpop.f32.mrf.mxu0
      %v6983 = vadd.f32 0.0, %v6982
      %v6984 = vpop.f32.mrf.mxu0
      %v6985 = vadd.f32 0.0, %v6984
      %6986 = vmatprep.mubr.bf16.mxu0 0
      %6987 = vmatmul.mubr.bf16.gmra.mxu0 %v6816
      %v6988 = vpop.f32.mrf.mxu0
      %v6989 = vadd.f32 0.0, %v6988
      %v6990 = vpop.f32.mrf.mxu0
      %v6991 = vadd.f32 0.0, %v6990
      %v6992 = vpop.f32.mrf.mxu0
      %v6993 = vadd.f32 0.0, %v6992
      %v6994 = vpop.f32.mrf.mxu0
      %v6995 = vadd.f32 0.0, %v6994
      %6996 = vmatprep.mubr.bf16.mxu0 0
      %6997 = vmatmul.mubr.bf16.gmra.mxu0 %v6819
      %v6998 = vpop.f32.mrf.mxu0
      %v6999 = vadd.f32 0.0, %v6998
      %v7000 = vpop.f32.mrf.mxu0
      %v7001 = vadd.f32 0.0, %v7000
      %v7002 = vpop.f32.mrf.mxu0
      %v7003 = vadd.f32 0.0, %v7002
      %v7004 = vpop.f32.mrf.mxu0
      %v7005 = vadd.f32 0.0, %v7004
      %7006 = vmatprep.mubr.bf16.mxu0 0
      %7007 = vmatmul.mubr.bf16.gmra.mxu0 %v6822
      %v7008 = vpop.f32.mrf.mxu0
      %v7009 = vadd.f32 0.0, %v7008
      %v7010 = vpop.f32.mrf.mxu0
      %v7011 = vadd.f32 0.0, %v7010
      %v7012 = vpop.f32.mrf.mxu0
      %v7013 = vadd.f32 0.0, %v7012
      %v7014 = vpop.f32.mrf.mxu0
      %v7015 = vadd.f32 0.0, %v7014
      %7016 = vdwg.mxu0
      %v7017 = vadd.f32 %v6672, %v6859
      %v7018 = vadd.f32 %v6673, %v6861
      %v7019 = vadd.f32 %v6674, %v6863
      %v7020 = vadd.f32 %v6675, %v6865
      %v7021 = vadd.f32 %v6676, %v6869
      %v7022 = vadd.f32 %v6677, %v6871
      %v7023 = vadd.f32 %v6678, %v6873
      %v7024 = vadd.f32 %v6679, %v6875
      %v7025 = vadd.f32 %v6680, %v6879
      %v7026 = vadd.f32 %v6681, %v6881
      %v7027 = vadd.f32 %v6682, %v6883
      %v7028 = vadd.f32 %v6683, %v6885
      %v7029 = vadd.f32 %v6684, %v6889
      %v7030 = vadd.f32 %v6685, %v6891
      %v7031 = vadd.f32 %v6686, %v6893
      %v7032 = vadd.f32 %v6687, %v6895
      %v7033 = vadd.f32 %v6688, %v6899
      %v7034 = vadd.f32 %v6689, %v6901
      %v7035 = vadd.f32 %v6690, %v6903
      %v7036 = vadd.f32 %v6691, %v6905
      %v7037 = vadd.f32 %v6692, %v6909
      %v7038 = vadd.f32 %v6693, %v6911
      %v7039 = vadd.f32 %v6694, %v6913
      %v7040 = vadd.f32 %v6695, %v6915
      %v7041 = vadd.f32 %v6696, %v6919
      %v7042 = vadd.f32 %v6697, %v6921
      %v7043 = vadd.f32 %v6698, %v6923
      %v7044 = vadd.f32 %v6699, %v6925
      %v7045 = vadd.f32 %v6700, %v6929
      %v7046 = vadd.f32 %v6701, %v6931
      %v7047 = vadd.f32 %v6702, %v6933
      %v7048 = vadd.f32 %v6703, %v6935
      %v7049 = vadd.f32 %v6704, %v6939
      %v7050 = vadd.f32 %v6705, %v6941
      %v7051 = vadd.f32 %v6706, %v6943
      %v7052 = vadd.f32 %v6707, %v6945
      %v7053 = vadd.f32 %v6708, %v6949
      %v7054 = vadd.f32 %v6709, %v6951
      %v7055 = vadd.f32 %v6710, %v6953
      %v7056 = vadd.f32 %v6711, %v6955
      %v7057 = vadd.f32 %v6712, %v6959
      %v7058 = vadd.f32 %v6713, %v6961
      %v7059 = vadd.f32 %v6714, %v6963
      %v7060 = vadd.f32 %v6715, %v6965
      %v7061 = vadd.f32 %v6716, %v6969
      %v7062 = vadd.f32 %v6717, %v6971
      %v7063 = vadd.f32 %v6718, %v6973
      %v7064 = vadd.f32 %v6719, %v6975
      %v7065 = vadd.f32 %v6720, %v6979
      %v7066 = vadd.f32 %v6721, %v6981
      %v7067 = vadd.f32 %v6722, %v6983
      %v7068 = vadd.f32 %v6723, %v6985
      %v7069 = vadd.f32 %v6724, %v6989
      %v7070 = vadd.f32 %v6725, %v6991
      %v7071 = vadd.f32 %v6726, %v6993
      %v7072 = vadd.f32 %v6727, %v6995
      %v7073 = vadd.f32 %v6728, %v6999
      %v7074 = vadd.f32 %v6729, %v7001
      %v7075 = vadd.f32 %v6730, %v7003
      %v7076 = vadd.f32 %v6731, %v7005
      %v7077 = vadd.f32 %v6732, %v7009
      %v7078 = vadd.f32 %v6733, %v7011
      %v7079 = vadd.f32 %v6734, %v7013
      %v7080 = vadd.f32 %v6735, %v7015
      %7081 = vst [vmem:[#allocation5] sm:$0xff] %v7017
      %7082 = vst [vmem:[#allocation5 + $0x8] sm:$0xff] %v7018
      %7083 = vst [vmem:[#allocation5 + $0x10] sm:$0xff] %v7019
      %7084 = vst [vmem:[#allocation5 + $0x18] sm:$0xff] %v7020
      %7085 = vst [vmem:[#allocation5 + $0x20] sm:$0xff] %v7021
      %7086 = vst [vmem:[#allocation5 + $0x28] sm:$0xff] %v7022
      %7087 = vst [vmem:[#allocation5 + $0x30] sm:$0xff] %v7023
      %7088 = vst [vmem:[#allocation5 + $0x38] sm:$0xff] %v7024
      %7089 = vst [vmem:[#allocation5 + $0x40] sm:$0xff] %v7025
      %7090 = vst [vmem:[#allocation5 + $0x48] sm:$0xff] %v7026
      %7091 = vst [vmem:[#allocation5 + $0x50] sm:$0xff] %v7027
      %7092 = vst [vmem:[#allocation5 + $0x58] sm:$0xff] %v7028
      %7093 = vst [vmem:[#allocation5 + $0x60] sm:$0xff] %v7029
      %7094 = vst [vmem:[#allocation5 + $0x68] sm:$0xff] %v7030
      %7095 = vst [vmem:[#allocation5 + $0x70] sm:$0xff] %v7031
      %7096 = vst [vmem:[#allocation5 + $0x78] sm:$0xff] %v7032
      %7097 = vst [vmem:[#allocation5 + $0x80] sm:$0xff] %v7033
      %7098 = vst [vmem:[#allocation5 + $0x88] sm:$0xff] %v7034
      %7099 = vst [vmem:[#allocation5 + $0x90] sm:$0xff] %v7035
      %7100 = vst [vmem:[#allocation5 + $0x98] sm:$0xff] %v7036
      %7101 = vst [vmem:[#allocation5 + $0xa0] sm:$0xff] %v7037
      %7102 = vst [vmem:[#allocation5 + $0xa8] sm:$0xff] %v7038
      %7103 = vst [vmem:[#allocation5 + $0xb0] sm:$0xff] %v7039
      %7104 = vst [vmem:[#allocation5 + $0xb8] sm:$0xff] %v7040
      %7105 = vst [vmem:[#allocation5 + $0xc0] sm:$0xff] %v7041
      %7106 = vst [vmem:[#allocation5 + $0xc8] sm:$0xff] %v7042
      %7107 = vst [vmem:[#allocation5 + $0xd0] sm:$0xff] %v7043
      %7108 = vst [vmem:[#allocation5 + $0xd8] sm:$0xff] %v7044
      %7109 = vst [vmem:[#allocation5 + $0xe0] sm:$0xff] %v7045
      %7110 = vst [vmem:[#allocation5 + $0xe8] sm:$0xff] %v7046
      %7111 = vst [vmem:[#allocation5 + $0xf0] sm:$0xff] %v7047
      %7112 = vst [vmem:[#allocation5 + $0xf8] sm:$0xff] %v7048
      %7113 = vst [vmem:[#allocation5 + $0x100] sm:$0xff] %v7049
      %7114 = vst [vmem:[#allocation5 + $0x108] sm:$0xff] %v7050
      %7115 = vst [vmem:[#allocation5 + $0x110] sm:$0xff] %v7051
      %7116 = vst [vmem:[#allocation5 + $0x118] sm:$0xff] %v7052
      %7117 = vst [vmem:[#allocation5 + $0x120] sm:$0xff] %v7053
      %7118 = vst [vmem:[#allocation5 + $0x128] sm:$0xff] %v7054
      %7119 = vst [vmem:[#allocation5 + $0x130] sm:$0xff] %v7055
      %7120 = vst [vmem:[#allocation5 + $0x138] sm:$0xff] %v7056
      %7121 = vst [vmem:[#allocation5 + $0x140] sm:$0xff] %v7057
      %7122 = vst [vmem:[#allocation5 + $0x148] sm:$0xff] %v7058
      %7123 = vst [vmem:[#allocation5 + $0x150] sm:$0xff] %v7059
      %7124 = vst [vmem:[#allocation5 + $0x158] sm:$0xff] %v7060
      %7125 = vst [vmem:[#allocation5 + $0x160] sm:$0xff] %v7061
      %7126 = vst [vmem:[#allocation5 + $0x168] sm:$0xff] %v7062
      %7127 = vst [vmem:[#allocation5 + $0x170] sm:$0xff] %v7063
      %7128 = vst [vmem:[#allocation5 + $0x178] sm:$0xff] %v7064
      %7129 = vst [vmem:[#allocation5 + $0x180] sm:$0xff] %v7065
      %7130 = vst [vmem:[#allocation5 + $0x188] sm:$0xff] %v7066
      %7131 = vst [vmem:[#allocation5 + $0x190] sm:$0xff] %v7067
      %7132 = vst [vmem:[#allocation5 + $0x198] sm:$0xff] %v7068
      %7133 = vst [vmem:[#allocation5 + $0x1a0] sm:$0xff] %v7069
      %7134 = vst [vmem:[#allocation5 + $0x1a8] sm:$0xff] %v7070
      %7135 = vst [vmem:[#allocation5 + $0x1b0] sm:$0xff] %v7071
      %7136 = vst [vmem:[#allocation5 + $0x1b8] sm:$0xff] %v7072
      %7137 = vst [vmem:[#allocation5 + $0x1c0] sm:$0xff] %v7073
      %7138 = vst [vmem:[#allocation5 + $0x1c8] sm:$0xff] %v7074
      %7139 = vst [vmem:[#allocation5 + $0x1d0] sm:$0xff] %v7075
      %7140 = vst [vmem:[#allocation5 + $0x1d8] sm:$0xff] %v7076
      %7141 = vst [vmem:[#allocation5 + $0x1e0] sm:$0xff] %v7077
      %7142 = vst [vmem:[#allocation5 + $0x1e8] sm:$0xff] %v7078
      %7143 = vst [vmem:[#allocation5 + $0x1f0] sm:$0xff] %v7079
      %7144 = vst [vmem:[#allocation5 + $0x1f8] sm:$0xff] %v7080
      %p7145 = scmp.eq.s32.totalorder %s24, 7
      // Predicated region
      $region57: #{_lambda_.1} parent=51 // pred_check
        %p7146 = pneg %p7145
      $region58: #{_lambda_.1} parent=51 // pred_check_branch
        %7148 = sbr.rel (%p7146) target = $region60
      $region59: #{_lambda_.1} parent=51 // pred_region
        %v7149 = vld [vmem:[#allocation5] sm:$0xff]
        %v7150 = vld [vmem:[#allocation5 + $0x8] sm:$0xff]
        %v7151 = vld [vmem:[#allocation5 + $0x10] sm:$0xff]
        %v7152 = vld [vmem:[#allocation5 + $0x18] sm:$0xff]
        %v7153 = vld [vmem:[#allocation5 + $0x20] sm:$0xff]
        %v7154 = vld [vmem:[#allocation5 + $0x28] sm:$0xff]
        %v7155 = vld [vmem:[#allocation5 + $0x30] sm:$0xff]
        %v7156 = vld [vmem:[#allocation5 + $0x38] sm:$0xff]
        %v7157 = vld [vmem:[#allocation5 + $0x40] sm:$0xff]
        %v7158 = vld [vmem:[#allocation5 + $0x48] sm:$0xff]
        %v7159 = vld [vmem:[#allocation5 + $0x50] sm:$0xff]
        %v7160 = vld [vmem:[#allocation5 + $0x58] sm:$0xff]
        %v7161 = vld [vmem:[#allocation5 + $0x60] sm:$0xff]
        %v7162 = vld [vmem:[#allocation5 + $0x68] sm:$0xff]
        %v7163 = vld [vmem:[#allocation5 + $0x70] sm:$0xff]
        %v7164 = vld [vmem:[#allocation5 + $0x78] sm:$0xff]
        %v7165 = vld [vmem:[#allocation5 + $0x80] sm:$0xff]
        %v7166 = vld [vmem:[#allocation5 + $0x88] sm:$0xff]
        %v7167 = vld [vmem:[#allocation5 + $0x90] sm:$0xff]
        %v7168 = vld [vmem:[#allocation5 + $0x98] sm:$0xff]
        %v7169 = vld [vmem:[#allocation5 + $0xa0] sm:$0xff]
        %v7170 = vld [vmem:[#allocation5 + $0xa8] sm:$0xff]
        %v7171 = vld [vmem:[#allocation5 + $0xb0] sm:$0xff]
        %v7172 = vld [vmem:[#allocation5 + $0xb8] sm:$0xff]
        %v7173 = vld [vmem:[#allocation5 + $0xc0] sm:$0xff]
        %v7174 = vld [vmem:[#allocation5 + $0xc8] sm:$0xff]
        %v7175 = vld [vmem:[#allocation5 + $0xd0] sm:$0xff]
        %v7176 = vld [vmem:[#allocation5 + $0xd8] sm:$0xff]
        %v7177 = vld [vmem:[#allocation5 + $0xe0] sm:$0xff]
        %v7178 = vld [vmem:[#allocation5 + $0xe8] sm:$0xff]
        %v7179 = vld [vmem:[#allocation5 + $0xf0] sm:$0xff]
        %v7180 = vld [vmem:[#allocation5 + $0xf8] sm:$0xff]
        %v7181 = vld [vmem:[#allocation5 + $0x100] sm:$0xff]
        %v7182 = vld [vmem:[#allocation5 + $0x108] sm:$0xff]
        %v7183 = vld [vmem:[#allocation5 + $0x110] sm:$0xff]
        %v7184 = vld [vmem:[#allocation5 + $0x118] sm:$0xff]
        %v7185 = vld [vmem:[#allocation5 + $0x120] sm:$0xff]
        %v7186 = vld [vmem:[#allocation5 + $0x128] sm:$0xff]
        %v7187 = vld [vmem:[#allocation5 + $0x130] sm:$0xff]
        %v7188 = vld [vmem:[#allocation5 + $0x138] sm:$0xff]
        %v7189 = vld [vmem:[#allocation5 + $0x140] sm:$0xff]
        %v7190 = vld [vmem:[#allocation5 + $0x148] sm:$0xff]
        %v7191 = vld [vmem:[#allocation5 + $0x150] sm:$0xff]
        %v7192 = vld [vmem:[#allocation5 + $0x158] sm:$0xff]
        %v7193 = vld [vmem:[#allocation5 + $0x160] sm:$0xff]
        %v7194 = vld [vmem:[#allocation5 + $0x168] sm:$0xff]
        %v7195 = vld [vmem:[#allocation5 + $0x170] sm:$0xff]
        %v7196 = vld [vmem:[#allocation5 + $0x178] sm:$0xff]
        %v7197 = vld [vmem:[#allocation5 + $0x180] sm:$0xff]
        %v7198 = vld [vmem:[#allocation5 + $0x188] sm:$0xff]
        %v7199 = vld [vmem:[#allocation5 + $0x190] sm:$0xff]
        %v7200 = vld [vmem:[#allocation5 + $0x198] sm:$0xff]
        %v7201 = vld [vmem:[#allocation5 + $0x1a0] sm:$0xff]
        %v7202 = vld [vmem:[#allocation5 + $0x1a8] sm:$0xff]
        %v7203 = vld [vmem:[#allocation5 + $0x1b0] sm:$0xff]
        %v7204 = vld [vmem:[#allocation5 + $0x1b8] sm:$0xff]
        %v7205 = vld [vmem:[#allocation5 + $0x1c0] sm:$0xff]
        %v7206 = vld [vmem:[#allocation5 + $0x1c8] sm:$0xff]
        %v7207 = vld [vmem:[#allocation5 + $0x1d0] sm:$0xff]
        %v7208 = vld [vmem:[#allocation5 + $0x1d8] sm:$0xff]
        %v7209 = vld [vmem:[#allocation5 + $0x1e0] sm:$0xff]
        %v7210 = vld [vmem:[#allocation5 + $0x1e8] sm:$0xff]
        %v7211 = vld [vmem:[#allocation5 + $0x1f0] sm:$0xff]
        %v7212 = vld [vmem:[#allocation5 + $0x1f8] sm:$0xff]
        %v7213 = vld [vmem:[%s7] sm:$0x3]
        %v7215 = vlaneseq
        %v7216 = vshrl.u32 %v7215, 7
        %v7217 = vsub.s32 0, %v7216
        %v7218 = vrot.slane %v7213, %v7217
        %v7219 = vlaneseq
        %v7220 = vshrl.u32 %v7219, 7
        %v7221 = vsub.s32 1, %v7220
        %v7222 = vrot.slane %v7213, %v7221
        %v7225 = vadd.f32 %v7149, %v7218
        %v7226 = vadd.f32 %v7150, %v7222
        %v7227 = vadd.f32 %v7151, %v7218
        %v7228 = vadd.f32 %v7152, %v7222
        %v7229 = vadd.f32 %v7153, %v7218
        %v7230 = vadd.f32 %v7154, %v7222
        %v7231 = vadd.f32 %v7155, %v7218
        %v7232 = vadd.f32 %v7156, %v7222
        %v7233 = vadd.f32 %v7157, %v7218
        %v7234 = vadd.f32 %v7158, %v7222
        %v7235 = vadd.f32 %v7159, %v7218
        %v7236 = vadd.f32 %v7160, %v7222
        %v7237 = vadd.f32 %v7161, %v7218
        %v7238 = vadd.f32 %v7162, %v7222
        %v7239 = vadd.f32 %v7163, %v7218
        %v7240 = vadd.f32 %v7164, %v7222
        %v7241 = vadd.f32 %v7165, %v7218
        %v7242 = vadd.f32 %v7166, %v7222
        %v7243 = vadd.f32 %v7167, %v7218
        %v7244 = vadd.f32 %v7168, %v7222
        %v7245 = vadd.f32 %v7169, %v7218
        %v7246 = vadd.f32 %v7170, %v7222
        %v7247 = vadd.f32 %v7171, %v7218
        %v7248 = vadd.f32 %v7172, %v7222
        %v7249 = vadd.f32 %v7173, %v7218
        %v7250 = vadd.f32 %v7174, %v7222
        %v7251 = vadd.f32 %v7175, %v7218
        %v7252 = vadd.f32 %v7176, %v7222
        %v7253 = vadd.f32 %v7177, %v7218
        %v7254 = vadd.f32 %v7178, %v7222
        %v7255 = vadd.f32 %v7179, %v7218
        %v7256 = vadd.f32 %v7180, %v7222
        %v7257 = vadd.f32 %v7181, %v7218
        %v7258 = vadd.f32 %v7182, %v7222
        %v7259 = vadd.f32 %v7183, %v7218
        %v7260 = vadd.f32 %v7184, %v7222
        %v7261 = vadd.f32 %v7185, %v7218
        %v7262 = vadd.f32 %v7186, %v7222
        %v7263 = vadd.f32 %v7187, %v7218
        %v7264 = vadd.f32 %v7188, %v7222
        %v7265 = vadd.f32 %v7189, %v7218
        %v7266 = vadd.f32 %v7190, %v7222
        %v7267 = vadd.f32 %v7191, %v7218
        %v7268 = vadd.f32 %v7192, %v7222
        %v7269 = vadd.f32 %v7193, %v7218
        %v7270 = vadd.f32 %v7194, %v7222
        %v7271 = vadd.f32 %v7195, %v7218
        %v7272 = vadd.f32 %v7196, %v7222
        %v7273 = vadd.f32 %v7197, %v7218
        %v7274 = vadd.f32 %v7198, %v7222
        %v7275 = vadd.f32 %v7199, %v7218
        %v7276 = vadd.f32 %v7200, %v7222
        %v7277 = vadd.f32 %v7201, %v7218
        %v7278 = vadd.f32 %v7202, %v7222
        %v7279 = vadd.f32 %v7203, %v7218
        %v7280 = vadd.f32 %v7204, %v7222
        %v7281 = vadd.f32 %v7205, %v7218
        %v7282 = vadd.f32 %v7206, %v7222
        %v7283 = vadd.f32 %v7207, %v7218
        %v7284 = vadd.f32 %v7208, %v7222
        %v7285 = vadd.f32 %v7209, %v7218
        %v7286 = vadd.f32 %v7210, %v7222
        %v7287 = vadd.f32 %v7211, %v7218
        %v7288 = vadd.f32 %v7212, %v7222
        %7289 = vxpose.xlu0.b32.start [1/16] %v7225, 128
        %7290 = vxpose.xlu0.b32.cont [2/16] %v7227, 128
        %7291 = vxpose.xlu0.b32.cont [3/16] %v7229, 128
        %7292 = vxpose.xlu0.b32.cont [4/16] %v7231, 128
        %7293 = vxpose.xlu0.b32.cont [5/16] %v7233, 128
        %7294 = vxpose.xlu0.b32.cont [6/16] %v7235, 128
        %7295 = vxpose.xlu0.b32.cont [7/16] %v7237, 128
        %7296 = vxpose.xlu0.b32.cont [8/16] %v7239, 128
        %7297 = vxpose.xlu0.b32.cont [9/16] %v7241, 128
        %7298 = vxpose.xlu0.b32.cont [10/16] %v7243, 128
        %7299 = vxpose.xlu0.b32.cont [11/16] %v7245, 128
        %7300 = vxpose.xlu0.b32.cont [12/16] %v7247, 128
        %7301 = vxpose.xlu0.b32.cont [13/16] %v7249, 128
        %7302 = vxpose.xlu0.b32.cont [14/16] %v7251, 128
        %7303 = vxpose.xlu0.b32.cont [15/16] %v7253, 128
        %7304 = vxpose.xlu0.b32.end [16/16] %v7255, 128
        %v7305 = vpop.trf.xlu0
        %v7306 = vpop.trf.xlu0
        %v7307 = vpop.trf.xlu0
        %v7308 = vpop.trf.xlu0
        %v7309 = vpop.trf.xlu0
        %v7310 = vpop.trf.xlu0
        %v7311 = vpop.trf.xlu0
        %v7312 = vpop.trf.xlu0
        %v7313 = vpop.trf.xlu0
        %v7314 = vpop.trf.xlu0
        %v7315 = vpop.trf.xlu0
        %v7316 = vpop.trf.xlu0
        %v7317 = vpop.trf.xlu0
        %v7318 = vpop.trf.xlu0
        %v7319 = vpop.trf.xlu0
        %v7320 = vpop.trf.xlu0
        %7321 = vxpose.xlu0.b32.start [1/16] %v7226, 128
        %7322 = vxpose.xlu0.b32.cont [2/16] %v7228, 128
        %7323 = vxpose.xlu0.b32.cont [3/16] %v7230, 128
        %7324 = vxpose.xlu0.b32.cont [4/16] %v7232, 128
        %7325 = vxpose.xlu0.b32.cont [5/16] %v7234, 128
        %7326 = vxpose.xlu0.b32.cont [6/16] %v7236, 128
        %7327 = vxpose.xlu0.b32.cont [7/16] %v7238, 128
        %7328 = vxpose.xlu0.b32.cont [8/16] %v7240, 128
        %7329 = vxpose.xlu0.b32.cont [9/16] %v7242, 128
        %7330 = vxpose.xlu0.b32.cont [10/16] %v7244, 128
        %7331 = vxpose.xlu0.b32.cont [11/16] %v7246, 128
        %7332 = vxpose.xlu0.b32.cont [12/16] %v7248, 128
        %7333 = vxpose.xlu0.b32.cont [13/16] %v7250, 128
        %7334 = vxpose.xlu0.b32.cont [14/16] %v7252, 128
        %7335 = vxpose.xlu0.b32.cont [15/16] %v7254, 128
        %7336 = vxpose.xlu0.b32.end [16/16] %v7256, 128
        %v7337 = vpop.trf.xlu0
        %v7338 = vpop.trf.xlu0
        %v7339 = vpop.trf.xlu0
        %v7340 = vpop.trf.xlu0
        %v7341 = vpop.trf.xlu0
        %v7342 = vpop.trf.xlu0
        %v7343 = vpop.trf.xlu0
        %v7344 = vpop.trf.xlu0
        %v7345 = vpop.trf.xlu0
        %v7346 = vpop.trf.xlu0
        %v7347 = vpop.trf.xlu0
        %v7348 = vpop.trf.xlu0
        %v7349 = vpop.trf.xlu0
        %v7350 = vpop.trf.xlu0
        %v7351 = vpop.trf.xlu0
        %v7352 = vpop.trf.xlu0
        %7353 = vxpose.xlu0.b32.start [1/16] %v7257, 128
        %7354 = vxpose.xlu0.b32.cont [2/16] %v7259, 128
        %7355 = vxpose.xlu0.b32.cont [3/16] %v7261, 128
        %7356 = vxpose.xlu0.b32.cont [4/16] %v7263, 128
        %7357 = vxpose.xlu0.b32.cont [5/16] %v7265, 128
        %7358 = vxpose.xlu0.b32.cont [6/16] %v7267, 128
        %7359 = vxpose.xlu0.b32.cont [7/16] %v7269, 128
        %7360 = vxpose.xlu0.b32.cont [8/16] %v7271, 128
        %7361 = vxpose.xlu0.b32.cont [9/16] %v7273, 128
        %7362 = vxpose.xlu0.b32.cont [10/16] %v7275, 128
        %7363 = vxpose.xlu0.b32.cont [11/16] %v7277, 128
        %7364 = vxpose.xlu0.b32.cont [12/16] %v7279, 128
        %7365 = vxpose.xlu0.b32.cont [13/16] %v7281, 128
        %7366 = vxpose.xlu0.b32.cont [14/16] %v7283, 128
        %7367 = vxpose.xlu0.b32.cont [15/16] %v7285, 128
        %7368 = vxpose.xlu0.b32.end [16/16] %v7287, 128
        %v7369 = vpop.trf.xlu0
        %v7370 = vpop.trf.xlu0
        %v7371 = vpop.trf.xlu0
        %v7372 = vpop.trf.xlu0
        %v7373 = vpop.trf.xlu0
        %v7374 = vpop.trf.xlu0
        %v7375 = vpop.trf.xlu0
        %v7376 = vpop.trf.xlu0
        %v7377 = vpop.trf.xlu0
        %v7378 = vpop.trf.xlu0
        %v7379 = vpop.trf.xlu0
        %v7380 = vpop.trf.xlu0
        %v7381 = vpop.trf.xlu0
        %v7382 = vpop.trf.xlu0
        %v7383 = vpop.trf.xlu0
        %v7384 = vpop.trf.xlu0
        %7385 = vxpose.xlu0.b32.start [1/16] %v7258, 128
        %7386 = vxpose.xlu0.b32.cont [2/16] %v7260, 128
        %7387 = vxpose.xlu0.b32.cont [3/16] %v7262, 128
        %7388 = vxpose.xlu0.b32.cont [4/16] %v7264, 128
        %7389 = vxpose.xlu0.b32.cont [5/16] %v7266, 128
        %7390 = vxpose.xlu0.b32.cont [6/16] %v7268, 128
        %7391 = vxpose.xlu0.b32.cont [7/16] %v7270, 128
        %7392 = vxpose.xlu0.b32.cont [8/16] %v7272, 128
        %7393 = vxpose.xlu0.b32.cont [9/16] %v7274, 128
        %7394 = vxpose.xlu0.b32.cont [10/16] %v7276, 128
        %7395 = vxpose.xlu0.b32.cont [11/16] %v7278, 128
        %7396 = vxpose.xlu0.b32.cont [12/16] %v7280, 128
        %7397 = vxpose.xlu0.b32.cont [13/16] %v7282, 128
        %7398 = vxpose.xlu0.b32.cont [14/16] %v7284, 128
        %7399 = vxpose.xlu0.b32.cont [15/16] %v7286, 128
        %7400 = vxpose.xlu0.b32.end [16/16] %v7288, 128
        %v7401 = vpop.trf.xlu0
        %v7402 = vpop.trf.xlu0
        %v7403 = vpop.trf.xlu0
        %v7404 = vpop.trf.xlu0
        %v7405 = vpop.trf.xlu0
        %v7406 = vpop.trf.xlu0
        %v7407 = vpop.trf.xlu0
        %v7408 = vpop.trf.xlu0
        %v7409 = vpop.trf.xlu0
        %v7410 = vpop.trf.xlu0
        %v7411 = vpop.trf.xlu0
        %v7412 = vpop.trf.xlu0
        %v7413 = vpop.trf.xlu0
        %v7414 = vpop.trf.xlu0
        %v7415 = vpop.trf.xlu0
        %v7416 = vpop.trf.xlu0
        %v7417 = vld [vmem:[%s342] sm:$0xff]
        %v7418 = vld [vmem:[%s342 + $0x8] sm:$0xff]
        %v7419 = vld [vmem:[%s342 + $0x10] sm:$0xff]
        %v7420 = vld [vmem:[%s342 + $0x18] sm:$0xff]
        %v7421 = vld [vmem:[%s342 + $0x20] sm:$0xff]
        %v7422 = vld [vmem:[%s342 + $0x28] sm:$0xff]
        %v7423 = vld [vmem:[%s342 + $0x30] sm:$0xff]
        %v7424 = vld [vmem:[%s342 + $0x38] sm:$0xff]
        %v7425 = vld [vmem:[%s342 + $0x40] sm:$0xff]
        %v7426 = vld [vmem:[%s342 + $0x48] sm:$0xff]
        %v7427 = vld [vmem:[%s342 + $0x50] sm:$0xff]
        %v7428 = vld [vmem:[%s342 + $0x58] sm:$0xff]
        %v7429 = vld [vmem:[%s342 + $0x60] sm:$0xff]
        %v7430 = vld [vmem:[%s342 + $0x68] sm:$0xff]
        %v7431 = vld [vmem:[%s342 + $0x70] sm:$0xff]
        %v7432 = vld [vmem:[%s342 + $0x78] sm:$0xff]
        %v7433 = vld [vmem:[%s342 + $0x80] sm:$0xff]
        %v7434 = vld [vmem:[%s342 + $0x88] sm:$0xff]
        %v7435 = vld [vmem:[%s342 + $0x90] sm:$0xff]
        %v7436 = vld [vmem:[%s342 + $0x98] sm:$0xff]
        %v7437 = vld [vmem:[%s342 + $0xa0] sm:$0xff]
        %v7438 = vld [vmem:[%s342 + $0xa8] sm:$0xff]
        %v7439 = vld [vmem:[%s342 + $0xb0] sm:$0xff]
        %v7440 = vld [vmem:[%s342 + $0xb8] sm:$0xff]
        %v7441 = vld [vmem:[%s342 + $0xc0] sm:$0xff]
        %v7442 = vld [vmem:[%s342 + $0xc8] sm:$0xff]
        %v7443 = vld [vmem:[%s342 + $0xd0] sm:$0xff]
        %v7444 = vld [vmem:[%s342 + $0xd8] sm:$0xff]
        %v7445 = vld [vmem:[%s342 + $0xe0] sm:$0xff]
        %v7446 = vld [vmem:[%s342 + $0xe8] sm:$0xff]
        %v7447 = vld [vmem:[%s342 + $0xf0] sm:$0xff]
        %v7448 = vld [vmem:[%s342 + $0xf8] sm:$0xff]
        %v7449 = vld [vmem:[%s342 + $0x100] sm:$0xff]
        %v7450 = vld [vmem:[%s342 + $0x108] sm:$0xff]
        %v7451 = vld [vmem:[%s342 + $0x110] sm:$0xff]
        %v7452 = vld [vmem:[%s342 + $0x118] sm:$0xff]
        %v7453 = vld [vmem:[%s342 + $0x120] sm:$0xff]
        %v7454 = vld [vmem:[%s342 + $0x128] sm:$0xff]
        %v7455 = vld [vmem:[%s342 + $0x130] sm:$0xff]
        %v7456 = vld [vmem:[%s342 + $0x138] sm:$0xff]
        %v7457 = vld [vmem:[%s342 + $0x140] sm:$0xff]
        %v7458 = vld [vmem:[%s342 + $0x148] sm:$0xff]
        %v7459 = vld [vmem:[%s342 + $0x150] sm:$0xff]
        %v7460 = vld [vmem:[%s342 + $0x158] sm:$0xff]
        %v7461 = vld [vmem:[%s342 + $0x160] sm:$0xff]
        %v7462 = vld [vmem:[%s342 + $0x168] sm:$0xff]
        %v7463 = vld [vmem:[%s342 + $0x170] sm:$0xff]
        %v7464 = vld [vmem:[%s342 + $0x178] sm:$0xff]
        %v7465 = vld [vmem:[%s342 + $0x180] sm:$0xff]
        %v7466 = vld [vmem:[%s342 + $0x188] sm:$0xff]
        %v7467 = vld [vmem:[%s342 + $0x190] sm:$0xff]
        %v7468 = vld [vmem:[%s342 + $0x198] sm:$0xff]
        %v7469 = vld [vmem:[%s342 + $0x1a0] sm:$0xff]
        %v7470 = vld [vmem:[%s342 + $0x1a8] sm:$0xff]
        %v7471 = vld [vmem:[%s342 + $0x1b0] sm:$0xff]
        %v7472 = vld [vmem:[%s342 + $0x1b8] sm:$0xff]
        %v7473 = vld [vmem:[%s342 + $0x1c0] sm:$0xff]
        %v7474 = vld [vmem:[%s342 + $0x1c8] sm:$0xff]
        %v7475 = vld [vmem:[%s342 + $0x1d0] sm:$0xff]
        %v7476 = vld [vmem:[%s342 + $0x1d8] sm:$0xff]
        %v7477 = vld [vmem:[%s342 + $0x1e0] sm:$0xff]
        %v7478 = vld [vmem:[%s342 + $0x1e8] sm:$0xff]
        %v7479 = vld [vmem:[%s342 + $0x1f0] sm:$0xff]
        %v7480 = vld [vmem:[%s342 + $0x1f8] sm:$0xff]
        %v7481 = vadd.f32 %v7305, %v7417
        %v7482 = vadd.f32 %v7369, %v7418
        %v7483 = vadd.f32 %v7306, %v7419
        %v7484 = vadd.f32 %v7370, %v7420
        %v7485 = vadd.f32 %v7307, %v7421
        %v7486 = vadd.f32 %v7371, %v7422
        %v7487 = vadd.f32 %v7308, %v7423
        %v7488 = vadd.f32 %v7372, %v7424
        %v7489 = vadd.f32 %v7309, %v7425
        %v7490 = vadd.f32 %v7373, %v7426
        %v7491 = vadd.f32 %v7310, %v7427
        %v7492 = vadd.f32 %v7374, %v7428
        %v7493 = vadd.f32 %v7311, %v7429
        %v7494 = vadd.f32 %v7375, %v7430
        %v7495 = vadd.f32 %v7312, %v7431
        %v7496 = vadd.f32 %v7376, %v7432
        %v7497 = vadd.f32 %v7313, %v7433
        %v7498 = vadd.f32 %v7377, %v7434
        %v7499 = vadd.f32 %v7314, %v7435
        %v7500 = vadd.f32 %v7378, %v7436
        %v7501 = vadd.f32 %v7315, %v7437
        %v7502 = vadd.f32 %v7379, %v7438
        %v7503 = vadd.f32 %v7316, %v7439
        %v7504 = vadd.f32 %v7380, %v7440
        %v7505 = vadd.f32 %v7317, %v7441
        %v7506 = vadd.f32 %v7381, %v7442
        %v7507 = vadd.f32 %v7318, %v7443
        %v7508 = vadd.f32 %v7382, %v7444
        %v7509 = vadd.f32 %v7319, %v7445
        %v7510 = vadd.f32 %v7383, %v7446
        %v7511 = vadd.f32 %v7320, %v7447
        %v7512 = vadd.f32 %v7384, %v7448
        %v7513 = vadd.f32 %v7337, %v7449
        %v7514 = vadd.f32 %v7401, %v7450
        %v7515 = vadd.f32 %v7338, %v7451
        %v7516 = vadd.f32 %v7402, %v7452
        %v7517 = vadd.f32 %v7339, %v7453
        %v7518 = vadd.f32 %v7403, %v7454
        %v7519 = vadd.f32 %v7340, %v7455
        %v7520 = vadd.f32 %v7404, %v7456
        %v7521 = vadd.f32 %v7341, %v7457
        %v7522 = vadd.f32 %v7405, %v7458
        %v7523 = vadd.f32 %v7342, %v7459
        %v7524 = vadd.f32 %v7406, %v7460
        %v7525 = vadd.f32 %v7343, %v7461
        %v7526 = vadd.f32 %v7407, %v7462
        %v7527 = vadd.f32 %v7344, %v7463
        %v7528 = vadd.f32 %v7408, %v7464
        %v7529 = vadd.f32 %v7345, %v7465
        %v7530 = vadd.f32 %v7409, %v7466
        %v7531 = vadd.f32 %v7346, %v7467
        %v7532 = vadd.f32 %v7410, %v7468
        %v7533 = vadd.f32 %v7347, %v7469
        %v7534 = vadd.f32 %v7411, %v7470
        %v7535 = vadd.f32 %v7348, %v7471
        %v7536 = vadd.f32 %v7412, %v7472
        %v7537 = vadd.f32 %v7349, %v7473
        %v7538 = vadd.f32 %v7413, %v7474
        %v7539 = vadd.f32 %v7350, %v7475
        %v7540 = vadd.f32 %v7414, %v7476
        %v7541 = vadd.f32 %v7351, %v7477
        %v7542 = vadd.f32 %v7415, %v7478
        %v7543 = vadd.f32 %v7352, %v7479
        %v7544 = vadd.f32 %v7416, %v7480
        %7545 = vst [vmem:[%s357] sm:$0xff] %v7481
        %7546 = vst [vmem:[%s357 + $0x8] sm:$0xff] %v7482
        %7547 = vst [vmem:[%s357 + $0x10] sm:$0xff] %v7483
        %7548 = vst [vmem:[%s357 + $0x18] sm:$0xff] %v7484
        %7549 = vst [vmem:[%s357 + $0x20] sm:$0xff] %v7485
        %7550 = vst [vmem:[%s357 + $0x28] sm:$0xff] %v7486
        %7551 = vst [vmem:[%s357 + $0x30] sm:$0xff] %v7487
        %7552 = vst [vmem:[%s357 + $0x38] sm:$0xff] %v7488
        %7553 = vst [vmem:[%s357 + $0x40] sm:$0xff] %v7489
        %7554 = vst [vmem:[%s357 + $0x48] sm:$0xff] %v7490
        %7555 = vst [vmem:[%s357 + $0x50] sm:$0xff] %v7491
        %7556 = vst [vmem:[%s357 + $0x58] sm:$0xff] %v7492
        %7557 = vst [vmem:[%s357 + $0x60] sm:$0xff] %v7493
        %7558 = vst [vmem:[%s357 + $0x68] sm:$0xff] %v7494
        %7559 = vst [vmem:[%s357 + $0x70] sm:$0xff] %v7495
        %7560 = vst [vmem:[%s357 + $0x78] sm:$0xff] %v7496
        %7561 = vst [vmem:[%s357 + $0x80] sm:$0xff] %v7497
        %7562 = vst [vmem:[%s357 + $0x88] sm:$0xff] %v7498
        %7563 = vst [vmem:[%s357 + $0x90] sm:$0xff] %v7499
        %7564 = vst [vmem:[%s357 + $0x98] sm:$0xff] %v7500
        %7565 = vst [vmem:[%s357 + $0xa0] sm:$0xff] %v7501
        %7566 = vst [vmem:[%s357 + $0xa8] sm:$0xff] %v7502
        %7567 = vst [vmem:[%s357 + $0xb0] sm:$0xff] %v7503
        %7568 = vst [vmem:[%s357 + $0xb8] sm:$0xff] %v7504
        %7569 = vst [vmem:[%s357 + $0xc0] sm:$0xff] %v7505
        %7570 = vst [vmem:[%s357 + $0xc8] sm:$0xff] %v7506
        %7571 = vst [vmem:[%s357 + $0xd0] sm:$0xff] %v7507
        %7572 = vst [vmem:[%s357 + $0xd8] sm:$0xff] %v7508
        %7573 = vst [vmem:[%s357 + $0xe0] sm:$0xff] %v7509
        %7574 = vst [vmem:[%s357 + $0xe8] sm:$0xff] %v7510
        %7575 = vst [vmem:[%s357 + $0xf0] sm:$0xff] %v7511
        %7576 = vst [vmem:[%s357 + $0xf8] sm:$0xff] %v7512
        %7577 = vst [vmem:[%s357 + $0x100] sm:$0xff] %v7513
        %7578 = vst [vmem:[%s357 + $0x108] sm:$0xff] %v7514
        %7579 = vst [vmem:[%s357 + $0x110] sm:$0xff] %v7515
        %7580 = vst [vmem:[%s357 + $0x118] sm:$0xff] %v7516
        %7581 = vst [vmem:[%s357 + $0x120] sm:$0xff] %v7517
        %7582 = vst [vmem:[%s357 + $0x128] sm:$0xff] %v7518
        %7583 = vst [vmem:[%s357 + $0x130] sm:$0xff] %v7519
        %7584 = vst [vmem:[%s357 + $0x138] sm:$0xff] %v7520
        %7585 = vst [vmem:[%s357 + $0x140] sm:$0xff] %v7521
        %7586 = vst [vmem:[%s357 + $0x148] sm:$0xff] %v7522
        %7587 = vst [vmem:[%s357 + $0x150] sm:$0xff] %v7523
        %7588 = vst [vmem:[%s357 + $0x158] sm:$0xff] %v7524
        %7589 = vst [vmem:[%s357 + $0x160] sm:$0xff] %v7525
        %7590 = vst [vmem:[%s357 + $0x168] sm:$0xff] %v7526
        %7591 = vst [vmem:[%s357 + $0x170] sm:$0xff] %v7527
        %7592 = vst [vmem:[%s357 + $0x178] sm:$0xff] %v7528
        %7593 = vst [vmem:[%s357 + $0x180] sm:$0xff] %v7529
        %7594 = vst [vmem:[%s357 + $0x188] sm:$0xff] %v7530
        %7595 = vst [vmem:[%s357 + $0x190] sm:$0xff] %v7531
        %7596 = vst [vmem:[%s357 + $0x198] sm:$0xff] %v7532
        %7597 = vst [vmem:[%s357 + $0x1a0] sm:$0xff] %v7533
        %7598 = vst [vmem:[%s357 + $0x1a8] sm:$0xff] %v7534
        %7599 = vst [vmem:[%s357 + $0x1b0] sm:$0xff] %v7535
        %7600 = vst [vmem:[%s357 + $0x1b8] sm:$0xff] %v7536
        %7601 = vst [vmem:[%s357 + $0x1c0] sm:$0xff] %v7537
        %7602 = vst [vmem:[%s357 + $0x1c8] sm:$0xff] %v7538
        %7603 = vst [vmem:[%s357 + $0x1d0] sm:$0xff] %v7539
        %7604 = vst [vmem:[%s357 + $0x1d8] sm:$0xff] %v7540
        %7605 = vst [vmem:[%s357 + $0x1e0] sm:$0xff] %v7541
        %7606 = vst [vmem:[%s357 + $0x1e8] sm:$0xff] %v7542
        %7607 = vst [vmem:[%s357 + $0x1f0] sm:$0xff] %v7543
        %7608 = vst [vmem:[%s357 + $0x1f8] sm:$0xff] %v7544
      $region60: #{_lambda_.1} parent=51 // pred_fallthru
        _
      %p7609 = scmp.lt.s32.totalorder %s23, 1
      %s7610 = scalar_select %p7609, %s23, 1
      %s7611 = smul.addr %s7610, 64
      %s7612 = smul.addr %s7611, 8
      %s7613 = scalar_lea.vmem %s8, %s7612
      // Predicated region
      $region61: #{_lambda_.1} parent=51 // pred_check
        %p7614 = pneg %p232
      $region62: #{_lambda_.1} parent=51 // pred_check_branch
        %7616 = sbr.rel (%p7614) target = $region64
      $region63: #{_lambda_.1} parent=51 // pred_region
        _
      $region64: #{_lambda_.1} parent=51 // pred_fallthru
        _
    $region52: #{_lambda_.1} parent=5 // pred_fallthru
      _
    %p7617 = scmp.le.s32.totalorder 2, %s14
    // Predicated region
    $region65: #{_lambda_.1} parent=5 // pred_check
      %p7618 = pneg %p7617
    $region66: #{_lambda_.1} parent=5 // pred_check_branch
      %7620 = sbr.rel (%p7618) target = $region68
    $region67: #{_lambda_.1} parent=5 // pred_region
      %s7621 = ssub.s32 %s14, 2
      // Predicated region
      $region69: #{_lambda_.1} parent=67 // pred_check
        %p7622 = pneg %p238
      $region70: #{_lambda_.1} parent=67 // pred_check_branch
        %7624 = sbr.rel (%p7622) target = $region72
      $region71: #{_lambda_.1} parent=67 // pred_region
        %p7625 = scmp.lt.s32.totalorder %s25, 1
        %s7626 = scalar_select %p7625, %s25, 1
        %s7627 = smul.addr %s7626, 64
        %s7628 = smul.addr %s7627, 8
        %s7629 = scalar_lea.vmem %s8, %s7628
      $region72: #{_lambda_.1} parent=67 // pred_fallthru
        _
    $region68: #{_lambda_.1} parent=5 // pred_fallthru
      _
  $region6: #{_lambda_.1} parent=0 // loop_footer
    %s18 = sadd.s32 1, %s14
  $region7: #{_lambda_.1} parent=0 // loop_footer_branch
    %13 = sbr.rel target = $region3
  $region8: #{_lambda_.1} parent=0 // loop_exit
    _

</llo_original>
